<compile_context>
chip_gen: v7x
topology: tpu7x:2x2x1
jax: 0.10.0
libtpu: 0.0.40
codegen_flags: <defaults>
</compile_context>

<pallas_src>
import functools

import jax
import jax.numpy as jnp
from jax import lax
from jax.experimental import pallas as pl
from jax.experimental.pallas import tpu as pltpu

LEAKY_SLOPE = 0.2
BN_EPS = 1e-5
KH = 4            # kernel height of every conv in the module
KW = 4            # kernel width
PADW = 1          # spatial padding of every conv
LANE = 128
SUBLANE = 8
TILE_M = 512      # row tile of the BN-apply elementwise kernel
COMPUTE_DTYPE = jnp.bfloat16           # MXU operand / activation storage dtype
VMEM_LIMIT = 48 * 1024 * 1024          # explicit cap with headroom below v7x's 64 MiB


def _round_up(x, m):
    return (x + m - 1) // m * m


def _leaky(x):
    return jnp.where(x >= 0, x, LEAKY_SLOPE * x)


# ---------------------------------------------------------------------------
# Phase 1: direct convolution, one output row per grid step (grid = (N, OH)).
# ---------------------------------------------------------------------------
def _make_conv_row_kernel(ntaps, ow, use_bias, use_bn, fuse_act):
    """Kernel computing y[n, oh, :, :] = conv(x)[n, oh] (+bias)(+LeakyReLU).

    Refs (in order):
      x_rows[0..KH-1] : (1, 1, WIN, K1) bf16  - padded-input row oh*stride + ih
      w_ref           : (KH, ntaps, K1, Coutp) bf16 - packed weights
      b_ref (opt)     : (1, Coutp) f32
      y_ref           : (1, 1, OW, Coutp)
      stats_ref (opt) : (1, 1, 2, Coutp) f32  - per-row partial sum / sum-of-sq
    """

    def kernel(*refs):
        x_refs = refs[:KH]
        pos = KH
        w_ref = refs[pos]; pos += 1
        b_ref = None
        if use_bias:
            b_ref = refs[pos]; pos += 1
        y_ref = refs[pos]; pos += 1
        stats_ref = refs[pos] if use_bn else None

        coutp = w_ref.shape[-1]
        acc = jnp.zeros((ow, coutp), jnp.float32)
        for ih in range(KH):
            row = x_refs[ih][0, 0]                       # (WIN, K1) bf16
            for t in range(ntaps):
                acc = acc + jnp.dot(row[t:t + ow, :], w_ref[ih, t],
                                    preferred_element_type=jnp.float32)
        if use_bias:
            acc = acc + b_ref[...]
        if fuse_act:
            acc = _leaky(acc)
        y_ref[0, 0] = acc.astype(y_ref.dtype)
        if use_bn:
            s = jnp.sum(acc, axis=0, keepdims=True)            # (1, Coutp)
            sq = jnp.sum(acc * acc, axis=0, keepdims=True)      # (1, Coutp)
            stats_ref[0, 0] = jnp.concatenate([s, sq], axis=0)  # (2, Coutp)

    return kernel


def _conv_phase1(x_in, w_packed, bias, *, stride, ntaps, oh, ow,
                 use_bias, use_bn, fuse_act, out_dtype):
    n, _, win, k1 = x_in.shape
    coutp = w_packed.shape[-1]

    # KH row-blocked views of the same padded input: H-block size 1, so the block
    # index along H equals the element row oh*stride + ih.
    in_specs = [
        pl.BlockSpec((1, 1, win, k1),
                     lambda b, o, ih=ih: (b, o * stride + ih, 0, 0))
        for ih in range(KH)
    ]
    operands = [x_in] * KH
    in_specs.append(pl.BlockSpec(w_packed.shape, lambda b, o: (0, 0, 0, 0)))
    operands.append(w_packed)
    if use_bias:
        in_specs.append(pl.BlockSpec((1, coutp), lambda b, o: (0, 0)))
        operands.append(bias.reshape(1, coutp).astype(jnp.float32))

    out_shape = [jax.ShapeDtypeStruct((n, oh, ow, coutp), out_dtype)]
    out_specs = [pl.BlockSpec((1, 1, ow, coutp), lambda b, o: (b, o, 0, 0))]
    if use_bn:
        out_shape.append(jax.ShapeDtypeStruct((n, oh, 2, coutp), jnp.float32))
        out_specs.append(pl.BlockSpec((1, 1, 2, coutp), lambda b, o: (b, o, 0, 0)))

    kernel = _make_conv_row_kernel(ntaps, ow, use_bias, use_bn, fuse_act)
    return pl.pallas_call(
        kernel,
        grid=(n, oh),
        in_specs=in_specs,
        out_specs=out_specs,
        out_shape=out_shape,
        compiler_params=pltpu.CompilerParams(
            dimension_semantics=("parallel", "parallel"),
            vmem_limit_bytes=VMEM_LIMIT),
    )(*operands)


# ---------------------------------------------------------------------------
# Phase 2: BatchNorm (folded per-channel scale/shift) + LeakyReLU, tiled over M.
# ---------------------------------------------------------------------------
def _bn_act_kernel(y_ref, scale_ref, shift_ref, o_ref):
    z = y_ref[...].astype(jnp.float32) * scale_ref[...] + shift_ref[...]
    o_ref[...] = _leaky(z).astype(o_ref.dtype)


def _apply_bn_act(y, stats, gamma, beta, out_dtype):
    """Training-mode BatchNorm2d (batch stats, biased variance) + LeakyReLU."""
    n, oh, ow, c = y.shape
    count = n * oh * ow
    total = jnp.sum(stats[:, :, 0, :], axis=(0, 1))      # (C,)
    total_sq = jnp.sum(stats[:, :, 1, :], axis=(0, 1))   # (C,)
    mean = total / count
    var = jnp.maximum(total_sq / count - mean * mean, 0.0)
    scale = gamma * lax.rsqrt(var + BN_EPS)
    shift = beta - mean * scale

    m = count
    tile_m = min(TILE_M, _round_up(m, SUBLANE))
    m_pad = _round_up(m, tile_m)
    y_flat = y.reshape(m, c)
    if m_pad != m:
        y_flat = jnp.pad(y_flat, ((0, m_pad - m), (0, 0)))

    out = pl.pallas_call(
        _bn_act_kernel,
        grid=(m_pad // tile_m,),
        in_specs=[pl.BlockSpec((tile_m, c), lambda i: (i, 0)),
                  pl.BlockSpec((1, c), lambda i: (0, 0)),
                  pl.BlockSpec((1, c), lambda i: (0, 0))],
        out_specs=pl.BlockSpec((tile_m, c), lambda i: (i, 0)),
        out_shape=jax.ShapeDtypeStruct((m_pad, c), out_dtype),
        compiler_params=pltpu.CompilerParams(
            dimension_semantics=("parallel",),
            vmem_limit_bytes=VMEM_LIMIT),
    )(y_flat, scale.reshape(1, c).astype(jnp.float32),
      shift.reshape(1, c).astype(jnp.float32))
    return out[:m].reshape(n, oh, ow, c)


# ---------------------------------------------------------------------------
# One Conv(k4, p1)(+BN)(+LeakyReLU) block.
# ---------------------------------------------------------------------------
def _conv_block(x, p):
    n, h, w_in, cin = x.shape
    stride = p["stride"]
    use_bias, use_bn, use_act = p["use_bias"], p["use_bn"], p["use_act"]
    wgt = p["w"]                                   # (KH, KW, Cin, Cout) f32
    cout = wgt.shape[-1]

    oh = (h + 2 * PADW - KH) // stride + 1
    ow = (w_in + 2 * PADW - KW) // stride + 1

    # Lane-dense output for the final 1-channel conv: pad Cout -> 128 with zero
    # filters (unmasked stores, full MXU columns); slice the extra channels off.
    coutp = LANE if cout < SUBLANE else cout
    bias = p["b"] if use_bias else None
    if coutp != cout:
        wgt = jnp.pad(wgt, ((0, 0), (0, 0), (0, 0), (0, coutp - cout)))
        if use_bias:
            bias = jnp.pad(bias, (0, coutp - cout))

    x_pad = jnp.pad(x, ((0, 0), (PADW, PADW), (PADW, PADW), (0, 0)))

    if stride == 2:
        # Pack column pairs into channels (free reshape) so every in-kernel tap
        # is a contiguous slice; the weight is re-packed to match:
        #   x_in[n, r, j, dw*Cin + c] = x_pad[n, r, 2j + dw, c]
        #   Wp[ih, q, dw*Cin + c, o]  = W[ih, 2q + dw, c, o]
        wp_dim = w_in + 2 * PADW
        if wp_dim % 2:
            x_pad = jnp.pad(x_pad, ((0, 0), (0, 0), (0, 1), (0, 0)))
            wp_dim += 1
        x_in = x_pad.reshape(n, h + 2 * PADW, wp_dim // 2, 2 * cin)
        w_packed = wgt.reshape(KH, 2, 2, cin, coutp).reshape(KH, 2, 2 * cin, coutp)
        ntaps = 2
    else:
        x_in = x_pad
        w_packed = wgt
        ntaps = KW

    x_in = x_in.astype(COMPUTE_DTYPE)
    w_packed = w_packed.astype(COMPUTE_DTYPE)

    fuse_act = use_act and not use_bn
    y_dtype = jnp.float32 if (use_bn or not use_act) else COMPUTE_DTYPE

    outs = _conv_phase1(x_in, w_packed, bias, stride=stride, ntaps=ntaps,
                        oh=oh, ow=ow, use_bias=use_bias, use_bn=use_bn,
                        fuse_act=fuse_act, out_dtype=y_dtype)
    y = outs[0]
    if use_bn:
        y = _apply_bn_act(y, outs[1], p["gamma"], p["beta"], COMPUTE_DTYPE)
    if coutp != cout:
        y = y[..., :cout]
    return y


# ---------------------------------------------------------------------------
# Module configuration / parameters / forward.
# ---------------------------------------------------------------------------
def _layer_specs(input_nc, ndf, n_layers):
    """Mirror NLayerDiscriminator.__init__ (BatchNorm2d => use_bias=False on the
    normed convs).  Tuples: (cin, cout, stride, use_bias, use_bn, use_act)."""
    specs = [(input_nc, ndf, 2, True, False, True)]
    nf_mult = 1
    for i in range(1, n_layers):
        prev, nf_mult = nf_mult, min(2 ** i, 8)
        specs.append((ndf * prev, ndf * nf_mult, 2, False, True, True))
    prev, nf_mult = nf_mult, min(2 ** n_layers, 8)
    specs.append((ndf * prev, ndf * nf_mult, 1, False, True, True))
    specs.append((ndf * nf_mult, 1, 1, True, False, False))
    return specs


def init_params(key, input_nc, ndf=64, n_layers=3):
    """Deterministic synthetic parameter init (shapes from the module's __init__)."""
    params = []
    for (cin, cout, stride, use_bias, use_bn, use_act) in _layer_specs(
            input_nc, ndf, n_layers):
        key, kw_, kb_, kg_, kbe_ = jax.random.split(key, 5)
        w = 0.05 * jax.random.normal(kw_, (KH, KW, cin, cout), jnp.float32)
        b = (0.05 * jax.random.normal(kb_, (cout,), jnp.float32)
             if use_bias else jnp.zeros((cout,), jnp.float32))
        if use_bn:
            gamma = 1.0 + 0.05 * jax.random.normal(kg_, (cout,), jnp.float32)
            beta = 0.05 * jax.random.normal(kbe_, (cout,), jnp.float32)
        else:
            gamma = jnp.ones((cout,), jnp.float32)
            beta = jnp.zeros((cout,), jnp.float32)
        params.append(dict(w=w, b=b, gamma=gamma, beta=beta, stride=stride,
                           use_bias=use_bias, use_bn=use_bn, use_act=use_act))
    return params


def nlayer_discriminator_forward(x_nchw, params):
    """Forward pass; NCHW in / NCHW out to match PyTorch semantics."""
    x = jnp.transpose(x_nchw, (0, 2, 3, 1)).astype(COMPUTE_DTYPE)  # NCHW -> NHWC
    for p in params:
        x = _conv_block(x, p)
    return jnp.transpose(x.astype(jnp.float32), (0, 3, 1, 2))      # NHWC -> NCHW


if __name__ == "__main__":
    key = jax.random.PRNGKey(0)
    k_x, k_p = jax.random.split(key)

    # Small shapes: batch=2, input_nc=4, spatial=32 (smallest that keeps the
    # final 1-channel patch map non-empty with the default n_layers=3), ndf=8.
    input_nc, ndf, n_layers = 4, 8, 3
    x = jax.random.normal(k_x, (2, input_nc, 32, 32), jnp.float32)

    params = init_params(k_p, input_nc, ndf=ndf, n_layers=n_layers)

    fwd = jax.jit(functools.partial(nlayer_discriminator_forward, params=params))
    out = fwd(x)
    jax.block_until_ready(out)

    # 32 -> 16 -> 8 -> 4 (stride-2 convs) -> 3 (stride-1) -> 2 (final conv)
    assert out.shape == (2, 1, 2, 2), out.shape
    assert out.dtype == jnp.float32
    print("KERNEL_OK")
</pallas_src>

<mosaic_0001>
module attributes {stable_mosaic.version = 11 : i64} {
  func.func @kernel(%arg0: i32, %arg1: i32, %arg2: memref<1x1x17x8xbf16, #tpu.memory_space<vmem>>, %arg3: memref<1x1x17x8xbf16, #tpu.memory_space<vmem>>, %arg4: memref<1x1x17x8xbf16, #tpu.memory_space<vmem>>, %arg5: memref<1x1x17x8xbf16, #tpu.memory_space<vmem>>, %arg6: memref<4x2x8x8xbf16, #tpu.memory_space<vmem>>, %arg7: memref<1x8xf32, #tpu.memory_space<vmem>>, %arg8: memref<1x1x16x8xbf16, #tpu.memory_space<vmem>>) attributes {dimension_semantics = [#tpu.dimension_semantics<parallel>, #tpu.dimension_semantics<parallel>], iteration_bounds = array<i64: 2, 16>, scalar_prefetch = 0 : i64, scratch_operands = 0 : i64, tpu.core_type = #tpu.core_type<tc>, window_params = [{transform_indices = @transform_0, window_bounds = array<i64: 1, 1, 17, 8>}, {transform_indices = @transform_1, window_bounds = array<i64: 1, 1, 17, 8>}, {transform_indices = @transform_2, window_bounds = array<i64: 1, 1, 17, 8>}, {transform_indices = @transform_3, window_bounds = array<i64: 1, 1, 17, 8>}, {pipeline_mode = #tpu.pipeline_mode<synchronous>, transform_indices = @transform_4, window_bounds = array<i64: 4, 2, 8, 8>}, {pipeline_mode = #tpu.pipeline_mode<synchronous>, transform_indices = @transform_5, window_bounds = array<i64: 1, 8>}, {transform_indices = @transform_6, window_bounds = array<i64: 1, 1, 16, 8>}]} {
    %cst = arith.constant 0.000000e+00 : f32
    %0 = vector.broadcast %cst : f32 to vector<16x8xf32>
    %c0 = arith.constant 0 : index
    %c0_0 = arith.constant 0 : index
    %c0_1 = arith.constant 0 : index
    %c0_2 = arith.constant 0 : index
    %1 = vector.load %arg2[%c0, %c0_0, %c0_1, %c0_2] : memref<1x1x17x8xbf16, #tpu.memory_space<vmem>>, vector<1x1x17x8xbf16>
    %2 = vector.shape_cast %1 : vector<1x1x17x8xbf16> to vector<17x8xbf16>
    %3 = vector.extract_strided_slice %2 {offsets = [0, 0], sizes = [16, 8], strides = [1, 1]} : vector<17x8xbf16> to vector<16x8xbf16>
    %c0_3 = arith.constant 0 : index
    %c0_4 = arith.constant 0 : index
    %c0_5 = arith.constant 0 : index
    %c0_6 = arith.constant 0 : index
    %4 = vector.load %arg6[%c0_3, %c0_4, %c0_5, %c0_6] : memref<4x2x8x8xbf16, #tpu.memory_space<vmem>>, vector<1x1x8x8xbf16>
    %5 = vector.shape_cast %4 : vector<1x1x8x8xbf16> to vector<8x8xbf16>
    %cst_7 = arith.constant dense<0.000000e+00> : vector<16x8xf32>
    %6 = tpu.matmul %3, %5, %cst_7 {dimension_numbers = #tpu.dot_dimension_numbers<[1], [0], [0], [1], [0, 0, 1, 1], [], []>} : vector<16x8xbf16>, vector<8x8xbf16>, vector<16x8xf32> -> vector<16x8xf32>
    %7 = arith.addf %0, %6 : vector<16x8xf32>
    %8 = vector.extract_strided_slice %2 {offsets = [1, 0], sizes = [16, 8], strides = [1, 1]} : vector<17x8xbf16> to vector<16x8xbf16>
    %c0_8 = arith.constant 0 : index
    %c1 = arith.constant 1 : index
    %c0_9 = arith.constant 0 : index
    %c0_10 = arith.constant 0 : index
    %9 = vector.load %arg6[%c0_8, %c1, %c0_9, %c0_10] : memref<4x2x8x8xbf16, #tpu.memory_space<vmem>>, vector<1x1x8x8xbf16>
    %10 = vector.shape_cast %9 : vector<1x1x8x8xbf16> to vector<8x8xbf16>
    %cst_11 = arith.constant dense<0.000000e+00> : vector<16x8xf32>
    %11 = tpu.matmul %8, %10, %cst_11 {dimension_numbers = #tpu.dot_dimension_numbers<[1], [0], [0], [1], [0, 0, 1, 1], [], []>} : vector<16x8xbf16>, vector<8x8xbf16>, vector<16x8xf32> -> vector<16x8xf32>
    %12 = arith.addf %7, %11 : vector<16x8xf32>
    %c0_12 = arith.constant 0 : index
    %c0_13 = arith.constant 0 : index
    %c0_14 = arith.constant 0 : index
    %c0_15 = arith.constant 0 : index
    %13 = vector.load %arg3[%c0_12, %c0_13, %c0_14, %c0_15] : memref<1x1x17x8xbf16, #tpu.memory_space<vmem>>, vector<1x1x17x8xbf16>
    %14 = vector.shape_cast %13 : vector<1x1x17x8xbf16> to vector<17x8xbf16>
    %15 = vector.extract_strided_slice %14 {offsets = [0, 0], sizes = [16, 8], strides = [1, 1]} : vector<17x8xbf16> to vector<16x8xbf16>
    %c1_16 = arith.constant 1 : index
    %c0_17 = arith.constant 0 : index
    %c0_18 = arith.constant 0 : index
    %c0_19 = arith.constant 0 : index
    %16 = vector.load %arg6[%c1_16, %c0_17, %c0_18, %c0_19] : memref<4x2x8x8xbf16, #tpu.memory_space<vmem>>, vector<1x1x8x8xbf16>
    %17 = vector.shape_cast %16 : vector<1x1x8x8xbf16> to vector<8x8xbf16>
    %cst_20 = arith.constant dense<0.000000e+00> : vector<16x8xf32>
    %18 = tpu.matmul %15, %17, %cst_20 {dimension_numbers = #tpu.dot_dimension_numbers<[1], [0], [0], [1], [0, 0, 1, 1], [], []>} : vector<16x8xbf16>, vector<8x8xbf16>, vector<16x8xf32> -> vector<16x8xf32>
    %19 = arith.addf %12, %18 : vector<16x8xf32>
    %20 = vector.extract_strided_slice %14 {offsets = [1, 0], sizes = [16, 8], strides = [1, 1]} : vector<17x8xbf16> to vector<16x8xbf16>
    %c1_21 = arith.constant 1 : index
    %c1_22 = arith.constant 1 : index
    %c0_23 = arith.constant 0 : index
    %c0_24 = arith.constant 0 : index
    %21 = vector.load %arg6[%c1_21, %c1_22, %c0_23, %c0_24] : memref<4x2x8x8xbf16, #tpu.memory_space<vmem>>, vector<1x1x8x8xbf16>
    %22 = vector.shape_cast %21 : vector<1x1x8x8xbf16> to vector<8x8xbf16>
    %cst_25 = arith.constant dense<0.000000e+00> : vector<16x8xf32>
    %23 = tpu.matmul %20, %22, %cst_25 {dimension_numbers = #tpu.dot_dimension_numbers<[1], [0], [0], [1], [0, 0, 1, 1], [], []>} : vector<16x8xbf16>, vector<8x8xbf16>, vector<16x8xf32> -> vector<16x8xf32>
    %24 = arith.addf %19, %23 : vector<16x8xf32>
    %c0_26 = arith.constant 0 : index
    %c0_27 = arith.constant 0 : index
    %c0_28 = arith.constant 0 : index
    %c0_29 = arith.constant 0 : index
    %25 = vector.load %arg4[%c0_26, %c0_27, %c0_28, %c0_29] : memref<1x1x17x8xbf16, #tpu.memory_space<vmem>>, vector<1x1x17x8xbf16>
    %26 = vector.shape_cast %25 : vector<1x1x17x8xbf16> to vector<17x8xbf16>
    %27 = vector.extract_strided_slice %26 {offsets = [0, 0], sizes = [16, 8], strides = [1, 1]} : vector<17x8xbf16> to vector<16x8xbf16>
    %c2 = arith.constant 2 : index
    %c0_30 = arith.constant 0 : index
    %c0_31 = arith.constant 0 : index
    %c0_32 = arith.constant 0 : index
    %28 = vector.load %arg6[%c2, %c0_30, %c0_31, %c0_32] : memref<4x2x8x8xbf16, #tpu.memory_space<vmem>>, vector<1x1x8x8xbf16>
    %29 = vector.shape_cast %28 : vector<1x1x8x8xbf16> to vector<8x8xbf16>
    %cst_33 = arith.constant dense<0.000000e+00> : vector<16x8xf32>
    %30 = tpu.matmul %27, %29, %cst_33 {dimension_numbers = #tpu.dot_dimension_numbers<[1], [0], [0], [1], [0, 0, 1, 1], [], []>} : vector<16x8xbf16>, vector<8x8xbf16>, vector<16x8xf32> -> vector<16x8xf32>
    %31 = arith.addf %24, %30 : vector<16x8xf32>
    %32 = vector.extract_strided_slice %26 {offsets = [1, 0], sizes = [16, 8], strides = [1, 1]} : vector<17x8xbf16> to vector<16x8xbf16>
    %c2_34 = arith.constant 2 : index
    %c1_35 = arith.constant 1 : index
    %c0_36 = arith.constant 0 : index
    %c0_37 = arith.constant 0 : index
    %33 = vector.load %arg6[%c2_34, %c1_35, %c0_36, %c0_37] : memref<4x2x8x8xbf16, #tpu.memory_space<vmem>>, vector<1x1x8x8xbf16>
    %34 = vector.shape_cast %33 : vector<1x1x8x8xbf16> to vector<8x8xbf16>
    %cst_38 = arith.constant dense<0.000000e+00> : vector<16x8xf32>
    %35 = tpu.matmul %32, %34, %cst_38 {dimension_numbers = #tpu.dot_dimension_numbers<[1], [0], [0], [1], [0, 0, 1, 1], [], []>} : vector<16x8xbf16>, vector<8x8xbf16>, vector<16x8xf32> -> vector<16x8xf32>
    %36 = arith.addf %31, %35 : vector<16x8xf32>
    %c0_39 = arith.constant 0 : index
    %c0_40 = arith.constant 0 : index
    %c0_41 = arith.constant 0 : index
    %c0_42 = arith.constant 0 : index
    %37 = vector.load %arg5[%c0_39, %c0_40, %c0_41, %c0_42] : memref<1x1x17x8xbf16, #tpu.memory_space<vmem>>, vector<1x1x17x8xbf16>
    %38 = vector.shape_cast %37 : vector<1x1x17x8xbf16> to vector<17x8xbf16>
    %39 = vector.extract_strided_slice %38 {offsets = [0, 0], sizes = [16, 8], strides = [1, 1]} : vector<17x8xbf16> to vector<16x8xbf16>
    %c3 = arith.constant 3 : index
    %c0_43 = arith.constant 0 : index
    %c0_44 = arith.constant 0 : index
    %c0_45 = arith.constant 0 : index
    %40 = vector.load %arg6[%c3, %c0_43, %c0_44, %c0_45] : memref<4x2x8x8xbf16, #tpu.memory_space<vmem>>, vector<1x1x8x8xbf16>
    %41 = vector.shape_cast %40 : vector<1x1x8x8xbf16> to vector<8x8xbf16>
    %cst_46 = arith.constant dense<0.000000e+00> : vector<16x8xf32>
    %42 = tpu.matmul %39, %41, %cst_46 {dimension_numbers = #tpu.dot_dimension_numbers<[1], [0], [0], [1], [0, 0, 1, 1], [], []>} : vector<16x8xbf16>, vector<8x8xbf16>, vector<16x8xf32> -> vector<16x8xf32>
    %43 = arith.addf %36, %42 : vector<16x8xf32>
    %44 = vector.extract_strided_slice %38 {offsets = [1, 0], sizes = [16, 8], strides = [1, 1]} : vector<17x8xbf16> to vector<16x8xbf16>
    %c3_47 = arith.constant 3 : index
    %c1_48 = arith.constant 1 : index
    %c0_49 = arith.constant 0 : index
    %c0_50 = arith.constant 0 : index
    %45 = vector.load %arg6[%c3_47, %c1_48, %c0_49, %c0_50] : memref<4x2x8x8xbf16, #tpu.memory_space<vmem>>, vector<1x1x8x8xbf16>
    %46 = vector.shape_cast %45 : vector<1x1x8x8xbf16> to vector<8x8xbf16>
    %cst_51 = arith.constant dense<0.000000e+00> : vector<16x8xf32>
    %47 = tpu.matmul %44, %46, %cst_51 {dimension_numbers = #tpu.dot_dimension_numbers<[1], [0], [0], [1], [0, 0, 1, 1], [], []>} : vector<16x8xbf16>, vector<8x8xbf16>, vector<16x8xf32> -> vector<16x8xf32>
    %48 = arith.addf %43, %47 : vector<16x8xf32>
    %c0_52 = arith.constant 0 : index
    %c0_53 = arith.constant 0 : index
    %49 = vector.load %arg7[%c0_52, %c0_53] : memref<1x8xf32, #tpu.memory_space<vmem>>, vector<1x8xf32>
    %50 = vector.broadcast %49 : vector<1x8xf32> to vector<16x8xf32>
    %51 = arith.addf %48, %50 : vector<16x8xf32>
    %cst_54 = arith.constant 0.000000e+00 : f32
    %52 = vector.broadcast %cst_54 : f32 to vector<16x8xf32>
    %53 = arith.cmpf oge, %51, %52 : vector<16x8xf32>
    %cst_55 = arith.constant 2.000000e-01 : f32
    %54 = vector.broadcast %cst_55 : f32 to vector<16x8xf32>
    %55 = arith.mulf %54, %51 : vector<16x8xf32>
    %56 = arith.select %53, %51, %55 : vector<16x8xi1>, vector<16x8xf32>
    %57 = arith.truncf %56 : vector<16x8xf32> to vector<16x8xbf16>
    %c0_56 = arith.constant 0 : index
    %c0_57 = arith.constant 0 : index
    %c0_58 = arith.constant 0 : index
    %c0_59 = arith.constant 0 : index
    %58 = vector.load %arg8[%c0_56, %c0_57, %c0_58, %c0_59] : memref<1x1x16x8xbf16, #tpu.memory_space<vmem>>, vector<1x1x16x8xbf16>
    %59 = vector.shape_cast %58 : vector<1x1x16x8xbf16> to vector<16x8xbf16>
    %60 = vector.shape_cast %57 : vector<16x8xbf16> to vector<1x1x16x8xbf16>
    tpu.vector_store %arg8[%c0_56, %c0_57, %c0_58, %c0_59], %60 {strides = array<i32>} : memref<1x1x16x8xbf16, #tpu.memory_space<vmem>>, vector<1x1x16x8xbf16>,
    return
  }
  func.func @transform_0(%arg0: i32, %arg1: i32) -> (i32, i32, i32, i32) {
    %c2_i32 = arith.constant 2 : i32
    %0 = arith.muli %arg1, %c2_i32 : i32
    %c0_i32 = arith.constant 0 : i32
    %1 = arith.addi %0, %c0_i32 : i32
    %c0_i32_0 = arith.constant 0 : i32
    %c0_i32_1 = arith.constant 0 : i32
    %c0_i32_2 = arith.constant 0 : i32
    return %arg0, %1, %c0_i32_0, %c0_i32_1 : i32, i32, i32, i32
  }
  func.func @transform_1(%arg0: i32, %arg1: i32) -> (i32, i32, i32, i32) {
    %c2_i32 = arith.constant 2 : i32
    %0 = arith.muli %arg1, %c2_i32 : i32
    %c1_i32 = arith.constant 1 : i32
    %1 = arith.addi %0, %c1_i32 : i32
    %c0_i32 = arith.constant 0 : i32
    %c0_i32_0 = arith.constant 0 : i32
    %c0_i32_1 = arith.constant 0 : i32
    return %arg0, %1, %c0_i32, %c0_i32_0 : i32, i32, i32, i32
  }
  func.func @transform_2(%arg0: i32, %arg1: i32) -> (i32, i32, i32, i32) {
    %c2_i32 = arith.constant 2 : i32
    %0 = arith.muli %arg1, %c2_i32 : i32
    %c2_i32_0 = arith.constant 2 : i32
    %1 = arith.addi %0, %c2_i32_0 : i32
    %c0_i32 = arith.constant 0 : i32
    %c0_i32_1 = arith.constant 0 : i32
    %c0_i32_2 = arith.constant 0 : i32
    return %arg0, %1, %c0_i32, %c0_i32_1 : i32, i32, i32, i32
  }
  func.func @transform_3(%arg0: i32, %arg1: i32) -> (i32, i32, i32, i32) {
    %c2_i32 = arith.constant 2 : i32
    %0 = arith.muli %arg1, %c2_i32 : i32
    %c3_i32 = arith.constant 3 : i32
    %1 = arith.addi %0, %c3_i32 : i32
    %c0_i32 = arith.constant 0 : i32
    %c0_i32_0 = arith.constant 0 : i32
    %c0_i32_1 = arith.constant 0 : i32
    return %arg0, %1, %c0_i32, %c0_i32_0 : i32, i32, i32, i32
  }
  func.func @transform_4(%arg0: i32, %arg1: i32) -> (i32, i32, i32, i32) {
    %c0_i32 = arith.constant 0 : i32
    %c0_i32_0 = arith.constant 0 : i32
    %c0_i32_1 = arith.constant 0 : i32
    %c0_i32_2 = arith.constant 0 : i32
    %c0_i32_3 = arith.constant 0 : i32
    return %c0_i32, %c0_i32_0, %c0_i32_1, %c0_i32_2 : i32, i32, i32, i32
  }
  func.func @transform_5(%arg0: i32, %arg1: i32) -> (i32, i32) {
    %c0_i32 = arith.constant 0 : i32
    %c0_i32_0 = arith.constant 0 : i32
    %c0_i32_1 = arith.constant 0 : i32
    return %c0_i32, %c0_i32_0 : i32, i32
  }
  func.func @transform_6(%arg0: i32, %arg1: i32) -> (i32, i32, i32, i32) {
    %c0_i32 = arith.constant 0 : i32
    %c0_i32_0 = arith.constant 0 : i32
    %c0_i32_1 = arith.constant 0 : i32
    return %arg0, %arg1, %c0_i32, %c0_i32_0 : i32, i32, i32, i32
  }
}

module attributes {stable_mosaic.version = 11 : i64} {
  func.func @kernel(%arg0: i32, %arg1: i32, %arg2: memref<1x1x9x16xbf16, #tpu.memory_space<vmem>>, %arg3: memref<1x1x9x16xbf16, #tpu.memory_space<vmem>>, %arg4: memref<1x1x9x16xbf16, #tpu.memory_space<vmem>>, %arg5: memref<1x1x9x16xbf16, #tpu.memory_space<vmem>>, %arg6: memref<4x2x16x16xbf16, #tpu.memory_space<vmem>>, %arg7: memref<1x1x8x16xf32, #tpu.memory_space<vmem>>, %arg8: memref<1x1x2x16xf32, #tpu.memory_space<vmem>>) attributes {dimension_semantics = [#tpu.dimension_semantics<parallel>, #tpu.dimension_semantics<parallel>], iteration_bounds = array<i64: 2, 8>, scalar_prefetch = 0 : i64, scratch_operands = 0 : i64, tpu.core_type = #tpu.core_type<tc>, window_params = [{transform_indices = @transform_0, window_bounds = array<i64: 1, 1, 9, 16>}, {transform_indices = @transform_1, window_bounds = array<i64: 1, 1, 9, 16>}, {transform_indices = @transform_2, window_bounds = array<i64: 1, 1, 9, 16>}, {transform_indices = @transform_3, window_bounds = array<i64: 1, 1, 9, 16>}, {pipeline_mode = #tpu.pipeline_mode<synchronous>, transform_indices = @transform_4, window_bounds = array<i64: 4, 2, 16, 16>}, {transform_indices = @transform_5, window_bounds = array<i64: 1, 1, 8, 16>}, {transform_indices = @transform_6, window_bounds = array<i64: 1, 1, 2, 16>}]} {
    %cst = arith.constant 0.000000e+00 : f32
    %0 = vector.broadcast %cst : f32 to vector<8x16xf32>
    %c0 = arith.constant 0 : index
    %c0_0 = arith.constant 0 : index
    %c0_1 = arith.constant 0 : index
    %c0_2 = arith.constant 0 : index
    %1 = vector.load %arg2[%c0, %c0_0, %c0_1, %c0_2] : memref<1x1x9x16xbf16, #tpu.memory_space<vmem>>, vector<1x1x9x16xbf16>
    %2 = vector.shape_cast %1 : vector<1x1x9x16xbf16> to vector<9x16xbf16>
    %3 = vector.extract_strided_slice %2 {offsets = [0, 0], sizes = [8, 16], strides = [1, 1]} : vector<9x16xbf16> to vector<8x16xbf16>
    %c0_3 = arith.constant 0 : index
    %c0_4 = arith.constant 0 : index
    %c0_5 = arith.constant 0 : index
    %c0_6 = arith.constant 0 : index
    %4 = vector.load %arg6[%c0_3, %c0_4, %c0_5, %c0_6] : memref<4x2x16x16xbf16, #tpu.memory_space<vmem>>, vector<1x1x16x16xbf16>
    %5 = vector.shape_cast %4 : vector<1x1x16x16xbf16> to vector<16x16xbf16>
    %cst_7 = arith.constant dense<0.000000e+00> : vector<8x16xf32>
    %6 = tpu.matmul %3, %5, %cst_7 {dimension_numbers = #tpu.dot_dimension_numbers<[1], [0], [0], [1], [0, 0, 1, 1], [], []>} : vector<8x16xbf16>, vector<16x16xbf16>, vector<8x16xf32> -> vector<8x16xf32>
    %7 = arith.addf %0, %6 : vector<8x16xf32>
    %8 = vector.extract_strided_slice %2 {offsets = [1, 0], sizes = [8, 16], strides = [1, 1]} : vector<9x16xbf16> to vector<8x16xbf16>
    %c0_8 = arith.constant 0 : index
    %c1 = arith.constant 1 : index
    %c0_9 = arith.constant 0 : index
    %c0_10 = arith.constant 0 : index
    %9 = vector.load %arg6[%c0_8, %c1, %c0_9, %c0_10] : memref<4x2x16x16xbf16, #tpu.memory_space<vmem>>, vector<1x1x16x16xbf16>
    %10 = vector.shape_cast %9 : vector<1x1x16x16xbf16> to vector<16x16xbf16>
    %cst_11 = arith.constant dense<0.000000e+00> : vector<8x16xf32>
    %11 = tpu.matmul %8, %10, %cst_11 {dimension_numbers = #tpu.dot_dimension_numbers<[1], [0], [0], [1], [0, 0, 1, 1], [], []>} : vector<8x16xbf16>, vector<16x16xbf16>, vector<8x16xf32> -> vector<8x16xf32>
    %12 = arith.addf %7, %11 : vector<8x16xf32>
    %c0_12 = arith.constant 0 : index
    %c0_13 = arith.constant 0 : index
    %c0_14 = arith.constant 0 : index
    %c0_15 = arith.constant 0 : index
    %13 = vector.load %arg3[%c0_12, %c0_13, %c0_14, %c0_15] : memref<1x1x9x16xbf16, #tpu.memory_space<vmem>>, vector<1x1x9x16xbf16>
    %14 = vector.shape_cast %13 : vector<1x1x9x16xbf16> to vector<9x16xbf16>
    %15 = vector.extract_strided_slice %14 {offsets = [0, 0], sizes = [8, 16], strides = [1, 1]} : vector<9x16xbf16> to vector<8x16xbf16>
    %c1_16 = arith.constant 1 : index
    %c0_17 = arith.constant 0 : index
    %c0_18 = arith.constant 0 : index
    %c0_19 = arith.constant 0 : index
    %16 = vector.load %arg6[%c1_16, %c0_17, %c0_18, %c0_19] : memref<4x2x16x16xbf16, #tpu.memory_space<vmem>>, vector<1x1x16x16xbf16>
    %17 = vector.shape_cast %16 : vector<1x1x16x16xbf16> to vector<16x16xbf16>
    %cst_20 = arith.constant dense<0.000000e+00> : vector<8x16xf32>
    %18 = tpu.matmul %15, %17, %cst_20 {dimension_numbers = #tpu.dot_dimension_numbers<[1], [0], [0], [1], [0, 0, 1, 1], [], []>} : vector<8x16xbf16>, vector<16x16xbf16>, vector<8x16xf32> -> vector<8x16xf32>
    %19 = arith.addf %12, %18 : vector<8x16xf32>
    %20 = vector.extract_strided_slice %14 {offsets = [1, 0], sizes = [8, 16], strides = [1, 1]} : vector<9x16xbf16> to vector<8x16xbf16>
    %c1_21 = arith.constant 1 : index
    %c1_22 = arith.constant 1 : index
    %c0_23 = arith.constant 0 : index
    %c0_24 = arith.constant 0 : index
    %21 = vector.load %arg6[%c1_21, %c1_22, %c0_23, %c0_24] : memref<4x2x16x16xbf16, #tpu.memory_space<vmem>>, vector<1x1x16x16xbf16>
    %22 = vector.shape_cast %21 : vector<1x1x16x16xbf16> to vector<16x16xbf16>
    %cst_25 = arith.constant dense<0.000000e+00> : vector<8x16xf32>
    %23 = tpu.matmul %20, %22, %cst_25 {dimension_numbers = #tpu.dot_dimension_numbers<[1], [0], [0], [1], [0, 0, 1, 1], [], []>} : vector<8x16xbf16>, vector<16x16xbf16>, vector<8x16xf32> -> vector<8x16xf32>
    %24 = arith.addf %19, %23 : vector<8x16xf32>
    %c0_26 = arith.constant 0 : index
    %c0_27 = arith.constant 0 : index
    %c0_28 = arith.constant 0 : index
    %c0_29 = arith.constant 0 : index
    %25 = vector.load %arg4[%c0_26, %c0_27, %c0_28, %c0_29] : memref<1x1x9x16xbf16, #tpu.memory_space<vmem>>, vector<1x1x9x16xbf16>
    %26 = vector.shape_cast %25 : vector<1x1x9x16xbf16> to vector<9x16xbf16>
    %27 = vector.extract_strided_slice %26 {offsets = [0, 0], sizes = [8, 16], strides = [1, 1]} : vector<9x16xbf16> to vector<8x16xbf16>
    %c2 = arith.constant 2 : index
    %c0_30 = arith.constant 0 : index
    %c0_31 = arith.constant 0 : index
    %c0_32 = arith.constant 0 : index
    %28 = vector.load %arg6[%c2, %c0_30, %c0_31, %c0_32] : memref<4x2x16x16xbf16, #tpu.memory_space<vmem>>, vector<1x1x16x16xbf16>
    %29 = vector.shape_cast %28 : vector<1x1x16x16xbf16> to vector<16x16xbf16>
    %cst_33 = arith.constant dense<0.000000e+00> : vector<8x16xf32>
    %30 = tpu.matmul %27, %29, %cst_33 {dimension_numbers = #tpu.dot_dimension_numbers<[1], [0], [0], [1], [0, 0, 1, 1], [], []>} : vector<8x16xbf16>, vector<16x16xbf16>, vector<8x16xf32> -> vector<8x16xf32>
    %31 = arith.addf %24, %30 : vector<8x16xf32>
    %32 = vector.extract_strided_slice %26 {offsets = [1, 0], sizes = [8, 16], strides = [1, 1]} : vector<9x16xbf16> to vector<8x16xbf16>
    %c2_34 = arith.constant 2 : index
    %c1_35 = arith.constant 1 : index
    %c0_36 = arith.constant 0 : index
    %c0_37 = arith.constant 0 : index
    %33 = vector.load %arg6[%c2_34, %c1_35, %c0_36, %c0_37] : memref<4x2x16x16xbf16, #tpu.memory_space<vmem>>, vector<1x1x16x16xbf16>
    %34 = vector.shape_cast %33 : vector<1x1x16x16xbf16> to vector<16x16xbf16>
    %cst_38 = arith.constant dense<0.000000e+00> : vector<8x16xf32>
    %35 = tpu.matmul %32, %34, %cst_38 {dimension_numbers = #tpu.dot_dimension_numbers<[1], [0], [0], [1], [0, 0, 1, 1], [], []>} : vector<8x16xbf16>, vector<16x16xbf16>, vector<8x16xf32> -> vector<8x16xf32>
    %36 = arith.addf %31, %35 : vector<8x16xf32>
    %c0_39 = arith.constant 0 : index
    %c0_40 = arith.constant 0 : index
    %c0_41 = arith.constant 0 : index
    %c0_42 = arith.constant 0 : index
    %37 = vector.load %arg5[%c0_39, %c0_40, %c0_41, %c0_42] : memref<1x1x9x16xbf16, #tpu.memory_space<vmem>>, vector<1x1x9x16xbf16>
    %38 = vector.shape_cast %37 : vector<1x1x9x16xbf16> to vector<9x16xbf16>
    %39 = vector.extract_strided_slice %38 {offsets = [0, 0], sizes = [8, 16], strides = [1, 1]} : vector<9x16xbf16> to vector<8x16xbf16>
    %c3 = arith.constant 3 : index
    %c0_43 = arith.constant 0 : index
    %c0_44 = arith.constant 0 : index
    %c0_45 = arith.constant 0 : index
    %40 = vector.load %arg6[%c3, %c0_43, %c0_44, %c0_45] : memref<4x2x16x16xbf16, #tpu.memory_space<vmem>>, vector<1x1x16x16xbf16>
    %41 = vector.shape_cast %40 : vector<1x1x16x16xbf16> to vector<16x16xbf16>
    %cst_46 = arith.constant dense<0.000000e+00> : vector<8x16xf32>
    %42 = tpu.matmul %39, %41, %cst_46 {dimension_numbers = #tpu.dot_dimension_numbers<[1], [0], [0], [1], [0, 0, 1, 1], [], []>} : vector<8x16xbf16>, vector<16x16xbf16>, vector<8x16xf32> -> vector<8x16xf32>
    %43 = arith.addf %36, %42 : vector<8x16xf32>
    %44 = vector.extract_strided_slice %38 {offsets = [1, 0], sizes = [8, 16], strides = [1, 1]} : vector<9x16xbf16> to vector<8x16xbf16>
    %c3_47 = arith.constant 3 : index
    %c1_48 = arith.constant 1 : index
    %c0_49 = arith.constant 0 : index
    %c0_50 = arith.constant 0 : index
    %45 = vector.load %arg6[%c3_47, %c1_48, %c0_49, %c0_50] : memref<4x2x16x16xbf16, #tpu.memory_space<vmem>>, vector<1x1x16x16xbf16>
    %46 = vector.shape_cast %45 : vector<1x1x16x16xbf16> to vector<16x16xbf16>
    %cst_51 = arith.constant dense<0.000000e+00> : vector<8x16xf32>
    %47 = tpu.matmul %44, %46, %cst_51 {dimension_numbers = #tpu.dot_dimension_numbers<[1], [0], [0], [1], [0, 0, 1, 1], [], []>} : vector<8x16xbf16>, vector<16x16xbf16>, vector<8x16xf32> -> vector<8x16xf32>
    %48 = arith.addf %43, %47 : vector<8x16xf32>
    %c0_52 = arith.constant 0 : index
    %c0_53 = arith.constant 0 : index
    %c0_54 = arith.constant 0 : index
    %c0_55 = arith.constant 0 : index
    %49 = vector.load %arg7[%c0_52, %c0_53, %c0_54, %c0_55] : memref<1x1x8x16xf32, #tpu.memory_space<vmem>>, vector<1x1x8x16xf32>
    %50 = vector.shape_cast %49 : vector<1x1x8x16xf32> to vector<8x16xf32>
    %51 = vector.shape_cast %48 : vector<8x16xf32> to vector<1x1x8x16xf32>
    tpu.vector_store %arg7[%c0_52, %c0_53, %c0_54, %c0_55], %51 {strides = array<i32>} : memref<1x1x8x16xf32, #tpu.memory_space<vmem>>, vector<1x1x8x16xf32>,
    %cst_56 = arith.constant dense<0.000000e+00> : vector<16xf32>
    %52 = vector.multi_reduction <add>, %48, %cst_56 [0] : vector<8x16xf32> to vector<16xf32>
    %53 = vector.shape_cast %52 : vector<16xf32> to vector<1x16xf32>
    %54 = arith.mulf %48, %48 : vector<8x16xf32>
    %cst_57 = arith.constant dense<0.000000e+00> : vector<16xf32>
    %55 = vector.multi_reduction <add>, %54, %cst_57 [0] : vector<8x16xf32> to vector<16xf32>
    %56 = vector.shape_cast %55 : vector<16xf32> to vector<1x16xf32>
    %57 = tpu.concatenate %53, %56 in 0 : vector<1x16xf32>, vector<1x16xf32> -> vector<2x16xf32>
    %c0_58 = arith.constant 0 : index
    %c0_59 = arith.constant 0 : index
    %c0_60 = arith.constant 0 : index
    %c0_61 = arith.constant 0 : index
    %58 = vector.load %arg8[%c0_58, %c0_59, %c0_60, %c0_61] : memref<1x1x2x16xf32, #tpu.memory_space<vmem>>, vector<1x1x2x16xf32>
    %59 = vector.shape_cast %58 : vector<1x1x2x16xf32> to vector<2x16xf32>
    %60 = vector.shape_cast %57 : vector<2x16xf32> to vector<1x1x2x16xf32>
    tpu.vector_store %arg8[%c0_58, %c0_59, %c0_60, %c0_61], %60 {strides = array<i32>} : memref<1x1x2x16xf32, #tpu.memory_space<vmem>>, vector<1x1x2x16xf32>,
    return
  }
  func.func @transform_0(%arg0: i32, %arg1: i32) -> (i32, i32, i32, i32) {
    %c2_i32 = arith.constant 2 : i32
    %0 = arith.muli %arg1, %c2_i32 : i32
    %c0_i32 = arith.constant 0 : i32
    %1 = arith.addi %0, %c0_i32 : i32
    %c0_i32_0 = arith.constant 0 : i32
    %c0_i32_1 = arith.constant 0 : i32
    %c0_i32_2 = arith.constant 0 : i32
    return %arg0, %1, %c0_i32_0, %c0_i32_1 : i32, i32, i32, i32
  }
  func.func @transform_1(%arg0: i32, %arg1: i32) -> (i32, i32, i32, i32) {
    %c2_i32 = arith.constant 2 : i32
    %0 = arith.muli %arg1, %c2_i32 : i32
    %c1_i32 = arith.constant 1 : i32
    %1 = arith.addi %0, %c1_i32 : i32
    %c0_i32 = arith.constant 0 : i32
    %c0_i32_0 = arith.constant 0 : i32
    %c0_i32_1 = arith.constant 0 : i32
    return %arg0, %1, %c0_i32, %c0_i32_0 : i32, i32, i32, i32
  }
  func.func @transform_2(%arg0: i32, %arg1: i32) -> (i32, i32, i32, i32) {
    %c2_i32 = arith.constant 2 : i32
    %0 = arith.muli %arg1, %c2_i32 : i32
    %c2_i32_0 = arith.constant 2 : i32
    %1 = arith.addi %0, %c2_i32_0 : i32
    %c0_i32 = arith.constant 0 : i32
    %c0_i32_1 = arith.constant 0 : i32
    %c0_i32_2 = arith.constant 0 : i32
    return %arg0, %1, %c0_i32, %c0_i32_1 : i32, i32, i32, i32
  }
  func.func @transform_3(%arg0: i32, %arg1: i32) -> (i32, i32, i32, i32) {
    %c2_i32 = arith.constant 2 : i32
    %0 = arith.muli %arg1, %c2_i32 : i32
    %c3_i32 = arith.constant 3 : i32
    %1 = arith.addi %0, %c3_i32 : i32
    %c0_i32 = arith.constant 0 : i32
    %c0_i32_0 = arith.constant 0 : i32
    %c0_i32_1 = arith.constant 0 : i32
    return %arg0, %1, %c0_i32, %c0_i32_0 : i32, i32, i32, i32
  }
  func.func @transform_4(%arg0: i32, %arg1: i32) -> (i32, i32, i32, i32) {
    %c0_i32 = arith.constant 0 : i32
    %c0_i32_0 = arith.constant 0 : i32
    %c0_i32_1 = arith.constant 0 : i32
    %c0_i32_2 = arith.constant 0 : i32
    %c0_i32_3 = arith.constant 0 : i32
    return %c0_i32, %c0_i32_0, %c0_i32_1, %c0_i32_2 : i32, i32, i32, i32
  }
  func.func @transform_5(%arg0: i32, %arg1: i32) -> (i32, i32, i32, i32) {
    %c0_i32 = arith.constant 0 : i32
    %c0_i32_0 = arith.constant 0 : i32
    %c0_i32_1 = arith.constant 0 : i32
    return %arg0, %arg1, %c0_i32, %c0_i32_0 : i32, i32, i32, i32
  }
  func.func @transform_6(%arg0: i32, %arg1: i32) -> (i32, i32, i32, i32) {
    %c0_i32 = arith.constant 0 : i32
    %c0_i32_0 = arith.constant 0 : i32
    %c0_i32_1 = arith.constant 0 : i32
    return %arg0, %arg1, %c0_i32, %c0_i32_0 : i32, i32, i32, i32
  }
}

module attributes {stable_mosaic.version = 11 : i64} {
  func.func @_bn_act_kernel(%arg0: i32, %arg1: memref<128x16xf32, #tpu.memory_space<vmem>>, %arg2: memref<1x16xf32, #tpu.memory_space<vmem>>, %arg3: memref<1x16xf32, #tpu.memory_space<vmem>>, %arg4: memref<128x16xbf16, #tpu.memory_space<vmem>>) attributes {dimension_semantics = [#tpu.dimension_semantics<parallel>], iteration_bounds = array<i64: 1>, scalar_prefetch = 0 : i64, scratch_operands = 0 : i64, tpu.core_type = #tpu.core_type<tc>, window_params = [{transform_indices = @transform_0, window_bounds = array<i64: 128, 16>}, {pipeline_mode = #tpu.pipeline_mode<synchronous>, transform_indices = @transform_1, window_bounds = array<i64: 1, 16>}, {pipeline_mode = #tpu.pipeline_mode<synchronous>, transform_indices = @transform_2, window_bounds = array<i64: 1, 16>}, {transform_indices = @transform_3, window_bounds = array<i64: 128, 16>}]} {
    %c0 = arith.constant 0 : index
    %c0_0 = arith.constant 0 : index
    %0 = vector.load %arg1[%c0, %c0_0] : memref<128x16xf32, #tpu.memory_space<vmem>>, vector<128x16xf32>
    %c0_1 = arith.constant 0 : index
    %c0_2 = arith.constant 0 : index
    %1 = vector.load %arg2[%c0_1, %c0_2] : memref<1x16xf32, #tpu.memory_space<vmem>>, vector<1x16xf32>
    %2 = vector.broadcast %1 : vector<1x16xf32> to vector<128x16xf32>
    %3 = arith.mulf %0, %2 : vector<128x16xf32>
    %c0_3 = arith.constant 0 : index
    %c0_4 = arith.constant 0 : index
    %4 = vector.load %arg3[%c0_3, %c0_4] : memref<1x16xf32, #tpu.memory_space<vmem>>, vector<1x16xf32>
    %5 = vector.broadcast %4 : vector<1x16xf32> to vector<128x16xf32>
    %6 = arith.addf %3, %5 : vector<128x16xf32>
    %cst = arith.constant 0.000000e+00 : f32
    %7 = vector.broadcast %cst : f32 to vector<128x16xf32>
    %8 = arith.cmpf oge, %6, %7 : vector<128x16xf32>
    %cst_5 = arith.constant 2.000000e-01 : f32
    %9 = vector.broadcast %cst_5 : f32 to vector<128x16xf32>
    %10 = arith.mulf %9, %6 : vector<128x16xf32>
    %11 = arith.select %8, %6, %10 : vector<128x16xi1>, vector<128x16xf32>
    %12 = arith.truncf %11 : vector<128x16xf32> to vector<128x16xbf16>
    %c0_6 = arith.constant 0 : index
    %c0_7 = arith.constant 0 : index
    %13 = vector.load %arg4[%c0_6, %c0_7] : memref<128x16xbf16, #tpu.memory_space<vmem>>, vector<128x16xbf16>
    tpu.vector_store %arg4[%c0_6, %c0_7], %12 {strides = array<i32>} : memref<128x16xbf16, #tpu.memory_space<vmem>>, vector<128x16xbf16>,
    return
  }
  func.func @transform_0(%arg0: i32) -> (i32, i32) {
    %c0_i32 = arith.constant 0 : i32
    %c0_i32_0 = arith.constant 0 : i32
    return %arg0, %c0_i32 : i32, i32
  }
  func.func @transform_1(%arg0: i32) -> (i32, i32) {
    %c0_i32 = arith.constant 0 : i32
    %c0_i32_0 = arith.constant 0 : i32
    %c0_i32_1 = arith.constant 0 : i32
    return %c0_i32, %c0_i32_0 : i32, i32
  }
  func.func @transform_2(%arg0: i32) -> (i32, i32) {
    %c0_i32 = arith.constant 0 : i32
    %c0_i32_0 = arith.constant 0 : i32
    %c0_i32_1 = arith.constant 0 : i32
    return %c0_i32, %c0_i32_0 : i32, i32
  }
  func.func @transform_3(%arg0: i32) -> (i32, i32) {
    %c0_i32 = arith.constant 0 : i32
    %c0_i32_0 = arith.constant 0 : i32
    return %arg0, %c0_i32 : i32, i32
  }
}

module attributes {stable_mosaic.version = 11 : i64} {
  func.func @kernel(%arg0: i32, %arg1: i32, %arg2: memref<1x1x5x32xbf16, #tpu.memory_space<vmem>>, %arg3: memref<1x1x5x32xbf16, #tpu.memory_space<vmem>>, %arg4: memref<1x1x5x32xbf16, #tpu.memory_space<vmem>>, %arg5: memref<1x1x5x32xbf16, #tpu.memory_space<vmem>>, %arg6: memref<4x2x32x32xbf16, #tpu.memory_space<vmem>>, %arg7: memref<1x1x4x32xf32, #tpu.memory_space<vmem>>, %arg8: memref<1x1x2x32xf32, #tpu.memory_space<vmem>>) attributes {dimension_semantics = [#tpu.dimension_semantics<parallel>, #tpu.dimension_semantics<parallel>], iteration_bounds = array<i64: 2, 4>, scalar_prefetch = 0 : i64, scratch_operands = 0 : i64, tpu.core_type = #tpu.core_type<tc>, window_params = [{transform_indices = @transform_0, window_bounds = array<i64: 1, 1, 5, 32>}, {transform_indices = @transform_1, window_bounds = array<i64: 1, 1, 5, 32>}, {transform_indices = @transform_2, window_bounds = array<i64: 1, 1, 5, 32>}, {transform_indices = @transform_3, window_bounds = array<i64: 1, 1, 5, 32>}, {pipeline_mode = #tpu.pipeline_mode<synchronous>, transform_indices = @transform_4, window_bounds = array<i64: 4, 2, 32, 32>}, {transform_indices = @transform_5, window_bounds = array<i64: 1, 1, 4, 32>}, {transform_indices = @transform_6, window_bounds = array<i64: 1, 1, 2, 32>}]} {
    %cst = arith.constant 0.000000e+00 : f32
    %0 = vector.broadcast %cst : f32 to vector<4x32xf32>
    %c0 = arith.constant 0 : index
    %c0_0 = arith.constant 0 : index
    %c0_1 = arith.constant 0 : index
    %c0_2 = arith.constant 0 : index
    %1 = vector.load %arg2[%c0, %c0_0, %c0_1, %c0_2] : memref<1x1x5x32xbf16, #tpu.memory_space<vmem>>, vector<1x1x5x32xbf16>
    %2 = vector.shape_cast %1 : vector<1x1x5x32xbf16> to vector<5x32xbf16>
    %3 = vector.extract_strided_slice %2 {offsets = [0, 0], sizes = [4, 32], strides = [1, 1]} : vector<5x32xbf16> to vector<4x32xbf16>
    %c0_3 = arith.constant 0 : index
    %c0_4 = arith.constant 0 : index
    %c0_5 = arith.constant 0 : index
    %c0_6 = arith.constant 0 : index
    %4 = vector.load %arg6[%c0_3, %c0_4, %c0_5, %c0_6] : memref<4x2x32x32xbf16, #tpu.memory_space<vmem>>, vector<1x1x32x32xbf16>
    %5 = vector.shape_cast %4 : vector<1x1x32x32xbf16> to vector<32x32xbf16>
    %cst_7 = arith.constant dense<0.000000e+00> : vector<4x32xf32>
    %6 = tpu.matmul %3, %5, %cst_7 {dimension_numbers = #tpu.dot_dimension_numbers<[1], [0], [0], [1], [0, 0, 1, 1], [], []>} : vector<4x32xbf16>, vector<32x32xbf16>, vector<4x32xf32> -> vector<4x32xf32>
    %7 = arith.addf %0, %6 : vector<4x32xf32>
    %8 = vector.extract_strided_slice %2 {offsets = [1, 0], sizes = [4, 32], strides = [1, 1]} : vector<5x32xbf16> to vector<4x32xbf16>
    %c0_8 = arith.constant 0 : index
    %c1 = arith.constant 1 : index
    %c0_9 = arith.constant 0 : index
    %c0_10 = arith.constant 0 : index
    %9 = vector.load %arg6[%c0_8, %c1, %c0_9, %c0_10] : memref<4x2x32x32xbf16, #tpu.memory_space<vmem>>, vector<1x1x32x32xbf16>
    %10 = vector.shape_cast %9 : vector<1x1x32x32xbf16> to vector<32x32xbf16>
    %cst_11 = arith.constant dense<0.000000e+00> : vector<4x32xf32>
    %11 = tpu.matmul %8, %10, %cst_11 {dimension_numbers = #tpu.dot_dimension_numbers<[1], [0], [0], [1], [0, 0, 1, 1], [], []>} : vector<4x32xbf16>, vector<32x32xbf16>, vector<4x32xf32> -> vector<4x32xf32>
    %12 = arith.addf %7, %11 : vector<4x32xf32>
    %c0_12 = arith.constant 0 : index
    %c0_13 = arith.constant 0 : index
    %c0_14 = arith.constant 0 : index
    %c0_15 = arith.constant 0 : index
    %13 = vector.load %arg3[%c0_12, %c0_13, %c0_14, %c0_15] : memref<1x1x5x32xbf16, #tpu.memory_space<vmem>>, vector<1x1x5x32xbf16>
    %14 = vector.shape_cast %13 : vector<1x1x5x32xbf16> to vector<5x32xbf16>
    %15 = vector.extract_strided_slice %14 {offsets = [0, 0], sizes = [4, 32], strides = [1, 1]} : vector<5x32xbf16> to vector<4x32xbf16>
    %c1_16 = arith.constant 1 : index
    %c0_17 = arith.constant 0 : index
    %c0_18 = arith.constant 0 : index
    %c0_19 = arith.constant 0 : index
    %16 = vector.load %arg6[%c1_16, %c0_17, %c0_18, %c0_19] : memref<4x2x32x32xbf16, #tpu.memory_space<vmem>>, vector<1x1x32x32xbf16>
    %17 = vector.shape_cast %16 : vector<1x1x32x32xbf16> to vector<32x32xbf16>
    %cst_20 = arith.constant dense<0.000000e+00> : vector<4x32xf32>
    %18 = tpu.matmul %15, %17, %cst_20 {dimension_numbers = #tpu.dot_dimension_numbers<[1], [0], [0], [1], [0, 0, 1, 1], [], []>} : vector<4x32xbf16>, vector<32x32xbf16>, vector<4x32xf32> -> vector<4x32xf32>
    %19 = arith.addf %12, %18 : vector<4x32xf32>
    %20 = vector.extract_strided_slice %14 {offsets = [1, 0], sizes = [4, 32], strides = [1, 1]} : vector<5x32xbf16> to vector<4x32xbf16>
    %c1_21 = arith.constant 1 : index
    %c1_22 = arith.constant 1 : index
    %c0_23 = arith.constant 0 : index
    %c0_24 = arith.constant 0 : index
    %21 = vector.load %arg6[%c1_21, %c1_22, %c0_23, %c0_24] : memref<4x2x32x32xbf16, #tpu.memory_space<vmem>>, vector<1x1x32x32xbf16>
    %22 = vector.shape_cast %21 : vector<1x1x32x32xbf16> to vector<32x32xbf16>
    %cst_25 = arith.constant dense<0.000000e+00> : vector<4x32xf32>
    %23 = tpu.matmul %20, %22, %cst_25 {dimension_numbers = #tpu.dot_dimension_numbers<[1], [0], [0], [1], [0, 0, 1, 1], [], []>} : vector<4x32xbf16>, vector<32x32xbf16>, vector<4x32xf32> -> vector<4x32xf32>
    %24 = arith.addf %19, %23 : vector<4x32xf32>
    %c0_26 = arith.constant 0 : index
    %c0_27 = arith.constant 0 : index
    %c0_28 = arith.constant 0 : index
    %c0_29 = arith.constant 0 : index
    %25 = vector.load %arg4[%c0_26, %c0_27, %c0_28, %c0_29] : memref<1x1x5x32xbf16, #tpu.memory_space<vmem>>, vector<1x1x5x32xbf16>
    %26 = vector.shape_cast %25 : vector<1x1x5x32xbf16> to vector<5x32xbf16>
    %27 = vector.extract_strided_slice %26 {offsets = [0, 0], sizes = [4, 32], strides = [1, 1]} : vector<5x32xbf16> to vector<4x32xbf16>
    %c2 = arith.constant 2 : index
    %c0_30 = arith.constant 0 : index
    %c0_31 = arith.constant 0 : index
    %c0_32 = arith.constant 0 : index
    %28 = vector.load %arg6[%c2, %c0_30, %c0_31, %c0_32] : memref<4x2x32x32xbf16, #tpu.memory_space<vmem>>, vector<1x1x32x32xbf16>
    %29 = vector.shape_cast %28 : vector<1x1x32x32xbf16> to vector<32x32xbf16>
    %cst_33 = arith.constant dense<0.000000e+00> : vector<4x32xf32>
    %30 = tpu.matmul %27, %29, %cst_33 {dimension_numbers = #tpu.dot_dimension_numbers<[1], [0], [0], [1], [0, 0, 1, 1], [], []>} : vector<4x32xbf16>, vector<32x32xbf16>, vector<4x32xf32> -> vector<4x32xf32>
    %31 = arith.addf %24, %30 : vector<4x32xf32>
    %32 = vector.extract_strided_slice %26 {offsets = [1, 0], sizes = [4, 32], strides = [1, 1]} : vector<5x32xbf16> to vector<4x32xbf16>
    %c2_34 = arith.constant 2 : index
    %c1_35 = arith.constant 1 : index
    %c0_36 = arith.constant 0 : index
    %c0_37 = arith.constant 0 : index
    %33 = vector.load %arg6[%c2_34, %c1_35, %c0_36, %c0_37] : memref<4x2x32x32xbf16, #tpu.memory_space<vmem>>, vector<1x1x32x32xbf16>
    %34 = vector.shape_cast %33 : vector<1x1x32x32xbf16> to vector<32x32xbf16>
    %cst_38 = arith.constant dense<0.000000e+00> : vector<4x32xf32>
    %35 = tpu.matmul %32, %34, %cst_38 {dimension_numbers = #tpu.dot_dimension_numbers<[1], [0], [0], [1], [0, 0, 1, 1], [], []>} : vector<4x32xbf16>, vector<32x32xbf16>, vector<4x32xf32> -> vector<4x32xf32>
    %36 = arith.addf %31, %35 : vector<4x32xf32>
    %c0_39 = arith.constant 0 : index
    %c0_40 = arith.constant 0 : index
    %c0_41 = arith.constant 0 : index
    %c0_42 = arith.constant 0 : index
    %37 = vector.load %arg5[%c0_39, %c0_40, %c0_41, %c0_42] : memref<1x1x5x32xbf16, #tpu.memory_space<vmem>>, vector<1x1x5x32xbf16>
    %38 = vector.shape_cast %37 : vector<1x1x5x32xbf16> to vector<5x32xbf16>
    %39 = vector.extract_strided_slice %38 {offsets = [0, 0], sizes = [4, 32], strides = [1, 1]} : vector<5x32xbf16> to vector<4x32xbf16>
    %c3 = arith.constant 3 : index
    %c0_43 = arith.constant 0 : index
    %c0_44 = arith.constant 0 : index
    %c0_45 = arith.constant 0 : index
    %40 = vector.load %arg6[%c3, %c0_43, %c0_44, %c0_45] : memref<4x2x32x32xbf16, #tpu.memory_space<vmem>>, vector<1x1x32x32xbf16>
    %41 = vector.shape_cast %40 : vector<1x1x32x32xbf16> to vector<32x32xbf16>
    %cst_46 = arith.constant dense<0.000000e+00> : vector<4x32xf32>
    %42 = tpu.matmul %39, %41, %cst_46 {dimension_numbers = #tpu.dot_dimension_numbers<[1], [0], [0], [1], [0, 0, 1, 1], [], []>} : vector<4x32xbf16>, vector<32x32xbf16>, vector<4x32xf32> -> vector<4x32xf32>
    %43 = arith.addf %36, %42 : vector<4x32xf32>
    %44 = vector.extract_strided_slice %38 {offsets = [1, 0], sizes = [4, 32], strides = [1, 1]} : vector<5x32xbf16> to vector<4x32xbf16>
    %c3_47 = arith.constant 3 : index
    %c1_48 = arith.constant 1 : index
    %c0_49 = arith.constant 0 : index
    %c0_50 = arith.constant 0 : index
    %45 = vector.load %arg6[%c3_47, %c1_48, %c0_49, %c0_50] : memref<4x2x32x32xbf16, #tpu.memory_space<vmem>>, vector<1x1x32x32xbf16>
    %46 = vector.shape_cast %45 : vector<1x1x32x32xbf16> to vector<32x32xbf16>
    %cst_51 = arith.constant dense<0.000000e+00> : vector<4x32xf32>
    %47 = tpu.matmul %44, %46, %cst_51 {dimension_numbers = #tpu.dot_dimension_numbers<[1], [0], [0], [1], [0, 0, 1, 1], [], []>} : vector<4x32xbf16>, vector<32x32xbf16>, vector<4x32xf32> -> vector<4x32xf32>
    %48 = arith.addf %43, %47 : vector<4x32xf32>
    %c0_52 = arith.constant 0 : index
    %c0_53 = arith.constant 0 : index
    %c0_54 = arith.constant 0 : index
    %c0_55 = arith.constant 0 : index
    %49 = vector.load %arg7[%c0_52, %c0_53, %c0_54, %c0_55] : memref<1x1x4x32xf32, #tpu.memory_space<vmem>>, vector<1x1x4x32xf32>
    %50 = vector.shape_cast %49 : vector<1x1x4x32xf32> to vector<4x32xf32>
    %51 = vector.shape_cast %48 : vector<4x32xf32> to vector<1x1x4x32xf32>
    tpu.vector_store %arg7[%c0_52, %c0_53, %c0_54, %c0_55], %51 {strides = array<i32>} : memref<1x1x4x32xf32, #tpu.memory_space<vmem>>, vector<1x1x4x32xf32>,
    %cst_56 = arith.constant dense<0.000000e+00> : vector<32xf32>
    %52 = vector.multi_reduction <add>, %48, %cst_56 [0] : vector<4x32xf32> to vector<32xf32>
    %53 = vector.shape_cast %52 : vector<32xf32> to vector<1x32xf32>
    %54 = arith.mulf %48, %48 : vector<4x32xf32>
    %cst_57 = arith.constant dense<0.000000e+00> : vector<32xf32>
    %55 = vector.multi_reduction <add>, %54, %cst_57 [0] : vector<4x32xf32> to vector<32xf32>
    %56 = vector.shape_cast %55 : vector<32xf32> to vector<1x32xf32>
    %57 = tpu.concatenate %53, %56 in 0 : vector<1x32xf32>, vector<1x32xf32> -> vector<2x32xf32>
    %c0_58 = arith.constant 0 : index
    %c0_59 = arith.constant 0 : index
    %c0_60 = arith.constant 0 : index
    %c0_61 = arith.constant 0 : index
    %58 = vector.load %arg8[%c0_58, %c0_59, %c0_60, %c0_61] : memref<1x1x2x32xf32, #tpu.memory_space<vmem>>, vector<1x1x2x32xf32>
    %59 = vector.shape_cast %58 : vector<1x1x2x32xf32> to vector<2x32xf32>
    %60 = vector.shape_cast %57 : vector<2x32xf32> to vector<1x1x2x32xf32>
    tpu.vector_store %arg8[%c0_58, %c0_59, %c0_60, %c0_61], %60 {strides = array<i32>} : memref<1x1x2x32xf32, #tpu.memory_space<vmem>>, vector<1x1x2x32xf32>,
    return
  }
  func.func @transform_0(%arg0: i32, %arg1: i32) -> (i32, i32, i32, i32) {
    %c2_i32 = arith.constant 2 : i32
    %0 = arith.muli %arg1, %c2_i32 : i32
    %c0_i32 = arith.constant 0 : i32
    %1 = arith.addi %0, %c0_i32 : i32
    %c0_i32_0 = arith.constant 0 : i32
    %c0_i32_1 = arith.constant 0 : i32
    %c0_i32_2 = arith.constant 0 : i32
    return %arg0, %1, %c0_i32_0, %c0_i32_1 : i32, i32, i32, i32
  }
  func.func @transform_1(%arg0: i32, %arg1: i32) -> (i32, i32, i32, i32) {
    %c2_i32 = arith.constant 2 : i32
    %0 = arith.muli %arg1, %c2_i32 : i32
    %c1_i32 = arith.constant 1 : i32
    %1 = arith.addi %0, %c1_i32 : i32
    %c0_i32 = arith.constant 0 : i32
    %c0_i32_0 = arith.constant 0 : i32
    %c0_i32_1 = arith.constant 0 : i32
    return %arg0, %1, %c0_i32, %c0_i32_0 : i32, i32, i32, i32
  }
  func.func @transform_2(%arg0: i32, %arg1: i32) -> (i32, i32, i32, i32) {
    %c2_i32 = arith.constant 2 : i32
    %0 = arith.muli %arg1, %c2_i32 : i32
    %c2_i32_0 = arith.constant 2 : i32
    %1 = arith.addi %0, %c2_i32_0 : i32
    %c0_i32 = arith.constant 0 : i32
    %c0_i32_1 = arith.constant 0 : i32
    %c0_i32_2 = arith.constant 0 : i32
    return %arg0, %1, %c0_i32, %c0_i32_1 : i32, i32, i32, i32
  }
  func.func @transform_3(%arg0: i32, %arg1: i32) -> (i32, i32, i32, i32) {
    %c2_i32 = arith.constant 2 : i32
    %0 = arith.muli %arg1, %c2_i32 : i32
    %c3_i32 = arith.constant 3 : i32
    %1 = arith.addi %0, %c3_i32 : i32
    %c0_i32 = arith.constant 0 : i32
    %c0_i32_0 = arith.constant 0 : i32
    %c0_i32_1 = arith.constant 0 : i32
    return %arg0, %1, %c0_i32, %c0_i32_0 : i32, i32, i32, i32
  }
  func.func @transform_4(%arg0: i32, %arg1: i32) -> (i32, i32, i32, i32) {
    %c0_i32 = arith.constant 0 : i32
    %c0_i32_0 = arith.constant 0 : i32
    %c0_i32_1 = arith.constant 0 : i32
    %c0_i32_2 = arith.constant 0 : i32
    %c0_i32_3 = arith.constant 0 : i32
    return %c0_i32, %c0_i32_0, %c0_i32_1, %c0_i32_2 : i32, i32, i32, i32
  }
  func.func @transform_5(%arg0: i32, %arg1: i32) -> (i32, i32, i32, i32) {
    %c0_i32 = arith.constant 0 : i32
    %c0_i32_0 = arith.constant 0 : i32
    %c0_i32_1 = arith.constant 0 : i32
    return %arg0, %arg1, %c0_i32, %c0_i32_0 : i32, i32, i32, i32
  }
  func.func @transform_6(%arg0: i32, %arg1: i32) -> (i32, i32, i32, i32) {
    %c0_i32 = arith.constant 0 : i32
    %c0_i32_0 = arith.constant 0 : i32
    %c0_i32_1 = arith.constant 0 : i32
    return %arg0, %arg1, %c0_i32, %c0_i32_0 : i32, i32, i32, i32
  }
}

module attributes {stable_mosaic.version = 11 : i64} {
  func.func @kernel(%arg0: i32, %arg1: i32, %arg2: memref<1x1x6x32xbf16, #tpu.memory_space<vmem>>, %arg3: memref<1x1x6x32xbf16, #tpu.memory_space<vmem>>, %arg4: memref<1x1x6x32xbf16, #tpu.memory_space<vmem>>, %arg5: memref<1x1x6x32xbf16, #tpu.memory_space<vmem>>, %arg6: memref<4x4x32x64xbf16, #tpu.memory_space<vmem>>, %arg7: memref<1x1x3x64xf32, #tpu.memory_space<vmem>>, %arg8: memref<1x1x2x64xf32, #tpu.memory_space<vmem>>) attributes {dimension_semantics = [#tpu.dimension_semantics<parallel>, #tpu.dimension_semantics<parallel>], iteration_bounds = array<i64: 2, 3>, scalar_prefetch = 0 : i64, scratch_operands = 0 : i64, tpu.core_type = #tpu.core_type<tc>, window_params = [{transform_indices = @transform_0, window_bounds = array<i64: 1, 1, 6, 32>}, {transform_indices = @transform_1, window_bounds = array<i64: 1, 1, 6, 32>}, {transform_indices = @transform_2, window_bounds = array<i64: 1, 1, 6, 32>}, {transform_indices = @transform_3, window_bounds = array<i64: 1, 1, 6, 32>}, {pipeline_mode = #tpu.pipeline_mode<synchronous>, transform_indices = @transform_4, window_bounds = array<i64: 4, 4, 32, 64>}, {transform_indices = @transform_5, window_bounds = array<i64: 1, 1, 3, 64>}, {transform_indices = @transform_6, window_bounds = array<i64: 1, 1, 2, 64>}]} {
    %cst = arith.constant 0.000000e+00 : f32
    %0 = vector.broadcast %cst : f32 to vector<3x64xf32>
    %c0 = arith.constant 0 : index
    %c0_0 = arith.constant 0 : index
    %c0_1 = arith.constant 0 : index
    %c0_2 = arith.constant 0 : index
    %1 = vector.load %arg2[%c0, %c0_0, %c0_1, %c0_2] : memref<1x1x6x32xbf16, #tpu.memory_space<vmem>>, vector<1x1x6x32xbf16>
    %2 = vector.shape_cast %1 : vector<1x1x6x32xbf16> to vector<6x32xbf16>
    %3 = vector.extract_strided_slice %2 {offsets = [0, 0], sizes = [3, 32], strides = [1, 1]} : vector<6x32xbf16> to vector<3x32xbf16>
    %c0_3 = arith.constant 0 : index
    %c0_4 = arith.constant 0 : index
    %c0_5 = arith.constant 0 : index
    %c0_6 = arith.constant 0 : index
    %4 = vector.load %arg6[%c0_3, %c0_4, %c0_5, %c0_6] : memref<4x4x32x64xbf16, #tpu.memory_space<vmem>>, vector<1x1x32x64xbf16>
    %5 = vector.shape_cast %4 : vector<1x1x32x64xbf16> to vector<32x64xbf16>
    %cst_7 = arith.constant dense<0.000000e+00> : vector<3x64xf32>
    %6 = tpu.matmul %3, %5, %cst_7 {dimension_numbers = #tpu.dot_dimension_numbers<[1], [0], [0], [1], [0, 0, 1, 1], [], []>} : vector<3x32xbf16>, vector<32x64xbf16>, vector<3x64xf32> -> vector<3x64xf32>
    %7 = arith.addf %0, %6 : vector<3x64xf32>
    %8 = vector.extract_strided_slice %2 {offsets = [1, 0], sizes = [3, 32], strides = [1, 1]} : vector<6x32xbf16> to vector<3x32xbf16>
    %c0_8 = arith.constant 0 : index
    %c1 = arith.constant 1 : index
    %c0_9 = arith.constant 0 : index
    %c0_10 = arith.constant 0 : index
    %9 = vector.load %arg6[%c0_8, %c1, %c0_9, %c0_10] : memref<4x4x32x64xbf16, #tpu.memory_space<vmem>>, vector<1x1x32x64xbf16>
    %10 = vector.shape_cast %9 : vector<1x1x32x64xbf16> to vector<32x64xbf16>
    %cst_11 = arith.constant dense<0.000000e+00> : vector<3x64xf32>
    %11 = tpu.matmul %8, %10, %cst_11 {dimension_numbers = #tpu.dot_dimension_numbers<[1], [0], [0], [1], [0, 0, 1, 1], [], []>} : vector<3x32xbf16>, vector<32x64xbf16>, vector<3x64xf32> -> vector<3x64xf32>
    %12 = arith.addf %7, %11 : vector<3x64xf32>
    %13 = vector.extract_strided_slice %2 {offsets = [2, 0], sizes = [3, 32], strides = [1, 1]} : vector<6x32xbf16> to vector<3x32xbf16>
    %c0_12 = arith.constant 0 : index
    %c2 = arith.constant 2 : index
    %c0_13 = arith.constant 0 : index
    %c0_14 = arith.constant 0 : index
    %14 = vector.load %arg6[%c0_12, %c2, %c0_13, %c0_14] : memref<4x4x32x64xbf16, #tpu.memory_space<vmem>>, vector<1x1x32x64xbf16>
    %15 = vector.shape_cast %14 : vector<1x1x32x64xbf16> to vector<32x64xbf16>
    %cst_15 = arith.constant dense<0.000000e+00> : vector<3x64xf32>
    %16 = tpu.matmul %13, %15, %cst_15 {dimension_numbers = #tpu.dot_dimension_numbers<[1], [0], [0], [1], [0, 0, 1, 1], [], []>} : vector<3x32xbf16>, vector<32x64xbf16>, vector<3x64xf32> -> vector<3x64xf32>
    %17 = arith.addf %12, %16 : vector<3x64xf32>
    %18 = vector.extract_strided_slice %2 {offsets = [3, 0], sizes = [3, 32], strides = [1, 1]} : vector<6x32xbf16> to vector<3x32xbf16>
    %c0_16 = arith.constant 0 : index
    %c3 = arith.constant 3 : index
    %c0_17 = arith.constant 0 : index
    %c0_18 = arith.constant 0 : index
    %19 = vector.load %arg6[%c0_16, %c3, %c0_17, %c0_18] : memref<4x4x32x64xbf16, #tpu.memory_space<vmem>>, vector<1x1x32x64xbf16>
    %20 = vector.shape_cast %19 : vector<1x1x32x64xbf16> to vector<32x64xbf16>
    %cst_19 = arith.constant dense<0.000000e+00> : vector<3x64xf32>
    %21 = tpu.matmul %18, %20, %cst_19 {dimension_numbers = #tpu.dot_dimension_numbers<[1], [0], [0], [1], [0, 0, 1, 1], [], []>} : vector<3x32xbf16>, vector<32x64xbf16>, vector<3x64xf32> -> vector<3x64xf32>
    %22 = arith.addf %17, %21 : vector<3x64xf32>
    %c0_20 = arith.constant 0 : index
    %c0_21 = arith.constant 0 : index
    %c0_22 = arith.constant 0 : index
    %c0_23 = arith.constant 0 : index
    %23 = vector.load %arg3[%c0_20, %c0_21, %c0_22, %c0_23] : memref<1x1x6x32xbf16, #tpu.memory_space<vmem>>, vector<1x1x6x32xbf16>
    %24 = vector.shape_cast %23 : vector<1x1x6x32xbf16> to vector<6x32xbf16>
    %25 = vector.extract_strided_slice %24 {offsets = [0, 0], sizes = [3, 32], strides = [1, 1]} : vector<6x32xbf16> to vector<3x32xbf16>
    %c1_24 = arith.constant 1 : index
    %c0_25 = arith.constant 0 : index
    %c0_26 = arith.constant 0 : index
    %c0_27 = arith.constant 0 : index
    %26 = vector.load %arg6[%c1_24, %c0_25, %c0_26, %c0_27] : memref<4x4x32x64xbf16, #tpu.memory_space<vmem>>, vector<1x1x32x64xbf16>
    %27 = vector.shape_cast %26 : vector<1x1x32x64xbf16> to vector<32x64xbf16>
    %cst_28 = arith.constant dense<0.000000e+00> : vector<3x64xf32>
    %28 = tpu.matmul %25, %27, %cst_28 {dimension_numbers = #tpu.dot_dimension_numbers<[1], [0], [0], [1], [0, 0, 1, 1], [], []>} : vector<3x32xbf16>, vector<32x64xbf16>, vector<3x64xf32> -> vector<3x64xf32>
    %29 = arith.addf %22, %28 : vector<3x64xf32>
    %30 = vector.extract_strided_slice %24 {offsets = [1, 0], sizes = [3, 32], strides = [1, 1]} : vector<6x32xbf16> to vector<3x32xbf16>
    %c1_29 = arith.constant 1 : index
    %c1_30 = arith.constant 1 : index
    %c0_31 = arith.constant 0 : index
    %c0_32 = arith.constant 0 : index
    %31 = vector.load %arg6[%c1_29, %c1_30, %c0_31, %c0_32] : memref<4x4x32x64xbf16, #tpu.memory_space<vmem>>, vector<1x1x32x64xbf16>
    %32 = vector.shape_cast %31 : vector<1x1x32x64xbf16> to vector<32x64xbf16>
    %cst_33 = arith.constant dense<0.000000e+00> : vector<3x64xf32>
    %33 = tpu.matmul %30, %32, %cst_33 {dimension_numbers = #tpu.dot_dimension_numbers<[1], [0], [0], [1], [0, 0, 1, 1], [], []>} : vector<3x32xbf16>, vector<32x64xbf16>, vector<3x64xf32> -> vector<3x64xf32>
    %34 = arith.addf %29, %33 : vector<3x64xf32>
    %35 = vector.extract_strided_slice %24 {offsets = [2, 0], sizes = [3, 32], strides = [1, 1]} : vector<6x32xbf16> to vector<3x32xbf16>
    %c1_34 = arith.constant 1 : index
    %c2_35 = arith.constant 2 : index
    %c0_36 = arith.constant 0 : index
    %c0_37 = arith.constant 0 : index
    %36 = vector.load %arg6[%c1_34, %c2_35, %c0_36, %c0_37] : memref<4x4x32x64xbf16, #tpu.memory_space<vmem>>, vector<1x1x32x64xbf16>
    %37 = vector.shape_cast %36 : vector<1x1x32x64xbf16> to vector<32x64xbf16>
    %cst_38 = arith.constant dense<0.000000e+00> : vector<3x64xf32>
    %38 = tpu.matmul %35, %37, %cst_38 {dimension_numbers = #tpu.dot_dimension_numbers<[1], [0], [0], [1], [0, 0, 1, 1], [], []>} : vector<3x32xbf16>, vector<32x64xbf16>, vector<3x64xf32> -> vector<3x64xf32>
    %39 = arith.addf %34, %38 : vector<3x64xf32>
    %40 = vector.extract_strided_slice %24 {offsets = [3, 0], sizes = [3, 32], strides = [1, 1]} : vector<6x32xbf16> to vector<3x32xbf16>
    %c1_39 = arith.constant 1 : index
    %c3_40 = arith.constant 3 : index
    %c0_41 = arith.constant 0 : index
    %c0_42 = arith.constant 0 : index
    %41 = vector.load %arg6[%c1_39, %c3_40, %c0_41, %c0_42] : memref<4x4x32x64xbf16, #tpu.memory_space<vmem>>, vector<1x1x32x64xbf16>
    %42 = vector.shape_cast %41 : vector<1x1x32x64xbf16> to vector<32x64xbf16>
    %cst_43 = arith.constant dense<0.000000e+00> : vector<3x64xf32>
    %43 = tpu.matmul %40, %42, %cst_43 {dimension_numbers = #tpu.dot_dimension_numbers<[1], [0], [0], [1], [0, 0, 1, 1], [], []>} : vector<3x32xbf16>, vector<32x64xbf16>, vector<3x64xf32> -> vector<3x64xf32>
    %44 = arith.addf %39, %43 : vector<3x64xf32>
    %c0_44 = arith.constant 0 : index
    %c0_45 = arith.constant 0 : index
    %c0_46 = arith.constant 0 : index
    %c0_47 = arith.constant 0 : index
    %45 = vector.load %arg4[%c0_44, %c0_45, %c0_46, %c0_47] : memref<1x1x6x32xbf16, #tpu.memory_space<vmem>>, vector<1x1x6x32xbf16>
    %46 = vector.shape_cast %45 : vector<1x1x6x32xbf16> to vector<6x32xbf16>
    %47 = vector.extract_strided_slice %46 {offsets = [0, 0], sizes = [3, 32], strides = [1, 1]} : vector<6x32xbf16> to vector<3x32xbf16>
    %c2_48 = arith.constant 2 : index
    %c0_49 = arith.constant 0 : index
    %c0_50 = arith.constant 0 : index
    %c0_51 = arith.constant 0 : index
    %48 = vector.load %arg6[%c2_48, %c0_49, %c0_50, %c0_51] : memref<4x4x32x64xbf16, #tpu.memory_space<vmem>>, vector<1x1x32x64xbf16>
    %49 = vector.shape_cast %48 : vector<1x1x32x64xbf16> to vector<32x64xbf16>
    %cst_52 = arith.constant dense<0.000000e+00> : vector<3x64xf32>
    %50 = tpu.matmul %47, %49, %cst_52 {dimension_numbers = #tpu.dot_dimension_numbers<[1], [0], [0], [1], [0, 0, 1, 1], [], []>} : vector<3x32xbf16>, vector<32x64xbf16>, vector<3x64xf32> -> vector<3x64xf32>
    %51 = arith.addf %44, %50 : vector<3x64xf32>
    %52 = vector.extract_strided_slice %46 {offsets = [1, 0], sizes = [3, 32], strides = [1, 1]} : vector<6x32xbf16> to vector<3x32xbf16>
    %c2_53 = arith.constant 2 : index
    %c1_54 = arith.constant 1 : index
    %c0_55 = arith.constant 0 : index
    %c0_56 = arith.constant 0 : index
    %53 = vector.load %arg6[%c2_53, %c1_54, %c0_55, %c0_56] : memref<4x4x32x64xbf16, #tpu.memory_space<vmem>>, vector<1x1x32x64xbf16>
    %54 = vector.shape_cast %53 : vector<1x1x32x64xbf16> to vector<32x64xbf16>
    %cst_57 = arith.constant dense<0.000000e+00> : vector<3x64xf32>
    %55 = tpu.matmul %52, %54, %cst_57 {dimension_numbers = #tpu.dot_dimension_numbers<[1], [0], [0], [1], [0, 0, 1, 1], [], []>} : vector<3x32xbf16>, vector<32x64xbf16>, vector<3x64xf32> -> vector<3x64xf32>
    %56 = arith.addf %51, %55 : vector<3x64xf32>
    %57 = vector.extract_strided_slice %46 {offsets = [2, 0], sizes = [3, 32], strides = [1, 1]} : vector<6x32xbf16> to vector<3x32xbf16>
    %c2_58 = arith.constant 2 : index
    %c2_59 = arith.constant 2 : index
    %c0_60 = arith.constant 0 : index
    %c0_61 = arith.constant 0 : index
    %58 = vector.load %arg6[%c2_58, %c2_59, %c0_60, %c0_61] : memref<4x4x32x64xbf16, #tpu.memory_space<vmem>>, vector<1x1x32x64xbf16>
    %59 = vector.shape_cast %58 : vector<1x1x32x64xbf16> to vector<32x64xbf16>
    %cst_62 = arith.constant dense<0.000000e+00> : vector<3x64xf32>
    %60 = tpu.matmul %57, %59, %cst_62 {dimension_numbers = #tpu.dot_dimension_numbers<[1], [0], [0], [1], [0, 0, 1, 1], [], []>} : vector<3x32xbf16>, vector<32x64xbf16>, vector<3x64xf32> -> vector<3x64xf32>
    %61 = arith.addf %56, %60 : vector<3x64xf32>
    %62 = vector.extract_strided_slice %46 {offsets = [3, 0], sizes = [3, 32], strides = [1, 1]} : vector<6x32xbf16> to vector<3x32xbf16>
    %c2_63 = arith.constant 2 : index
    %c3_64 = arith.constant 3 : index
    %c0_65 = arith.constant 0 : index
    %c0_66 = arith.constant 0 : index
    %63 = vector.load %arg6[%c2_63, %c3_64, %c0_65, %c0_66] : memref<4x4x32x64xbf16, #tpu.memory_space<vmem>>, vector<1x1x32x64xbf16>
    %64 = vector.shape_cast %63 : vector<1x1x32x64xbf16> to vector<32x64xbf16>
    %cst_67 = arith.constant dense<0.000000e+00> : vector<3x64xf32>
    %65 = tpu.matmul %62, %64, %cst_67 {dimension_numbers = #tpu.dot_dimension_numbers<[1], [0], [0], [1], [0, 0, 1, 1], [], []>} : vector<3x32xbf16>, vector<32x64xbf16>, vector<3x64xf32> -> vector<3x64xf32>
    %66 = arith.addf %61, %65 : vector<3x64xf32>
    %c0_68 = arith.constant 0 : index
    %c0_69 = arith.constant 0 : index
    %c0_70 = arith.constant 0 : index
    %c0_71 = arith.constant 0 : index
    %67 = vector.load %arg5[%c0_68, %c0_69, %c0_70, %c0_71] : memref<1x1x6x32xbf16, #tpu.memory_space<vmem>>, vector<1x1x6x32xbf16>
    %68 = vector.shape_cast %67 : vector<1x1x6x32xbf16> to vector<6x32xbf16>
    %69 = vector.extract_strided_slice %68 {offsets = [0, 0], sizes = [3, 32], strides = [1, 1]} : vector<6x32xbf16> to vector<3x32xbf16>
    %c3_72 = arith.constant 3 : index
    %c0_73 = arith.constant 0 : index
    %c0_74 = arith.constant 0 : index
    %c0_75 = arith.constant 0 : index
    %70 = vector.load %arg6[%c3_72, %c0_73, %c0_74, %c0_75] : memref<4x4x32x64xbf16, #tpu.memory_space<vmem>>, vector<1x1x32x64xbf16>
    %71 = vector.shape_cast %70 : vector<1x1x32x64xbf16> to vector<32x64xbf16>
    %cst_76 = arith.constant dense<0.000000e+00> : vector<3x64xf32>
    %72 = tpu.matmul %69, %71, %cst_76 {dimension_numbers = #tpu.dot_dimension_numbers<[1], [0], [0], [1], [0, 0, 1, 1], [], []>} : vector<3x32xbf16>, vector<32x64xbf16>, vector<3x64xf32> -> vector<3x64xf32>
    %73 = arith.addf %66, %72 : vector<3x64xf32>
    %74 = vector.extract_strided_slice %68 {offsets = [1, 0], sizes = [3, 32], strides = [1, 1]} : vector<6x32xbf16> to vector<3x32xbf16>
    %c3_77 = arith.constant 3 : index
    %c1_78 = arith.constant 1 : index
    %c0_79 = arith.constant 0 : index
    %c0_80 = arith.constant 0 : index
    %75 = vector.load %arg6[%c3_77, %c1_78, %c0_79, %c0_80] : memref<4x4x32x64xbf16, #tpu.memory_space<vmem>>, vector<1x1x32x64xbf16>
    %76 = vector.shape_cast %75 : vector<1x1x32x64xbf16> to vector<32x64xbf16>
    %cst_81 = arith.constant dense<0.000000e+00> : vector<3x64xf32>
    %77 = tpu.matmul %74, %76, %cst_81 {dimension_numbers = #tpu.dot_dimension_numbers<[1], [0], [0], [1], [0, 0, 1, 1], [], []>} : vector<3x32xbf16>, vector<32x64xbf16>, vector<3x64xf32> -> vector<3x64xf32>
    %78 = arith.addf %73, %77 : vector<3x64xf32>
    %79 = vector.extract_strided_slice %68 {offsets = [2, 0], sizes = [3, 32], strides = [1, 1]} : vector<6x32xbf16> to vector<3x32xbf16>
    %c3_82 = arith.constant 3 : index
    %c2_83 = arith.constant 2 : index
    %c0_84 = arith.constant 0 : index
    %c0_85 = arith.constant 0 : index
    %80 = vector.load %arg6[%c3_82, %c2_83, %c0_84, %c0_85] : memref<4x4x32x64xbf16, #tpu.memory_space<vmem>>, vector<1x1x32x64xbf16>
    %81 = vector.shape_cast %80 : vector<1x1x32x64xbf16> to vector<32x64xbf16>
    %cst_86 = arith.constant dense<0.000000e+00> : vector<3x64xf32>
    %82 = tpu.matmul %79, %81, %cst_86 {dimension_numbers = #tpu.dot_dimension_numbers<[1], [0], [0], [1], [0, 0, 1, 1], [], []>} : vector<3x32xbf16>, vector<32x64xbf16>, vector<3x64xf32> -> vector<3x64xf32>
    %83 = arith.addf %78, %82 : vector<3x64xf32>
    %84 = vector.extract_strided_slice %68 {offsets = [3, 0], sizes = [3, 32], strides = [1, 1]} : vector<6x32xbf16> to vector<3x32xbf16>
    %c3_87 = arith.constant 3 : index
    %c3_88 = arith.constant 3 : index
    %c0_89 = arith.constant 0 : index
    %c0_90 = arith.constant 0 : index
    %85 = vector.load %arg6[%c3_87, %c3_88, %c0_89, %c0_90] : memref<4x4x32x64xbf16, #tpu.memory_space<vmem>>, vector<1x1x32x64xbf16>
    %86 = vector.shape_cast %85 : vector<1x1x32x64xbf16> to vector<32x64xbf16>
    %cst_91 = arith.constant dense<0.000000e+00> : vector<3x64xf32>
    %87 = tpu.matmul %84, %86, %cst_91 {dimension_numbers = #tpu.dot_dimension_numbers<[1], [0], [0], [1], [0, 0, 1, 1], [], []>} : vector<3x32xbf16>, vector<32x64xbf16>, vector<3x64xf32> -> vector<3x64xf32>
    %88 = arith.addf %83, %87 : vector<3x64xf32>
    %c0_92 = arith.constant 0 : index
    %c0_93 = arith.constant 0 : index
    %c0_94 = arith.constant 0 : index
    %c0_95 = arith.constant 0 : index
    %89 = vector.load %arg7[%c0_92, %c0_93, %c0_94, %c0_95] : memref<1x1x3x64xf32, #tpu.memory_space<vmem>>, vector<1x1x3x64xf32>
    %90 = vector.shape_cast %89 : vector<1x1x3x64xf32> to vector<3x64xf32>
    %91 = vector.shape_cast %88 : vector<3x64xf32> to vector<1x1x3x64xf32>
    tpu.vector_store %arg7[%c0_92, %c0_93, %c0_94, %c0_95], %91 {strides = array<i32>} : memref<1x1x3x64xf32, #tpu.memory_space<vmem>>, vector<1x1x3x64xf32>,
    %cst_96 = arith.constant dense<0.000000e+00> : vector<64xf32>
    %92 = vector.multi_reduction <add>, %88, %cst_96 [0] : vector<3x64xf32> to vector<64xf32>
    %93 = vector.shape_cast %92 : vector<64xf32> to vector<1x64xf32>
    %94 = arith.mulf %88, %88 : vector<3x64xf32>
    %cst_97 = arith.constant dense<0.000000e+00> : vector<64xf32>
    %95 = vector.multi_reduction <add>, %94, %cst_97 [0] : vector<3x64xf32> to vector<64xf32>
    %96 = vector.shape_cast %95 : vector<64xf32> to vector<1x64xf32>
    %97 = tpu.concatenate %93, %96 in 0 : vector<1x64xf32>, vector<1x64xf32> -> vector<2x64xf32>
    %c0_98 = arith.constant 0 : index
    %c0_99 = arith.constant 0 : index
    %c0_100 = arith.constant 0 : index
    %c0_101 = arith.constant 0 : index
    %98 = vector.load %arg8[%c0_98, %c0_99, %c0_100, %c0_101] : memref<1x1x2x64xf32, #tpu.memory_space<vmem>>, vector<1x1x2x64xf32>
    %99 = vector.shape_cast %98 : vector<1x1x2x64xf32> to vector<2x64xf32>
    %100 = vector.shape_cast %97 : vector<2x64xf32> to vector<1x1x2x64xf32>
    tpu.vector_store %arg8[%c0_98, %c0_99, %c0_100, %c0_101], %100 {strides = array<i32>} : memref<1x1x2x64xf32, #tpu.memory_space<vmem>>, vector<1x1x2x64xf32>,
    return
  }
  func.func @transform_0(%arg0: i32, %arg1: i32) -> (i32, i32, i32, i32) {
    %c1_i32 = arith.constant 1 : i32
    %0 = arith.muli %arg1, %c1_i32 : i32
    %c0_i32 = arith.constant 0 : i32
    %1 = arith.addi %0, %c0_i32 : i32
    %c0_i32_0 = arith.constant 0 : i32
    %c0_i32_1 = arith.constant 0 : i32
    %c0_i32_2 = arith.constant 0 : i32
    return %arg0, %1, %c0_i32_0, %c0_i32_1 : i32, i32, i32, i32
  }
  func.func @transform_1(%arg0: i32, %arg1: i32) -> (i32, i32, i32, i32) {
    %c1_i32 = arith.constant 1 : i32
    %0 = arith.muli %arg1, %c1_i32 : i32
    %c1_i32_0 = arith.constant 1 : i32
    %1 = arith.addi %0, %c1_i32_0 : i32
    %c0_i32 = arith.constant 0 : i32
    %c0_i32_1 = arith.constant 0 : i32
    %c0_i32_2 = arith.constant 0 : i32
    return %arg0, %1, %c0_i32, %c0_i32_1 : i32, i32, i32, i32
  }
  func.func @transform_2(%arg0: i32, %arg1: i32) -> (i32, i32, i32, i32) {
    %c1_i32 = arith.constant 1 : i32
    %0 = arith.muli %arg1, %c1_i32 : i32
    %c2_i32 = arith.constant 2 : i32
    %1 = arith.addi %0, %c2_i32 : i32
    %c0_i32 = arith.constant 0 : i32
    %c0_i32_0 = arith.constant 0 : i32
    %c0_i32_1 = arith.constant 0 : i32
    return %arg0, %1, %c0_i32, %c0_i32_0 : i32, i32, i32, i32
  }
  func.func @transform_3(%arg0: i32, %arg1: i32) -> (i32, i32, i32, i32) {
    %c1_i32 = arith.constant 1 : i32
    %0 = arith.muli %arg1, %c1_i32 : i32
    %c3_i32 = arith.constant 3 : i32
    %1 = arith.addi %0, %c3_i32 : i32
    %c0_i32 = arith.constant 0 : i32
    %c0_i32_0 = arith.constant 0 : i32
    %c0_i32_1 = arith.constant 0 : i32
    return %arg0, %1, %c0_i32, %c0_i32_0 : i32, i32, i32, i32
  }
  func.func @transform_4(%arg0: i32, %arg1: i32) -> (i32, i32, i32, i32) {
    %c0_i32 = arith.constant 0 : i32
    %c0_i32_0 = arith.constant 0 : i32
    %c0_i32_1 = arith.constant 0 : i32
    %c0_i32_2 = arith.constant 0 : i32
    %c0_i32_3 = arith.constant 0 : i32
    return %c0_i32, %c0_i32_0, %c0_i32_1, %c0_i32_2 : i32, i32, i32, i32
  }
  func.func @transform_5(%arg0: i32, %arg1: i32) -> (i32, i32, i32, i32) {
    %c0_i32 = arith.constant 0 : i32
    %c0_i32_0 = arith.constant 0 : i32
    %c0_i32_1 = arith.constant 0 : i32
    return %arg0, %arg1, %c0_i32, %c0_i32_0 : i32, i32, i32, i32
  }
  func.func @transform_6(%arg0: i32, %arg1: i32) -> (i32, i32, i32, i32) {
    %c0_i32 = arith.constant 0 : i32
    %c0_i32_0 = arith.constant 0 : i32
    %c0_i32_1 = arith.constant 0 : i32
    return %arg0, %arg1, %c0_i32, %c0_i32_0 : i32, i32, i32, i32
  }
}

module attributes {stable_mosaic.version = 11 : i64} {
  func.func @_bn_act_kernel(%arg0: i32, %arg1: memref<32x32xf32, #tpu.memory_space<vmem>>, %arg2: memref<1x32xf32, #tpu.memory_space<vmem>>, %arg3: memref<1x32xf32, #tpu.memory_space<vmem>>, %arg4: memref<32x32xbf16, #tpu.memory_space<vmem>>) attributes {dimension_semantics = [#tpu.dimension_semantics<parallel>], iteration_bounds = array<i64: 1>, scalar_prefetch = 0 : i64, scratch_operands = 0 : i64, tpu.core_type = #tpu.core_type<tc>, window_params = [{transform_indices = @transform_0, window_bounds = array<i64: 32, 32>}, {pipeline_mode = #tpu.pipeline_mode<synchronous>, transform_indices = @transform_1, window_bounds = array<i64: 1, 32>}, {pipeline_mode = #tpu.pipeline_mode<synchronous>, transform_indices = @transform_2, window_bounds = array<i64: 1, 32>}, {transform_indices = @transform_3, window_bounds = array<i64: 32, 32>}]} {
    %c0 = arith.constant 0 : index
    %c0_0 = arith.constant 0 : index
    %0 = vector.load %arg1[%c0, %c0_0] : memref<32x32xf32, #tpu.memory_space<vmem>>, vector<32x32xf32>
    %c0_1 = arith.constant 0 : index
    %c0_2 = arith.constant 0 : index
    %1 = vector.load %arg2[%c0_1, %c0_2] : memref<1x32xf32, #tpu.memory_space<vmem>>, vector<1x32xf32>
    %2 = vector.broadcast %1 : vector<1x32xf32> to vector<32x32xf32>
    %3 = arith.mulf %0, %2 : vector<32x32xf32>
    %c0_3 = arith.constant 0 : index
    %c0_4 = arith.constant 0 : index
    %4 = vector.load %arg3[%c0_3, %c0_4] : memref<1x32xf32, #tpu.memory_space<vmem>>, vector<1x32xf32>
    %5 = vector.broadcast %4 : vector<1x32xf32> to vector<32x32xf32>
    %6 = arith.addf %3, %5 : vector<32x32xf32>
    %cst = arith.constant 0.000000e+00 : f32
    %7 = vector.broadcast %cst : f32 to vector<32x32xf32>
    %8 = arith.cmpf oge, %6, %7 : vector<32x32xf32>
    %cst_5 = arith.constant 2.000000e-01 : f32
    %9 = vector.broadcast %cst_5 : f32 to vector<32x32xf32>
    %10 = arith.mulf %9, %6 : vector<32x32xf32>
    %11 = arith.select %8, %6, %10 : vector<32x32xi1>, vector<32x32xf32>
    %12 = arith.truncf %11 : vector<32x32xf32> to vector<32x32xbf16>
    %c0_6 = arith.constant 0 : index
    %c0_7 = arith.constant 0 : index
    %13 = vector.load %arg4[%c0_6, %c0_7] : memref<32x32xbf16, #tpu.memory_space<vmem>>, vector<32x32xbf16>
    tpu.vector_store %arg4[%c0_6, %c0_7], %12 {strides = array<i32>} : memref<32x32xbf16, #tpu.memory_space<vmem>>, vector<32x32xbf16>,
    return
  }
  func.func @transform_0(%arg0: i32) -> (i32, i32) {
    %c0_i32 = arith.constant 0 : i32
    %c0_i32_0 = arith.constant 0 : i32
    return %arg0, %c0_i32 : i32, i32
  }
  func.func @transform_1(%arg0: i32) -> (i32, i32) {
    %c0_i32 = arith.constant 0 : i32
    %c0_i32_0 = arith.constant 0 : i32
    %c0_i32_1 = arith.constant 0 : i32
    return %c0_i32, %c0_i32_0 : i32, i32
  }
  func.func @transform_2(%arg0: i32) -> (i32, i32) {
    %c0_i32 = arith.constant 0 : i32
    %c0_i32_0 = arith.constant 0 : i32
    %c0_i32_1 = arith.constant 0 : i32
    return %c0_i32, %c0_i32_0 : i32, i32
  }
  func.func @transform_3(%arg0: i32) -> (i32, i32) {
    %c0_i32 = arith.constant 0 : i32
    %c0_i32_0 = arith.constant 0 : i32
    return %arg0, %c0_i32 : i32, i32
  }
}

module attributes {stable_mosaic.version = 11 : i64} {
  func.func @_bn_act_kernel(%arg0: i32, %arg1: memref<24x64xf32, #tpu.memory_space<vmem>>, %arg2: memref<1x64xf32, #tpu.memory_space<vmem>>, %arg3: memref<1x64xf32, #tpu.memory_space<vmem>>, %arg4: memref<24x64xbf16, #tpu.memory_space<vmem>>) attributes {dimension_semantics = [#tpu.dimension_semantics<parallel>], iteration_bounds = array<i64: 1>, scalar_prefetch = 0 : i64, scratch_operands = 0 : i64, tpu.core_type = #tpu.core_type<tc>, window_params = [{transform_indices = @transform_0, window_bounds = array<i64: 24, 64>}, {pipeline_mode = #tpu.pipeline_mode<synchronous>, transform_indices = @transform_1, window_bounds = array<i64: 1, 64>}, {pipeline_mode = #tpu.pipeline_mode<synchronous>, transform_indices = @transform_2, window_bounds = array<i64: 1, 64>}, {transform_indices = @transform_3, window_bounds = array<i64: 24, 64>}]} {
    %c0 = arith.constant 0 : index
    %c0_0 = arith.constant 0 : index
    %0 = vector.load %arg1[%c0, %c0_0] : memref<24x64xf32, #tpu.memory_space<vmem>>, vector<24x64xf32>
    %c0_1 = arith.constant 0 : index
    %c0_2 = arith.constant 0 : index
    %1 = vector.load %arg2[%c0_1, %c0_2] : memref<1x64xf32, #tpu.memory_space<vmem>>, vector<1x64xf32>
    %2 = vector.broadcast %1 : vector<1x64xf32> to vector<24x64xf32>
    %3 = arith.mulf %0, %2 : vector<24x64xf32>
    %c0_3 = arith.constant 0 : index
    %c0_4 = arith.constant 0 : index
    %4 = vector.load %arg3[%c0_3, %c0_4] : memref<1x64xf32, #tpu.memory_space<vmem>>, vector<1x64xf32>
    %5 = vector.broadcast %4 : vector<1x64xf32> to vector<24x64xf32>
    %6 = arith.addf %3, %5 : vector<24x64xf32>
    %cst = arith.constant 0.000000e+00 : f32
    %7 = vector.broadcast %cst : f32 to vector<24x64xf32>
    %8 = arith.cmpf oge, %6, %7 : vector<24x64xf32>
    %cst_5 = arith.constant 2.000000e-01 : f32
    %9 = vector.broadcast %cst_5 : f32 to vector<24x64xf32>
    %10 = arith.mulf %9, %6 : vector<24x64xf32>
    %11 = arith.select %8, %6, %10 : vector<24x64xi1>, vector<24x64xf32>
    %12 = arith.truncf %11 : vector<24x64xf32> to vector<24x64xbf16>
    %c0_6 = arith.constant 0 : index
    %c0_7 = arith.constant 0 : index
    %13 = vector.load %arg4[%c0_6, %c0_7] : memref<24x64xbf16, #tpu.memory_space<vmem>>, vector<24x64xbf16>
    tpu.vector_store %arg4[%c0_6, %c0_7], %12 {strides = array<i32>} : memref<24x64xbf16, #tpu.memory_space<vmem>>, vector<24x64xbf16>,
    return
  }
  func.func @transform_0(%arg0: i32) -> (i32, i32) {
    %c0_i32 = arith.constant 0 : i32
    %c0_i32_0 = arith.constant 0 : i32
    return %arg0, %c0_i32 : i32, i32
  }
  func.func @transform_1(%arg0: i32) -> (i32, i32) {
    %c0_i32 = arith.constant 0 : i32
    %c0_i32_0 = arith.constant 0 : i32
    %c0_i32_1 = arith.constant 0 : i32
    return %c0_i32, %c0_i32_0 : i32, i32
  }
  func.func @transform_2(%arg0: i32) -> (i32, i32) {
    %c0_i32 = arith.constant 0 : i32
    %c0_i32_0 = arith.constant 0 : i32
    %c0_i32_1 = arith.constant 0 : i32
    return %c0_i32, %c0_i32_0 : i32, i32
  }
  func.func @transform_3(%arg0: i32) -> (i32, i32) {
    %c0_i32 = arith.constant 0 : i32
    %c0_i32_0 = arith.constant 0 : i32
    return %arg0, %c0_i32 : i32, i32
  }
}

module attributes {stable_mosaic.version = 11 : i64} {
  func.func @kernel(%arg0: i32, %arg1: i32, %arg2: memref<1x1x5x64xbf16, #tpu.memory_space<vmem>>, %arg3: memref<1x1x5x64xbf16, #tpu.memory_space<vmem>>, %arg4: memref<1x1x5x64xbf16, #tpu.memory_space<vmem>>, %arg5: memref<1x1x5x64xbf16, #tpu.memory_space<vmem>>, %arg6: memref<4x4x64x128xbf16, #tpu.memory_space<vmem>>, %arg7: memref<1x128xf32, #tpu.memory_space<vmem>>, %arg8: memref<1x1x2x128xf32, #tpu.memory_space<vmem>>) attributes {dimension_semantics = [#tpu.dimension_semantics<parallel>, #tpu.dimension_semantics<parallel>], iteration_bounds = array<i64: 2, 2>, scalar_prefetch = 0 : i64, scratch_operands = 0 : i64, tpu.core_type = #tpu.core_type<tc>, window_params = [{transform_indices = @transform_0, window_bounds = array<i64: 1, 1, 5, 64>}, {transform_indices = @transform_1, window_bounds = array<i64: 1, 1, 5, 64>}, {transform_indices = @transform_2, window_bounds = array<i64: 1, 1, 5, 64>}, {transform_indices = @transform_3, window_bounds = array<i64: 1, 1, 5, 64>}, {pipeline_mode = #tpu.pipeline_mode<synchronous>, transform_indices = @transform_4, window_bounds = array<i64: 4, 4, 64, 128>}, {pipeline_mode = #tpu.pipeline_mode<synchronous>, transform_indices = @transform_5, window_bounds = array<i64: 1, 128>}, {transform_indices = @transform_6, window_bounds = array<i64: 1, 1, 2, 128>}]} {
    %cst = arith.constant 0.000000e+00 : f32
    %0 = vector.broadcast %cst : f32 to vector<2x128xf32>
    %c0 = arith.constant 0 : index
    %c0_0 = arith.constant 0 : index
    %c0_1 = arith.constant 0 : index
    %c0_2 = arith.constant 0 : index
    %1 = vector.load %arg2[%c0, %c0_0, %c0_1, %c0_2] : memref<1x1x5x64xbf16, #tpu.memory_space<vmem>>, vector<1x1x5x64xbf16>
    %2 = vector.shape_cast %1 : vector<1x1x5x64xbf16> to vector<5x64xbf16>
    %3 = vector.extract_strided_slice %2 {offsets = [0, 0], sizes = [2, 64], strides = [1, 1]} : vector<5x64xbf16> to vector<2x64xbf16>
    %c0_3 = arith.constant 0 : index
    %c0_4 = arith.constant 0 : index
    %c0_5 = arith.constant 0 : index
    %c0_6 = arith.constant 0 : index
    %4 = vector.load %arg6[%c0_3, %c0_4, %c0_5, %c0_6] : memref<4x4x64x128xbf16, #tpu.memory_space<vmem>>, vector<1x1x64x128xbf16>
    %5 = vector.shape_cast %4 : vector<1x1x64x128xbf16> to vector<64x128xbf16>
    %cst_7 = arith.constant dense<0.000000e+00> : vector<2x128xf32>
    %6 = tpu.matmul %3, %5, %cst_7 {dimension_numbers = #tpu.dot_dimension_numbers<[1], [0], [0], [1], [0, 0, 1, 1], [], []>} : vector<2x64xbf16>, vector<64x128xbf16>, vector<2x128xf32> -> vector<2x128xf32>
    %7 = arith.addf %0, %6 : vector<2x128xf32>
    %8 = vector.extract_strided_slice %2 {offsets = [1, 0], sizes = [2, 64], strides = [1, 1]} : vector<5x64xbf16> to vector<2x64xbf16>
    %c0_8 = arith.constant 0 : index
    %c1 = arith.constant 1 : index
    %c0_9 = arith.constant 0 : index
    %c0_10 = arith.constant 0 : index
    %9 = vector.load %arg6[%c0_8, %c1, %c0_9, %c0_10] : memref<4x4x64x128xbf16, #tpu.memory_space<vmem>>, vector<1x1x64x128xbf16>
    %10 = vector.shape_cast %9 : vector<1x1x64x128xbf16> to vector<64x128xbf16>
    %cst_11 = arith.constant dense<0.000000e+00> : vector<2x128xf32>
    %11 = tpu.matmul %8, %10, %cst_11 {dimension_numbers = #tpu.dot_dimension_numbers<[1], [0], [0], [1], [0, 0, 1, 1], [], []>} : vector<2x64xbf16>, vector<64x128xbf16>, vector<2x128xf32> -> vector<2x128xf32>
    %12 = arith.addf %7, %11 : vector<2x128xf32>
    %13 = vector.extract_strided_slice %2 {offsets = [2, 0], sizes = [2, 64], strides = [1, 1]} : vector<5x64xbf16> to vector<2x64xbf16>
    %c0_12 = arith.constant 0 : index
    %c2 = arith.constant 2 : index
    %c0_13 = arith.constant 0 : index
    %c0_14 = arith.constant 0 : index
    %14 = vector.load %arg6[%c0_12, %c2, %c0_13, %c0_14] : memref<4x4x64x128xbf16, #tpu.memory_space<vmem>>, vector<1x1x64x128xbf16>
    %15 = vector.shape_cast %14 : vector<1x1x64x128xbf16> to vector<64x128xbf16>
    %cst_15 = arith.constant dense<0.000000e+00> : vector<2x128xf32>
    %16 = tpu.matmul %13, %15, %cst_15 {dimension_numbers = #tpu.dot_dimension_numbers<[1], [0], [0], [1], [0, 0, 1, 1], [], []>} : vector<2x64xbf16>, vector<64x128xbf16>, vector<2x128xf32> -> vector<2x128xf32>
    %17 = arith.addf %12, %16 : vector<2x128xf32>
    %18 = vector.extract_strided_slice %2 {offsets = [3, 0], sizes = [2, 64], strides = [1, 1]} : vector<5x64xbf16> to vector<2x64xbf16>
    %c0_16 = arith.constant 0 : index
    %c3 = arith.constant 3 : index
    %c0_17 = arith.constant 0 : index
    %c0_18 = arith.constant 0 : index
    %19 = vector.load %arg6[%c0_16, %c3, %c0_17, %c0_18] : memref<4x4x64x128xbf16, #tpu.memory_space<vmem>>, vector<1x1x64x128xbf16>
    %20 = vector.shape_cast %19 : vector<1x1x64x128xbf16> to vector<64x128xbf16>
    %cst_19 = arith.constant dense<0.000000e+00> : vector<2x128xf32>
    %21 = tpu.matmul %18, %20, %cst_19 {dimension_numbers = #tpu.dot_dimension_numbers<[1], [0], [0], [1], [0, 0, 1, 1], [], []>} : vector<2x64xbf16>, vector<64x128xbf16>, vector<2x128xf32> -> vector<2x128xf32>
    %22 = arith.addf %17, %21 : vector<2x128xf32>
    %c0_20 = arith.constant 0 : index
    %c0_21 = arith.constant 0 : index
    %c0_22 = arith.constant 0 : index
    %c0_23 = arith.constant 0 : index
    %23 = vector.load %arg3[%c0_20, %c0_21, %c0_22, %c0_23] : memref<1x1x5x64xbf16, #tpu.memory_space<vmem>>, vector<1x1x5x64xbf16>
    %24 = vector.shape_cast %23 : vector<1x1x5x64xbf16> to vector<5x64xbf16>
    %25 = vector.extract_strided_slice %24 {offsets = [0, 0], sizes = [2, 64], strides = [1, 1]} : vector<5x64xbf16> to vector<2x64xbf16>
    %c1_24 = arith.constant 1 : index
    %c0_25 = arith.constant 0 : index
    %c0_26 = arith.constant 0 : index
    %c0_27 = arith.constant 0 : index
    %26 = vector.load %arg6[%c1_24, %c0_25, %c0_26, %c0_27] : memref<4x4x64x128xbf16, #tpu.memory_space<vmem>>, vector<1x1x64x128xbf16>
    %27 = vector.shape_cast %26 : vector<1x1x64x128xbf16> to vector<64x128xbf16>
    %cst_28 = arith.constant dense<0.000000e+00> : vector<2x128xf32>
    %28 = tpu.matmul %25, %27, %cst_28 {dimension_numbers = #tpu.dot_dimension_numbers<[1], [0], [0], [1], [0, 0, 1, 1], [], []>} : vector<2x64xbf16>, vector<64x128xbf16>, vector<2x128xf32> -> vector<2x128xf32>
    %29 = arith.addf %22, %28 : vector<2x128xf32>
    %30 = vector.extract_strided_slice %24 {offsets = [1, 0], sizes = [2, 64], strides = [1, 1]} : vector<5x64xbf16> to vector<2x64xbf16>
    %c1_29 = arith.constant 1 : index
    %c1_30 = arith.constant 1 : index
    %c0_31 = arith.constant 0 : index
    %c0_32 = arith.constant 0 : index
    %31 = vector.load %arg6[%c1_29, %c1_30, %c0_31, %c0_32] : memref<4x4x64x128xbf16, #tpu.memory_space<vmem>>, vector<1x1x64x128xbf16>
    %32 = vector.shape_cast %31 : vector<1x1x64x128xbf16> to vector<64x128xbf16>
    %cst_33 = arith.constant dense<0.000000e+00> : vector<2x128xf32>
    %33 = tpu.matmul %30, %32, %cst_33 {dimension_numbers = #tpu.dot_dimension_numbers<[1], [0], [0], [1], [0, 0, 1, 1], [], []>} : vector<2x64xbf16>, vector<64x128xbf16>, vector<2x128xf32> -> vector<2x128xf32>
    %34 = arith.addf %29, %33 : vector<2x128xf32>
    %35 = vector.extract_strided_slice %24 {offsets = [2, 0], sizes = [2, 64], strides = [1, 1]} : vector<5x64xbf16> to vector<2x64xbf16>
    %c1_34 = arith.constant 1 : index
    %c2_35 = arith.constant 2 : index
    %c0_36 = arith.constant 0 : index
    %c0_37 = arith.constant 0 : index
    %36 = vector.load %arg6[%c1_34, %c2_35, %c0_36, %c0_37] : memref<4x4x64x128xbf16, #tpu.memory_space<vmem>>, vector<1x1x64x128xbf16>
    %37 = vector.shape_cast %36 : vector<1x1x64x128xbf16> to vector<64x128xbf16>
    %cst_38 = arith.constant dense<0.000000e+00> : vector<2x128xf32>
    %38 = tpu.matmul %35, %37, %cst_38 {dimension_numbers = #tpu.dot_dimension_numbers<[1], [0], [0], [1], [0, 0, 1, 1], [], []>} : vector<2x64xbf16>, vector<64x128xbf16>, vector<2x128xf32> -> vector<2x128xf32>
    %39 = arith.addf %34, %38 : vector<2x128xf32>
    %40 = vector.extract_strided_slice %24 {offsets = [3, 0], sizes = [2, 64], strides = [1, 1]} : vector<5x64xbf16> to vector<2x64xbf16>
    %c1_39 = arith.constant 1 : index
    %c3_40 = arith.constant 3 : index
    %c0_41 = arith.constant 0 : index
    %c0_42 = arith.constant 0 : index
    %41 = vector.load %arg6[%c1_39, %c3_40, %c0_41, %c0_42] : memref<4x4x64x128xbf16, #tpu.memory_space<vmem>>, vector<1x1x64x128xbf16>
    %42 = vector.shape_cast %41 : vector<1x1x64x128xbf16> to vector<64x128xbf16>
    %cst_43 = arith.constant dense<0.000000e+00> : vector<2x128xf32>
    %43 = tpu.matmul %40, %42, %cst_43 {dimension_numbers = #tpu.dot_dimension_numbers<[1], [0], [0], [1], [0, 0, 1, 1], [], []>} : vector<2x64xbf16>, vector<64x128xbf16>, vector<2x128xf32> -> vector<2x128xf32>
    %44 = arith.addf %39, %43 : vector<2x128xf32>
    %c0_44 = arith.constant 0 : index
    %c0_45 = arith.constant 0 : index
    %c0_46 = arith.constant 0 : index
    %c0_47 = arith.constant 0 : index
    %45 = vector.load %arg4[%c0_44, %c0_45, %c0_46, %c0_47] : memref<1x1x5x64xbf16, #tpu.memory_space<vmem>>, vector<1x1x5x64xbf16>
    %46 = vector.shape_cast %45 : vector<1x1x5x64xbf16> to vector<5x64xbf16>
    %47 = vector.extract_strided_slice %46 {offsets = [0, 0], sizes = [2, 64], strides = [1, 1]} : vector<5x64xbf16> to vector<2x64xbf16>
    %c2_48 = arith.constant 2 : index
    %c0_49 = arith.constant 0 : index
    %c0_50 = arith.constant 0 : index
    %c0_51 = arith.constant 0 : index
    %48 = vector.load %arg6[%c2_48, %c0_49, %c0_50, %c0_51] : memref<4x4x64x128xbf16, #tpu.memory_space<vmem>>, vector<1x1x64x128xbf16>
    %49 = vector.shape_cast %48 : vector<1x1x64x128xbf16> to vector<64x128xbf16>
    %cst_52 = arith.constant dense<0.000000e+00> : vector<2x128xf32>
    %50 = tpu.matmul %47, %49, %cst_52 {dimension_numbers = #tpu.dot_dimension_numbers<[1], [0], [0], [1], [0, 0, 1, 1], [], []>} : vector<2x64xbf16>, vector<64x128xbf16>, vector<2x128xf32> -> vector<2x128xf32>
    %51 = arith.addf %44, %50 : vector<2x128xf32>
    %52 = vector.extract_strided_slice %46 {offsets = [1, 0], sizes = [2, 64], strides = [1, 1]} : vector<5x64xbf16> to vector<2x64xbf16>
    %c2_53 = arith.constant 2 : index
    %c1_54 = arith.constant 1 : index
    %c0_55 = arith.constant 0 : index
    %c0_56 = arith.constant 0 : index
    %53 = vector.load %arg6[%c2_53, %c1_54, %c0_55, %c0_56] : memref<4x4x64x128xbf16, #tpu.memory_space<vmem>>, vector<1x1x64x128xbf16>
    %54 = vector.shape_cast %53 : vector<1x1x64x128xbf16> to vector<64x128xbf16>
    %cst_57 = arith.constant dense<0.000000e+00> : vector<2x128xf32>
    %55 = tpu.matmul %52, %54, %cst_57 {dimension_numbers = #tpu.dot_dimension_numbers<[1], [0], [0], [1], [0, 0, 1, 1], [], []>} : vector<2x64xbf16>, vector<64x128xbf16>, vector<2x128xf32> -> vector<2x128xf32>
    %56 = arith.addf %51, %55 : vector<2x128xf32>
    %57 = vector.extract_strided_slice %46 {offsets = [2, 0], sizes = [2, 64], strides = [1, 1]} : vector<5x64xbf16> to vector<2x64xbf16>
    %c2_58 = arith.constant 2 : index
    %c2_59 = arith.constant 2 : index
    %c0_60 = arith.constant 0 : index
    %c0_61 = arith.constant 0 : index
    %58 = vector.load %arg6[%c2_58, %c2_59, %c0_60, %c0_61] : memref<4x4x64x128xbf16, #tpu.memory_space<vmem>>, vector<1x1x64x128xbf16>
    %59 = vector.shape_cast %58 : vector<1x1x64x128xbf16> to vector<64x128xbf16>
    %cst_62 = arith.constant dense<0.000000e+00> : vector<2x128xf32>
    %60 = tpu.matmul %57, %59, %cst_62 {dimension_numbers = #tpu.dot_dimension_numbers<[1], [0], [0], [1], [0, 0, 1, 1], [], []>} : vector<2x64xbf16>, vector<64x128xbf16>, vector<2x128xf32> -> vector<2x128xf32>
    %61 = arith.addf %56, %60 : vector<2x128xf32>
    %62 = vector.extract_strided_slice %46 {offsets = [3, 0], sizes = [2, 64], strides = [1, 1]} : vector<5x64xbf16> to vector<2x64xbf16>
    %c2_63 = arith.constant 2 : index
    %c3_64 = arith.constant 3 : index
    %c0_65 = arith.constant 0 : index
    %c0_66 = arith.constant 0 : index
    %63 = vector.load %arg6[%c2_63, %c3_64, %c0_65, %c0_66] : memref<4x4x64x128xbf16, #tpu.memory_space<vmem>>, vector<1x1x64x128xbf16>
    %64 = vector.shape_cast %63 : vector<1x1x64x128xbf16> to vector<64x128xbf16>
    %cst_67 = arith.constant dense<0.000000e+00> : vector<2x128xf32>
    %65 = tpu.matmul %62, %64, %cst_67 {dimension_numbers = #tpu.dot_dimension_numbers<[1], [0], [0], [1], [0, 0, 1, 1], [], []>} : vector<2x64xbf16>, vector<64x128xbf16>, vector<2x128xf32> -> vector<2x128xf32>
    %66 = arith.addf %61, %65 : vector<2x128xf32>
    %c0_68 = arith.constant 0 : index
    %c0_69 = arith.constant 0 : index
    %c0_70 = arith.constant 0 : index
    %c0_71 = arith.constant 0 : index
    %67 = vector.load %arg5[%c0_68, %c0_69, %c0_70, %c0_71] : memref<1x1x5x64xbf16, #tpu.memory_space<vmem>>, vector<1x1x5x64xbf16>
    %68 = vector.shape_cast %67 : vector<1x1x5x64xbf16> to vector<5x64xbf16>
    %69 = vector.extract_strided_slice %68 {offsets = [0, 0], sizes = [2, 64], strides = [1, 1]} : vector<5x64xbf16> to vector<2x64xbf16>
    %c3_72 = arith.constant 3 : index
    %c0_73 = arith.constant 0 : index
    %c0_74 = arith.constant 0 : index
    %c0_75 = arith.constant 0 : index
    %70 = vector.load %arg6[%c3_72, %c0_73, %c0_74, %c0_75] : memref<4x4x64x128xbf16, #tpu.memory_space<vmem>>, vector<1x1x64x128xbf16>
    %71 = vector.shape_cast %70 : vector<1x1x64x128xbf16> to vector<64x128xbf16>
    %cst_76 = arith.constant dense<0.000000e+00> : vector<2x128xf32>
    %72 = tpu.matmul %69, %71, %cst_76 {dimension_numbers = #tpu.dot_dimension_numbers<[1], [0], [0], [1], [0, 0, 1, 1], [], []>} : vector<2x64xbf16>, vector<64x128xbf16>, vector<2x128xf32> -> vector<2x128xf32>
    %73 = arith.addf %66, %72 : vector<2x128xf32>
    %74 = vector.extract_strided_slice %68 {offsets = [1, 0], sizes = [2, 64], strides = [1, 1]} : vector<5x64xbf16> to vector<2x64xbf16>
    %c3_77 = arith.constant 3 : index
    %c1_78 = arith.constant 1 : index
    %c0_79 = arith.constant 0 : index
    %c0_80 = arith.constant 0 : index
    %75 = vector.load %arg6[%c3_77, %c1_78, %c0_79, %c0_80] : memref<4x4x64x128xbf16, #tpu.memory_space<vmem>>, vector<1x1x64x128xbf16>
    %76 = vector.shape_cast %75 : vector<1x1x64x128xbf16> to vector<64x128xbf16>
    %cst_81 = arith.constant dense<0.000000e+00> : vector<2x128xf32>
    %77 = tpu.matmul %74, %76, %cst_81 {dimension_numbers = #tpu.dot_dimension_numbers<[1], [0], [0], [1], [0, 0, 1, 1], [], []>} : vector<2x64xbf16>, vector<64x128xbf16>, vector<2x128xf32> -> vector<2x128xf32>
    %78 = arith.addf %73, %77 : vector<2x128xf32>
    %79 = vector.extract_strided_slice %68 {offsets = [2, 0], sizes = [2, 64], strides = [1, 1]} : vector<5x64xbf16> to vector<2x64xbf16>
    %c3_82 = arith.constant 3 : index
    %c2_83 = arith.constant 2 : index
    %c0_84 = arith.constant 0 : index
    %c0_85 = arith.constant 0 : index
    %80 = vector.load %arg6[%c3_82, %c2_83, %c0_84, %c0_85] : memref<4x4x64x128xbf16, #tpu.memory_space<vmem>>, vector<1x1x64x128xbf16>
    %81 = vector.shape_cast %80 : vector<1x1x64x128xbf16> to vector<64x128xbf16>
    %cst_86 = arith.constant dense<0.000000e+00> : vector<2x128xf32>
    %82 = tpu.matmul %79, %81, %cst_86 {dimension_numbers = #tpu.dot_dimension_numbers<[1], [0], [0], [1], [0, 0, 1, 1], [], []>} : vector<2x64xbf16>, vector<64x128xbf16>, vector<2x128xf32> -> vector<2x128xf32>
    %83 = arith.addf %78, %82 : vector<2x128xf32>
    %84 = vector.extract_strided_slice %68 {offsets = [3, 0], sizes = [2, 64], strides = [1, 1]} : vector<5x64xbf16> to vector<2x64xbf16>
    %c3_87 = arith.constant 3 : index
    %c3_88 = arith.constant 3 : index
    %c0_89 = arith.constant 0 : index
    %c0_90 = arith.constant 0 : index
    %85 = vector.load %arg6[%c3_87, %c3_88, %c0_89, %c0_90] : memref<4x4x64x128xbf16, #tpu.memory_space<vmem>>, vector<1x1x64x128xbf16>
    %86 = vector.shape_cast %85 : vector<1x1x64x128xbf16> to vector<64x128xbf16>
    %cst_91 = arith.constant dense<0.000000e+00> : vector<2x128xf32>
    %87 = tpu.matmul %84, %86, %cst_91 {dimension_numbers = #tpu.dot_dimension_numbers<[1], [0], [0], [1], [0, 0, 1, 1], [], []>} : vector<2x64xbf16>, vector<64x128xbf16>, vector<2x128xf32> -> vector<2x128xf32>
    %88 = arith.addf %83, %87 : vector<2x128xf32>
    %c0_92 = arith.constant 0 : index
    %c0_93 = arith.constant 0 : index
    %89 = vector.load %arg7[%c0_92, %c0_93] : memref<1x128xf32, #tpu.memory_space<vmem>>, vector<1x128xf32>
    %90 = vector.broadcast %89 : vector<1x128xf32> to vector<2x128xf32>
    %91 = arith.addf %88, %90 : vector<2x128xf32>
    %c0_94 = arith.constant 0 : index
    %c0_95 = arith.constant 0 : index
    %c0_96 = arith.constant 0 : index
    %c0_97 = arith.constant 0 : index
    %92 = vector.load %arg8[%c0_94, %c0_95, %c0_96, %c0_97] : memref<1x1x2x128xf32, #tpu.memory_space<vmem>>, vector<1x1x2x128xf32>
    %93 = vector.shape_cast %92 : vector<1x1x2x128xf32> to vector<2x128xf32>
    %94 = vector.shape_cast %91 : vector<2x128xf32> to vector<1x1x2x128xf32>
    tpu.vector_store %arg8[%c0_94, %c0_95, %c0_96, %c0_97], %94 {strides = array<i32>} : memref<1x1x2x128xf32, #tpu.memory_space<vmem>>, vector<1x1x2x128xf32>,
    return
  }
  func.func @transform_0(%arg0: i32, %arg1: i32) -> (i32, i32, i32, i32) {
    %c1_i32 = arith.constant 1 : i32
    %0 = arith.muli %arg1, %c1_i32 : i32
    %c0_i32 = arith.constant 0 : i32
    %1 = arith.addi %0, %c0_i32 : i32
    %c0_i32_0 = arith.constant 0 : i32
    %c0_i32_1 = arith.constant 0 : i32
    %c0_i32_2 = arith.constant 0 : i32
    return %arg0, %1, %c0_i32_0, %c0_i32_1 : i32, i32, i32, i32
  }
  func.func @transform_1(%arg0: i32, %arg1: i32) -> (i32, i32, i32, i32) {
    %c1_i32 = arith.constant 1 : i32
    %0 = arith.muli %arg1, %c1_i32 : i32
    %c1_i32_0 = arith.constant 1 : i32
    %1 = arith.addi %0, %c1_i32_0 : i32
    %c0_i32 = arith.constant 0 : i32
    %c0_i32_1 = arith.constant 0 : i32
    %c0_i32_2 = arith.constant 0 : i32
    return %arg0, %1, %c0_i32, %c0_i32_1 : i32, i32, i32, i32
  }
  func.func @transform_2(%arg0: i32, %arg1: i32) -> (i32, i32, i32, i32) {
    %c1_i32 = arith.constant 1 : i32
    %0 = arith.muli %arg1, %c1_i32 : i32
    %c2_i32 = arith.constant 2 : i32
    %1 = arith.addi %0, %c2_i32 : i32
    %c0_i32 = arith.constant 0 : i32
    %c0_i32_0 = arith.constant 0 : i32
    %c0_i32_1 = arith.constant 0 : i32
    return %arg0, %1, %c0_i32, %c0_i32_0 : i32, i32, i32, i32
  }
  func.func @transform_3(%arg0: i32, %arg1: i32) -> (i32, i32, i32, i32) {
    %c1_i32 = arith.constant 1 : i32
    %0 = arith.muli %arg1, %c1_i32 : i32
    %c3_i32 = arith.constant 3 : i32
    %1 = arith.addi %0, %c3_i32 : i32
    %c0_i32 = arith.constant 0 : i32
    %c0_i32_0 = arith.constant 0 : i32
    %c0_i32_1 = arith.constant 0 : i32
    return %arg0, %1, %c0_i32, %c0_i32_0 : i32, i32, i32, i32
  }
  func.func @transform_4(%arg0: i32, %arg1: i32) -> (i32, i32, i32, i32) {
    %c0_i32 = arith.constant 0 : i32
    %c0_i32_0 = arith.constant 0 : i32
    %c0_i32_1 = arith.constant 0 : i32
    %c0_i32_2 = arith.constant 0 : i32
    %c0_i32_3 = arith.constant 0 : i32
    return %c0_i32, %c0_i32_0, %c0_i32_1, %c0_i32_2 : i32, i32, i32, i32
  }
  func.func @transform_5(%arg0: i32, %arg1: i32) -> (i32, i32) {
    %c0_i32 = arith.constant 0 : i32
    %c0_i32_0 = arith.constant 0 : i32
    %c0_i32_1 = arith.constant 0 : i32
    return %c0_i32, %c0_i32_0 : i32, i32
  }
  func.func @transform_6(%arg0: i32, %arg1: i32) -> (i32, i32, i32, i32) {
    %c0_i32 = arith.constant 0 : i32
    %c0_i32_0 = arith.constant 0 : i32
    %c0_i32_1 = arith.constant 0 : i32
    return %arg0, %arg1, %c0_i32, %c0_i32_0 : i32, i32, i32, i32
  }
}

</mosaic_0001>

<llo_original>
// kernel: nlayer_discriminator_forward.8
$region0: #{nlayer_discriminator_forward.8}
  #allocation0 [shape = 'u32[]', space=smem, size = 0x4, offset = 0x4, fixed_abs, tag = 'smem constant byte address 0x4 - core index']
  #allocation1 [shape = 'u32[144,128]{1,0:T(1,128)}', space=vmem, size = 0x12000, scoped, tag = 'internal scratch']
  %s0 = inlined_call_operand.vmem [shape: bf16[2,34,17,8], index: 0, kind: input, shape index: {}, may-alias: {0,1,2,3}]
  %s1 = inlined_call_operand.vmem [shape: bf16[2,34,17,8], index: 1, kind: input, shape index: {}, may-alias: {0,1,2,3}]
  %s2 = inlined_call_operand.vmem [shape: bf16[2,34,17,8], index: 2, kind: input, shape index: {}, may-alias: {0,1,2,3}]
  %s3 = inlined_call_operand.vmem [shape: bf16[2,34,17,8], index: 3, kind: input, shape index: {}, may-alias: {0,1,2,3}]
  %s4 = inlined_call_operand.vmem [shape: bf16[4,2,8,8], index: 4, kind: input, shape index: {}]
  %s5 = inlined_call_operand.vmem [shape: f32[1,8], index: 5, kind: input, shape index: {}]
  %s6 = inlined_call_operand.vmem [shape: bf16[2,16,16,8], index: 6, kind: output, shape index: {}]
  %s7 = sld [smem:[#allocation0]]
  $region57: #{nlayer_discriminator_forward.8} parent=0
    _
  %s9 = ssub.s32 1, %s7
  %s10 = scalar_select 0, %s9, %s7
  loop: start=0, step=1, limit=34
  $region2: #{nlayer_discriminator_forward.8} parent=0 // loop_pre_header
    _
  $region3: #{nlayer_discriminator_forward.8} parent=0 // loop_header
    %s12 = sphi 0, %s16
    %p13 = scmp.ge.s32.totalorder %s12, 34
    %s19 = sphi 0, %s31
    %s20 = sphi 0, %s27
    %s21 = sphi 0, %s19
    %s22 = sphi 0, %s20
    %s23 = sphi 0, %s21
    %s24 = sphi 0, %s22
    %s38 = sphi 0, %s40
    %s41 = sphi 0, %s38
    %s42 = sphi 0, %s41
    %s58 = sphi 0, %s42
    %s70 = sphi 0, %s72
    %s73 = sphi 0, %s70
    %s74 = sphi 0, %s73
    %s90 = sphi 0, %s74
    %s102 = sphi 0, %s104
    %s105 = sphi 0, %s102
    %s106 = sphi 0, %s105
    %s122 = sphi 0, %s106
    %s134 = sphi 0, %s136
    %s137 = sphi 0, %s134
    %s138 = sphi 0, %s137
    %s154 = sphi 0, %s138
    %s158 = sphi 0, %s158
    %s160 = sphi 0, %s158
    %s161 = sphi 0, %s160
    %s175 = sphi 0, %s161
    %s179 = sphi 0, %s179
    %s181 = sphi 0, %s179
    %s182 = sphi 0, %s181
    %s196 = sphi 0, %s182
    %s204 = sphi 0, %s206
    %s207 = sphi 0, %s204
    %s208 = sphi 0, %s207
    %s224 = sphi 0, %s208
  $region4: #{nlayer_discriminator_forward.8} parent=0 // loop_header_branch
    %15 = sbr.rel (%p13) target = $region8
  $region5: #{nlayer_discriminator_forward.8} parent=0 // loop_body
    %s17 = ssub.s32 %s12, 1
    %s18 = ssub.s32 %s12, 2
    %s25 = sadd.s32 1, %s20
    %p26 = scmp.ge.s32.totalorder %s25, 16
    %s27 = scalar_select %p26, 0, %s25
    %s28 = sadd.s32 1, %s19
    %s29 = scalar_select %p26, %s28, %s19
    %p30 = scmp.ge.s32.totalorder %s29, 2
    %s31 = scalar_select %p30, 0, %s29
    %s32 = smul.u32 %s20, 2
    %s33 = smul.u32 %s27, 2
    %s34 = ssub.s32 %s19, %s31
    %s35 = ssub.s32 %s32, %s33
    %s36 = sor.u32 %s34, %s35
    %p37 = scmp.eq.s32.totalorder %s36, 0
    %s39 = sadd.s32 %s38, 1
    %s40 = scalar_select %p37, %s38, %s39
    %p43 = pneg %p37
    %p44 = scmp.eq.s32.totalorder %s12, 31
    %p45 = por %p43, %p44
    %p46 = scmp.ne.s32.totalorder %s38, %s41
    %p47 = scmp.eq.s32.totalorder %s12, 0
    %p48 = por %p46, %p47
    %p49 = scmp.ne.s32.totalorder %s38, %s41
    %p50 = scmp.eq.s32.totalorder %s17, 31
    %p51 = por %p49, %p50
    %p52 = scmp.ne.s32.totalorder %s41, %s42
    %p53 = scmp.eq.s32.totalorder %s17, 0
    %p54 = por %p52, %p53
    %p55 = scmp.ne.s32.totalorder %s41, %s42
    %p56 = scmp.eq.s32.totalorder %s18, 31
    %p57 = por %p55, %p56
    %p59 = scmp.ne.s32.totalorder %s42, %s58
    %p60 = scmp.eq.s32.totalorder %s18, 0
    %p61 = por %p59, %p60
    %s62 = smul.u32 %s20, 2
    %s63 = sadd.s32 %s62, 1
    %s64 = smul.u32 %s27, 2
    %s65 = sadd.s32 %s64, 1
    %s66 = ssub.s32 %s19, %s31
    %s67 = ssub.s32 %s63, %s65
    %s68 = sor.u32 %s66, %s67
    %p69 = scmp.eq.s32.totalorder %s68, 0
    %s71 = sadd.s32 %s70, 1
    %s72 = scalar_select %p69, %s70, %s71
    %p75 = pneg %p69
    %p76 = scmp.eq.s32.totalorder %s12, 31
    %p77 = por %p75, %p76
    %p78 = scmp.ne.s32.totalorder %s70, %s73
    %p79 = scmp.eq.s32.totalorder %s12, 0
    %p80 = por %p78, %p79
    %p81 = scmp.ne.s32.totalorder %s70, %s73
    %p82 = scmp.eq.s32.totalorder %s17, 31
    %p83 = por %p81, %p82
    %p84 = scmp.ne.s32.totalorder %s73, %s74
    %p85 = scmp.eq.s32.totalorder %s17, 0
    %p86 = por %p84, %p85
    %p87 = scmp.ne.s32.totalorder %s73, %s74
    %p88 = scmp.eq.s32.totalorder %s18, 31
    %p89 = por %p87, %p88
    %p91 = scmp.ne.s32.totalorder %s74, %s90
    %p92 = scmp.eq.s32.totalorder %s18, 0
    %p93 = por %p91, %p92
    %s94 = smul.u32 %s20, 2
    %s95 = sadd.s32 %s94, 2
    %s96 = smul.u32 %s27, 2
    %s97 = sadd.s32 %s96, 2
    %s98 = ssub.s32 %s19, %s31
    %s99 = ssub.s32 %s95, %s97
    %s100 = sor.u32 %s98, %s99
    %p101 = scmp.eq.s32.totalorder %s100, 0
    %s103 = sadd.s32 %s102, 1
    %s104 = scalar_select %p101, %s102, %s103
    %p107 = pneg %p101
    %p108 = scmp.eq.s32.totalorder %s12, 31
    %p109 = por %p107, %p108
    %p110 = scmp.ne.s32.totalorder %s102, %s105
    %p111 = scmp.eq.s32.totalorder %s12, 0
    %p112 = por %p110, %p111
    %p113 = scmp.ne.s32.totalorder %s102, %s105
    %p114 = scmp.eq.s32.totalorder %s17, 31
    %p115 = por %p113, %p114
    %p116 = scmp.ne.s32.totalorder %s105, %s106
    %p117 = scmp.eq.s32.totalorder %s17, 0
    %p118 = por %p116, %p117
    %p119 = scmp.ne.s32.totalorder %s105, %s106
    %p120 = scmp.eq.s32.totalorder %s18, 31
    %p121 = por %p119, %p120
    %p123 = scmp.ne.s32.totalorder %s106, %s122
    %p124 = scmp.eq.s32.totalorder %s18, 0
    %p125 = por %p123, %p124
    %s126 = smul.u32 %s20, 2
    %s127 = sadd.s32 %s126, 3
    %s128 = smul.u32 %s27, 2
    %s129 = sadd.s32 %s128, 3
    %s130 = ssub.s32 %s19, %s31
    %s131 = ssub.s32 %s127, %s129
    %s132 = sor.u32 %s130, %s131
    %p133 = scmp.eq.s32.totalorder %s132, 0
    %s135 = sadd.s32 %s134, 1
    %s136 = scalar_select %p133, %s134, %s135
    %p139 = pneg %p133
    %p140 = scmp.eq.s32.totalorder %s12, 31
    %p141 = por %p139, %p140
    %p142 = scmp.ne.s32.totalorder %s134, %s137
    %p143 = scmp.eq.s32.totalorder %s12, 0
    %p144 = por %p142, %p143
    %p145 = scmp.ne.s32.totalorder %s134, %s137
    %p146 = scmp.eq.s32.totalorder %s17, 31
    %p147 = por %p145, %p146
    %p148 = scmp.ne.s32.totalorder %s137, %s138
    %p149 = scmp.eq.s32.totalorder %s17, 0
    %p150 = por %p148, %p149
    %p151 = scmp.ne.s32.totalorder %s137, %s138
    %p152 = scmp.eq.s32.totalorder %s18, 31
    %p153 = por %p151, %p152
    %p155 = scmp.ne.s32.totalorder %s138, %s154
    %p156 = scmp.eq.s32.totalorder %s18, 0
    %p157 = por %p155, %p156
    %s159 = sadd.s32 %s158, 1
    %p162 = scmp.eq.s32.totalorder %s12, 31
    %p163 = scmp.ne.s32.totalorder %s158, %s160
    %p164 = scmp.eq.s32.totalorder %s12, 0
    %p165 = por %p163, %p164
    %p166 = scmp.ne.s32.totalorder %s158, %s160
    %p167 = scmp.eq.s32.totalorder %s17, 31
    %p168 = por %p166, %p167
    %p169 = scmp.ne.s32.totalorder %s160, %s161
    %p170 = scmp.eq.s32.totalorder %s17, 0
    %p171 = por %p169, %p170
    %p172 = scmp.ne.s32.totalorder %s160, %s161
    %p173 = scmp.eq.s32.totalorder %s18, 31
    %p174 = por %p172, %p173
    %p176 = scmp.ne.s32.totalorder %s161, %s175
    %p177 = scmp.eq.s32.totalorder %s18, 0
    %p178 = por %p176, %p177
    %s180 = sadd.s32 %s179, 1
    %p183 = scmp.eq.s32.totalorder %s12, 31
    %p184 = scmp.ne.s32.totalorder %s179, %s181
    %p185 = scmp.eq.s32.totalorder %s12, 0
    %p186 = por %p184, %p185
    %p187 = scmp.ne.s32.totalorder %s179, %s181
    %p188 = scmp.eq.s32.totalorder %s17, 31
    %p189 = por %p187, %p188
    %p190 = scmp.ne.s32.totalorder %s181, %s182
    %p191 = scmp.eq.s32.totalorder %s17, 0
    %p192 = por %p190, %p191
    %p193 = scmp.ne.s32.totalorder %s181, %s182
    %p194 = scmp.eq.s32.totalorder %s18, 31
    %p195 = por %p193, %p194
    %p197 = scmp.ne.s32.totalorder %s182, %s196
    %p198 = scmp.eq.s32.totalorder %s18, 0
    %p199 = por %p197, %p198
    %s200 = ssub.s32 %s19, %s31
    %s201 = ssub.s32 %s20, %s27
    %s202 = sor.u32 %s200, %s201
    %p203 = scmp.eq.s32.totalorder %s202, 0
    %s205 = sadd.s32 %s204, 1
    %s206 = scalar_select %p203, %s204, %s205
    %p209 = pneg %p203
    %p210 = scmp.eq.s32.totalorder %s12, 31
    %p211 = por %p209, %p210
    %p212 = scmp.ne.s32.totalorder %s204, %s207
    %p213 = scmp.eq.s32.totalorder %s12, 0
    %p214 = por %p212, %p213
    %p215 = scmp.ne.s32.totalorder %s204, %s207
    %p216 = scmp.eq.s32.totalorder %s17, 31
    %p217 = por %p215, %p216
    %p218 = scmp.ne.s32.totalorder %s207, %s208
    %p219 = scmp.eq.s32.totalorder %s17, 0
    %p220 = por %p218, %p219
    %p221 = scmp.ne.s32.totalorder %s207, %s208
    %p222 = scmp.eq.s32.totalorder %s18, 31
    %p223 = por %p221, %p222
    %p225 = scmp.ne.s32.totalorder %s208, %s224
    %p226 = scmp.eq.s32.totalorder %s18, 0
    %p227 = por %p225, %p226
    %p228 = scmp.le.s32.totalorder 1, %s12
    %p229 = scmp.lt.s32.totalorder %s12, 33
    %p230 = pnand %p228, %p229
    %p231 = pneg %p230
    // Predicated region
    $region9: #{nlayer_discriminator_forward.8} parent=5 // pred_check
      _
    $region10: #{nlayer_discriminator_forward.8} parent=5 // pred_check_branch
      %233 = sbr.rel (%p230) target = $region12
    $region11: #{nlayer_discriminator_forward.8} parent=5 // pred_region
      %s234 = ssub.s32 %s12, 1
      // Predicated region
      $region13: #{nlayer_discriminator_forward.8} parent=11 // pred_check
        %p235 = pneg %p171
      $region14: #{nlayer_discriminator_forward.8} parent=11 // pred_check_branch
        %237 = sbr.rel (%p235) target = $region16
      $region15: #{nlayer_discriminator_forward.8} parent=11 // pred_region
        _
      $region16: #{nlayer_discriminator_forward.8} parent=11 // pred_fallthru
        _
      // Predicated region
      $region17: #{nlayer_discriminator_forward.8} parent=11 // pred_check
        %p238 = pneg %p192
      $region18: #{nlayer_discriminator_forward.8} parent=11 // pred_check_branch
        %240 = sbr.rel (%p238) target = $region20
      $region19: #{nlayer_discriminator_forward.8} parent=11 // pred_region
        _
      $region20: #{nlayer_discriminator_forward.8} parent=11 // pred_fallthru
        _
    $region12: #{nlayer_discriminator_forward.8} parent=5 // pred_fallthru
      _
    %p241 = scmp.lt.s32.totalorder %s12, 32
    // Predicated region
    $region21: #{nlayer_discriminator_forward.8} parent=5 // pred_check
      %p242 = pneg %p241
    $region22: #{nlayer_discriminator_forward.8} parent=5 // pred_check_branch
      %244 = sbr.rel (%p242) target = $region24
    $region23: #{nlayer_discriminator_forward.8} parent=5 // pred_region
      // Predicated region
      $region25: #{nlayer_discriminator_forward.8} parent=23 // pred_check
        %p245 = pneg %p48
      $region26: #{nlayer_discriminator_forward.8} parent=23 // pred_check_branch
        %247 = sbr.rel (%p245) target = $region28
      $region27: #{nlayer_discriminator_forward.8} parent=23 // pred_region
        %s248 = smul.u32 %s20, 2
        %p249 = scmp.lt.s32.totalorder %s19, 1
        %s250 = scalar_select %p249, %s19, 1
        %p251 = scmp.lt.s32.totalorder %s248, 33
        %s252 = scalar_select %p251, %s248, 33
        %s253 = smul.addr %s252, 3
        %s254 = smul.addr %s250, 102
        %s255 = sadd.s32 %s253, %s254
        %s256 = smul.addr %s255, 4
        %s257 = scalar_lea.vmem %s0, %s256
        %s258 = smul.u32 %s20, 2
      $region28: #{nlayer_discriminator_forward.8} parent=23 // pred_fallthru
        _
      // Predicated region
      $region29: #{nlayer_discriminator_forward.8} parent=23 // pred_check
        %p259 = pneg %p80
      $region30: #{nlayer_discriminator_forward.8} parent=23 // pred_check_branch
        %261 = sbr.rel (%p259) target = $region32
      $region31: #{nlayer_discriminator_forward.8} parent=23 // pred_region
        %s262 = smul.u32 %s20, 2
        %s263 = sadd.s32 %s262, 1
        %p264 = scmp.lt.s32.totalorder %s19, 1
        %s265 = scalar_select %p264, %s19, 1
        %p266 = scmp.lt.s32.totalorder %s263, 33
        %s267 = scalar_select %p266, %s263, 33
        %s268 = smul.addr %s267, 3
        %s269 = smul.addr %s265, 102
        %s270 = sadd.s32 %s268, %s269
        %s271 = smul.addr %s270, 4
        %s272 = scalar_lea.vmem %s1, %s271
        %s273 = smul.u32 %s20, 2
        %s274 = sadd.s32 %s273, 1
      $region32: #{nlayer_discriminator_forward.8} parent=23 // pred_fallthru
        _
      // Predicated region
      $region33: #{nlayer_discriminator_forward.8} parent=23 // pred_check
        %p275 = pneg %p112
      $region34: #{nlayer_discriminator_forward.8} parent=23 // pred_check_branch
        %277 = sbr.rel (%p275) target = $region36
      $region35: #{nlayer_discriminator_forward.8} parent=23 // pred_region
        %s278 = smul.u32 %s20, 2
        %s279 = sadd.s32 %s278, 2
        %p280 = scmp.lt.s32.totalorder %s19, 1
        %s281 = scalar_select %p280, %s19, 1
        %p282 = scmp.lt.s32.totalorder %s279, 33
        %s283 = scalar_select %p282, %s279, 33
        %s284 = smul.addr %s283, 3
        %s285 = smul.addr %s281, 102
        %s286 = sadd.s32 %s284, %s285
        %s287 = smul.addr %s286, 4
        %s288 = scalar_lea.vmem %s2, %s287
        %s289 = smul.u32 %s20, 2
        %s290 = sadd.s32 %s289, 2
      $region36: #{nlayer_discriminator_forward.8} parent=23 // pred_fallthru
        _
      // Predicated region
      $region37: #{nlayer_discriminator_forward.8} parent=23 // pred_check
        %p291 = pneg %p144
      $region38: #{nlayer_discriminator_forward.8} parent=23 // pred_check_branch
        %293 = sbr.rel (%p291) target = $region40
      $region39: #{nlayer_discriminator_forward.8} parent=23 // pred_region
        %s294 = smul.u32 %s20, 2
        %s295 = sadd.s32 %s294, 3
        %p296 = scmp.lt.s32.totalorder %s19, 1
        %s297 = scalar_select %p296, %s19, 1
        %p298 = scmp.lt.s32.totalorder %s295, 33
        %s299 = scalar_select %p298, %s295, 33
        %s300 = smul.addr %s299, 3
        %s301 = smul.addr %s297, 102
        %s302 = sadd.s32 %s300, %s301
        %s303 = smul.addr %s302, 4
        %s304 = scalar_lea.vmem %s3, %s303
        %s305 = smul.u32 %s20, 2
        %s306 = sadd.s32 %s305, 3
      $region40: #{nlayer_discriminator_forward.8} parent=23 // pred_fallthru
        _
    $region24: #{nlayer_discriminator_forward.8} parent=5 // pred_fallthru
      _
    %p307 = scmp.le.s32.totalorder 1, %s12
    %p308 = scmp.lt.s32.totalorder %s12, 33
    %p309 = pnand %p307, %p308
    %p310 = pneg %p309
    // Predicated region
    $region41: #{nlayer_discriminator_forward.8} parent=5 // pred_check
      _
    $region42: #{nlayer_discriminator_forward.8} parent=5 // pred_check_branch
      %312 = sbr.rel (%p309) target = $region44
    $region43: #{nlayer_discriminator_forward.8} parent=5 // pred_region
      %s313 = ssub.s32 %s12, 1
      %s314 = smul.u32 %s22, 2
      %p315 = scmp.lt.s32.totalorder %s21, 1
      %s316 = scalar_select %p315, %s21, 1
      %p317 = scmp.lt.s32.totalorder %s314, 33
      %s318 = scalar_select %p317, %s314, 33
      %s319 = smul.addr %s318, 3
      %s320 = smul.addr %s316, 102
      %s321 = sadd.s32 %s319, %s320
      %s322 = smul.addr %s321, 4
      %s323 = scalar_lea.vmem %s0, %s322
      %p324 = pneg %p54
      %p325 = pneg %p51
      %s326 = smul.u32 %s22, 2
      %s327 = sadd.s32 %s326, 1
      %p328 = scmp.lt.s32.totalorder %s21, 1
      %s329 = scalar_select %p328, %s21, 1
      %p330 = scmp.lt.s32.totalorder %s327, 33
      %s331 = scalar_select %p330, %s327, 33
      %s332 = smul.addr %s331, 3
      %s333 = smul.addr %s329, 102
      %s334 = sadd.s32 %s332, %s333
      %s335 = smul.addr %s334, 4
      %s336 = scalar_lea.vmem %s1, %s335
      %p337 = pneg %p86
      %p338 = pneg %p83
      %s339 = smul.u32 %s22, 2
      %s340 = sadd.s32 %s339, 2
      %p341 = scmp.lt.s32.totalorder %s21, 1
      %s342 = scalar_select %p341, %s21, 1
      %p343 = scmp.lt.s32.totalorder %s340, 33
      %s344 = scalar_select %p343, %s340, 33
      %s345 = smul.addr %s344, 3
      %s346 = smul.addr %s342, 102
      %s347 = sadd.s32 %s345, %s346
      %s348 = smul.addr %s347, 4
      %s349 = scalar_lea.vmem %s2, %s348
      %p350 = pneg %p118
      %p351 = pneg %p115
      %s352 = smul.u32 %s22, 2
      %s353 = sadd.s32 %s352, 3
      %p354 = scmp.lt.s32.totalorder %s21, 1
      %s355 = scalar_select %p354, %s21, 1
      %p356 = scmp.lt.s32.totalorder %s353, 33
      %s357 = scalar_select %p356, %s353, 33
      %s358 = smul.addr %s357, 3
      %s359 = smul.addr %s355, 102
      %s360 = sadd.s32 %s358, %s359
      %s361 = smul.addr %s360, 4
      %s362 = scalar_lea.vmem %s3, %s361
      %p363 = pneg %p150
      %p364 = pneg %p147
      %p365 = pneg %p171
      %p366 = pneg %p168
      %p367 = pneg %p192
      %p368 = pneg %p189
      %p369 = pneg %p220
      %p370 = pneg %p217
      %p371 = scmp.lt.s32.totalorder %s21, 1
      %s372 = scalar_select %p371, %s21, 1
      %p373 = scmp.lt.s32.totalorder %s22, 15
      %s374 = scalar_select %p373, %s22, 15
      %s375 = smul.addr %s374, 2
      %s376 = smul.addr %s372, 32
      %s377 = sadd.s32 %s375, %s376
      %s378 = smul.addr %s377, 4
      %s379 = scalar_lea.vmem %s6, %s378
      %s380 = smul.u32 %s22, 2
      %p381 = scmp.lt.s32.totalorder %s21, 1
      %s382 = scalar_select %p381, %s21, 1
      %p383 = scmp.lt.s32.totalorder %s380, 33
      %s384 = scalar_select %p383, %s380, 33
      %s385 = smul.addr %s384, 3
      %s386 = smul.addr %s382, 102
      %s387 = sadd.s32 %s385, %s386
      %s388 = smul.addr %s387, 4
      %s389 = scalar_lea.vmem %s0, %s388
      %s390 = smul.u32 %s22, 2
      %s391 = smul.u32 %s22, 2
      %s392 = sadd.s32 %s391, 1
      %p393 = scmp.lt.s32.totalorder %s21, 1
      %s394 = scalar_select %p393, %s21, 1
      %p395 = scmp.lt.s32.totalorder %s392, 33
      %s396 = scalar_select %p395, %s392, 33
      %s397 = smul.addr %s396, 3
      %s398 = smul.addr %s394, 102
      %s399 = sadd.s32 %s397, %s398
      %s400 = smul.addr %s399, 4
      %s401 = scalar_lea.vmem %s1, %s400
      %s402 = smul.u32 %s22, 2
      %s403 = sadd.s32 %s402, 1
      %s404 = smul.u32 %s22, 2
      %s405 = sadd.s32 %s404, 2
      %p406 = scmp.lt.s32.totalorder %s21, 1
      %s407 = scalar_select %p406, %s21, 1
      %p408 = scmp.lt.s32.totalorder %s405, 33
      %s409 = scalar_select %p408, %s405, 33
      %s410 = smul.addr %s409, 3
      %s411 = smul.addr %s407, 102
      %s412 = sadd.s32 %s410, %s411
      %s413 = smul.addr %s412, 4
      %s414 = scalar_lea.vmem %s2, %s413
      %s415 = smul.u32 %s22, 2
      %s416 = sadd.s32 %s415, 2
      %s417 = smul.u32 %s22, 2
      %s418 = sadd.s32 %s417, 3
      %p419 = scmp.lt.s32.totalorder %s21, 1
      %s420 = scalar_select %p419, %s21, 1
      %p421 = scmp.lt.s32.totalorder %s418, 33
      %s422 = scalar_select %p421, %s418, 33
      %s423 = smul.addr %s422, 3
      %s424 = smul.addr %s420, 102
      %s425 = sadd.s32 %s423, %s424
      %s426 = smul.addr %s425, 4
      %s427 = scalar_lea.vmem %s3, %s426
      %s428 = smul.u32 %s22, 2
      %s429 = sadd.s32 %s428, 3
      %p430 = scmp.lt.s32.totalorder %s21, 1
      %s431 = scalar_select %p430, %s21, 1
      %p432 = scmp.lt.s32.totalorder %s22, 15
      %s433 = scalar_select %p432, %s22, 15
      %s434 = smul.addr %s433, 2
      %s435 = smul.addr %s431, 32
      %s436 = sadd.s32 %s434, %s435
      %s437 = smul.addr %s436, 4
      %s438 = scalar_lea.vmem %s6, %s437
      %v440 = vld [vmem:[%s389] sm:$0xf]
      %v441 = vld [vmem:[%s389 + $0x4] sm:$0xf]
      %v442 = vld [vmem:[%s389 + $0x8] sm:$0x1]
      %v443 = vld [vmem:[%s4] sm:$0xf]
      %s444 = scalar_lea.vmem %s4, 4
      %v445 = vld [vmem:[%s444] sm:$0xf]
      %v449 = vunpack.c.l.b16 %v440
      %v450 = vunpack.c.l.b16 %v441
      %v451 = vunpack.c.l.b16 %v442
      %v452 = vpack.c.b16 %v450, %v449
      %v453 = vpack.c.b16 %v451, %v451
      %vm454 = vsmask.f32 7424
      %v456 = vshrl.u32 %v452, 16
      %v458 = vshll.u32 %v452, 16
      %v460 = vrot.slane %v458, 1
      %v461 = vor.u32 %v456, %v460
      %v463 = vshll.u32 %v453, 16
      %v465 = vrot.slane %v463, 1
      %v466 = vsel %vm454, %v461, %v465
      %vm467 = vcmask 64512
      %v469 = vsel %vm467, %v466, 0
      %vm471 = vcmask 1043456
      %v473 = vsel %vm471, %v445, 0
      %475 = vmatprep.subr.bf16.mxu0 0
      %476 = vmatpush1.bf16.msra.mxu0 %v473
      %477 = vmatprep.subr.bf16.mxu0 0
      %478 = vmatpush1.bf16.msra.mxu0 0
      %479 = vmatprep.subr.bf16.mxu0 0
      %480 = vmatpush1.bf16.msra.mxu0 0
      %481 = vmatprep.subr.bf16.mxu0 0
      %482 = vmatpush1.bf16.msra.mxu0 0
      %483 = vmatprep.subr.bf16.mxu0 0
      %484 = vmatpush1.bf16.msra.mxu0 0
      %485 = vmatprep.subr.bf16.mxu0 0
      %486 = vmatpush1.bf16.msra.mxu0 0
      %487 = vmatprep.subr.bf16.mxu0 0
      %488 = vmatpush1.bf16.msra.mxu0 0
      %489 = vmatprep.subr.bf16.mxu0 0
      %490 = vmatpush1.bf16.msra.mxu0 0
      %491 = vmatprep.subr.bf16.mxu0 0
      %492 = vmatpush1.bf16.msra.mxu0 0
      %493 = vmatprep.subr.bf16.mxu0 0
      %494 = vmatpush1.bf16.msra.mxu0 0
      %495 = vmatprep.subr.bf16.mxu0 0
      %496 = vmatpush1.bf16.msra.mxu0 0
      %497 = vmatprep.subr.bf16.mxu0 0
      %498 = vmatpush1.bf16.msra.mxu0 0
      %499 = vmatprep.subr.bf16.mxu0 0
      %500 = vmatpush1.bf16.msra.mxu0 0
      %501 = vmatprep.subr.bf16.mxu0 0
      %502 = vmatpush1.bf16.msra.mxu0 0
      %503 = vmatprep.subr.bf16.mxu0 0
      %504 = vmatpush1.bf16.msra.mxu0 0
      %505 = vmatprep.subr.bf16.mxu0 0
      %506 = vmatpush1.bf16.msra.mxu0 0
      %507 = vmatprep.mubr.bf16.mxu0 0
      %508 = vmatmul.mubr.bf16.gmra.mrb[0].mxu0 %v469
      %v509 = vpop.f32.mrb[0].mxu0
      %v510 = vadd.f32 0.0, %v509
      %v511 = vpop.f32.mrb[0].mxu0
      %v512 = vpop.f32.mrb[0].mxu0
      %v513 = vadd.f32 0.0, %v512
      %v514 = vpop.f32.mrb[0].mxu0
      %515 = vdwg.mxu0
      %v516 = vsel %vm467, %v452, 0
      %v519 = vsel %vm471, %v443, 0
      %521 = vmatprep.subr.bf16.mxu0 0
      %522 = vmatpush1.bf16.msra.mxu0 %v519
      %523 = vmatprep.subr.bf16.mxu0 0
      %524 = vmatpush1.bf16.msra.mxu0 0
      %525 = vmatprep.subr.bf16.mxu0 0
      %526 = vmatpush1.bf16.msra.mxu0 0
      %527 = vmatprep.subr.bf16.mxu0 0
      %528 = vmatpush1.bf16.msra.mxu0 0
      %529 = vmatprep.subr.bf16.mxu0 0
      %530 = vmatpush1.bf16.msra.mxu0 0
      %531 = vmatprep.subr.bf16.mxu0 0
      %532 = vmatpush1.bf16.msra.mxu0 0
      %533 = vmatprep.subr.bf16.mxu0 0
      %534 = vmatpush1.bf16.msra.mxu0 0
      %535 = vmatprep.subr.bf16.mxu0 0
      %536 = vmatpush1.bf16.msra.mxu0 0
      %537 = vmatprep.subr.bf16.mxu0 0
      %538 = vmatpush1.bf16.msra.mxu0 0
      %539 = vmatprep.subr.bf16.mxu0 0
      %540 = vmatpush1.bf16.msra.mxu0 0
      %541 = vmatprep.subr.bf16.mxu0 0
      %542 = vmatpush1.bf16.msra.mxu0 0
      %543 = vmatprep.subr.bf16.mxu0 0
      %544 = vmatpush1.bf16.msra.mxu0 0
      %545 = vmatprep.subr.bf16.mxu0 0
      %546 = vmatpush1.bf16.msra.mxu0 0
      %547 = vmatprep.subr.bf16.mxu0 0
      %548 = vmatpush1.bf16.msra.mxu0 0
      %549 = vmatprep.subr.bf16.mxu0 0
      %550 = vmatpush1.bf16.msra.mxu0 0
      %551 = vmatprep.subr.bf16.mxu0 0
      %552 = vmatpush1.bf16.msra.mxu0 0
      %553 = vmatprep.mubr.bf16.mxu0 0
      %554 = vmatmul.mubr.bf16.gmra.mrb[0].mxu0 %v516
      %v555 = vpop.f32.mrb[0].mxu0
      %v556 = vadd.f32 %v510, %v555
      %v557 = vpop.f32.mrb[0].mxu0
      %v558 = vpop.f32.mrb[0].mxu0
      %v559 = vadd.f32 %v513, %v558
      %v560 = vpop.f32.mrb[0].mxu0
      %561 = vdwg.mxu0
      %v562 = vld [vmem:[%s401] sm:$0xf]
      %v563 = vld [vmem:[%s401 + $0x4] sm:$0xf]
      %v564 = vld [vmem:[%s401 + $0x8] sm:$0x1]
      %s565 = scalar_lea.vmem %s4, 8
      %v566 = vld [vmem:[%s565] sm:$0xf]
      %v569 = vunpack.c.l.b16 %v562
      %v570 = vunpack.c.l.b16 %v563
      %v571 = vpack.c.b16 %v570, %v569
      %v573 = vsel %vm467, %v571, 0
      %v576 = vsel %vm471, %v566, 0
      %578 = vmatprep.subr.bf16.mxu0 0
      %579 = vmatpush1.bf16.msra.mxu0 %v576
      %580 = vmatprep.subr.bf16.mxu0 0
      %581 = vmatpush1.bf16.msra.mxu0 0
      %582 = vmatprep.subr.bf16.mxu0 0
      %583 = vmatpush1.bf16.msra.mxu0 0
      %584 = vmatprep.subr.bf16.mxu0 0
      %585 = vmatpush1.bf16.msra.mxu0 0
      %586 = vmatprep.subr.bf16.mxu0 0
      %587 = vmatpush1.bf16.msra.mxu0 0
      %588 = vmatprep.subr.bf16.mxu0 0
      %589 = vmatpush1.bf16.msra.mxu0 0
      %590 = vmatprep.subr.bf16.mxu0 0
      %591 = vmatpush1.bf16.msra.mxu0 0
      %592 = vmatprep.subr.bf16.mxu0 0
      %593 = vmatpush1.bf16.msra.mxu0 0
      %594 = vmatprep.subr.bf16.mxu0 0
      %595 = vmatpush1.bf16.msra.mxu0 0
      %596 = vmatprep.subr.bf16.mxu0 0
      %597 = vmatpush1.bf16.msra.mxu0 0
      %598 = vmatprep.subr.bf16.mxu0 0
      %599 = vmatpush1.bf16.msra.mxu0 0
      %600 = vmatprep.subr.bf16.mxu0 0
      %601 = vmatpush1.bf16.msra.mxu0 0
      %602 = vmatprep.subr.bf16.mxu0 0
      %603 = vmatpush1.bf16.msra.mxu0 0
      %604 = vmatprep.subr.bf16.mxu0 0
      %605 = vmatpush1.bf16.msra.mxu0 0
      %606 = vmatprep.subr.bf16.mxu0 0
      %607 = vmatpush1.bf16.msra.mxu0 0
      %608 = vmatprep.subr.bf16.mxu0 0
      %609 = vmatpush1.bf16.msra.mxu0 0
      %610 = vmatprep.mubr.bf16.mxu0 0
      %611 = vmatmul.mubr.bf16.gmra.mrb[0].mxu0 %v573
      %v612 = vpop.f32.mrb[0].mxu0
      %v613 = vadd.f32 0.0, %v612
      %v614 = vpop.f32.mrb[0].mxu0
      %v615 = vpop.f32.mrb[0].mxu0
      %v616 = vadd.f32 0.0, %v615
      %v617 = vpop.f32.mrb[0].mxu0
      %618 = vdwg.mxu0
      %v619 = vadd.f32 %v556, %v613
      %v620 = vadd.f32 %v559, %v616
      %s621 = scalar_lea.vmem %s4, 12
      %v622 = vld [vmem:[%s621] sm:$0xf]
      %v624 = vunpack.c.l.b16 %v564
      %v625 = vpack.c.b16 %v624, %v624
      %v626 = vshrl.u32 %v571, 16
      %v628 = vshll.u32 %v571, 16
      %v630 = vrot.slane %v628, 1
      %v631 = vor.u32 %v626, %v630
      %v633 = vshll.u32 %v625, 16
      %v635 = vrot.slane %v633, 1
      %v636 = vsel %vm454, %v631, %v635
      %v638 = vsel %vm467, %v636, 0
      %v641 = vsel %vm471, %v622, 0
      %643 = vmatprep.subr.bf16.mxu0 0
      %644 = vmatpush1.bf16.msra.mxu0 %v641
      %645 = vmatprep.subr.bf16.mxu0 0
      %646 = vmatpush1.bf16.msra.mxu0 0
      %647 = vmatprep.subr.bf16.mxu0 0
      %648 = vmatpush1.bf16.msra.mxu0 0
      %649 = vmatprep.subr.bf16.mxu0 0
      %650 = vmatpush1.bf16.msra.mxu0 0
      %651 = vmatprep.subr.bf16.mxu0 0
      %652 = vmatpush1.bf16.msra.mxu0 0
      %653 = vmatprep.subr.bf16.mxu0 0
      %654 = vmatpush1.bf16.msra.mxu0 0
      %655 = vmatprep.subr.bf16.mxu0 0
      %656 = vmatpush1.bf16.msra.mxu0 0
      %657 = vmatprep.subr.bf16.mxu0 0
      %658 = vmatpush1.bf16.msra.mxu0 0
      %659 = vmatprep.subr.bf16.mxu0 0
      %660 = vmatpush1.bf16.msra.mxu0 0
      %661 = vmatprep.subr.bf16.mxu0 0
      %662 = vmatpush1.bf16.msra.mxu0 0
      %663 = vmatprep.subr.bf16.mxu0 0
      %664 = vmatpush1.bf16.msra.mxu0 0
      %665 = vmatprep.subr.bf16.mxu0 0
      %666 = vmatpush1.bf16.msra.mxu0 0
      %667 = vmatprep.subr.bf16.mxu0 0
      %668 = vmatpush1.bf16.msra.mxu0 0
      %669 = vmatprep.subr.bf16.mxu0 0
      %670 = vmatpush1.bf16.msra.mxu0 0
      %671 = vmatprep.subr.bf16.mxu0 0
      %672 = vmatpush1.bf16.msra.mxu0 0
      %673 = vmatprep.subr.bf16.mxu0 0
      %674 = vmatpush1.bf16.msra.mxu0 0
      %675 = vmatprep.mubr.bf16.mxu0 0
      %676 = vmatmul.mubr.bf16.gmra.mrb[0].mxu0 %v638
      %v677 = vpop.f32.mrb[0].mxu0
      %v678 = vadd.f32 0.0, %v677
      %v679 = vpop.f32.mrb[0].mxu0
      %v680 = vpop.f32.mrb[0].mxu0
      %v681 = vadd.f32 0.0, %v680
      %v682 = vpop.f32.mrb[0].mxu0
      %683 = vdwg.mxu0
      %v684 = vadd.f32 %v619, %v678
      %v685 = vadd.f32 %v620, %v681
      %v686 = vld [vmem:[%s414] sm:$0xf]
      %v687 = vld [vmem:[%s414 + $0x4] sm:$0xf]
      %v688 = vld [vmem:[%s414 + $0x8] sm:$0x1]
      %s689 = scalar_lea.vmem %s4, 16
      %v690 = vld [vmem:[%s689] sm:$0xf]
      %v693 = vunpack.c.l.b16 %v686
      %v694 = vunpack.c.l.b16 %v687
      %v695 = vpack.c.b16 %v694, %v693
      %v697 = vsel %vm467, %v695, 0
      %v700 = vsel %vm471, %v690, 0
      %702 = vmatprep.subr.bf16.mxu0 0
      %703 = vmatpush1.bf16.msra.mxu0 %v700
      %704 = vmatprep.subr.bf16.mxu0 0
      %705 = vmatpush1.bf16.msra.mxu0 0
      %706 = vmatprep.subr.bf16.mxu0 0
      %707 = vmatpush1.bf16.msra.mxu0 0
      %708 = vmatprep.subr.bf16.mxu0 0
      %709 = vmatpush1.bf16.msra.mxu0 0
      %710 = vmatprep.subr.bf16.mxu0 0
      %711 = vmatpush1.bf16.msra.mxu0 0
      %712 = vmatprep.subr.bf16.mxu0 0
      %713 = vmatpush1.bf16.msra.mxu0 0
      %714 = vmatprep.subr.bf16.mxu0 0
      %715 = vmatpush1.bf16.msra.mxu0 0
      %716 = vmatprep.subr.bf16.mxu0 0
      %717 = vmatpush1.bf16.msra.mxu0 0
      %718 = vmatprep.subr.bf16.mxu0 0
      %719 = vmatpush1.bf16.msra.mxu0 0
      %720 = vmatprep.subr.bf16.mxu0 0
      %721 = vmatpush1.bf16.msra.mxu0 0
      %722 = vmatprep.subr.bf16.mxu0 0
      %723 = vmatpush1.bf16.msra.mxu0 0
      %724 = vmatprep.subr.bf16.mxu0 0
      %725 = vmatpush1.bf16.msra.mxu0 0
      %726 = vmatprep.subr.bf16.mxu0 0
      %727 = vmatpush1.bf16.msra.mxu0 0
      %728 = vmatprep.subr.bf16.mxu0 0
      %729 = vmatpush1.bf16.msra.mxu0 0
      %730 = vmatprep.subr.bf16.mxu0 0
      %731 = vmatpush1.bf16.msra.mxu0 0
      %732 = vmatprep.subr.bf16.mxu0 0
      %733 = vmatpush1.bf16.msra.mxu0 0
      %734 = vmatprep.mubr.bf16.mxu0 0
      %735 = vmatmul.mubr.bf16.gmra.mrb[0].mxu0 %v697
      %v736 = vpop.f32.mrb[0].mxu0
      %v737 = vadd.f32 0.0, %v736
      %v738 = vpop.f32.mrb[0].mxu0
      %v739 = vpop.f32.mrb[0].mxu0
      %v740 = vadd.f32 0.0, %v739
      %v741 = vpop.f32.mrb[0].mxu0
      %742 = vdwg.mxu0
      %v743 = vadd.f32 %v684, %v737
      %v744 = vadd.f32 %v685, %v740
      %s745 = scalar_lea.vmem %s4, 20
      %v746 = vld [vmem:[%s745] sm:$0xf]
      %v748 = vunpack.c.l.b16 %v688
      %v749 = vpack.c.b16 %v748, %v748
      %v750 = vshrl.u32 %v695, 16
      %v752 = vshll.u32 %v695, 16
      %v754 = vrot.slane %v752, 1
      %v755 = vor.u32 %v750, %v754
      %v757 = vshll.u32 %v749, 16
      %v759 = vrot.slane %v757, 1
      %v760 = vsel %vm454, %v755, %v759
      %v762 = vsel %vm467, %v760, 0
      %v765 = vsel %vm471, %v746, 0
      %767 = vmatprep.subr.bf16.mxu0 0
      %768 = vmatpush1.bf16.msra.mxu0 %v765
      %769 = vmatprep.subr.bf16.mxu0 0
      %770 = vmatpush1.bf16.msra.mxu0 0
      %771 = vmatprep.subr.bf16.mxu0 0
      %772 = vmatpush1.bf16.msra.mxu0 0
      %773 = vmatprep.subr.bf16.mxu0 0
      %774 = vmatpush1.bf16.msra.mxu0 0
      %775 = vmatprep.subr.bf16.mxu0 0
      %776 = vmatpush1.bf16.msra.mxu0 0
      %777 = vmatprep.subr.bf16.mxu0 0
      %778 = vmatpush1.bf16.msra.mxu0 0
      %779 = vmatprep.subr.bf16.mxu0 0
      %780 = vmatpush1.bf16.msra.mxu0 0
      %781 = vmatprep.subr.bf16.mxu0 0
      %782 = vmatpush1.bf16.msra.mxu0 0
      %783 = vmatprep.subr.bf16.mxu0 0
      %784 = vmatpush1.bf16.msra.mxu0 0
      %785 = vmatprep.subr.bf16.mxu0 0
      %786 = vmatpush1.bf16.msra.mxu0 0
      %787 = vmatprep.subr.bf16.mxu0 0
      %788 = vmatpush1.bf16.msra.mxu0 0
      %789 = vmatprep.subr.bf16.mxu0 0
      %790 = vmatpush1.bf16.msra.mxu0 0
      %791 = vmatprep.subr.bf16.mxu0 0
      %792 = vmatpush1.bf16.msra.mxu0 0
      %793 = vmatprep.subr.bf16.mxu0 0
      %794 = vmatpush1.bf16.msra.mxu0 0
      %795 = vmatprep.subr.bf16.mxu0 0
      %796 = vmatpush1.bf16.msra.mxu0 0
      %797 = vmatprep.subr.bf16.mxu0 0
      %798 = vmatpush1.bf16.msra.mxu0 0
      %799 = vmatprep.mubr.bf16.mxu0 0
      %800 = vmatmul.mubr.bf16.gmra.mrb[0].mxu0 %v762
      %v801 = vpop.f32.mrb[0].mxu0
      %v802 = vadd.f32 0.0, %v801
      %v803 = vpop.f32.mrb[0].mxu0
      %v804 = vpop.f32.mrb[0].mxu0
      %v805 = vadd.f32 0.0, %v804
      %v806 = vpop.f32.mrb[0].mxu0
      %807 = vdwg.mxu0
      %v808 = vadd.f32 %v743, %v802
      %v809 = vadd.f32 %v744, %v805
      %v810 = vld [vmem:[%s427] sm:$0xf]
      %v811 = vld [vmem:[%s427 + $0x4] sm:$0xf]
      %v812 = vld [vmem:[%s427 + $0x8] sm:$0x1]
      %s813 = scalar_lea.vmem %s4, 24
      %v814 = vld [vmem:[%s813] sm:$0xf]
      %v817 = vunpack.c.l.b16 %v810
      %v818 = vunpack.c.l.b16 %v811
      %v819 = vpack.c.b16 %v818, %v817
      %v821 = vsel %vm467, %v819, 0
      %v824 = vsel %vm471, %v814, 0
      %826 = vmatprep.subr.bf16.mxu0 0
      %827 = vmatpush1.bf16.msra.mxu0 %v824
      %828 = vmatprep.subr.bf16.mxu0 0
      %829 = vmatpush1.bf16.msra.mxu0 0
      %830 = vmatprep.subr.bf16.mxu0 0
      %831 = vmatpush1.bf16.msra.mxu0 0
      %832 = vmatprep.subr.bf16.mxu0 0
      %833 = vmatpush1.bf16.msra.mxu0 0
      %834 = vmatprep.subr.bf16.mxu0 0
      %835 = vmatpush1.bf16.msra.mxu0 0
      %836 = vmatprep.subr.bf16.mxu0 0
      %837 = vmatpush1.bf16.msra.mxu0 0
      %838 = vmatprep.subr.bf16.mxu0 0
      %839 = vmatpush1.bf16.msra.mxu0 0
      %840 = vmatprep.subr.bf16.mxu0 0
      %841 = vmatpush1.bf16.msra.mxu0 0
      %842 = vmatprep.subr.bf16.mxu0 0
      %843 = vmatpush1.bf16.msra.mxu0 0
      %844 = vmatprep.subr.bf16.mxu0 0
      %845 = vmatpush1.bf16.msra.mxu0 0
      %846 = vmatprep.subr.bf16.mxu0 0
      %847 = vmatpush1.bf16.msra.mxu0 0
      %848 = vmatprep.subr.bf16.mxu0 0
      %849 = vmatpush1.bf16.msra.mxu0 0
      %850 = vmatprep.subr.bf16.mxu0 0
      %851 = vmatpush1.bf16.msra.mxu0 0
      %852 = vmatprep.subr.bf16.mxu0 0
      %853 = vmatpush1.bf16.msra.mxu0 0
      %854 = vmatprep.subr.bf16.mxu0 0
      %855 = vmatpush1.bf16.msra.mxu0 0
      %856 = vmatprep.subr.bf16.mxu0 0
      %857 = vmatpush1.bf16.msra.mxu0 0
      %858 = vmatprep.mubr.bf16.mxu0 0
      %859 = vmatmul.mubr.bf16.gmra.mrb[0].mxu0 %v821
      %v860 = vpop.f32.mrb[0].mxu0
      %v861 = vadd.f32 0.0, %v860
      %v862 = vpop.f32.mrb[0].mxu0
      %v863 = vpop.f32.mrb[0].mxu0
      %v864 = vadd.f32 0.0, %v863
      %v865 = vpop.f32.mrb[0].mxu0
      %866 = vdwg.mxu0
      %v867 = vadd.f32 %v808, %v861
      %v868 = vadd.f32 %v809, %v864
      %s869 = scalar_lea.vmem %s4, 28
      %v870 = vld [vmem:[%s869] sm:$0xf]
      %v872 = vunpack.c.l.b16 %v812
      %v873 = vpack.c.b16 %v872, %v872
      %v874 = vshrl.u32 %v819, 16
      %v876 = vshll.u32 %v819, 16
      %v878 = vrot.slane %v876, 1
      %v879 = vor.u32 %v874, %v878
      %v881 = vshll.u32 %v873, 16
      %v883 = vrot.slane %v881, 1
      %v884 = vsel %vm454, %v879, %v883
      %v886 = vsel %vm467, %v884, 0
      %v889 = vsel %vm471, %v870, 0
      %891 = vmatprep.subr.bf16.mxu0 0
      %892 = vmatpush1.bf16.msra.mxu0 %v889
      %893 = vmatprep.subr.bf16.mxu0 0
      %894 = vmatpush1.bf16.msra.mxu0 0
      %895 = vmatprep.subr.bf16.mxu0 0
      %896 = vmatpush1.bf16.msra.mxu0 0
      %897 = vmatprep.subr.bf16.mxu0 0
      %898 = vmatpush1.bf16.msra.mxu0 0
      %899 = vmatprep.subr.bf16.mxu0 0
      %900 = vmatpush1.bf16.msra.mxu0 0
      %901 = vmatprep.subr.bf16.mxu0 0
      %902 = vmatpush1.bf16.msra.mxu0 0
      %903 = vmatprep.subr.bf16.mxu0 0
      %904 = vmatpush1.bf16.msra.mxu0 0
      %905 = vmatprep.subr.bf16.mxu0 0
      %906 = vmatpush1.bf16.msra.mxu0 0
      %907 = vmatprep.subr.bf16.mxu0 0
      %908 = vmatpush1.bf16.msra.mxu0 0
      %909 = vmatprep.subr.bf16.mxu0 0
      %910 = vmatpush1.bf16.msra.mxu0 0
      %911 = vmatprep.subr.bf16.mxu0 0
      %912 = vmatpush1.bf16.msra.mxu0 0
      %913 = vmatprep.subr.bf16.mxu0 0
      %914 = vmatpush1.bf16.msra.mxu0 0
      %915 = vmatprep.subr.bf16.mxu0 0
      %916 = vmatpush1.bf16.msra.mxu0 0
      %917 = vmatprep.subr.bf16.mxu0 0
      %918 = vmatpush1.bf16.msra.mxu0 0
      %919 = vmatprep.subr.bf16.mxu0 0
      %920 = vmatpush1.bf16.msra.mxu0 0
      %921 = vmatprep.subr.bf16.mxu0 0
      %922 = vmatpush1.bf16.msra.mxu0 0
      %923 = vmatprep.mubr.bf16.mxu0 0
      %924 = vmatmul.mubr.bf16.gmra.mrb[0].mxu0 %v886
      %v925 = vpop.f32.mrb[0].mxu0
      %v926 = vadd.f32 0.0, %v925
      %v927 = vpop.f32.mrb[0].mxu0
      %v928 = vpop.f32.mrb[0].mxu0
      %v929 = vadd.f32 0.0, %v928
      %v930 = vpop.f32.mrb[0].mxu0
      %931 = vdwg.mxu0
      %v932 = vadd.f32 %v867, %v926
      %v933 = vadd.f32 %v868, %v929
      %v934 = vld [vmem:[%s5] sm:$0x1]
      %v936 = vlaneseq
      %v937 = vshrl.u32 %v936, 7
      %v938 = vsub.s32 0, %v937
      %v939 = vrot.slane %v934, %v938
      %v941 = vadd.f32 %v932, %v939
      %v942 = vadd.f32 %v933, %v939
      %vm943 = vcmp.ge.f32.partialorder %v941, 0.0
      %vm944 = vcmp.ge.f32.partialorder %v942, 0.0
      %v945 = vmul.f32 %v941, 0.2
      %v946 = vmul.f32 %v942, 0.2
      %v947 = vsel %vm943, %v941, %v945
      %v948 = vsel %vm944, %v942, %v946
      %v949 = vpack.c.bf16 %v948, %v947
      %v951 = vunpack.c.l.b16 %v949
      %v952 = vunpack.c.h.b16 %v949
      %v953 = vpack.c.b16 %v951, %v951
      %v954 = vpack.c.b16 %v952, %v952
      %vm957 = vcmask 60416
      %958 = vst.msk [vmem:[%s438] sm:$0xf] %vm957, %v953
      %959 = vst.msk [vmem:[%s438 + $0x4] sm:$0xf] %vm957, %v954
      %p960 = scmp.lt.s32.totalorder %s21, 1
      %s961 = scalar_select %p960, %s21, 1
      %p962 = scmp.lt.s32.totalorder %s22, 15
      %s963 = scalar_select %p962, %s22, 15
      %s964 = smul.addr %s963, 2
      %s965 = smul.addr %s961, 32
      %s966 = sadd.s32 %s964, %s965
      %s967 = smul.addr %s966, 4
      %s968 = scalar_lea.vmem %s6, %s967
      // Predicated region
      $region45: #{nlayer_discriminator_forward.8} parent=43 // pred_check
        %p969 = pneg %p217
      $region46: #{nlayer_discriminator_forward.8} parent=43 // pred_check_branch
        %971 = sbr.rel (%p969) target = $region48
      $region47: #{nlayer_discriminator_forward.8} parent=43 // pred_region
        _
      $region48: #{nlayer_discriminator_forward.8} parent=43 // pred_fallthru
        _
    $region44: #{nlayer_discriminator_forward.8} parent=5 // pred_fallthru
      _
    %p972 = scmp.le.s32.totalorder 2, %s12
    // Predicated region
    $region49: #{nlayer_discriminator_forward.8} parent=5 // pred_check
      %p973 = pneg %p972
    $region50: #{nlayer_discriminator_forward.8} parent=5 // pred_check_branch
      %975 = sbr.rel (%p973) target = $region52
    $region51: #{nlayer_discriminator_forward.8} parent=5 // pred_region
      %s976 = ssub.s32 %s12, 2
      // Predicated region
      $region53: #{nlayer_discriminator_forward.8} parent=51 // pred_check
        %p977 = pneg %p223
      $region54: #{nlayer_discriminator_forward.8} parent=51 // pred_check_branch
        %979 = sbr.rel (%p977) target = $region56
      $region55: #{nlayer_discriminator_forward.8} parent=51 // pred_region
        %p980 = scmp.lt.s32.totalorder %s23, 1
        %s981 = scalar_select %p980, %s23, 1
        %p982 = scmp.lt.s32.totalorder %s24, 15
        %s983 = scalar_select %p982, %s24, 15
        %s984 = smul.addr %s983, 2
        %s985 = smul.addr %s981, 32
        %s986 = sadd.s32 %s984, %s985
        %s987 = smul.addr %s986, 4
        %s988 = scalar_lea.vmem %s6, %s987
      $region56: #{nlayer_discriminator_forward.8} parent=51 // pred_fallthru
        _
    $region52: #{nlayer_discriminator_forward.8} parent=5 // pred_fallthru
      _
  $region6: #{nlayer_discriminator_forward.8} parent=0 // loop_footer
    %s16 = sadd.s32 1, %s12
  $region7: #{nlayer_discriminator_forward.8} parent=0 // loop_footer_branch
    %11 = sbr.rel target = $region3
  $region8: #{nlayer_discriminator_forward.8} parent=0 // loop_exit
    _

// kernel: nlayer_discriminator_forward.9
$region0: #{nlayer_discriminator_forward.9}
  #allocation0 [shape = 'u32[]', space=smem, size = 0x4, offset = 0x4, fixed_abs, tag = 'smem constant byte address 0x4 - core index']
  #allocation1 [shape = 'u32[144,128]{1,0:T(1,128)}', space=vmem, size = 0x12000, scoped, tag = 'internal scratch']
  %s0 = inlined_call_operand.vmem [shape: bf16[2,18,9,16], index: 0, kind: input, shape index: {}, may-alias: {0,1,2,3}]
  %s1 = inlined_call_operand.vmem [shape: bf16[2,18,9,16], index: 1, kind: input, shape index: {}, may-alias: {0,1,2,3}]
  %s2 = inlined_call_operand.vmem [shape: bf16[2,18,9,16], index: 2, kind: input, shape index: {}, may-alias: {0,1,2,3}]
  %s3 = inlined_call_operand.vmem [shape: bf16[2,18,9,16], index: 3, kind: input, shape index: {}, may-alias: {0,1,2,3}]
  %s4 = inlined_call_operand.vmem [shape: bf16[4,2,16,16], index: 4, kind: input, shape index: {}]
  %s5 = inlined_call_operand.vmem [shape: f32[2,8,8,16], index: 5, kind: output, shape index: {0}]
  %s6 = inlined_call_operand.vmem [shape: f32[2,8,2,16], index: 6, kind: output, shape index: {1}]
  %7 = xla_tuple %s5, %s6
  %s8 = sld [smem:[#allocation0]]
  $region61: #{nlayer_discriminator_forward.9} parent=0
    _
  %s10 = ssub.s32 1, %s8
  %s11 = scalar_select 0, %s10, %s8
  loop: start=0, step=1, limit=18
  $region2: #{nlayer_discriminator_forward.9} parent=0 // loop_pre_header
    _
  $region3: #{nlayer_discriminator_forward.9} parent=0 // loop_header
    %s13 = sphi 0, %s17
    %p14 = scmp.ge.s32.totalorder %s13, 18
    %s20 = sphi 0, %s32
    %s21 = sphi 0, %s28
    %s22 = sphi 0, %s20
    %s23 = sphi 0, %s21
    %s24 = sphi 0, %s22
    %s25 = sphi 0, %s23
    %s39 = sphi 0, %s41
    %s42 = sphi 0, %s39
    %s43 = sphi 0, %s42
    %s59 = sphi 0, %s43
    %s71 = sphi 0, %s73
    %s74 = sphi 0, %s71
    %s75 = sphi 0, %s74
    %s91 = sphi 0, %s75
    %s103 = sphi 0, %s105
    %s106 = sphi 0, %s103
    %s107 = sphi 0, %s106
    %s123 = sphi 0, %s107
    %s135 = sphi 0, %s137
    %s138 = sphi 0, %s135
    %s139 = sphi 0, %s138
    %s155 = sphi 0, %s139
    %s159 = sphi 0, %s159
    %s161 = sphi 0, %s159
    %s162 = sphi 0, %s161
    %s176 = sphi 0, %s162
    %s184 = sphi 0, %s186
    %s187 = sphi 0, %s184
    %s188 = sphi 0, %s187
    %s204 = sphi 0, %s188
    %s212 = sphi 0, %s214
    %s215 = sphi 0, %s212
    %s216 = sphi 0, %s215
    %s232 = sphi 0, %s216
  $region4: #{nlayer_discriminator_forward.9} parent=0 // loop_header_branch
    %16 = sbr.rel (%p14) target = $region8
  $region5: #{nlayer_discriminator_forward.9} parent=0 // loop_body
    %s18 = ssub.s32 %s13, 1
    %s19 = ssub.s32 %s13, 2
    %s26 = sadd.s32 1, %s21
    %p27 = scmp.ge.s32.totalorder %s26, 8
    %s28 = scalar_select %p27, 0, %s26
    %s29 = sadd.s32 1, %s20
    %s30 = scalar_select %p27, %s29, %s20
    %p31 = scmp.ge.s32.totalorder %s30, 2
    %s32 = scalar_select %p31, 0, %s30
    %s33 = smul.u32 %s21, 2
    %s34 = smul.u32 %s28, 2
    %s35 = ssub.s32 %s20, %s32
    %s36 = ssub.s32 %s33, %s34
    %s37 = sor.u32 %s35, %s36
    %p38 = scmp.eq.s32.totalorder %s37, 0
    %s40 = sadd.s32 %s39, 1
    %s41 = scalar_select %p38, %s39, %s40
    %p44 = pneg %p38
    %p45 = scmp.eq.s32.totalorder %s13, 15
    %p46 = por %p44, %p45
    %p47 = scmp.ne.s32.totalorder %s39, %s42
    %p48 = scmp.eq.s32.totalorder %s13, 0
    %p49 = por %p47, %p48
    %p50 = scmp.ne.s32.totalorder %s39, %s42
    %p51 = scmp.eq.s32.totalorder %s18, 15
    %p52 = por %p50, %p51
    %p53 = scmp.ne.s32.totalorder %s42, %s43
    %p54 = scmp.eq.s32.totalorder %s18, 0
    %p55 = por %p53, %p54
    %p56 = scmp.ne.s32.totalorder %s42, %s43
    %p57 = scmp.eq.s32.totalorder %s19, 15
    %p58 = por %p56, %p57
    %p60 = scmp.ne.s32.totalorder %s43, %s59
    %p61 = scmp.eq.s32.totalorder %s19, 0
    %p62 = por %p60, %p61
    %s63 = smul.u32 %s21, 2
    %s64 = sadd.s32 %s63, 1
    %s65 = smul.u32 %s28, 2
    %s66 = sadd.s32 %s65, 1
    %s67 = ssub.s32 %s20, %s32
    %s68 = ssub.s32 %s64, %s66
    %s69 = sor.u32 %s67, %s68
    %p70 = scmp.eq.s32.totalorder %s69, 0
    %s72 = sadd.s32 %s71, 1
    %s73 = scalar_select %p70, %s71, %s72
    %p76 = pneg %p70
    %p77 = scmp.eq.s32.totalorder %s13, 15
    %p78 = por %p76, %p77
    %p79 = scmp.ne.s32.totalorder %s71, %s74
    %p80 = scmp.eq.s32.totalorder %s13, 0
    %p81 = por %p79, %p80
    %p82 = scmp.ne.s32.totalorder %s71, %s74
    %p83 = scmp.eq.s32.totalorder %s18, 15
    %p84 = por %p82, %p83
    %p85 = scmp.ne.s32.totalorder %s74, %s75
    %p86 = scmp.eq.s32.totalorder %s18, 0
    %p87 = por %p85, %p86
    %p88 = scmp.ne.s32.totalorder %s74, %s75
    %p89 = scmp.eq.s32.totalorder %s19, 15
    %p90 = por %p88, %p89
    %p92 = scmp.ne.s32.totalorder %s75, %s91
    %p93 = scmp.eq.s32.totalorder %s19, 0
    %p94 = por %p92, %p93
    %s95 = smul.u32 %s21, 2
    %s96 = sadd.s32 %s95, 2
    %s97 = smul.u32 %s28, 2
    %s98 = sadd.s32 %s97, 2
    %s99 = ssub.s32 %s20, %s32
    %s100 = ssub.s32 %s96, %s98
    %s101 = sor.u32 %s99, %s100
    %p102 = scmp.eq.s32.totalorder %s101, 0
    %s104 = sadd.s32 %s103, 1
    %s105 = scalar_select %p102, %s103, %s104
    %p108 = pneg %p102
    %p109 = scmp.eq.s32.totalorder %s13, 15
    %p110 = por %p108, %p109
    %p111 = scmp.ne.s32.totalorder %s103, %s106
    %p112 = scmp.eq.s32.totalorder %s13, 0
    %p113 = por %p111, %p112
    %p114 = scmp.ne.s32.totalorder %s103, %s106
    %p115 = scmp.eq.s32.totalorder %s18, 15
    %p116 = por %p114, %p115
    %p117 = scmp.ne.s32.totalorder %s106, %s107
    %p118 = scmp.eq.s32.totalorder %s18, 0
    %p119 = por %p117, %p118
    %p120 = scmp.ne.s32.totalorder %s106, %s107
    %p121 = scmp.eq.s32.totalorder %s19, 15
    %p122 = por %p120, %p121
    %p124 = scmp.ne.s32.totalorder %s107, %s123
    %p125 = scmp.eq.s32.totalorder %s19, 0
    %p126 = por %p124, %p125
    %s127 = smul.u32 %s21, 2
    %s128 = sadd.s32 %s127, 3
    %s129 = smul.u32 %s28, 2
    %s130 = sadd.s32 %s129, 3
    %s131 = ssub.s32 %s20, %s32
    %s132 = ssub.s32 %s128, %s130
    %s133 = sor.u32 %s131, %s132
    %p134 = scmp.eq.s32.totalorder %s133, 0
    %s136 = sadd.s32 %s135, 1
    %s137 = scalar_select %p134, %s135, %s136
    %p140 = pneg %p134
    %p141 = scmp.eq.s32.totalorder %s13, 15
    %p142 = por %p140, %p141
    %p143 = scmp.ne.s32.totalorder %s135, %s138
    %p144 = scmp.eq.s32.totalorder %s13, 0
    %p145 = por %p143, %p144
    %p146 = scmp.ne.s32.totalorder %s135, %s138
    %p147 = scmp.eq.s32.totalorder %s18, 15
    %p148 = por %p146, %p147
    %p149 = scmp.ne.s32.totalorder %s138, %s139
    %p150 = scmp.eq.s32.totalorder %s18, 0
    %p151 = por %p149, %p150
    %p152 = scmp.ne.s32.totalorder %s138, %s139
    %p153 = scmp.eq.s32.totalorder %s19, 15
    %p154 = por %p152, %p153
    %p156 = scmp.ne.s32.totalorder %s139, %s155
    %p157 = scmp.eq.s32.totalorder %s19, 0
    %p158 = por %p156, %p157
    %s160 = sadd.s32 %s159, 1
    %p163 = scmp.eq.s32.totalorder %s13, 15
    %p164 = scmp.ne.s32.totalorder %s159, %s161
    %p165 = scmp.eq.s32.totalorder %s13, 0
    %p166 = por %p164, %p165
    %p167 = scmp.ne.s32.totalorder %s159, %s161
    %p168 = scmp.eq.s32.totalorder %s18, 15
    %p169 = por %p167, %p168
    %p170 = scmp.ne.s32.totalorder %s161, %s162
    %p171 = scmp.eq.s32.totalorder %s18, 0
    %p172 = por %p170, %p171
    %p173 = scmp.ne.s32.totalorder %s161, %s162
    %p174 = scmp.eq.s32.totalorder %s19, 15
    %p175 = por %p173, %p174
    %p177 = scmp.ne.s32.totalorder %s162, %s176
    %p178 = scmp.eq.s32.totalorder %s19, 0
    %p179 = por %p177, %p178
    %s180 = ssub.s32 %s20, %s32
    %s181 = ssub.s32 %s21, %s28
    %s182 = sor.u32 %s180, %s181
    %p183 = scmp.eq.s32.totalorder %s182, 0
    %s185 = sadd.s32 %s184, 1
    %s186 = scalar_select %p183, %s184, %s185
    %p189 = pneg %p183
    %p190 = scmp.eq.s32.totalorder %s13, 15
    %p191 = por %p189, %p190
    %p192 = scmp.ne.s32.totalorder %s184, %s187
    %p193 = scmp.eq.s32.totalorder %s13, 0
    %p194 = por %p192, %p193
    %p195 = scmp.ne.s32.totalorder %s184, %s187
    %p196 = scmp.eq.s32.totalorder %s18, 15
    %p197 = por %p195, %p196
    %p198 = scmp.ne.s32.totalorder %s187, %s188
    %p199 = scmp.eq.s32.totalorder %s18, 0
    %p200 = por %p198, %p199
    %p201 = scmp.ne.s32.totalorder %s187, %s188
    %p202 = scmp.eq.s32.totalorder %s19, 15
    %p203 = por %p201, %p202
    %p205 = scmp.ne.s32.totalorder %s188, %s204
    %p206 = scmp.eq.s32.totalorder %s19, 0
    %p207 = por %p205, %p206
    %s208 = ssub.s32 %s20, %s32
    %s209 = ssub.s32 %s21, %s28
    %s210 = sor.u32 %s208, %s209
    %p211 = scmp.eq.s32.totalorder %s210, 0
    %s213 = sadd.s32 %s212, 1
    %s214 = scalar_select %p211, %s212, %s213
    %p217 = pneg %p211
    %p218 = scmp.eq.s32.totalorder %s13, 15
    %p219 = por %p217, %p218
    %p220 = scmp.ne.s32.totalorder %s212, %s215
    %p221 = scmp.eq.s32.totalorder %s13, 0
    %p222 = por %p220, %p221
    %p223 = scmp.ne.s32.totalorder %s212, %s215
    %p224 = scmp.eq.s32.totalorder %s18, 15
    %p225 = por %p223, %p224
    %p226 = scmp.ne.s32.totalorder %s215, %s216
    %p227 = scmp.eq.s32.totalorder %s18, 0
    %p228 = por %p226, %p227
    %p229 = scmp.ne.s32.totalorder %s215, %s216
    %p230 = scmp.eq.s32.totalorder %s19, 15
    %p231 = por %p229, %p230
    %p233 = scmp.ne.s32.totalorder %s216, %s232
    %p234 = scmp.eq.s32.totalorder %s19, 0
    %p235 = por %p233, %p234
    %p236 = scmp.le.s32.totalorder 1, %s13
    %p237 = scmp.lt.s32.totalorder %s13, 17
    %p238 = pnand %p236, %p237
    %p239 = pneg %p238
    // Predicated region
    $region9: #{nlayer_discriminator_forward.9} parent=5 // pred_check
      _
    $region10: #{nlayer_discriminator_forward.9} parent=5 // pred_check_branch
      %241 = sbr.rel (%p238) target = $region12
    $region11: #{nlayer_discriminator_forward.9} parent=5 // pred_region
      %s242 = ssub.s32 %s13, 1
      // Predicated region
      $region13: #{nlayer_discriminator_forward.9} parent=11 // pred_check
        %p243 = pneg %p172
      $region14: #{nlayer_discriminator_forward.9} parent=11 // pred_check_branch
        %245 = sbr.rel (%p243) target = $region16
      $region15: #{nlayer_discriminator_forward.9} parent=11 // pred_region
        _
      $region16: #{nlayer_discriminator_forward.9} parent=11 // pred_fallthru
        _
    $region12: #{nlayer_discriminator_forward.9} parent=5 // pred_fallthru
      _
    %p246 = scmp.lt.s32.totalorder %s13, 16
    // Predicated region
    $region17: #{nlayer_discriminator_forward.9} parent=5 // pred_check
      %p247 = pneg %p246
    $region18: #{nlayer_discriminator_forward.9} parent=5 // pred_check_branch
      %249 = sbr.rel (%p247) target = $region20
    $region19: #{nlayer_discriminator_forward.9} parent=5 // pred_region
      // Predicated region
      $region21: #{nlayer_discriminator_forward.9} parent=19 // pred_check
        %p250 = pneg %p49
      $region22: #{nlayer_discriminator_forward.9} parent=19 // pred_check_branch
        %252 = sbr.rel (%p250) target = $region24
      $region23: #{nlayer_discriminator_forward.9} parent=19 // pred_region
        %s253 = smul.u32 %s21, 2
        %p254 = scmp.lt.s32.totalorder %s20, 1
        %s255 = scalar_select %p254, %s20, 1
        %p256 = scmp.lt.s32.totalorder %s253, 17
        %s257 = scalar_select %p256, %s253, 17
        %s258 = smul.addr %s257, 2
        %s259 = smul.addr %s255, 36
        %s260 = sadd.s32 %s258, %s259
        %s261 = smul.addr %s260, 4
        %s262 = scalar_lea.vmem %s0, %s261
        %s263 = smul.u32 %s21, 2
      $region24: #{nlayer_discriminator_forward.9} parent=19 // pred_fallthru
        _
      // Predicated region
      $region25: #{nlayer_discriminator_forward.9} parent=19 // pred_check
        %p264 = pneg %p81
      $region26: #{nlayer_discriminator_forward.9} parent=19 // pred_check_branch
        %266 = sbr.rel (%p264) target = $region28
      $region27: #{nlayer_discriminator_forward.9} parent=19 // pred_region
        %s267 = smul.u32 %s21, 2
        %s268 = sadd.s32 %s267, 1
        %p269 = scmp.lt.s32.totalorder %s20, 1
        %s270 = scalar_select %p269, %s20, 1
        %p271 = scmp.lt.s32.totalorder %s268, 17
        %s272 = scalar_select %p271, %s268, 17
        %s273 = smul.addr %s272, 2
        %s274 = smul.addr %s270, 36
        %s275 = sadd.s32 %s273, %s274
        %s276 = smul.addr %s275, 4
        %s277 = scalar_lea.vmem %s1, %s276
        %s278 = smul.u32 %s21, 2
        %s279 = sadd.s32 %s278, 1
      $region28: #{nlayer_discriminator_forward.9} parent=19 // pred_fallthru
        _
      // Predicated region
      $region29: #{nlayer_discriminator_forward.9} parent=19 // pred_check
        %p280 = pneg %p113
      $region30: #{nlayer_discriminator_forward.9} parent=19 // pred_check_branch
        %282 = sbr.rel (%p280) target = $region32
      $region31: #{nlayer_discriminator_forward.9} parent=19 // pred_region
        %s283 = smul.u32 %s21, 2
        %s284 = sadd.s32 %s283, 2
        %p285 = scmp.lt.s32.totalorder %s20, 1
        %s286 = scalar_select %p285, %s20, 1
        %p287 = scmp.lt.s32.totalorder %s284, 17
        %s288 = scalar_select %p287, %s284, 17
        %s289 = smul.addr %s288, 2
        %s290 = smul.addr %s286, 36
        %s291 = sadd.s32 %s289, %s290
        %s292 = smul.addr %s291, 4
        %s293 = scalar_lea.vmem %s2, %s292
        %s294 = smul.u32 %s21, 2
        %s295 = sadd.s32 %s294, 2
      $region32: #{nlayer_discriminator_forward.9} parent=19 // pred_fallthru
        _
      // Predicated region
      $region33: #{nlayer_discriminator_forward.9} parent=19 // pred_check
        %p296 = pneg %p145
      $region34: #{nlayer_discriminator_forward.9} parent=19 // pred_check_branch
        %298 = sbr.rel (%p296) target = $region36
      $region35: #{nlayer_discriminator_forward.9} parent=19 // pred_region
        %s299 = smul.u32 %s21, 2
        %s300 = sadd.s32 %s299, 3
        %p301 = scmp.lt.s32.totalorder %s20, 1
        %s302 = scalar_select %p301, %s20, 1
        %p303 = scmp.lt.s32.totalorder %s300, 17
        %s304 = scalar_select %p303, %s300, 17
        %s305 = smul.addr %s304, 2
        %s306 = smul.addr %s302, 36
        %s307 = sadd.s32 %s305, %s306
        %s308 = smul.addr %s307, 4
        %s309 = scalar_lea.vmem %s3, %s308
        %s310 = smul.u32 %s21, 2
        %s311 = sadd.s32 %s310, 3
      $region36: #{nlayer_discriminator_forward.9} parent=19 // pred_fallthru
        _
    $region20: #{nlayer_discriminator_forward.9} parent=5 // pred_fallthru
      _
    %p312 = scmp.le.s32.totalorder 1, %s13
    %p313 = scmp.lt.s32.totalorder %s13, 17
    %p314 = pnand %p312, %p313
    %p315 = pneg %p314
    // Predicated region
    $region37: #{nlayer_discriminator_forward.9} parent=5 // pred_check
      _
    $region38: #{nlayer_discriminator_forward.9} parent=5 // pred_check_branch
      %317 = sbr.rel (%p314) target = $region40
    $region39: #{nlayer_discriminator_forward.9} parent=5 // pred_region
      %s318 = ssub.s32 %s13, 1
      %s319 = smul.u32 %s23, 2
      %p320 = scmp.lt.s32.totalorder %s22, 1
      %s321 = scalar_select %p320, %s22, 1
      %p322 = scmp.lt.s32.totalorder %s319, 17
      %s323 = scalar_select %p322, %s319, 17
      %s324 = smul.addr %s323, 2
      %s325 = smul.addr %s321, 36
      %s326 = sadd.s32 %s324, %s325
      %s327 = smul.addr %s326, 4
      %s328 = scalar_lea.vmem %s0, %s327
      %p329 = pneg %p55
      %p330 = pneg %p52
      %s331 = smul.u32 %s23, 2
      %s332 = sadd.s32 %s331, 1
      %p333 = scmp.lt.s32.totalorder %s22, 1
      %s334 = scalar_select %p333, %s22, 1
      %p335 = scmp.lt.s32.totalorder %s332, 17
      %s336 = scalar_select %p335, %s332, 17
      %s337 = smul.addr %s336, 2
      %s338 = smul.addr %s334, 36
      %s339 = sadd.s32 %s337, %s338
      %s340 = smul.addr %s339, 4
      %s341 = scalar_lea.vmem %s1, %s340
      %p342 = pneg %p87
      %p343 = pneg %p84
      %s344 = smul.u32 %s23, 2
      %s345 = sadd.s32 %s344, 2
      %p346 = scmp.lt.s32.totalorder %s22, 1
      %s347 = scalar_select %p346, %s22, 1
      %p348 = scmp.lt.s32.totalorder %s345, 17
      %s349 = scalar_select %p348, %s345, 17
      %s350 = smul.addr %s349, 2
      %s351 = smul.addr %s347, 36
      %s352 = sadd.s32 %s350, %s351
      %s353 = smul.addr %s352, 4
      %s354 = scalar_lea.vmem %s2, %s353
      %p355 = pneg %p119
      %p356 = pneg %p116
      %s357 = smul.u32 %s23, 2
      %s358 = sadd.s32 %s357, 3
      %p359 = scmp.lt.s32.totalorder %s22, 1
      %s360 = scalar_select %p359, %s22, 1
      %p361 = scmp.lt.s32.totalorder %s358, 17
      %s362 = scalar_select %p361, %s358, 17
      %s363 = smul.addr %s362, 2
      %s364 = smul.addr %s360, 36
      %s365 = sadd.s32 %s363, %s364
      %s366 = smul.addr %s365, 4
      %s367 = scalar_lea.vmem %s3, %s366
      %p368 = pneg %p151
      %p369 = pneg %p148
      %p370 = pneg %p172
      %p371 = pneg %p169
      %p372 = pneg %p200
      %p373 = pneg %p197
      %p374 = scmp.lt.s32.totalorder %s22, 1
      %s375 = scalar_select %p374, %s22, 1
      %p376 = scmp.lt.s32.totalorder %s23, 7
      %s377 = scalar_select %p376, %s23, 7
      %s378 = smul.addr %s375, 8
      %s379 = sadd.s32 %s377, %s378
      %s380 = smul.addr %s379, 8
      %s381 = scalar_lea.vmem %s5, %s380
      %p382 = pneg %p228
      %p383 = pneg %p225
      %p384 = scmp.lt.s32.totalorder %s22, 1
      %s385 = scalar_select %p384, %s22, 1
      %p386 = scmp.lt.s32.totalorder %s23, 7
      %s387 = scalar_select %p386, %s23, 7
      %s388 = smul.addr %s385, 8
      %s389 = sadd.s32 %s387, %s388
      %s390 = smul.addr %s389, 2
      %s391 = scalar_lea.vmem %s6, %s390
      %s392 = smul.u32 %s23, 2
      %p393 = scmp.lt.s32.totalorder %s22, 1
      %s394 = scalar_select %p393, %s22, 1
      %p395 = scmp.lt.s32.totalorder %s392, 17
      %s396 = scalar_select %p395, %s392, 17
      %s397 = smul.addr %s396, 2
      %s398 = smul.addr %s394, 36
      %s399 = sadd.s32 %s397, %s398
      %s400 = smul.addr %s399, 4
      %s401 = scalar_lea.vmem %s0, %s400
      %s402 = smul.u32 %s23, 2
      %s403 = smul.u32 %s23, 2
      %s404 = sadd.s32 %s403, 1
      %p405 = scmp.lt.s32.totalorder %s22, 1
      %s406 = scalar_select %p405, %s22, 1
      %p407 = scmp.lt.s32.totalorder %s404, 17
      %s408 = scalar_select %p407, %s404, 17
      %s409 = smul.addr %s408, 2
      %s410 = smul.addr %s406, 36
      %s411 = sadd.s32 %s409, %s410
      %s412 = smul.addr %s411, 4
      %s413 = scalar_lea.vmem %s1, %s412
      %s414 = smul.u32 %s23, 2
      %s415 = sadd.s32 %s414, 1
      %s416 = smul.u32 %s23, 2
      %s417 = sadd.s32 %s416, 2
      %p418 = scmp.lt.s32.totalorder %s22, 1
      %s419 = scalar_select %p418, %s22, 1
      %p420 = scmp.lt.s32.totalorder %s417, 17
      %s421 = scalar_select %p420, %s417, 17
      %s422 = smul.addr %s421, 2
      %s423 = smul.addr %s419, 36
      %s424 = sadd.s32 %s422, %s423
      %s425 = smul.addr %s424, 4
      %s426 = scalar_lea.vmem %s2, %s425
      %s427 = smul.u32 %s23, 2
      %s428 = sadd.s32 %s427, 2
      %s429 = smul.u32 %s23, 2
      %s430 = sadd.s32 %s429, 3
      %p431 = scmp.lt.s32.totalorder %s22, 1
      %s432 = scalar_select %p431, %s22, 1
      %p433 = scmp.lt.s32.totalorder %s430, 17
      %s434 = scalar_select %p433, %s430, 17
      %s435 = smul.addr %s434, 2
      %s436 = smul.addr %s432, 36
      %s437 = sadd.s32 %s435, %s436
      %s438 = smul.addr %s437, 4
      %s439 = scalar_lea.vmem %s3, %s438
      %s440 = smul.u32 %s23, 2
      %s441 = sadd.s32 %s440, 3
      %p442 = scmp.lt.s32.totalorder %s22, 1
      %s443 = scalar_select %p442, %s22, 1
      %p444 = scmp.lt.s32.totalorder %s23, 7
      %s445 = scalar_select %p444, %s23, 7
      %s446 = smul.addr %s443, 8
      %s447 = sadd.s32 %s445, %s446
      %s448 = smul.addr %s447, 8
      %s449 = scalar_lea.vmem %s5, %s448
      %p450 = scmp.lt.s32.totalorder %s22, 1
      %s451 = scalar_select %p450, %s22, 1
      %p452 = scmp.lt.s32.totalorder %s23, 7
      %s453 = scalar_select %p452, %s23, 7
      %s454 = smul.addr %s451, 8
      %s455 = sadd.s32 %s453, %s454
      %s456 = smul.addr %s455, 2
      %s457 = scalar_lea.vmem %s6, %s456
      %v459 = vld [vmem:[%s401] sm:$0xf]
      %v460 = vld [vmem:[%s401 + $0x4] sm:$0x1]
      %v461 = vld [vmem:[%s4] sm:$0xf]
      %v462 = vld [vmem:[%s4 + $0x4] sm:$0xf]
      %s463 = scalar_lea.vmem %s4, 8
      %v464 = vld [vmem:[%s463] sm:$0xf]
      %v465 = vld [vmem:[%s463 + $0x4] sm:$0xf]
      %v468 = vunpack.c.l.b16 %v459
      %v469 = vunpack.c.l.b16 %v460
      %v470 = vpack.c.b16 %v469, %v468
      %v472 = vshrl.u32 %v470, 16
      %v474 = vshll.u32 %v470, 16
      %v476 = vrot.slane %v474, 1
      %v477 = vor.u32 %v472, %v476
      %v480 = vunpack.c.l.b16 %v464
      %v481 = vunpack.c.l.b16 %v465
      %v482 = vpack.c.b16 %v481, %v480
      %vm484 = vcmask 130048
      %v486 = vsel %vm484, %v477, 0
      %488 = vmatprep.subr.bf16.mxu0 0
      %489 = vmatpush1.bf16.msra.mxu0 %v482
      %490 = vmatprep.subr.bf16.mxu0 0
      %491 = vmatpush1.bf16.msra.mxu0 0
      %492 = vmatprep.subr.bf16.mxu0 0
      %493 = vmatpush1.bf16.msra.mxu0 0
      %494 = vmatprep.subr.bf16.mxu0 0
      %495 = vmatpush1.bf16.msra.mxu0 0
      %496 = vmatprep.subr.bf16.mxu0 0
      %497 = vmatpush1.bf16.msra.mxu0 0
      %498 = vmatprep.subr.bf16.mxu0 0
      %499 = vmatpush1.bf16.msra.mxu0 0
      %500 = vmatprep.subr.bf16.mxu0 0
      %501 = vmatpush1.bf16.msra.mxu0 0
      %502 = vmatprep.subr.bf16.mxu0 0
      %503 = vmatpush1.bf16.msra.mxu0 0
      %504 = vmatprep.subr.bf16.mxu0 0
      %505 = vmatpush1.bf16.msra.mxu0 0
      %506 = vmatprep.subr.bf16.mxu0 0
      %507 = vmatpush1.bf16.msra.mxu0 0
      %508 = vmatprep.subr.bf16.mxu0 0
      %509 = vmatpush1.bf16.msra.mxu0 0
      %510 = vmatprep.subr.bf16.mxu0 0
      %511 = vmatpush1.bf16.msra.mxu0 0
      %512 = vmatprep.subr.bf16.mxu0 0
      %513 = vmatpush1.bf16.msra.mxu0 0
      %514 = vmatprep.subr.bf16.mxu0 0
      %515 = vmatpush1.bf16.msra.mxu0 0
      %516 = vmatprep.subr.bf16.mxu0 0
      %517 = vmatpush1.bf16.msra.mxu0 0
      %518 = vmatprep.subr.bf16.mxu0 0
      %519 = vmatpush1.bf16.msra.mxu0 0
      %520 = vmatprep.mubr.bf16.mxu0 0
      %521 = vmatmul.mubr.bf16.gmra.mrb[0].mxu0 %v486
      %v522 = vpop.f32.mrb[0].mxu0
      %v523 = vadd.f32 0.0, %v522
      %v524 = vpop.f32.mrb[0].mxu0
      %v525 = vpop.f32.mrb[0].mxu0
      %v526 = vpop.f32.mrb[0].mxu0
      %527 = vdwg.mxu0
      %v530 = vunpack.c.l.b16 %v461
      %v531 = vunpack.c.l.b16 %v462
      %v532 = vpack.c.b16 %v531, %v530
      %v535 = vsel %vm484, %v459, 0
      %537 = vmatprep.subr.bf16.mxu0 0
      %538 = vmatpush1.bf16.msra.mxu0 %v532
      %539 = vmatprep.subr.bf16.mxu0 0
      %540 = vmatpush1.bf16.msra.mxu0 0
      %541 = vmatprep.subr.bf16.mxu0 0
      %542 = vmatpush1.bf16.msra.mxu0 0
      %543 = vmatprep.subr.bf16.mxu0 0
      %544 = vmatpush1.bf16.msra.mxu0 0
      %545 = vmatprep.subr.bf16.mxu0 0
      %546 = vmatpush1.bf16.msra.mxu0 0
      %547 = vmatprep.subr.bf16.mxu0 0
      %548 = vmatpush1.bf16.msra.mxu0 0
      %549 = vmatprep.subr.bf16.mxu0 0
      %550 = vmatpush1.bf16.msra.mxu0 0
      %551 = vmatprep.subr.bf16.mxu0 0
      %552 = vmatpush1.bf16.msra.mxu0 0
      %553 = vmatprep.subr.bf16.mxu0 0
      %554 = vmatpush1.bf16.msra.mxu0 0
      %555 = vmatprep.subr.bf16.mxu0 0
      %556 = vmatpush1.bf16.msra.mxu0 0
      %557 = vmatprep.subr.bf16.mxu0 0
      %558 = vmatpush1.bf16.msra.mxu0 0
      %559 = vmatprep.subr.bf16.mxu0 0
      %560 = vmatpush1.bf16.msra.mxu0 0
      %561 = vmatprep.subr.bf16.mxu0 0
      %562 = vmatpush1.bf16.msra.mxu0 0
      %563 = vmatprep.subr.bf16.mxu0 0
      %564 = vmatpush1.bf16.msra.mxu0 0
      %565 = vmatprep.subr.bf16.mxu0 0
      %566 = vmatpush1.bf16.msra.mxu0 0
      %567 = vmatprep.subr.bf16.mxu0 0
      %568 = vmatpush1.bf16.msra.mxu0 0
      %569 = vmatprep.mubr.bf16.mxu0 0
      %570 = vmatmul.mubr.bf16.gmra.mrb[0].mxu0 %v535
      %v571 = vpop.f32.mrb[0].mxu0
      %v572 = vadd.f32 %v523, %v571
      %v573 = vpop.f32.mrb[0].mxu0
      %v574 = vpop.f32.mrb[0].mxu0
      %v575 = vpop.f32.mrb[0].mxu0
      %576 = vdwg.mxu0
      %v577 = vld [vmem:[%s413] sm:$0xf]
      %v578 = vld [vmem:[%s413 + $0x4] sm:$0x1]
      %s579 = scalar_lea.vmem %s4, 16
      %v580 = vld [vmem:[%s579] sm:$0xf]
      %v581 = vld [vmem:[%s579 + $0x4] sm:$0xf]
      %v584 = vunpack.c.l.b16 %v580
      %v585 = vunpack.c.l.b16 %v581
      %v586 = vpack.c.b16 %v585, %v584
      %v589 = vsel %vm484, %v577, 0
      %591 = vmatprep.subr.bf16.mxu0 0
      %592 = vmatpush1.bf16.msra.mxu0 %v586
      %593 = vmatprep.subr.bf16.mxu0 0
      %594 = vmatpush1.bf16.msra.mxu0 0
      %595 = vmatprep.subr.bf16.mxu0 0
      %596 = vmatpush1.bf16.msra.mxu0 0
      %597 = vmatprep.subr.bf16.mxu0 0
      %598 = vmatpush1.bf16.msra.mxu0 0
      %599 = vmatprep.subr.bf16.mxu0 0
      %600 = vmatpush1.bf16.msra.mxu0 0
      %601 = vmatprep.subr.bf16.mxu0 0
      %602 = vmatpush1.bf16.msra.mxu0 0
      %603 = vmatprep.subr.bf16.mxu0 0
      %604 = vmatpush1.bf16.msra.mxu0 0
      %605 = vmatprep.subr.bf16.mxu0 0
      %606 = vmatpush1.bf16.msra.mxu0 0
      %607 = vmatprep.subr.bf16.mxu0 0
      %608 = vmatpush1.bf16.msra.mxu0 0
      %609 = vmatprep.subr.bf16.mxu0 0
      %610 = vmatpush1.bf16.msra.mxu0 0
      %611 = vmatprep.subr.bf16.mxu0 0
      %612 = vmatpush1.bf16.msra.mxu0 0
      %613 = vmatprep.subr.bf16.mxu0 0
      %614 = vmatpush1.bf16.msra.mxu0 0
      %615 = vmatprep.subr.bf16.mxu0 0
      %616 = vmatpush1.bf16.msra.mxu0 0
      %617 = vmatprep.subr.bf16.mxu0 0
      %618 = vmatpush1.bf16.msra.mxu0 0
      %619 = vmatprep.subr.bf16.mxu0 0
      %620 = vmatpush1.bf16.msra.mxu0 0
      %621 = vmatprep.subr.bf16.mxu0 0
      %622 = vmatpush1.bf16.msra.mxu0 0
      %623 = vmatprep.mubr.bf16.mxu0 0
      %624 = vmatmul.mubr.bf16.gmra.mrb[0].mxu0 %v589
      %v625 = vpop.f32.mrb[0].mxu0
      %v626 = vadd.f32 0.0, %v625
      %v627 = vpop.f32.mrb[0].mxu0
      %v628 = vpop.f32.mrb[0].mxu0
      %v629 = vpop.f32.mrb[0].mxu0
      %630 = vdwg.mxu0
      %v631 = vadd.f32 %v572, %v626
      %s632 = scalar_lea.vmem %s4, 24
      %v633 = vld [vmem:[%s632] sm:$0xf]
      %v634 = vld [vmem:[%s632 + $0x4] sm:$0xf]
      %v637 = vunpack.c.l.b16 %v577
      %v638 = vunpack.c.l.b16 %v578
      %v639 = vpack.c.b16 %v638, %v637
      %v641 = vshrl.u32 %v639, 16
      %v643 = vshll.u32 %v639, 16
      %v645 = vrot.slane %v643, 1
      %v646 = vor.u32 %v641, %v645
      %v649 = vunpack.c.l.b16 %v633
      %v650 = vunpack.c.l.b16 %v634
      %v651 = vpack.c.b16 %v650, %v649
      %v654 = vsel %vm484, %v646, 0
      %656 = vmatprep.subr.bf16.mxu0 0
      %657 = vmatpush1.bf16.msra.mxu0 %v651
      %658 = vmatprep.subr.bf16.mxu0 0
      %659 = vmatpush1.bf16.msra.mxu0 0
      %660 = vmatprep.subr.bf16.mxu0 0
      %661 = vmatpush1.bf16.msra.mxu0 0
      %662 = vmatprep.subr.bf16.mxu0 0
      %663 = vmatpush1.bf16.msra.mxu0 0
      %664 = vmatprep.subr.bf16.mxu0 0
      %665 = vmatpush1.bf16.msra.mxu0 0
      %666 = vmatprep.subr.bf16.mxu0 0
      %667 = vmatpush1.bf16.msra.mxu0 0
      %668 = vmatprep.subr.bf16.mxu0 0
      %669 = vmatpush1.bf16.msra.mxu0 0
      %670 = vmatprep.subr.bf16.mxu0 0
      %671 = vmatpush1.bf16.msra.mxu0 0
      %672 = vmatprep.subr.bf16.mxu0 0
      %673 = vmatpush1.bf16.msra.mxu0 0
      %674 = vmatprep.subr.bf16.mxu0 0
      %675 = vmatpush1.bf16.msra.mxu0 0
      %676 = vmatprep.subr.bf16.mxu0 0
      %677 = vmatpush1.bf16.msra.mxu0 0
      %678 = vmatprep.subr.bf16.mxu0 0
      %679 = vmatpush1.bf16.msra.mxu0 0
      %680 = vmatprep.subr.bf16.mxu0 0
      %681 = vmatpush1.bf16.msra.mxu0 0
      %682 = vmatprep.subr.bf16.mxu0 0
      %683 = vmatpush1.bf16.msra.mxu0 0
      %684 = vmatprep.subr.bf16.mxu0 0
      %685 = vmatpush1.bf16.msra.mxu0 0
      %686 = vmatprep.subr.bf16.mxu0 0
      %687 = vmatpush1.bf16.msra.mxu0 0
      %688 = vmatprep.mubr.bf16.mxu0 0
      %689 = vmatmul.mubr.bf16.gmra.mrb[0].mxu0 %v654
      %v690 = vpop.f32.mrb[0].mxu0
      %v691 = vadd.f32 0.0, %v690
      %v692 = vpop.f32.mrb[0].mxu0
      %v693 = vpop.f32.mrb[0].mxu0
      %v694 = vpop.f32.mrb[0].mxu0
      %695 = vdwg.mxu0
      %v696 = vadd.f32 %v631, %v691
      %v697 = vld [vmem:[%s426] sm:$0xf]
      %v698 = vld [vmem:[%s426 + $0x4] sm:$0x1]
      %s699 = scalar_lea.vmem %s4, 32
      %v700 = vld [vmem:[%s699] sm:$0xf]
      %v701 = vld [vmem:[%s699 + $0x4] sm:$0xf]
      %v704 = vunpack.c.l.b16 %v700
      %v705 = vunpack.c.l.b16 %v701
      %v706 = vpack.c.b16 %v705, %v704
      %v709 = vsel %vm484, %v697, 0
      %711 = vmatprep.subr.bf16.mxu0 0
      %712 = vmatpush1.bf16.msra.mxu0 %v706
      %713 = vmatprep.subr.bf16.mxu0 0
      %714 = vmatpush1.bf16.msra.mxu0 0
      %715 = vmatprep.subr.bf16.mxu0 0
      %716 = vmatpush1.bf16.msra.mxu0 0
      %717 = vmatprep.subr.bf16.mxu0 0
      %718 = vmatpush1.bf16.msra.mxu0 0
      %719 = vmatprep.subr.bf16.mxu0 0
      %720 = vmatpush1.bf16.msra.mxu0 0
      %721 = vmatprep.subr.bf16.mxu0 0
      %722 = vmatpush1.bf16.msra.mxu0 0
      %723 = vmatprep.subr.bf16.mxu0 0
      %724 = vmatpush1.bf16.msra.mxu0 0
      %725 = vmatprep.subr.bf16.mxu0 0
      %726 = vmatpush1.bf16.msra.mxu0 0
      %727 = vmatprep.subr.bf16.mxu0 0
      %728 = vmatpush1.bf16.msra.mxu0 0
      %729 = vmatprep.subr.bf16.mxu0 0
      %730 = vmatpush1.bf16.msra.mxu0 0
      %731 = vmatprep.subr.bf16.mxu0 0
      %732 = vmatpush1.bf16.msra.mxu0 0
      %733 = vmatprep.subr.bf16.mxu0 0
      %734 = vmatpush1.bf16.msra.mxu0 0
      %735 = vmatprep.subr.bf16.mxu0 0
      %736 = vmatpush1.bf16.msra.mxu0 0
      %737 = vmatprep.subr.bf16.mxu0 0
      %738 = vmatpush1.bf16.msra.mxu0 0
      %739 = vmatprep.subr.bf16.mxu0 0
      %740 = vmatpush1.bf16.msra.mxu0 0
      %741 = vmatprep.subr.bf16.mxu0 0
      %742 = vmatpush1.bf16.msra.mxu0 0
      %743 = vmatprep.mubr.bf16.mxu0 0
      %744 = vmatmul.mubr.bf16.gmra.mrb[0].mxu0 %v709
      %v745 = vpop.f32.mrb[0].mxu0
      %v746 = vadd.f32 0.0, %v745
      %v747 = vpop.f32.mrb[0].mxu0
      %v748 = vpop.f32.mrb[0].mxu0
      %v749 = vpop.f32.mrb[0].mxu0
      %750 = vdwg.mxu0
      %v751 = vadd.f32 %v696, %v746
      %s752 = scalar_lea.vmem %s4, 40
      %v753 = vld [vmem:[%s752] sm:$0xf]
      %v754 = vld [vmem:[%s752 + $0x4] sm:$0xf]
      %v757 = vunpack.c.l.b16 %v697
      %v758 = vunpack.c.l.b16 %v698
      %v759 = vpack.c.b16 %v758, %v757
      %v761 = vshrl.u32 %v759, 16
      %v763 = vshll.u32 %v759, 16
      %v765 = vrot.slane %v763, 1
      %v766 = vor.u32 %v761, %v765
      %v769 = vunpack.c.l.b16 %v753
      %v770 = vunpack.c.l.b16 %v754
      %v771 = vpack.c.b16 %v770, %v769
      %v774 = vsel %vm484, %v766, 0
      %776 = vmatprep.subr.bf16.mxu0 0
      %777 = vmatpush1.bf16.msra.mxu0 %v771
      %778 = vmatprep.subr.bf16.mxu0 0
      %779 = vmatpush1.bf16.msra.mxu0 0
      %780 = vmatprep.subr.bf16.mxu0 0
      %781 = vmatpush1.bf16.msra.mxu0 0
      %782 = vmatprep.subr.bf16.mxu0 0
      %783 = vmatpush1.bf16.msra.mxu0 0
      %784 = vmatprep.subr.bf16.mxu0 0
      %785 = vmatpush1.bf16.msra.mxu0 0
      %786 = vmatprep.subr.bf16.mxu0 0
      %787 = vmatpush1.bf16.msra.mxu0 0
      %788 = vmatprep.subr.bf16.mxu0 0
      %789 = vmatpush1.bf16.msra.mxu0 0
      %790 = vmatprep.subr.bf16.mxu0 0
      %791 = vmatpush1.bf16.msra.mxu0 0
      %792 = vmatprep.subr.bf16.mxu0 0
      %793 = vmatpush1.bf16.msra.mxu0 0
      %794 = vmatprep.subr.bf16.mxu0 0
      %795 = vmatpush1.bf16.msra.mxu0 0
      %796 = vmatprep.subr.bf16.mxu0 0
      %797 = vmatpush1.bf16.msra.mxu0 0
      %798 = vmatprep.subr.bf16.mxu0 0
      %799 = vmatpush1.bf16.msra.mxu0 0
      %800 = vmatprep.subr.bf16.mxu0 0
      %801 = vmatpush1.bf16.msra.mxu0 0
      %802 = vmatprep.subr.bf16.mxu0 0
      %803 = vmatpush1.bf16.msra.mxu0 0
      %804 = vmatprep.subr.bf16.mxu0 0
      %805 = vmatpush1.bf16.msra.mxu0 0
      %806 = vmatprep.subr.bf16.mxu0 0
      %807 = vmatpush1.bf16.msra.mxu0 0
      %808 = vmatprep.mubr.bf16.mxu0 0
      %809 = vmatmul.mubr.bf16.gmra.mrb[0].mxu0 %v774
      %v810 = vpop.f32.mrb[0].mxu0
      %v811 = vadd.f32 0.0, %v810
      %v812 = vpop.f32.mrb[0].mxu0
      %v813 = vpop.f32.mrb[0].mxu0
      %v814 = vpop.f32.mrb[0].mxu0
      %815 = vdwg.mxu0
      %v816 = vadd.f32 %v751, %v811
      %v817 = vld [vmem:[%s439] sm:$0xf]
      %v818 = vld [vmem:[%s439 + $0x4] sm:$0x1]
      %s819 = scalar_lea.vmem %s4, 48
      %v820 = vld [vmem:[%s819] sm:$0xf]
      %v821 = vld [vmem:[%s819 + $0x4] sm:$0xf]
      %v824 = vunpack.c.l.b16 %v820
      %v825 = vunpack.c.l.b16 %v821
      %v826 = vpack.c.b16 %v825, %v824
      %v829 = vsel %vm484, %v817, 0
      %831 = vmatprep.subr.bf16.mxu0 0
      %832 = vmatpush1.bf16.msra.mxu0 %v826
      %833 = vmatprep.subr.bf16.mxu0 0
      %834 = vmatpush1.bf16.msra.mxu0 0
      %835 = vmatprep.subr.bf16.mxu0 0
      %836 = vmatpush1.bf16.msra.mxu0 0
      %837 = vmatprep.subr.bf16.mxu0 0
      %838 = vmatpush1.bf16.msra.mxu0 0
      %839 = vmatprep.subr.bf16.mxu0 0
      %840 = vmatpush1.bf16.msra.mxu0 0
      %841 = vmatprep.subr.bf16.mxu0 0
      %842 = vmatpush1.bf16.msra.mxu0 0
      %843 = vmatprep.subr.bf16.mxu0 0
      %844 = vmatpush1.bf16.msra.mxu0 0
      %845 = vmatprep.subr.bf16.mxu0 0
      %846 = vmatpush1.bf16.msra.mxu0 0
      %847 = vmatprep.subr.bf16.mxu0 0
      %848 = vmatpush1.bf16.msra.mxu0 0
      %849 = vmatprep.subr.bf16.mxu0 0
      %850 = vmatpush1.bf16.msra.mxu0 0
      %851 = vmatprep.subr.bf16.mxu0 0
      %852 = vmatpush1.bf16.msra.mxu0 0
      %853 = vmatprep.subr.bf16.mxu0 0
      %854 = vmatpush1.bf16.msra.mxu0 0
      %855 = vmatprep.subr.bf16.mxu0 0
      %856 = vmatpush1.bf16.msra.mxu0 0
      %857 = vmatprep.subr.bf16.mxu0 0
      %858 = vmatpush1.bf16.msra.mxu0 0
      %859 = vmatprep.subr.bf16.mxu0 0
      %860 = vmatpush1.bf16.msra.mxu0 0
      %861 = vmatprep.subr.bf16.mxu0 0
      %862 = vmatpush1.bf16.msra.mxu0 0
      %863 = vmatprep.mubr.bf16.mxu0 0
      %864 = vmatmul.mubr.bf16.gmra.mrb[0].mxu0 %v829
      %v865 = vpop.f32.mrb[0].mxu0
      %v866 = vadd.f32 0.0, %v865
      %v867 = vpop.f32.mrb[0].mxu0
      %v868 = vpop.f32.mrb[0].mxu0
      %v869 = vpop.f32.mrb[0].mxu0
      %870 = vdwg.mxu0
      %v871 = vadd.f32 %v816, %v866
      %s872 = scalar_lea.vmem %s4, 56
      %v873 = vld [vmem:[%s872] sm:$0xf]
      %v874 = vld [vmem:[%s872 + $0x4] sm:$0xf]
      %v877 = vunpack.c.l.b16 %v817
      %v878 = vunpack.c.l.b16 %v818
      %v879 = vpack.c.b16 %v878, %v877
      %v881 = vshrl.u32 %v879, 16
      %v883 = vshll.u32 %v879, 16
      %v885 = vrot.slane %v883, 1
      %v886 = vor.u32 %v881, %v885
      %v889 = vunpack.c.l.b16 %v873
      %v890 = vunpack.c.l.b16 %v874
      %v891 = vpack.c.b16 %v890, %v889
      %v894 = vsel %vm484, %v886, 0
      %896 = vmatprep.subr.bf16.mxu0 0
      %897 = vmatpush1.bf16.msra.mxu0 %v891
      %898 = vmatprep.subr.bf16.mxu0 0
      %899 = vmatpush1.bf16.msra.mxu0 0
      %900 = vmatprep.subr.bf16.mxu0 0
      %901 = vmatpush1.bf16.msra.mxu0 0
      %902 = vmatprep.subr.bf16.mxu0 0
      %903 = vmatpush1.bf16.msra.mxu0 0
      %904 = vmatprep.subr.bf16.mxu0 0
      %905 = vmatpush1.bf16.msra.mxu0 0
      %906 = vmatprep.subr.bf16.mxu0 0
      %907 = vmatpush1.bf16.msra.mxu0 0
      %908 = vmatprep.subr.bf16.mxu0 0
      %909 = vmatpush1.bf16.msra.mxu0 0
      %910 = vmatprep.subr.bf16.mxu0 0
      %911 = vmatpush1.bf16.msra.mxu0 0
      %912 = vmatprep.subr.bf16.mxu0 0
      %913 = vmatpush1.bf16.msra.mxu0 0
      %914 = vmatprep.subr.bf16.mxu0 0
      %915 = vmatpush1.bf16.msra.mxu0 0
      %916 = vmatprep.subr.bf16.mxu0 0
      %917 = vmatpush1.bf16.msra.mxu0 0
      %918 = vmatprep.subr.bf16.mxu0 0
      %919 = vmatpush1.bf16.msra.mxu0 0
      %920 = vmatprep.subr.bf16.mxu0 0
      %921 = vmatpush1.bf16.msra.mxu0 0
      %922 = vmatprep.subr.bf16.mxu0 0
      %923 = vmatpush1.bf16.msra.mxu0 0
      %924 = vmatprep.subr.bf16.mxu0 0
      %925 = vmatpush1.bf16.msra.mxu0 0
      %926 = vmatprep.subr.bf16.mxu0 0
      %927 = vmatpush1.bf16.msra.mxu0 0
      %928 = vmatprep.mubr.bf16.mxu0 0
      %929 = vmatmul.mubr.bf16.gmra.mrb[0].mxu0 %v894
      %v930 = vpop.f32.mrb[0].mxu0
      %v931 = vadd.f32 0.0, %v930
      %v932 = vpop.f32.mrb[0].mxu0
      %v933 = vpop.f32.mrb[0].mxu0
      %v934 = vpop.f32.mrb[0].mxu0
      %935 = vdwg.mxu0
      %v936 = vadd.f32 %v871, %v931
      %937 = vst.msk [vmem:[%s449] sm:$0xff] %vm484, %v936
      %v938 = vsel %vm484, %v936, 0.0
      %v939 = vrot.slane %v938, 4
      %v940 = vadd.f32 %v938, %v939
      %v941 = vrot.slane %v940, 2
      %v942 = vadd.f32 %v940, %v941
      %v943 = vrot.slane %v942, 1
      %v944 = vadd.f32 %v942, %v943
      %v945 = vmul.f32 %v936, %v936
      %v946 = vsel %vm484, %v945, 0.0
      %v947 = vrot.slane %v946, 4
      %v948 = vadd.f32 %v946, %v947
      %v949 = vrot.slane %v948, 2
      %v950 = vadd.f32 %v948, %v949
      %v951 = vrot.slane %v950, 1
      %v952 = vadd.f32 %v950, %v951
      %vm953 = vcmask 1040384
      %v954 = vsel %vm953, %v944, %v952
      %vm955 = vcmask 123904
      %956 = vst.msk [vmem:[%s457] sm:$0x3] %vm955, %v954
      %p957 = scmp.lt.s32.totalorder %s22, 1
      %s958 = scalar_select %p957, %s22, 1
      %p959 = scmp.lt.s32.totalorder %s23, 7
      %s960 = scalar_select %p959, %s23, 7
      %s961 = smul.addr %s958, 8
      %s962 = sadd.s32 %s960, %s961
      %s963 = smul.addr %s962, 8
      %s964 = scalar_lea.vmem %s5, %s963
      %p965 = scmp.lt.s32.totalorder %s22, 1
      %s966 = scalar_select %p965, %s22, 1
      %p967 = scmp.lt.s32.totalorder %s23, 7
      %s968 = scalar_select %p967, %s23, 7
      %s969 = smul.addr %s966, 8
      %s970 = sadd.s32 %s968, %s969
      %s971 = smul.addr %s970, 2
      %s972 = scalar_lea.vmem %s6, %s971
      // Predicated region
      $region41: #{nlayer_discriminator_forward.9} parent=39 // pred_check
        %p973 = pneg %p197
      $region42: #{nlayer_discriminator_forward.9} parent=39 // pred_check_branch
        %975 = sbr.rel (%p973) target = $region44
      $region43: #{nlayer_discriminator_forward.9} parent=39 // pred_region
        _
      $region44: #{nlayer_discriminator_forward.9} parent=39 // pred_fallthru
        _
      // Predicated region
      $region45: #{nlayer_discriminator_forward.9} parent=39 // pred_check
        %p976 = pneg %p225
      $region46: #{nlayer_discriminator_forward.9} parent=39 // pred_check_branch
        %978 = sbr.rel (%p976) target = $region48
      $region47: #{nlayer_discriminator_forward.9} parent=39 // pred_region
        _
      $region48: #{nlayer_discriminator_forward.9} parent=39 // pred_fallthru
        _
    $region40: #{nlayer_discriminator_forward.9} parent=5 // pred_fallthru
      _
    %p979 = scmp.le.s32.totalorder 2, %s13
    // Predicated region
    $region49: #{nlayer_discriminator_forward.9} parent=5 // pred_check
      %p980 = pneg %p979
    $region50: #{nlayer_discriminator_forward.9} parent=5 // pred_check_branch
      %982 = sbr.rel (%p980) target = $region52
    $region51: #{nlayer_discriminator_forward.9} parent=5 // pred_region
      %s983 = ssub.s32 %s13, 2
      // Predicated region
      $region53: #{nlayer_discriminator_forward.9} parent=51 // pred_check
        %p984 = pneg %p203
      $region54: #{nlayer_discriminator_forward.9} parent=51 // pred_check_branch
        %986 = sbr.rel (%p984) target = $region56
      $region55: #{nlayer_discriminator_forward.9} parent=51 // pred_region
        %p987 = scmp.lt.s32.totalorder %s24, 1
        %s988 = scalar_select %p987, %s24, 1
        %p989 = scmp.lt.s32.totalorder %s25, 7
        %s990 = scalar_select %p989, %s25, 7
        %s991 = smul.addr %s988, 8
        %s992 = sadd.s32 %s990, %s991
        %s993 = smul.addr %s992, 8
        %s994 = scalar_lea.vmem %s5, %s993
      $region56: #{nlayer_discriminator_forward.9} parent=51 // pred_fallthru
        _
      // Predicated region
      $region57: #{nlayer_discriminator_forward.9} parent=51 // pred_check
        %p995 = pneg %p231
      $region58: #{nlayer_discriminator_forward.9} parent=51 // pred_check_branch
        %997 = sbr.rel (%p995) target = $region60
      $region59: #{nlayer_discriminator_forward.9} parent=51 // pred_region
        %p998 = scmp.lt.s32.totalorder %s24, 1
        %s999 = scalar_select %p998, %s24, 1
        %p1000 = scmp.lt.s32.totalorder %s25, 7
        %s1001 = scalar_select %p1000, %s25, 7
        %s1002 = smul.addr %s999, 8
        %s1003 = sadd.s32 %s1001, %s1002
        %s1004 = smul.addr %s1003, 2
        %s1005 = scalar_lea.vmem %s6, %s1004
      $region60: #{nlayer_discriminator_forward.9} parent=51 // pred_fallthru
        _
    $region52: #{nlayer_discriminator_forward.9} parent=5 // pred_fallthru
      _
  $region6: #{nlayer_discriminator_forward.9} parent=0 // loop_footer
    %s17 = sadd.s32 1, %s13
  $region7: #{nlayer_discriminator_forward.9} parent=0 // loop_footer_branch
    %12 = sbr.rel target = $region3
  $region8: #{nlayer_discriminator_forward.9} parent=0 // loop_exit
    _

// kernel: nlayer_discriminator_forward.10
$region0: #{nlayer_discriminator_forward.10}
  #allocation0 [shape = 'u32[]', space=smem, size = 0x4, offset = 0x4, fixed_abs, tag = 'smem constant byte address 0x4 - core index']
  #allocation1 [shape = 'u32[144,128]{1,0:T(1,128)}', space=vmem, size = 0x12000, scoped, tag = 'internal scratch']
  %s0 = inlined_call_operand.vmem [shape: f32[128,16], index: 0, kind: input, shape index: {}]
  %s1 = inlined_call_operand.vmem [shape: f32[1,16], index: 1, kind: input, shape index: {}]
  %s2 = inlined_call_operand.vmem [shape: f32[1,16], index: 2, kind: input, shape index: {}]
  %s3 = inlined_call_operand.vmem [shape: bf16[128,16], index: 3, kind: output, shape index: {}]
  %s4 = sld [smem:[#allocation0]]
  $region22: #{nlayer_discriminator_forward.10} parent=0
    _
  %s6 = ssub.s32 1, %s4
  %s7 = scalar_select 0, %s6, %s4
  // Predicated region
  $region2: #{nlayer_discriminator_forward.10} parent=0 // pred_check
    _
  $region3: #{nlayer_discriminator_forward.10} parent=0 // pred_check_branch
    %9 = sbr.rel (0) target = $region5
  $region4: #{nlayer_discriminator_forward.10} parent=0 // pred_region
    _
  $region5: #{nlayer_discriminator_forward.10} parent=0 // pred_fallthru
    _
  // Predicated region
  $region6: #{nlayer_discriminator_forward.10} parent=0 // pred_check
    _
  $region7: #{nlayer_discriminator_forward.10} parent=0 // pred_check_branch
    %11 = sbr.rel (0) target = $region9
  $region8: #{nlayer_discriminator_forward.10} parent=0 // pred_region
    _
  $region9: #{nlayer_discriminator_forward.10} parent=0 // pred_fallthru
    _
  // Predicated region
  $region10: #{nlayer_discriminator_forward.10} parent=0 // pred_check
    _
  $region11: #{nlayer_discriminator_forward.10} parent=0 // pred_check_branch
    %13 = sbr.rel (0) target = $region13
  $region12: #{nlayer_discriminator_forward.10} parent=0 // pred_region
    _
  $region13: #{nlayer_discriminator_forward.10} parent=0 // pred_fallthru
    _
  %v14 = vld [vmem:[%s0] sm:$0xff]
  %v15 = vld [vmem:[%s0 + $0x8] sm:$0xff]
  %v16 = vld [vmem:[%s0 + $0x10] sm:$0xff]
  %v17 = vld [vmem:[%s0 + $0x18] sm:$0xff]
  %v18 = vld [vmem:[%s0 + $0x20] sm:$0xff]
  %v19 = vld [vmem:[%s0 + $0x28] sm:$0xff]
  %v20 = vld [vmem:[%s0 + $0x30] sm:$0xff]
  %v21 = vld [vmem:[%s0 + $0x38] sm:$0xff]
  %v22 = vld [vmem:[%s0 + $0x40] sm:$0xff]
  %v23 = vld [vmem:[%s0 + $0x48] sm:$0xff]
  %v24 = vld [vmem:[%s0 + $0x50] sm:$0xff]
  %v25 = vld [vmem:[%s0 + $0x58] sm:$0xff]
  %v26 = vld [vmem:[%s0 + $0x60] sm:$0xff]
  %v27 = vld [vmem:[%s0 + $0x68] sm:$0xff]
  %v28 = vld [vmem:[%s0 + $0x70] sm:$0xff]
  %v29 = vld [vmem:[%s0 + $0x78] sm:$0xff]
  %v30 = vld [vmem:[%s1] sm:$0x1]
  %v32 = vlaneseq
  %v33 = vshrl.u32 %v32, 7
  %v34 = vsub.s32 0, %v33
  %v35 = vrot.slane %v30, %v34
  %v37 = vmul.f32 %v14, %v35
  %v38 = vmul.f32 %v15, %v35
  %v39 = vmul.f32 %v16, %v35
  %v40 = vmul.f32 %v17, %v35
  %v41 = vmul.f32 %v18, %v35
  %v42 = vmul.f32 %v19, %v35
  %v43 = vmul.f32 %v20, %v35
  %v44 = vmul.f32 %v21, %v35
  %v45 = vmul.f32 %v22, %v35
  %v46 = vmul.f32 %v23, %v35
  %v47 = vmul.f32 %v24, %v35
  %v48 = vmul.f32 %v25, %v35
  %v49 = vmul.f32 %v26, %v35
  %v50 = vmul.f32 %v27, %v35
  %v51 = vmul.f32 %v28, %v35
  %v52 = vmul.f32 %v29, %v35
  %v53 = vld [vmem:[%s2] sm:$0x1]
  %v55 = vlaneseq
  %v56 = vshrl.u32 %v55, 7
  %v57 = vsub.s32 0, %v56
  %v58 = vrot.slane %v53, %v57
  %v60 = vadd.f32 %v37, %v58
  %v61 = vadd.f32 %v38, %v58
  %v62 = vadd.f32 %v39, %v58
  %v63 = vadd.f32 %v40, %v58
  %v64 = vadd.f32 %v41, %v58
  %v65 = vadd.f32 %v42, %v58
  %v66 = vadd.f32 %v43, %v58
  %v67 = vadd.f32 %v44, %v58
  %v68 = vadd.f32 %v45, %v58
  %v69 = vadd.f32 %v46, %v58
  %v70 = vadd.f32 %v47, %v58
  %v71 = vadd.f32 %v48, %v58
  %v72 = vadd.f32 %v49, %v58
  %v73 = vadd.f32 %v50, %v58
  %v74 = vadd.f32 %v51, %v58
  %v75 = vadd.f32 %v52, %v58
  %vm76 = vcmp.ge.f32.partialorder %v60, 0.0
  %vm77 = vcmp.ge.f32.partialorder %v61, 0.0
  %vm78 = vcmp.ge.f32.partialorder %v62, 0.0
  %vm79 = vcmp.ge.f32.partialorder %v63, 0.0
  %vm80 = vcmp.ge.f32.partialorder %v64, 0.0
  %vm81 = vcmp.ge.f32.partialorder %v65, 0.0
  %vm82 = vcmp.ge.f32.partialorder %v66, 0.0
  %vm83 = vcmp.ge.f32.partialorder %v67, 0.0
  %vm84 = vcmp.ge.f32.partialorder %v68, 0.0
  %vm85 = vcmp.ge.f32.partialorder %v69, 0.0
  %vm86 = vcmp.ge.f32.partialorder %v70, 0.0
  %vm87 = vcmp.ge.f32.partialorder %v71, 0.0
  %vm88 = vcmp.ge.f32.partialorder %v72, 0.0
  %vm89 = vcmp.ge.f32.partialorder %v73, 0.0
  %vm90 = vcmp.ge.f32.partialorder %v74, 0.0
  %vm91 = vcmp.ge.f32.partialorder %v75, 0.0
  %v92 = vmul.f32 %v60, 0.2
  %v93 = vmul.f32 %v61, 0.2
  %v94 = vmul.f32 %v62, 0.2
  %v95 = vmul.f32 %v63, 0.2
  %v96 = vmul.f32 %v64, 0.2
  %v97 = vmul.f32 %v65, 0.2
  %v98 = vmul.f32 %v66, 0.2
  %v99 = vmul.f32 %v67, 0.2
  %v100 = vmul.f32 %v68, 0.2
  %v101 = vmul.f32 %v69, 0.2
  %v102 = vmul.f32 %v70, 0.2
  %v103 = vmul.f32 %v71, 0.2
  %v104 = vmul.f32 %v72, 0.2
  %v105 = vmul.f32 %v73, 0.2
  %v106 = vmul.f32 %v74, 0.2
  %v107 = vmul.f32 %v75, 0.2
  %v108 = vsel %vm76, %v60, %v92
  %v109 = vsel %vm77, %v61, %v93
  %v110 = vsel %vm78, %v62, %v94
  %v111 = vsel %vm79, %v63, %v95
  %v112 = vsel %vm80, %v64, %v96
  %v113 = vsel %vm81, %v65, %v97
  %v114 = vsel %vm82, %v66, %v98
  %v115 = vsel %vm83, %v67, %v99
  %v116 = vsel %vm84, %v68, %v100
  %v117 = vsel %vm85, %v69, %v101
  %v118 = vsel %vm86, %v70, %v102
  %v119 = vsel %vm87, %v71, %v103
  %v120 = vsel %vm88, %v72, %v104
  %v121 = vsel %vm89, %v73, %v105
  %v122 = vsel %vm90, %v74, %v106
  %v123 = vsel %vm91, %v75, %v107
  %v124 = vpack.c.bf16 %v109, %v108
  %v125 = vpack.c.bf16 %v111, %v110
  %v126 = vpack.c.bf16 %v113, %v112
  %v127 = vpack.c.bf16 %v115, %v114
  %v128 = vpack.c.bf16 %v117, %v116
  %v129 = vpack.c.bf16 %v119, %v118
  %v130 = vpack.c.bf16 %v121, %v120
  %v131 = vpack.c.bf16 %v123, %v122
  %v140 = vunpack.c.l.b16 %v124
  %v141 = vunpack.c.h.b16 %v124
  %v142 = vunpack.c.l.b16 %v125
  %v143 = vunpack.c.h.b16 %v125
  %v144 = vunpack.c.l.b16 %v126
  %v145 = vunpack.c.h.b16 %v126
  %v146 = vunpack.c.l.b16 %v127
  %v147 = vunpack.c.h.b16 %v127
  %v148 = vunpack.c.l.b16 %v128
  %v149 = vunpack.c.h.b16 %v128
  %v150 = vunpack.c.l.b16 %v129
  %v151 = vunpack.c.h.b16 %v129
  %v152 = vunpack.c.l.b16 %v130
  %v153 = vunpack.c.h.b16 %v130
  %v154 = vunpack.c.l.b16 %v131
  %v155 = vunpack.c.h.b16 %v131
  %v156 = vpack.c.b16 %v140, %v140
  %v157 = vpack.c.b16 %v141, %v141
  %v158 = vpack.c.b16 %v142, %v142
  %v159 = vpack.c.b16 %v143, %v143
  %v160 = vpack.c.b16 %v144, %v144
  %v161 = vpack.c.b16 %v145, %v145
  %v162 = vpack.c.b16 %v146, %v146
  %v163 = vpack.c.b16 %v147, %v147
  %v164 = vpack.c.b16 %v148, %v148
  %v165 = vpack.c.b16 %v149, %v149
  %v166 = vpack.c.b16 %v150, %v150
  %v167 = vpack.c.b16 %v151, %v151
  %v168 = vpack.c.b16 %v152, %v152
  %v169 = vpack.c.b16 %v153, %v153
  %v170 = vpack.c.b16 %v154, %v154
  %v171 = vpack.c.b16 %v155, %v155
  %vm188 = vcmask 125952
  %189 = vst.msk [vmem:[%s3] sm:$0xf] %vm188, %v156
  %190 = vst.msk [vmem:[%s3 + $0x4] sm:$0xf] %vm188, %v157
  %191 = vst.msk [vmem:[%s3 + $0x8] sm:$0xf] %vm188, %v158
  %192 = vst.msk [vmem:[%s3 + $0xc] sm:$0xf] %vm188, %v159
  %193 = vst.msk [vmem:[%s3 + $0x10] sm:$0xf] %vm188, %v160
  %194 = vst.msk [vmem:[%s3 + $0x14] sm:$0xf] %vm188, %v161
  %195 = vst.msk [vmem:[%s3 + $0x18] sm:$0xf] %vm188, %v162
  %196 = vst.msk [vmem:[%s3 + $0x1c] sm:$0xf] %vm188, %v163
  %197 = vst.msk [vmem:[%s3 + $0x20] sm:$0xf] %vm188, %v164
  %198 = vst.msk [vmem:[%s3 + $0x24] sm:$0xf] %vm188, %v165
  %199 = vst.msk [vmem:[%s3 + $0x28] sm:$0xf] %vm188, %v166
  %200 = vst.msk [vmem:[%s3 + $0x2c] sm:$0xf] %vm188, %v167
  %201 = vst.msk [vmem:[%s3 + $0x30] sm:$0xf] %vm188, %v168
  %202 = vst.msk [vmem:[%s3 + $0x34] sm:$0xf] %vm188, %v169
  %203 = vst.msk [vmem:[%s3 + $0x38] sm:$0xf] %vm188, %v170
  %204 = vst.msk [vmem:[%s3 + $0x3c] sm:$0xf] %vm188, %v171
  // Predicated region
  $region14: #{nlayer_discriminator_forward.10} parent=0 // pred_check
    _
  $region15: #{nlayer_discriminator_forward.10} parent=0 // pred_check_branch
    %206 = sbr.rel (0) target = $region17
  $region16: #{nlayer_discriminator_forward.10} parent=0 // pred_region
    _
  $region17: #{nlayer_discriminator_forward.10} parent=0 // pred_fallthru
    _
  // Predicated region
  $region18: #{nlayer_discriminator_forward.10} parent=0 // pred_check
    _
  $region19: #{nlayer_discriminator_forward.10} parent=0 // pred_check_branch
    %208 = sbr.rel (0) target = $region21
  $region20: #{nlayer_discriminator_forward.10} parent=0 // pred_region
    _
  $region21: #{nlayer_discriminator_forward.10} parent=0 // pred_fallthru
    _

// kernel: nlayer_discriminator_forward.11
$region0: #{nlayer_discriminator_forward.11}
  #allocation0 [shape = 'u32[]', space=smem, size = 0x4, offset = 0x4, fixed_abs, tag = 'smem constant byte address 0x4 - core index']
  #allocation1 [shape = 'u32[144,128]{1,0:T(1,128)}', space=vmem, size = 0x12000, scoped, tag = 'internal scratch']
  %s0 = inlined_call_operand.vmem [shape: bf16[2,10,5,32], index: 0, kind: input, shape index: {}, may-alias: {0,1,2,3}]
  %s1 = inlined_call_operand.vmem [shape: bf16[2,10,5,32], index: 1, kind: input, shape index: {}, may-alias: {0,1,2,3}]
  %s2 = inlined_call_operand.vmem [shape: bf16[2,10,5,32], index: 2, kind: input, shape index: {}, may-alias: {0,1,2,3}]
  %s3 = inlined_call_operand.vmem [shape: bf16[2,10,5,32], index: 3, kind: input, shape index: {}, may-alias: {0,1,2,3}]
  %s4 = inlined_call_operand.vmem [shape: bf16[4,2,32,32], index: 4, kind: input, shape index: {}]
  %s5 = inlined_call_operand.vmem [shape: f32[2,4,4,32], index: 5, kind: output, shape index: {0}]
  %s6 = inlined_call_operand.vmem [shape: f32[2,4,2,32], index: 6, kind: output, shape index: {1}]
  %7 = xla_tuple %s5, %s6
  %s8 = sld [smem:[#allocation0]]
  $region61: #{nlayer_discriminator_forward.11} parent=0
    _
  %s10 = ssub.s32 1, %s8
  %s11 = scalar_select 0, %s10, %s8
  loop: start=0, step=1, limit=10
  $region2: #{nlayer_discriminator_forward.11} parent=0 // loop_pre_header
    _
  $region3: #{nlayer_discriminator_forward.11} parent=0 // loop_header
    %s13 = sphi 0, %s17
    %p14 = scmp.ge.s32.totalorder %s13, 10
    %s20 = sphi 0, %s32
    %s21 = sphi 0, %s28
    %s22 = sphi 0, %s20
    %s23 = sphi 0, %s21
    %s24 = sphi 0, %s22
    %s25 = sphi 0, %s23
    %s39 = sphi 0, %s41
    %s42 = sphi 0, %s39
    %s43 = sphi 0, %s42
    %s59 = sphi 0, %s43
    %s71 = sphi 0, %s73
    %s74 = sphi 0, %s71
    %s75 = sphi 0, %s74
    %s91 = sphi 0, %s75
    %s103 = sphi 0, %s105
    %s106 = sphi 0, %s103
    %s107 = sphi 0, %s106
    %s123 = sphi 0, %s107
    %s135 = sphi 0, %s137
    %s138 = sphi 0, %s135
    %s139 = sphi 0, %s138
    %s155 = sphi 0, %s139
    %s159 = sphi 0, %s159
    %s161 = sphi 0, %s159
    %s162 = sphi 0, %s161
    %s176 = sphi 0, %s162
    %s184 = sphi 0, %s186
    %s187 = sphi 0, %s184
    %s188 = sphi 0, %s187
    %s204 = sphi 0, %s188
    %s212 = sphi 0, %s214
    %s215 = sphi 0, %s212
    %s216 = sphi 0, %s215
    %s232 = sphi 0, %s216
  $region4: #{nlayer_discriminator_forward.11} parent=0 // loop_header_branch
    %16 = sbr.rel (%p14) target = $region8
  $region5: #{nlayer_discriminator_forward.11} parent=0 // loop_body
    %s18 = ssub.s32 %s13, 1
    %s19 = ssub.s32 %s13, 2
    %s26 = sadd.s32 1, %s21
    %p27 = scmp.ge.s32.totalorder %s26, 4
    %s28 = scalar_select %p27, 0, %s26
    %s29 = sadd.s32 1, %s20
    %s30 = scalar_select %p27, %s29, %s20
    %p31 = scmp.ge.s32.totalorder %s30, 2
    %s32 = scalar_select %p31, 0, %s30
    %s33 = smul.u32 %s21, 2
    %s34 = smul.u32 %s28, 2
    %s35 = ssub.s32 %s20, %s32
    %s36 = ssub.s32 %s33, %s34
    %s37 = sor.u32 %s35, %s36
    %p38 = scmp.eq.s32.totalorder %s37, 0
    %s40 = sadd.s32 %s39, 1
    %s41 = scalar_select %p38, %s39, %s40
    %p44 = pneg %p38
    %p45 = scmp.eq.s32.totalorder %s13, 7
    %p46 = por %p44, %p45
    %p47 = scmp.ne.s32.totalorder %s39, %s42
    %p48 = scmp.eq.s32.totalorder %s13, 0
    %p49 = por %p47, %p48
    %p50 = scmp.ne.s32.totalorder %s39, %s42
    %p51 = scmp.eq.s32.totalorder %s18, 7
    %p52 = por %p50, %p51
    %p53 = scmp.ne.s32.totalorder %s42, %s43
    %p54 = scmp.eq.s32.totalorder %s18, 0
    %p55 = por %p53, %p54
    %p56 = scmp.ne.s32.totalorder %s42, %s43
    %p57 = scmp.eq.s32.totalorder %s19, 7
    %p58 = por %p56, %p57
    %p60 = scmp.ne.s32.totalorder %s43, %s59
    %p61 = scmp.eq.s32.totalorder %s19, 0
    %p62 = por %p60, %p61
    %s63 = smul.u32 %s21, 2
    %s64 = sadd.s32 %s63, 1
    %s65 = smul.u32 %s28, 2
    %s66 = sadd.s32 %s65, 1
    %s67 = ssub.s32 %s20, %s32
    %s68 = ssub.s32 %s64, %s66
    %s69 = sor.u32 %s67, %s68
    %p70 = scmp.eq.s32.totalorder %s69, 0
    %s72 = sadd.s32 %s71, 1
    %s73 = scalar_select %p70, %s71, %s72
    %p76 = pneg %p70
    %p77 = scmp.eq.s32.totalorder %s13, 7
    %p78 = por %p76, %p77
    %p79 = scmp.ne.s32.totalorder %s71, %s74
    %p80 = scmp.eq.s32.totalorder %s13, 0
    %p81 = por %p79, %p80
    %p82 = scmp.ne.s32.totalorder %s71, %s74
    %p83 = scmp.eq.s32.totalorder %s18, 7
    %p84 = por %p82, %p83
    %p85 = scmp.ne.s32.totalorder %s74, %s75
    %p86 = scmp.eq.s32.totalorder %s18, 0
    %p87 = por %p85, %p86
    %p88 = scmp.ne.s32.totalorder %s74, %s75
    %p89 = scmp.eq.s32.totalorder %s19, 7
    %p90 = por %p88, %p89
    %p92 = scmp.ne.s32.totalorder %s75, %s91
    %p93 = scmp.eq.s32.totalorder %s19, 0
    %p94 = por %p92, %p93
    %s95 = smul.u32 %s21, 2
    %s96 = sadd.s32 %s95, 2
    %s97 = smul.u32 %s28, 2
    %s98 = sadd.s32 %s97, 2
    %s99 = ssub.s32 %s20, %s32
    %s100 = ssub.s32 %s96, %s98
    %s101 = sor.u32 %s99, %s100
    %p102 = scmp.eq.s32.totalorder %s101, 0
    %s104 = sadd.s32 %s103, 1
    %s105 = scalar_select %p102, %s103, %s104
    %p108 = pneg %p102
    %p109 = scmp.eq.s32.totalorder %s13, 7
    %p110 = por %p108, %p109
    %p111 = scmp.ne.s32.totalorder %s103, %s106
    %p112 = scmp.eq.s32.totalorder %s13, 0
    %p113 = por %p111, %p112
    %p114 = scmp.ne.s32.totalorder %s103, %s106
    %p115 = scmp.eq.s32.totalorder %s18, 7
    %p116 = por %p114, %p115
    %p117 = scmp.ne.s32.totalorder %s106, %s107
    %p118 = scmp.eq.s32.totalorder %s18, 0
    %p119 = por %p117, %p118
    %p120 = scmp.ne.s32.totalorder %s106, %s107
    %p121 = scmp.eq.s32.totalorder %s19, 7
    %p122 = por %p120, %p121
    %p124 = scmp.ne.s32.totalorder %s107, %s123
    %p125 = scmp.eq.s32.totalorder %s19, 0
    %p126 = por %p124, %p125
    %s127 = smul.u32 %s21, 2
    %s128 = sadd.s32 %s127, 3
    %s129 = smul.u32 %s28, 2
    %s130 = sadd.s32 %s129, 3
    %s131 = ssub.s32 %s20, %s32
    %s132 = ssub.s32 %s128, %s130
    %s133 = sor.u32 %s131, %s132
    %p134 = scmp.eq.s32.totalorder %s133, 0
    %s136 = sadd.s32 %s135, 1
    %s137 = scalar_select %p134, %s135, %s136
    %p140 = pneg %p134
    %p141 = scmp.eq.s32.totalorder %s13, 7
    %p142 = por %p140, %p141
    %p143 = scmp.ne.s32.totalorder %s135, %s138
    %p144 = scmp.eq.s32.totalorder %s13, 0
    %p145 = por %p143, %p144
    %p146 = scmp.ne.s32.totalorder %s135, %s138
    %p147 = scmp.eq.s32.totalorder %s18, 7
    %p148 = por %p146, %p147
    %p149 = scmp.ne.s32.totalorder %s138, %s139
    %p150 = scmp.eq.s32.totalorder %s18, 0
    %p151 = por %p149, %p150
    %p152 = scmp.ne.s32.totalorder %s138, %s139
    %p153 = scmp.eq.s32.totalorder %s19, 7
    %p154 = por %p152, %p153
    %p156 = scmp.ne.s32.totalorder %s139, %s155
    %p157 = scmp.eq.s32.totalorder %s19, 0
    %p158 = por %p156, %p157
    %s160 = sadd.s32 %s159, 1
    %p163 = scmp.eq.s32.totalorder %s13, 7
    %p164 = scmp.ne.s32.totalorder %s159, %s161
    %p165 = scmp.eq.s32.totalorder %s13, 0
    %p166 = por %p164, %p165
    %p167 = scmp.ne.s32.totalorder %s159, %s161
    %p168 = scmp.eq.s32.totalorder %s18, 7
    %p169 = por %p167, %p168
    %p170 = scmp.ne.s32.totalorder %s161, %s162
    %p171 = scmp.eq.s32.totalorder %s18, 0
    %p172 = por %p170, %p171
    %p173 = scmp.ne.s32.totalorder %s161, %s162
    %p174 = scmp.eq.s32.totalorder %s19, 7
    %p175 = por %p173, %p174
    %p177 = scmp.ne.s32.totalorder %s162, %s176
    %p178 = scmp.eq.s32.totalorder %s19, 0
    %p179 = por %p177, %p178
    %s180 = ssub.s32 %s20, %s32
    %s181 = ssub.s32 %s21, %s28
    %s182 = sor.u32 %s180, %s181
    %p183 = scmp.eq.s32.totalorder %s182, 0
    %s185 = sadd.s32 %s184, 1
    %s186 = scalar_select %p183, %s184, %s185
    %p189 = pneg %p183
    %p190 = scmp.eq.s32.totalorder %s13, 7
    %p191 = por %p189, %p190
    %p192 = scmp.ne.s32.totalorder %s184, %s187
    %p193 = scmp.eq.s32.totalorder %s13, 0
    %p194 = por %p192, %p193
    %p195 = scmp.ne.s32.totalorder %s184, %s187
    %p196 = scmp.eq.s32.totalorder %s18, 7
    %p197 = por %p195, %p196
    %p198 = scmp.ne.s32.totalorder %s187, %s188
    %p199 = scmp.eq.s32.totalorder %s18, 0
    %p200 = por %p198, %p199
    %p201 = scmp.ne.s32.totalorder %s187, %s188
    %p202 = scmp.eq.s32.totalorder %s19, 7
    %p203 = por %p201, %p202
    %p205 = scmp.ne.s32.totalorder %s188, %s204
    %p206 = scmp.eq.s32.totalorder %s19, 0
    %p207 = por %p205, %p206
    %s208 = ssub.s32 %s20, %s32
    %s209 = ssub.s32 %s21, %s28
    %s210 = sor.u32 %s208, %s209
    %p211 = scmp.eq.s32.totalorder %s210, 0
    %s213 = sadd.s32 %s212, 1
    %s214 = scalar_select %p211, %s212, %s213
    %p217 = pneg %p211
    %p218 = scmp.eq.s32.totalorder %s13, 7
    %p219 = por %p217, %p218
    %p220 = scmp.ne.s32.totalorder %s212, %s215
    %p221 = scmp.eq.s32.totalorder %s13, 0
    %p222 = por %p220, %p221
    %p223 = scmp.ne.s32.totalorder %s212, %s215
    %p224 = scmp.eq.s32.totalorder %s18, 7
    %p225 = por %p223, %p224
    %p226 = scmp.ne.s32.totalorder %s215, %s216
    %p227 = scmp.eq.s32.totalorder %s18, 0
    %p228 = por %p226, %p227
    %p229 = scmp.ne.s32.totalorder %s215, %s216
    %p230 = scmp.eq.s32.totalorder %s19, 7
    %p231 = por %p229, %p230
    %p233 = scmp.ne.s32.totalorder %s216, %s232
    %p234 = scmp.eq.s32.totalorder %s19, 0
    %p235 = por %p233, %p234
    %p236 = scmp.le.s32.totalorder 1, %s13
    %p237 = scmp.lt.s32.totalorder %s13, 9
    %p238 = pnand %p236, %p237
    %p239 = pneg %p238
    // Predicated region
    $region9: #{nlayer_discriminator_forward.11} parent=5 // pred_check
      _
    $region10: #{nlayer_discriminator_forward.11} parent=5 // pred_check_branch
      %241 = sbr.rel (%p238) target = $region12
    $region11: #{nlayer_discriminator_forward.11} parent=5 // pred_region
      %s242 = ssub.s32 %s13, 1
      // Predicated region
      $region13: #{nlayer_discriminator_forward.11} parent=11 // pred_check
        %p243 = pneg %p172
      $region14: #{nlayer_discriminator_forward.11} parent=11 // pred_check_branch
        %245 = sbr.rel (%p243) target = $region16
      $region15: #{nlayer_discriminator_forward.11} parent=11 // pred_region
        _
      $region16: #{nlayer_discriminator_forward.11} parent=11 // pred_fallthru
        _
    $region12: #{nlayer_discriminator_forward.11} parent=5 // pred_fallthru
      _
    %p246 = scmp.lt.s32.totalorder %s13, 8
    // Predicated region
    $region17: #{nlayer_discriminator_forward.11} parent=5 // pred_check
      %p247 = pneg %p246
    $region18: #{nlayer_discriminator_forward.11} parent=5 // pred_check_branch
      %249 = sbr.rel (%p247) target = $region20
    $region19: #{nlayer_discriminator_forward.11} parent=5 // pred_region
      // Predicated region
      $region21: #{nlayer_discriminator_forward.11} parent=19 // pred_check
        %p250 = pneg %p49
      $region22: #{nlayer_discriminator_forward.11} parent=19 // pred_check_branch
        %252 = sbr.rel (%p250) target = $region24
      $region23: #{nlayer_discriminator_forward.11} parent=19 // pred_region
        %s253 = smul.u32 %s21, 2
        %p254 = scmp.lt.s32.totalorder %s20, 1
        %s255 = scalar_select %p254, %s20, 1
        %p256 = scmp.lt.s32.totalorder %s253, 9
        %s257 = scalar_select %p256, %s253, 9
        %s258 = smul.addr %s255, 10
        %s259 = sadd.s32 %s257, %s258
        %s260 = smul.addr %s259, 4
        %s261 = scalar_lea.vmem %s0, %s260
        %s262 = smul.u32 %s21, 2
      $region24: #{nlayer_discriminator_forward.11} parent=19 // pred_fallthru
        _
      // Predicated region
      $region25: #{nlayer_discriminator_forward.11} parent=19 // pred_check
        %p263 = pneg %p81
      $region26: #{nlayer_discriminator_forward.11} parent=19 // pred_check_branch
        %265 = sbr.rel (%p263) target = $region28
      $region27: #{nlayer_discriminator_forward.11} parent=19 // pred_region
        %s266 = smul.u32 %s21, 2
        %s267 = sadd.s32 %s266, 1
        %p268 = scmp.lt.s32.totalorder %s20, 1
        %s269 = scalar_select %p268, %s20, 1
        %p270 = scmp.lt.s32.totalorder %s267, 9
        %s271 = scalar_select %p270, %s267, 9
        %s272 = smul.addr %s269, 10
        %s273 = sadd.s32 %s271, %s272
        %s274 = smul.addr %s273, 4
        %s275 = scalar_lea.vmem %s1, %s274
        %s276 = smul.u32 %s21, 2
        %s277 = sadd.s32 %s276, 1
      $region28: #{nlayer_discriminator_forward.11} parent=19 // pred_fallthru
        _
      // Predicated region
      $region29: #{nlayer_discriminator_forward.11} parent=19 // pred_check
        %p278 = pneg %p113
      $region30: #{nlayer_discriminator_forward.11} parent=19 // pred_check_branch
        %280 = sbr.rel (%p278) target = $region32
      $region31: #{nlayer_discriminator_forward.11} parent=19 // pred_region
        %s281 = smul.u32 %s21, 2
        %s282 = sadd.s32 %s281, 2
        %p283 = scmp.lt.s32.totalorder %s20, 1
        %s284 = scalar_select %p283, %s20, 1
        %p285 = scmp.lt.s32.totalorder %s282, 9
        %s286 = scalar_select %p285, %s282, 9
        %s287 = smul.addr %s284, 10
        %s288 = sadd.s32 %s286, %s287
        %s289 = smul.addr %s288, 4
        %s290 = scalar_lea.vmem %s2, %s289
        %s291 = smul.u32 %s21, 2
        %s292 = sadd.s32 %s291, 2
      $region32: #{nlayer_discriminator_forward.11} parent=19 // pred_fallthru
        _
      // Predicated region
      $region33: #{nlayer_discriminator_forward.11} parent=19 // pred_check
        %p293 = pneg %p145
      $region34: #{nlayer_discriminator_forward.11} parent=19 // pred_check_branch
        %295 = sbr.rel (%p293) target = $region36
      $region35: #{nlayer_discriminator_forward.11} parent=19 // pred_region
        %s296 = smul.u32 %s21, 2
        %s297 = sadd.s32 %s296, 3
        %p298 = scmp.lt.s32.totalorder %s20, 1
        %s299 = scalar_select %p298, %s20, 1
        %p300 = scmp.lt.s32.totalorder %s297, 9
        %s301 = scalar_select %p300, %s297, 9
        %s302 = smul.addr %s299, 10
        %s303 = sadd.s32 %s301, %s302
        %s304 = smul.addr %s303, 4
        %s305 = scalar_lea.vmem %s3, %s304
        %s306 = smul.u32 %s21, 2
        %s307 = sadd.s32 %s306, 3
      $region36: #{nlayer_discriminator_forward.11} parent=19 // pred_fallthru
        _
    $region20: #{nlayer_discriminator_forward.11} parent=5 // pred_fallthru
      _
    %p308 = scmp.le.s32.totalorder 1, %s13
    %p309 = scmp.lt.s32.totalorder %s13, 9
    %p310 = pnand %p308, %p309
    %p311 = pneg %p310
    // Predicated region
    $region37: #{nlayer_discriminator_forward.11} parent=5 // pred_check
      _
    $region38: #{nlayer_discriminator_forward.11} parent=5 // pred_check_branch
      %313 = sbr.rel (%p310) target = $region40
    $region39: #{nlayer_discriminator_forward.11} parent=5 // pred_region
      %s314 = ssub.s32 %s13, 1
      %s315 = smul.u32 %s23, 2
      %p316 = scmp.lt.s32.totalorder %s22, 1
      %s317 = scalar_select %p316, %s22, 1
      %p318 = scmp.lt.s32.totalorder %s315, 9
      %s319 = scalar_select %p318, %s315, 9
      %s320 = smul.addr %s317, 10
      %s321 = sadd.s32 %s319, %s320
      %s322 = smul.addr %s321, 4
      %s323 = scalar_lea.vmem %s0, %s322
      %p324 = pneg %p55
      %p325 = pneg %p52
      %s326 = smul.u32 %s23, 2
      %s327 = sadd.s32 %s326, 1
      %p328 = scmp.lt.s32.totalorder %s22, 1
      %s329 = scalar_select %p328, %s22, 1
      %p330 = scmp.lt.s32.totalorder %s327, 9
      %s331 = scalar_select %p330, %s327, 9
      %s332 = smul.addr %s329, 10
      %s333 = sadd.s32 %s331, %s332
      %s334 = smul.addr %s333, 4
      %s335 = scalar_lea.vmem %s1, %s334
      %p336 = pneg %p87
      %p337 = pneg %p84
      %s338 = smul.u32 %s23, 2
      %s339 = sadd.s32 %s338, 2
      %p340 = scmp.lt.s32.totalorder %s22, 1
      %s341 = scalar_select %p340, %s22, 1
      %p342 = scmp.lt.s32.totalorder %s339, 9
      %s343 = scalar_select %p342, %s339, 9
      %s344 = smul.addr %s341, 10
      %s345 = sadd.s32 %s343, %s344
      %s346 = smul.addr %s345, 4
      %s347 = scalar_lea.vmem %s2, %s346
      %p348 = pneg %p119
      %p349 = pneg %p116
      %s350 = smul.u32 %s23, 2
      %s351 = sadd.s32 %s350, 3
      %p352 = scmp.lt.s32.totalorder %s22, 1
      %s353 = scalar_select %p352, %s22, 1
      %p354 = scmp.lt.s32.totalorder %s351, 9
      %s355 = scalar_select %p354, %s351, 9
      %s356 = smul.addr %s353, 10
      %s357 = sadd.s32 %s355, %s356
      %s358 = smul.addr %s357, 4
      %s359 = scalar_lea.vmem %s3, %s358
      %p360 = pneg %p151
      %p361 = pneg %p148
      %p362 = pneg %p172
      %p363 = pneg %p169
      %p364 = pneg %p200
      %p365 = pneg %p197
      %p366 = scmp.lt.s32.totalorder %s22, 1
      %s367 = scalar_select %p366, %s22, 1
      %p368 = scmp.lt.s32.totalorder %s23, 3
      %s369 = scalar_select %p368, %s23, 3
      %s370 = smul.addr %s367, 4
      %s371 = sadd.s32 %s369, %s370
      %s372 = smul.addr %s371, 4
      %s373 = scalar_lea.vmem %s5, %s372
      %p374 = pneg %p228
      %p375 = pneg %p225
      %p376 = scmp.lt.s32.totalorder %s22, 1
      %s377 = scalar_select %p376, %s22, 1
      %p378 = scmp.lt.s32.totalorder %s23, 3
      %s379 = scalar_select %p378, %s23, 3
      %s380 = smul.addr %s377, 4
      %s381 = sadd.s32 %s379, %s380
      %s382 = smul.addr %s381, 2
      %s383 = scalar_lea.vmem %s6, %s382
      %s384 = smul.u32 %s23, 2
      %p385 = scmp.lt.s32.totalorder %s22, 1
      %s386 = scalar_select %p385, %s22, 1
      %p387 = scmp.lt.s32.totalorder %s384, 9
      %s388 = scalar_select %p387, %s384, 9
      %s389 = smul.addr %s386, 10
      %s390 = sadd.s32 %s388, %s389
      %s391 = smul.addr %s390, 4
      %s392 = scalar_lea.vmem %s0, %s391
      %s393 = smul.u32 %s23, 2
      %s394 = smul.u32 %s23, 2
      %s395 = sadd.s32 %s394, 1
      %p396 = scmp.lt.s32.totalorder %s22, 1
      %s397 = scalar_select %p396, %s22, 1
      %p398 = scmp.lt.s32.totalorder %s395, 9
      %s399 = scalar_select %p398, %s395, 9
      %s400 = smul.addr %s397, 10
      %s401 = sadd.s32 %s399, %s400
      %s402 = smul.addr %s401, 4
      %s403 = scalar_lea.vmem %s1, %s402
      %s404 = smul.u32 %s23, 2
      %s405 = sadd.s32 %s404, 1
      %s406 = smul.u32 %s23, 2
      %s407 = sadd.s32 %s406, 2
      %p408 = scmp.lt.s32.totalorder %s22, 1
      %s409 = scalar_select %p408, %s22, 1
      %p410 = scmp.lt.s32.totalorder %s407, 9
      %s411 = scalar_select %p410, %s407, 9
      %s412 = smul.addr %s409, 10
      %s413 = sadd.s32 %s411, %s412
      %s414 = smul.addr %s413, 4
      %s415 = scalar_lea.vmem %s2, %s414
      %s416 = smul.u32 %s23, 2
      %s417 = sadd.s32 %s416, 2
      %s418 = smul.u32 %s23, 2
      %s419 = sadd.s32 %s418, 3
      %p420 = scmp.lt.s32.totalorder %s22, 1
      %s421 = scalar_select %p420, %s22, 1
      %p422 = scmp.lt.s32.totalorder %s419, 9
      %s423 = scalar_select %p422, %s419, 9
      %s424 = smul.addr %s421, 10
      %s425 = sadd.s32 %s423, %s424
      %s426 = smul.addr %s425, 4
      %s427 = scalar_lea.vmem %s3, %s426
      %s428 = smul.u32 %s23, 2
      %s429 = sadd.s32 %s428, 3
      %p430 = scmp.lt.s32.totalorder %s22, 1
      %s431 = scalar_select %p430, %s22, 1
      %p432 = scmp.lt.s32.totalorder %s23, 3
      %s433 = scalar_select %p432, %s23, 3
      %s434 = smul.addr %s431, 4
      %s435 = sadd.s32 %s433, %s434
      %s436 = smul.addr %s435, 4
      %s437 = scalar_lea.vmem %s5, %s436
      %p438 = scmp.lt.s32.totalorder %s22, 1
      %s439 = scalar_select %p438, %s22, 1
      %p440 = scmp.lt.s32.totalorder %s23, 3
      %s441 = scalar_select %p440, %s23, 3
      %s442 = smul.addr %s439, 4
      %s443 = sadd.s32 %s441, %s442
      %s444 = smul.addr %s443, 2
      %s445 = scalar_lea.vmem %s6, %s444
      %v447 = vld [vmem:[%s392] sm:$0x7]
      %v448 = vld [vmem:[%s4] sm:$0xf]
      %v449 = vld [vmem:[%s4 + $0x4] sm:$0xf]
      %v450 = vld [vmem:[%s4 + $0x8] sm:$0xf]
      %v451 = vld [vmem:[%s4 + $0xc] sm:$0xf]
      %s452 = scalar_lea.vmem %s4, 16
      %v453 = vld [vmem:[%s452] sm:$0xf]
      %v454 = vld [vmem:[%s452 + $0x4] sm:$0xf]
      %v455 = vld [vmem:[%s452 + $0x8] sm:$0xf]
      %v456 = vld [vmem:[%s452 + $0xc] sm:$0xf]
      %v458 = vunpack.c.l.b16 %v447
      %v459 = vpack.c.b16 %v458, %v458
      %v461 = vshrl.u32 %v459, 16
      %v463 = vshll.u32 %v459, 16
      %v465 = vrot.slane %v463, 1
      %v466 = vor.u32 %v461, %v465
      %v471 = vunpack.c.l.b16 %v453
      %v472 = vunpack.c.l.b16 %v454
      %v473 = vunpack.c.l.b16 %v455
      %v474 = vunpack.c.l.b16 %v456
      %v475 = vpack.c.b16 %v472, %v471
      %v476 = vpack.c.b16 %v474, %v473
      %vm479 = vcmask 261120
      %v481 = vsel %vm479, %v466, 0
      %483 = vmatprep.subr.bf16.mxu0 0
      %484 = vmatpush1.bf16.msra.mxu0 %v475
      %485 = vmatprep.subr.bf16.mxu0 0
      %486 = vmatpush1.bf16.msra.mxu0 %v476
      %487 = vmatprep.subr.bf16.mxu0 0
      %488 = vmatpush1.bf16.msra.mxu0 0
      %489 = vmatprep.subr.bf16.mxu0 0
      %490 = vmatpush1.bf16.msra.mxu0 0
      %491 = vmatprep.subr.bf16.mxu0 0
      %492 = vmatpush1.bf16.msra.mxu0 0
      %493 = vmatprep.subr.bf16.mxu0 0
      %494 = vmatpush1.bf16.msra.mxu0 0
      %495 = vmatprep.subr.bf16.mxu0 0
      %496 = vmatpush1.bf16.msra.mxu0 0
      %497 = vmatprep.subr.bf16.mxu0 0
      %498 = vmatpush1.bf16.msra.mxu0 0
      %499 = vmatprep.subr.bf16.mxu0 0
      %500 = vmatpush1.bf16.msra.mxu0 0
      %501 = vmatprep.subr.bf16.mxu0 0
      %502 = vmatpush1.bf16.msra.mxu0 0
      %503 = vmatprep.subr.bf16.mxu0 0
      %504 = vmatpush1.bf16.msra.mxu0 0
      %505 = vmatprep.subr.bf16.mxu0 0
      %506 = vmatpush1.bf16.msra.mxu0 0
      %507 = vmatprep.subr.bf16.mxu0 0
      %508 = vmatpush1.bf16.msra.mxu0 0
      %509 = vmatprep.subr.bf16.mxu0 0
      %510 = vmatpush1.bf16.msra.mxu0 0
      %511 = vmatprep.subr.bf16.mxu0 0
      %512 = vmatpush1.bf16.msra.mxu0 0
      %513 = vmatprep.subr.bf16.mxu0 0
      %514 = vmatpush1.bf16.msra.mxu0 0
      %515 = vmatprep.mubr.bf16.mxu0 0
      %516 = vmatmul.mubr.bf16.gmra.mrb[0].mxu0 %v481
      %v517 = vpop.f32.mrb[0].mxu0
      %v518 = vadd.f32 0.0, %v517
      %v519 = vpop.f32.mrb[0].mxu0
      %v520 = vpop.f32.mrb[0].mxu0
      %v521 = vpop.f32.mrb[0].mxu0
      %522 = vdwg.mxu0
      %v527 = vunpack.c.l.b16 %v448
      %v528 = vunpack.c.l.b16 %v449
      %v529 = vunpack.c.l.b16 %v450
      %v530 = vunpack.c.l.b16 %v451
      %v531 = vpack.c.b16 %v528, %v527
      %v532 = vpack.c.b16 %v530, %v529
      %v536 = vsel %vm479, %v447, 0
      %538 = vmatprep.subr.bf16.mxu0 0
      %539 = vmatpush1.bf16.msra.mxu0 %v531
      %540 = vmatprep.subr.bf16.mxu0 0
      %541 = vmatpush1.bf16.msra.mxu0 %v532
      %542 = vmatprep.subr.bf16.mxu0 0
      %543 = vmatpush1.bf16.msra.mxu0 0
      %544 = vmatprep.subr.bf16.mxu0 0
      %545 = vmatpush1.bf16.msra.mxu0 0
      %546 = vmatprep.subr.bf16.mxu0 0
      %547 = vmatpush1.bf16.msra.mxu0 0
      %548 = vmatprep.subr.bf16.mxu0 0
      %549 = vmatpush1.bf16.msra.mxu0 0
      %550 = vmatprep.subr.bf16.mxu0 0
      %551 = vmatpush1.bf16.msra.mxu0 0
      %552 = vmatprep.subr.bf16.mxu0 0
      %553 = vmatpush1.bf16.msra.mxu0 0
      %554 = vmatprep.subr.bf16.mxu0 0
      %555 = vmatpush1.bf16.msra.mxu0 0
      %556 = vmatprep.subr.bf16.mxu0 0
      %557 = vmatpush1.bf16.msra.mxu0 0
      %558 = vmatprep.subr.bf16.mxu0 0
      %559 = vmatpush1.bf16.msra.mxu0 0
      %560 = vmatprep.subr.bf16.mxu0 0
      %561 = vmatpush1.bf16.msra.mxu0 0
      %562 = vmatprep.subr.bf16.mxu0 0
      %563 = vmatpush1.bf16.msra.mxu0 0
      %564 = vmatprep.subr.bf16.mxu0 0
      %565 = vmatpush1.bf16.msra.mxu0 0
      %566 = vmatprep.subr.bf16.mxu0 0
      %567 = vmatpush1.bf16.msra.mxu0 0
      %568 = vmatprep.subr.bf16.mxu0 0
      %569 = vmatpush1.bf16.msra.mxu0 0
      %570 = vmatprep.mubr.bf16.mxu0 0
      %571 = vmatmul.mubr.bf16.gmra.mrb[0].mxu0 %v536
      %v572 = vpop.f32.mrb[0].mxu0
      %v573 = vadd.f32 %v518, %v572
      %v574 = vpop.f32.mrb[0].mxu0
      %v575 = vpop.f32.mrb[0].mxu0
      %v576 = vpop.f32.mrb[0].mxu0
      %577 = vdwg.mxu0
      %v578 = vld [vmem:[%s403] sm:$0x7]
      %s579 = scalar_lea.vmem %s4, 32
      %v580 = vld [vmem:[%s579] sm:$0xf]
      %v581 = vld [vmem:[%s579 + $0x4] sm:$0xf]
      %v582 = vld [vmem:[%s579 + $0x8] sm:$0xf]
      %v583 = vld [vmem:[%s579 + $0xc] sm:$0xf]
      %v588 = vunpack.c.l.b16 %v580
      %v589 = vunpack.c.l.b16 %v581
      %v590 = vunpack.c.l.b16 %v582
      %v591 = vunpack.c.l.b16 %v583
      %v592 = vpack.c.b16 %v589, %v588
      %v593 = vpack.c.b16 %v591, %v590
      %v597 = vsel %vm479, %v578, 0
      %599 = vmatprep.subr.bf16.mxu0 0
      %600 = vmatpush1.bf16.msra.mxu0 %v592
      %601 = vmatprep.subr.bf16.mxu0 0
      %602 = vmatpush1.bf16.msra.mxu0 %v593
      %603 = vmatprep.subr.bf16.mxu0 0
      %604 = vmatpush1.bf16.msra.mxu0 0
      %605 = vmatprep.subr.bf16.mxu0 0
      %606 = vmatpush1.bf16.msra.mxu0 0
      %607 = vmatprep.subr.bf16.mxu0 0
      %608 = vmatpush1.bf16.msra.mxu0 0
      %609 = vmatprep.subr.bf16.mxu0 0
      %610 = vmatpush1.bf16.msra.mxu0 0
      %611 = vmatprep.subr.bf16.mxu0 0
      %612 = vmatpush1.bf16.msra.mxu0 0
      %613 = vmatprep.subr.bf16.mxu0 0
      %614 = vmatpush1.bf16.msra.mxu0 0
      %615 = vmatprep.subr.bf16.mxu0 0
      %616 = vmatpush1.bf16.msra.mxu0 0
      %617 = vmatprep.subr.bf16.mxu0 0
      %618 = vmatpush1.bf16.msra.mxu0 0
      %619 = vmatprep.subr.bf16.mxu0 0
      %620 = vmatpush1.bf16.msra.mxu0 0
      %621 = vmatprep.subr.bf16.mxu0 0
      %622 = vmatpush1.bf16.msra.mxu0 0
      %623 = vmatprep.subr.bf16.mxu0 0
      %624 = vmatpush1.bf16.msra.mxu0 0
      %625 = vmatprep.subr.bf16.mxu0 0
      %626 = vmatpush1.bf16.msra.mxu0 0
      %627 = vmatprep.subr.bf16.mxu0 0
      %628 = vmatpush1.bf16.msra.mxu0 0
      %629 = vmatprep.subr.bf16.mxu0 0
      %630 = vmatpush1.bf16.msra.mxu0 0
      %631 = vmatprep.mubr.bf16.mxu0 0
      %632 = vmatmul.mubr.bf16.gmra.mrb[0].mxu0 %v597
      %v633 = vpop.f32.mrb[0].mxu0
      %v634 = vadd.f32 0.0, %v633
      %v635 = vpop.f32.mrb[0].mxu0
      %v636 = vpop.f32.mrb[0].mxu0
      %v637 = vpop.f32.mrb[0].mxu0
      %638 = vdwg.mxu0
      %v639 = vadd.f32 %v573, %v634
      %s640 = scalar_lea.vmem %s4, 48
      %v641 = vld [vmem:[%s640] sm:$0xf]
      %v642 = vld [vmem:[%s640 + $0x4] sm:$0xf]
      %v643 = vld [vmem:[%s640 + $0x8] sm:$0xf]
      %v644 = vld [vmem:[%s640 + $0xc] sm:$0xf]
      %v646 = vunpack.c.l.b16 %v578
      %v647 = vpack.c.b16 %v646, %v646
      %v649 = vshrl.u32 %v647, 16
      %v651 = vshll.u32 %v647, 16
      %v653 = vrot.slane %v651, 1
      %v654 = vor.u32 %v649, %v653
      %v659 = vunpack.c.l.b16 %v641
      %v660 = vunpack.c.l.b16 %v642
      %v661 = vunpack.c.l.b16 %v643
      %v662 = vunpack.c.l.b16 %v644
      %v663 = vpack.c.b16 %v660, %v659
      %v664 = vpack.c.b16 %v662, %v661
      %v668 = vsel %vm479, %v654, 0
      %670 = vmatprep.subr.bf16.mxu0 0
      %671 = vmatpush1.bf16.msra.mxu0 %v663
      %672 = vmatprep.subr.bf16.mxu0 0
      %673 = vmatpush1.bf16.msra.mxu0 %v664
      %674 = vmatprep.subr.bf16.mxu0 0
      %675 = vmatpush1.bf16.msra.mxu0 0
      %676 = vmatprep.subr.bf16.mxu0 0
      %677 = vmatpush1.bf16.msra.mxu0 0
      %678 = vmatprep.subr.bf16.mxu0 0
      %679 = vmatpush1.bf16.msra.mxu0 0
      %680 = vmatprep.subr.bf16.mxu0 0
      %681 = vmatpush1.bf16.msra.mxu0 0
      %682 = vmatprep.subr.bf16.mxu0 0
      %683 = vmatpush1.bf16.msra.mxu0 0
      %684 = vmatprep.subr.bf16.mxu0 0
      %685 = vmatpush1.bf16.msra.mxu0 0
      %686 = vmatprep.subr.bf16.mxu0 0
      %687 = vmatpush1.bf16.msra.mxu0 0
      %688 = vmatprep.subr.bf16.mxu0 0
      %689 = vmatpush1.bf16.msra.mxu0 0
      %690 = vmatprep.subr.bf16.mxu0 0
      %691 = vmatpush1.bf16.msra.mxu0 0
      %692 = vmatprep.subr.bf16.mxu0 0
      %693 = vmatpush1.bf16.msra.mxu0 0
      %694 = vmatprep.subr.bf16.mxu0 0
      %695 = vmatpush1.bf16.msra.mxu0 0
      %696 = vmatprep.subr.bf16.mxu0 0
      %697 = vmatpush1.bf16.msra.mxu0 0
      %698 = vmatprep.subr.bf16.mxu0 0
      %699 = vmatpush1.bf16.msra.mxu0 0
      %700 = vmatprep.subr.bf16.mxu0 0
      %701 = vmatpush1.bf16.msra.mxu0 0
      %702 = vmatprep.mubr.bf16.mxu0 0
      %703 = vmatmul.mubr.bf16.gmra.mrb[0].mxu0 %v668
      %v704 = vpop.f32.mrb[0].mxu0
      %v705 = vadd.f32 0.0, %v704
      %v706 = vpop.f32.mrb[0].mxu0
      %v707 = vpop.f32.mrb[0].mxu0
      %v708 = vpop.f32.mrb[0].mxu0
      %709 = vdwg.mxu0
      %v710 = vadd.f32 %v639, %v705
      %v711 = vld [vmem:[%s415] sm:$0x7]
      %s712 = scalar_lea.vmem %s4, 64
      %v713 = vld [vmem:[%s712] sm:$0xf]
      %v714 = vld [vmem:[%s712 + $0x4] sm:$0xf]
      %v715 = vld [vmem:[%s712 + $0x8] sm:$0xf]
      %v716 = vld [vmem:[%s712 + $0xc] sm:$0xf]
      %v721 = vunpack.c.l.b16 %v713
      %v722 = vunpack.c.l.b16 %v714
      %v723 = vunpack.c.l.b16 %v715
      %v724 = vunpack.c.l.b16 %v716
      %v725 = vpack.c.b16 %v722, %v721
      %v726 = vpack.c.b16 %v724, %v723
      %v730 = vsel %vm479, %v711, 0
      %732 = vmatprep.subr.bf16.mxu0 0
      %733 = vmatpush1.bf16.msra.mxu0 %v725
      %734 = vmatprep.subr.bf16.mxu0 0
      %735 = vmatpush1.bf16.msra.mxu0 %v726
      %736 = vmatprep.subr.bf16.mxu0 0
      %737 = vmatpush1.bf16.msra.mxu0 0
      %738 = vmatprep.subr.bf16.mxu0 0
      %739 = vmatpush1.bf16.msra.mxu0 0
      %740 = vmatprep.subr.bf16.mxu0 0
      %741 = vmatpush1.bf16.msra.mxu0 0
      %742 = vmatprep.subr.bf16.mxu0 0
      %743 = vmatpush1.bf16.msra.mxu0 0
      %744 = vmatprep.subr.bf16.mxu0 0
      %745 = vmatpush1.bf16.msra.mxu0 0
      %746 = vmatprep.subr.bf16.mxu0 0
      %747 = vmatpush1.bf16.msra.mxu0 0
      %748 = vmatprep.subr.bf16.mxu0 0
      %749 = vmatpush1.bf16.msra.mxu0 0
      %750 = vmatprep.subr.bf16.mxu0 0
      %751 = vmatpush1.bf16.msra.mxu0 0
      %752 = vmatprep.subr.bf16.mxu0 0
      %753 = vmatpush1.bf16.msra.mxu0 0
      %754 = vmatprep.subr.bf16.mxu0 0
      %755 = vmatpush1.bf16.msra.mxu0 0
      %756 = vmatprep.subr.bf16.mxu0 0
      %757 = vmatpush1.bf16.msra.mxu0 0
      %758 = vmatprep.subr.bf16.mxu0 0
      %759 = vmatpush1.bf16.msra.mxu0 0
      %760 = vmatprep.subr.bf16.mxu0 0
      %761 = vmatpush1.bf16.msra.mxu0 0
      %762 = vmatprep.subr.bf16.mxu0 0
      %763 = vmatpush1.bf16.msra.mxu0 0
      %764 = vmatprep.mubr.bf16.mxu0 0
      %765 = vmatmul.mubr.bf16.gmra.mrb[0].mxu0 %v730
      %v766 = vpop.f32.mrb[0].mxu0
      %v767 = vadd.f32 0.0, %v766
      %v768 = vpop.f32.mrb[0].mxu0
      %v769 = vpop.f32.mrb[0].mxu0
      %v770 = vpop.f32.mrb[0].mxu0
      %771 = vdwg.mxu0
      %v772 = vadd.f32 %v710, %v767
      %s773 = scalar_lea.vmem %s4, 80
      %v774 = vld [vmem:[%s773] sm:$0xf]
      %v775 = vld [vmem:[%s773 + $0x4] sm:$0xf]
      %v776 = vld [vmem:[%s773 + $0x8] sm:$0xf]
      %v777 = vld [vmem:[%s773 + $0xc] sm:$0xf]
      %v779 = vunpack.c.l.b16 %v711
      %v780 = vpack.c.b16 %v779, %v779
      %v782 = vshrl.u32 %v780, 16
      %v784 = vshll.u32 %v780, 16
      %v786 = vrot.slane %v784, 1
      %v787 = vor.u32 %v782, %v786
      %v792 = vunpack.c.l.b16 %v774
      %v793 = vunpack.c.l.b16 %v775
      %v794 = vunpack.c.l.b16 %v776
      %v795 = vunpack.c.l.b16 %v777
      %v796 = vpack.c.b16 %v793, %v792
      %v797 = vpack.c.b16 %v795, %v794
      %v801 = vsel %vm479, %v787, 0
      %803 = vmatprep.subr.bf16.mxu0 0
      %804 = vmatpush1.bf16.msra.mxu0 %v796
      %805 = vmatprep.subr.bf16.mxu0 0
      %806 = vmatpush1.bf16.msra.mxu0 %v797
      %807 = vmatprep.subr.bf16.mxu0 0
      %808 = vmatpush1.bf16.msra.mxu0 0
      %809 = vmatprep.subr.bf16.mxu0 0
      %810 = vmatpush1.bf16.msra.mxu0 0
      %811 = vmatprep.subr.bf16.mxu0 0
      %812 = vmatpush1.bf16.msra.mxu0 0
      %813 = vmatprep.subr.bf16.mxu0 0
      %814 = vmatpush1.bf16.msra.mxu0 0
      %815 = vmatprep.subr.bf16.mxu0 0
      %816 = vmatpush1.bf16.msra.mxu0 0
      %817 = vmatprep.subr.bf16.mxu0 0
      %818 = vmatpush1.bf16.msra.mxu0 0
      %819 = vmatprep.subr.bf16.mxu0 0
      %820 = vmatpush1.bf16.msra.mxu0 0
      %821 = vmatprep.subr.bf16.mxu0 0
      %822 = vmatpush1.bf16.msra.mxu0 0
      %823 = vmatprep.subr.bf16.mxu0 0
      %824 = vmatpush1.bf16.msra.mxu0 0
      %825 = vmatprep.subr.bf16.mxu0 0
      %826 = vmatpush1.bf16.msra.mxu0 0
      %827 = vmatprep.subr.bf16.mxu0 0
      %828 = vmatpush1.bf16.msra.mxu0 0
      %829 = vmatprep.subr.bf16.mxu0 0
      %830 = vmatpush1.bf16.msra.mxu0 0
      %831 = vmatprep.subr.bf16.mxu0 0
      %832 = vmatpush1.bf16.msra.mxu0 0
      %833 = vmatprep.subr.bf16.mxu0 0
      %834 = vmatpush1.bf16.msra.mxu0 0
      %835 = vmatprep.mubr.bf16.mxu0 0
      %836 = vmatmul.mubr.bf16.gmra.mrb[0].mxu0 %v801
      %v837 = vpop.f32.mrb[0].mxu0
      %v838 = vadd.f32 0.0, %v837
      %v839 = vpop.f32.mrb[0].mxu0
      %v840 = vpop.f32.mrb[0].mxu0
      %v841 = vpop.f32.mrb[0].mxu0
      %842 = vdwg.mxu0
      %v843 = vadd.f32 %v772, %v838
      %v844 = vld [vmem:[%s427] sm:$0x7]
      %s845 = scalar_lea.vmem %s4, 96
      %v846 = vld [vmem:[%s845] sm:$0xf]
      %v847 = vld [vmem:[%s845 + $0x4] sm:$0xf]
      %v848 = vld [vmem:[%s845 + $0x8] sm:$0xf]
      %v849 = vld [vmem:[%s845 + $0xc] sm:$0xf]
      %v854 = vunpack.c.l.b16 %v846
      %v855 = vunpack.c.l.b16 %v847
      %v856 = vunpack.c.l.b16 %v848
      %v857 = vunpack.c.l.b16 %v849
      %v858 = vpack.c.b16 %v855, %v854
      %v859 = vpack.c.b16 %v857, %v856
      %v863 = vsel %vm479, %v844, 0
      %865 = vmatprep.subr.bf16.mxu0 0
      %866 = vmatpush1.bf16.msra.mxu0 %v858
      %867 = vmatprep.subr.bf16.mxu0 0
      %868 = vmatpush1.bf16.msra.mxu0 %v859
      %869 = vmatprep.subr.bf16.mxu0 0
      %870 = vmatpush1.bf16.msra.mxu0 0
      %871 = vmatprep.subr.bf16.mxu0 0
      %872 = vmatpush1.bf16.msra.mxu0 0
      %873 = vmatprep.subr.bf16.mxu0 0
      %874 = vmatpush1.bf16.msra.mxu0 0
      %875 = vmatprep.subr.bf16.mxu0 0
      %876 = vmatpush1.bf16.msra.mxu0 0
      %877 = vmatprep.subr.bf16.mxu0 0
      %878 = vmatpush1.bf16.msra.mxu0 0
      %879 = vmatprep.subr.bf16.mxu0 0
      %880 = vmatpush1.bf16.msra.mxu0 0
      %881 = vmatprep.subr.bf16.mxu0 0
      %882 = vmatpush1.bf16.msra.mxu0 0
      %883 = vmatprep.subr.bf16.mxu0 0
      %884 = vmatpush1.bf16.msra.mxu0 0
      %885 = vmatprep.subr.bf16.mxu0 0
      %886 = vmatpush1.bf16.msra.mxu0 0
      %887 = vmatprep.subr.bf16.mxu0 0
      %888 = vmatpush1.bf16.msra.mxu0 0
      %889 = vmatprep.subr.bf16.mxu0 0
      %890 = vmatpush1.bf16.msra.mxu0 0
      %891 = vmatprep.subr.bf16.mxu0 0
      %892 = vmatpush1.bf16.msra.mxu0 0
      %893 = vmatprep.subr.bf16.mxu0 0
      %894 = vmatpush1.bf16.msra.mxu0 0
      %895 = vmatprep.subr.bf16.mxu0 0
      %896 = vmatpush1.bf16.msra.mxu0 0
      %897 = vmatprep.mubr.bf16.mxu0 0
      %898 = vmatmul.mubr.bf16.gmra.mrb[0].mxu0 %v863
      %v899 = vpop.f32.mrb[0].mxu0
      %v900 = vadd.f32 0.0, %v899
      %v901 = vpop.f32.mrb[0].mxu0
      %v902 = vpop.f32.mrb[0].mxu0
      %v903 = vpop.f32.mrb[0].mxu0
      %904 = vdwg.mxu0
      %v905 = vadd.f32 %v843, %v900
      %s906 = scalar_lea.vmem %s4, 112
      %v907 = vld [vmem:[%s906] sm:$0xf]
      %v908 = vld [vmem:[%s906 + $0x4] sm:$0xf]
      %v909 = vld [vmem:[%s906 + $0x8] sm:$0xf]
      %v910 = vld [vmem:[%s906 + $0xc] sm:$0xf]
      %v912 = vunpack.c.l.b16 %v844
      %v913 = vpack.c.b16 %v912, %v912
      %v915 = vshrl.u32 %v913, 16
      %v917 = vshll.u32 %v913, 16
      %v919 = vrot.slane %v917, 1
      %v920 = vor.u32 %v915, %v919
      %v925 = vunpack.c.l.b16 %v907
      %v926 = vunpack.c.l.b16 %v908
      %v927 = vunpack.c.l.b16 %v909
      %v928 = vunpack.c.l.b16 %v910
      %v929 = vpack.c.b16 %v926, %v925
      %v930 = vpack.c.b16 %v928, %v927
      %v934 = vsel %vm479, %v920, 0
      %936 = vmatprep.subr.bf16.mxu0 0
      %937 = vmatpush1.bf16.msra.mxu0 %v929
      %938 = vmatprep.subr.bf16.mxu0 0
      %939 = vmatpush1.bf16.msra.mxu0 %v930
      %940 = vmatprep.subr.bf16.mxu0 0
      %941 = vmatpush1.bf16.msra.mxu0 0
      %942 = vmatprep.subr.bf16.mxu0 0
      %943 = vmatpush1.bf16.msra.mxu0 0
      %944 = vmatprep.subr.bf16.mxu0 0
      %945 = vmatpush1.bf16.msra.mxu0 0
      %946 = vmatprep.subr.bf16.mxu0 0
      %947 = vmatpush1.bf16.msra.mxu0 0
      %948 = vmatprep.subr.bf16.mxu0 0
      %949 = vmatpush1.bf16.msra.mxu0 0
      %950 = vmatprep.subr.bf16.mxu0 0
      %951 = vmatpush1.bf16.msra.mxu0 0
      %952 = vmatprep.subr.bf16.mxu0 0
      %953 = vmatpush1.bf16.msra.mxu0 0
      %954 = vmatprep.subr.bf16.mxu0 0
      %955 = vmatpush1.bf16.msra.mxu0 0
      %956 = vmatprep.subr.bf16.mxu0 0
      %957 = vmatpush1.bf16.msra.mxu0 0
      %958 = vmatprep.subr.bf16.mxu0 0
      %959 = vmatpush1.bf16.msra.mxu0 0
      %960 = vmatprep.subr.bf16.mxu0 0
      %961 = vmatpush1.bf16.msra.mxu0 0
      %962 = vmatprep.subr.bf16.mxu0 0
      %963 = vmatpush1.bf16.msra.mxu0 0
      %964 = vmatprep.subr.bf16.mxu0 0
      %965 = vmatpush1.bf16.msra.mxu0 0
      %966 = vmatprep.subr.bf16.mxu0 0
      %967 = vmatpush1.bf16.msra.mxu0 0
      %968 = vmatprep.mubr.bf16.mxu0 0
      %969 = vmatmul.mubr.bf16.gmra.mrb[0].mxu0 %v934
      %v970 = vpop.f32.mrb[0].mxu0
      %v971 = vadd.f32 0.0, %v970
      %v972 = vpop.f32.mrb[0].mxu0
      %v973 = vpop.f32.mrb[0].mxu0
      %v974 = vpop.f32.mrb[0].mxu0
      %975 = vdwg.mxu0
      %v976 = vadd.f32 %v905, %v971
      %vm977 = vcmask 257024
      %978 = vst.msk [vmem:[%s437] sm:$0xf] %vm977, %v976
      %v979 = vsel %vm977, %v976, 0.0
      %v980 = vrot.slane %v979, 4
      %v981 = vadd.f32 %v979, %v980
      %v982 = vrot.slane %v981, 2
      %v983 = vadd.f32 %v981, %v982
      %v984 = vrot.slane %v983, 1
      %v985 = vadd.f32 %v983, %v984
      %v986 = vmul.f32 %v976, %v976
      %v987 = vsel %vm977, %v986, 0.0
      %v988 = vrot.slane %v987, 4
      %v989 = vadd.f32 %v987, %v988
      %v990 = vrot.slane %v989, 2
      %v991 = vadd.f32 %v989, %v990
      %v992 = vrot.slane %v991, 1
      %v993 = vadd.f32 %v991, %v992
      %vm994 = vcmask 1040384
      %v995 = vsel %vm994, %v985, %v993
      %vm996 = vcmask 254976
      %997 = vst.msk [vmem:[%s445] sm:$0x3] %vm996, %v995
      %p998 = scmp.lt.s32.totalorder %s22, 1
      %s999 = scalar_select %p998, %s22, 1
      %p1000 = scmp.lt.s32.totalorder %s23, 3
      %s1001 = scalar_select %p1000, %s23, 3
      %s1002 = smul.addr %s999, 4
      %s1003 = sadd.s32 %s1001, %s1002
      %s1004 = smul.addr %s1003, 4
      %s1005 = scalar_lea.vmem %s5, %s1004
      %p1006 = scmp.lt.s32.totalorder %s22, 1
      %s1007 = scalar_select %p1006, %s22, 1
      %p1008 = scmp.lt.s32.totalorder %s23, 3
      %s1009 = scalar_select %p1008, %s23, 3
      %s1010 = smul.addr %s1007, 4
      %s1011 = sadd.s32 %s1009, %s1010
      %s1012 = smul.addr %s1011, 2
      %s1013 = scalar_lea.vmem %s6, %s1012
      // Predicated region
      $region41: #{nlayer_discriminator_forward.11} parent=39 // pred_check
        %p1014 = pneg %p197
      $region42: #{nlayer_discriminator_forward.11} parent=39 // pred_check_branch
        %1016 = sbr.rel (%p1014) target = $region44
      $region43: #{nlayer_discriminator_forward.11} parent=39 // pred_region
        _
      $region44: #{nlayer_discriminator_forward.11} parent=39 // pred_fallthru
        _
      // Predicated region
      $region45: #{nlayer_discriminator_forward.11} parent=39 // pred_check
        %p1017 = pneg %p225
      $region46: #{nlayer_discriminator_forward.11} parent=39 // pred_check_branch
        %1019 = sbr.rel (%p1017) target = $region48
      $region47: #{nlayer_discriminator_forward.11} parent=39 // pred_region
        _
      $region48: #{nlayer_discriminator_forward.11} parent=39 // pred_fallthru
        _
    $region40: #{nlayer_discriminator_forward.11} parent=5 // pred_fallthru
      _
    %p1020 = scmp.le.s32.totalorder 2, %s13
    // Predicated region
    $region49: #{nlayer_discriminator_forward.11} parent=5 // pred_check
      %p1021 = pneg %p1020
    $region50: #{nlayer_discriminator_forward.11} parent=5 // pred_check_branch
      %1023 = sbr.rel (%p1021) target = $region52
    $region51: #{nlayer_discriminator_forward.11} parent=5 // pred_region
      %s1024 = ssub.s32 %s13, 2
      // Predicated region
      $region53: #{nlayer_discriminator_forward.11} parent=51 // pred_check
        %p1025 = pneg %p203
      $region54: #{nlayer_discriminator_forward.11} parent=51 // pred_check_branch
        %1027 = sbr.rel (%p1025) target = $region56
      $region55: #{nlayer_discriminator_forward.11} parent=51 // pred_region
        %p1028 = scmp.lt.s32.totalorder %s24, 1
        %s1029 = scalar_select %p1028, %s24, 1
        %p1030 = scmp.lt.s32.totalorder %s25, 3
        %s1031 = scalar_select %p1030, %s25, 3
        %s1032 = smul.addr %s1029, 4
        %s1033 = sadd.s32 %s1031, %s1032
        %s1034 = smul.addr %s1033, 4
        %s1035 = scalar_lea.vmem %s5, %s1034
      $region56: #{nlayer_discriminator_forward.11} parent=51 // pred_fallthru
        _
      // Predicated region
      $region57: #{nlayer_discriminator_forward.11} parent=51 // pred_check
        %p1036 = pneg %p231
      $region58: #{nlayer_discriminator_forward.11} parent=51 // pred_check_branch
        %1038 = sbr.rel (%p1036) target = $region60
      $region59: #{nlayer_discriminator_forward.11} parent=51 // pred_region
        %p1039 = scmp.lt.s32.totalorder %s24, 1
        %s1040 = scalar_select %p1039, %s24, 1
        %p1041 = scmp.lt.s32.totalorder %s25, 3
        %s1042 = scalar_select %p1041, %s25, 3
        %s1043 = smul.addr %s1040, 4
        %s1044 = sadd.s32 %s1042, %s1043
        %s1045 = smul.addr %s1044, 2
        %s1046 = scalar_lea.vmem %s6, %s1045
      $region60: #{nlayer_discriminator_forward.11} parent=51 // pred_fallthru
        _
    $region52: #{nlayer_discriminator_forward.11} parent=5 // pred_fallthru
      _
  $region6: #{nlayer_discriminator_forward.11} parent=0 // loop_footer
    %s17 = sadd.s32 1, %s13
  $region7: #{nlayer_discriminator_forward.11} parent=0 // loop_footer_branch
    %12 = sbr.rel target = $region3
  $region8: #{nlayer_discriminator_forward.11} parent=0 // loop_exit
    _

// kernel: nlayer_discriminator_forward.12
$region0: #{nlayer_discriminator_forward.12}
  #allocation0 [shape = 'u32[]', space=smem, size = 0x4, offset = 0x4, fixed_abs, tag = 'smem constant byte address 0x4 - core index']
  #allocation1 [shape = 'u32[144,128]{1,0:T(1,128)}', space=vmem, size = 0x12000, scoped, tag = 'internal scratch']
  %s0 = inlined_call_operand.vmem [shape: f32[32,32], index: 0, kind: input, shape index: {}]
  %s1 = inlined_call_operand.vmem [shape: f32[1,32], index: 1, kind: input, shape index: {}]
  %s2 = inlined_call_operand.vmem [shape: f32[1,32], index: 2, kind: input, shape index: {}]
  %s3 = inlined_call_operand.vmem [shape: bf16[32,32], index: 3, kind: output, shape index: {}]
  %s4 = sld [smem:[#allocation0]]
  $region22: #{nlayer_discriminator_forward.12} parent=0
    _
  %s6 = ssub.s32 1, %s4
  %s7 = scalar_select 0, %s6, %s4
  // Predicated region
  $region2: #{nlayer_discriminator_forward.12} parent=0 // pred_check
    _
  $region3: #{nlayer_discriminator_forward.12} parent=0 // pred_check_branch
    %9 = sbr.rel (0) target = $region5
  $region4: #{nlayer_discriminator_forward.12} parent=0 // pred_region
    _
  $region5: #{nlayer_discriminator_forward.12} parent=0 // pred_fallthru
    _
  // Predicated region
  $region6: #{nlayer_discriminator_forward.12} parent=0 // pred_check
    _
  $region7: #{nlayer_discriminator_forward.12} parent=0 // pred_check_branch
    %11 = sbr.rel (0) target = $region9
  $region8: #{nlayer_discriminator_forward.12} parent=0 // pred_region
    _
  $region9: #{nlayer_discriminator_forward.12} parent=0 // pred_fallthru
    _
  // Predicated region
  $region10: #{nlayer_discriminator_forward.12} parent=0 // pred_check
    _
  $region11: #{nlayer_discriminator_forward.12} parent=0 // pred_check_branch
    %13 = sbr.rel (0) target = $region13
  $region12: #{nlayer_discriminator_forward.12} parent=0 // pred_region
    _
  $region13: #{nlayer_discriminator_forward.12} parent=0 // pred_fallthru
    _
  %v14 = vld [vmem:[%s0] sm:$0xff]
  %v15 = vld [vmem:[%s0 + $0x8] sm:$0xff]
  %v16 = vld [vmem:[%s0 + $0x10] sm:$0xff]
  %v17 = vld [vmem:[%s0 + $0x18] sm:$0xff]
  %v18 = vld [vmem:[%s1] sm:$0x1]
  %v20 = vlaneseq
  %v21 = vshrl.u32 %v20, 7
  %v22 = vsub.s32 0, %v21
  %v23 = vrot.slane %v18, %v22
  %v25 = vmul.f32 %v14, %v23
  %v26 = vmul.f32 %v15, %v23
  %v27 = vmul.f32 %v16, %v23
  %v28 = vmul.f32 %v17, %v23
  %v29 = vld [vmem:[%s2] sm:$0x1]
  %v31 = vlaneseq
  %v32 = vshrl.u32 %v31, 7
  %v33 = vsub.s32 0, %v32
  %v34 = vrot.slane %v29, %v33
  %v36 = vadd.f32 %v25, %v34
  %v37 = vadd.f32 %v26, %v34
  %v38 = vadd.f32 %v27, %v34
  %v39 = vadd.f32 %v28, %v34
  %vm40 = vcmp.ge.f32.partialorder %v36, 0.0
  %vm41 = vcmp.ge.f32.partialorder %v37, 0.0
  %vm42 = vcmp.ge.f32.partialorder %v38, 0.0
  %vm43 = vcmp.ge.f32.partialorder %v39, 0.0
  %v44 = vmul.f32 %v36, 0.2
  %v45 = vmul.f32 %v37, 0.2
  %v46 = vmul.f32 %v38, 0.2
  %v47 = vmul.f32 %v39, 0.2
  %v48 = vsel %vm40, %v36, %v44
  %v49 = vsel %vm41, %v37, %v45
  %v50 = vsel %vm42, %v38, %v46
  %v51 = vsel %vm43, %v39, %v47
  %v52 = vpack.c.bf16 %v49, %v48
  %v53 = vpack.c.bf16 %v51, %v50
  %v56 = vunpack.c.l.b16 %v52
  %v57 = vunpack.c.h.b16 %v52
  %v58 = vunpack.c.l.b16 %v53
  %v59 = vunpack.c.h.b16 %v53
  %v60 = vpack.c.b16 %v56, %v56
  %v61 = vpack.c.b16 %v57, %v57
  %v62 = vpack.c.b16 %v58, %v58
  %v63 = vpack.c.b16 %v59, %v59
  %vm68 = vcmask 257024
  %69 = vst.msk [vmem:[%s3] sm:$0xf] %vm68, %v60
  %70 = vst.msk [vmem:[%s3 + $0x4] sm:$0xf] %vm68, %v61
  %71 = vst.msk [vmem:[%s3 + $0x8] sm:$0xf] %vm68, %v62
  %72 = vst.msk [vmem:[%s3 + $0xc] sm:$0xf] %vm68, %v63
  // Predicated region
  $region14: #{nlayer_discriminator_forward.12} parent=0 // pred_check
    _
  $region15: #{nlayer_discriminator_forward.12} parent=0 // pred_check_branch
    %74 = sbr.rel (0) target = $region17
  $region16: #{nlayer_discriminator_forward.12} parent=0 // pred_region
    _
  $region17: #{nlayer_discriminator_forward.12} parent=0 // pred_fallthru
    _
  // Predicated region
  $region18: #{nlayer_discriminator_forward.12} parent=0 // pred_check
    _
  $region19: #{nlayer_discriminator_forward.12} parent=0 // pred_check_branch
    %76 = sbr.rel (0) target = $region21
  $region20: #{nlayer_discriminator_forward.12} parent=0 // pred_region
    _
  $region21: #{nlayer_discriminator_forward.12} parent=0 // pred_fallthru
    _

// kernel: nlayer_discriminator_forward.14
$region0: #{nlayer_discriminator_forward.14}
  #allocation0 [shape = 'u32[]', space=smem, size = 0x4, offset = 0x4, fixed_abs, tag = 'smem constant byte address 0x4 - core index']
  #allocation1 [shape = 'u32[144,128]{1,0:T(1,128)}', space=vmem, size = 0x12000, scoped, tag = 'internal scratch']
  %s0 = inlined_call_operand.vmem [shape: f32[24,64], index: 0, kind: input, shape index: {}]
  %s1 = inlined_call_operand.vmem [shape: f32[1,64], index: 1, kind: input, shape index: {}]
  %s2 = inlined_call_operand.vmem [shape: f32[1,64], index: 2, kind: input, shape index: {}]
  %s3 = inlined_call_operand.vmem [shape: bf16[24,64], index: 3, kind: output, shape index: {}]
  %s4 = sld [smem:[#allocation0]]
  $region22: #{nlayer_discriminator_forward.14} parent=0
    _
  %s6 = ssub.s32 1, %s4
  %s7 = scalar_select 0, %s6, %s4
  // Predicated region
  $region2: #{nlayer_discriminator_forward.14} parent=0 // pred_check
    _
  $region3: #{nlayer_discriminator_forward.14} parent=0 // pred_check_branch
    %9 = sbr.rel (0) target = $region5
  $region4: #{nlayer_discriminator_forward.14} parent=0 // pred_region
    _
  $region5: #{nlayer_discriminator_forward.14} parent=0 // pred_fallthru
    _
  // Predicated region
  $region6: #{nlayer_discriminator_forward.14} parent=0 // pred_check
    _
  $region7: #{nlayer_discriminator_forward.14} parent=0 // pred_check_branch
    %11 = sbr.rel (0) target = $region9
  $region8: #{nlayer_discriminator_forward.14} parent=0 // pred_region
    _
  $region9: #{nlayer_discriminator_forward.14} parent=0 // pred_fallthru
    _
  // Predicated region
  $region10: #{nlayer_discriminator_forward.14} parent=0 // pred_check
    _
  $region11: #{nlayer_discriminator_forward.14} parent=0 // pred_check_branch
    %13 = sbr.rel (0) target = $region13
  $region12: #{nlayer_discriminator_forward.14} parent=0 // pred_region
    _
  $region13: #{nlayer_discriminator_forward.14} parent=0 // pred_fallthru
    _
  %v14 = vld [vmem:[%s0] sm:$0xff]
  %v15 = vld [vmem:[%s0 + $0x8] sm:$0xff]
  %v16 = vld [vmem:[%s0 + $0x10] sm:$0xff]
  %v17 = vld [vmem:[%s1] sm:$0x1]
  %v19 = vlaneseq
  %v20 = vshrl.u32 %v19, 7
  %v21 = vsub.s32 0, %v20
  %v22 = vrot.slane %v17, %v21
  %v24 = vmul.f32 %v14, %v22
  %v25 = vmul.f32 %v15, %v22
  %v26 = vmul.f32 %v16, %v22
  %v27 = vld [vmem:[%s2] sm:$0x1]
  %v29 = vlaneseq
  %v30 = vshrl.u32 %v29, 7
  %v31 = vsub.s32 0, %v30
  %v32 = vrot.slane %v27, %v31
  %v34 = vadd.f32 %v24, %v32
  %v35 = vadd.f32 %v25, %v32
  %v36 = vadd.f32 %v26, %v32
  %vm37 = vcmp.ge.f32.partialorder %v34, 0.0
  %vm38 = vcmp.ge.f32.partialorder %v35, 0.0
  %vm39 = vcmp.ge.f32.partialorder %v36, 0.0
  %v40 = vmul.f32 %v34, 0.2
  %v41 = vmul.f32 %v35, 0.2
  %v42 = vmul.f32 %v36, 0.2
  %v43 = vsel %vm37, %v34, %v40
  %v44 = vsel %vm38, %v35, %v41
  %v45 = vsel %vm39, %v36, %v42
  %v46 = vpack.c.bf16 %v44, %v43
  %v47 = vpack.c.bf16 %v45, %v45
  %v50 = vunpack.c.l.b16 %v46
  %v51 = vunpack.c.h.b16 %v46
  %v52 = vunpack.c.l.b16 %v47
  %v53 = vpack.c.b16 %v50, %v50
  %v54 = vpack.c.b16 %v51, %v51
  %v55 = vpack.c.b16 %v52, %v52
  %vm59 = vcmask 519168
  %60 = vst.msk [vmem:[%s3] sm:$0xf] %vm59, %v53
  %61 = vst.msk [vmem:[%s3 + $0x4] sm:$0xf] %vm59, %v54
  %62 = vst.msk [vmem:[%s3 + $0x8] sm:$0xf] %vm59, %v55
  // Predicated region
  $region14: #{nlayer_discriminator_forward.14} parent=0 // pred_check
    _
  $region15: #{nlayer_discriminator_forward.14} parent=0 // pred_check_branch
    %64 = sbr.rel (0) target = $region17
  $region16: #{nlayer_discriminator_forward.14} parent=0 // pred_region
    _
  $region17: #{nlayer_discriminator_forward.14} parent=0 // pred_fallthru
    _
  // Predicated region
  $region18: #{nlayer_discriminator_forward.14} parent=0 // pred_check
    _
  $region19: #{nlayer_discriminator_forward.14} parent=0 // pred_check_branch
    %66 = sbr.rel (0) target = $region21
  $region20: #{nlayer_discriminator_forward.14} parent=0 // pred_region
    _
  $region21: #{nlayer_discriminator_forward.14} parent=0 // pred_fallthru
    _

// kernel: nlayer_discriminator_forward.13
$region0: #{nlayer_discriminator_forward.13}
  #allocation0 [shape = 'u32[]', space=smem, size = 0x4, offset = 0x4, fixed_abs, tag = 'smem constant byte address 0x4 - core index']
  #allocation1 [shape = 'u32[144,128]{1,0:T(1,128)}', space=vmem, size = 0x12000, scoped, tag = 'internal scratch']
  %s0 = inlined_call_operand.vmem [shape: bf16[2,6,6,32], index: 0, kind: input, shape index: {}, may-alias: {0,1,2,3}]
  %s1 = inlined_call_operand.vmem [shape: bf16[2,6,6,32], index: 1, kind: input, shape index: {}, may-alias: {0,1,2,3}]
  %s2 = inlined_call_operand.vmem [shape: bf16[2,6,6,32], index: 2, kind: input, shape index: {}, may-alias: {0,1,2,3}]
  %s3 = inlined_call_operand.vmem [shape: bf16[2,6,6,32], index: 3, kind: input, shape index: {}, may-alias: {0,1,2,3}]
  %s4 = inlined_call_operand.vmem [shape: bf16[4,4,32,64], index: 4, kind: input, shape index: {}]
  %s5 = inlined_call_operand.vmem [shape: f32[2,3,3,64], index: 5, kind: output, shape index: {0}]
  %s6 = inlined_call_operand.vmem [shape: f32[2,3,2,64], index: 6, kind: output, shape index: {1}]
  %7 = xla_tuple %s5, %s6
  %s8 = sld [smem:[#allocation0]]
  $region61: #{nlayer_discriminator_forward.13} parent=0
    _
  %s10 = ssub.s32 1, %s8
  %s11 = scalar_select 0, %s10, %s8
  loop: start=0, step=1, limit=8
  $region2: #{nlayer_discriminator_forward.13} parent=0 // loop_pre_header
    _
  $region3: #{nlayer_discriminator_forward.13} parent=0 // loop_header
    %s13 = sphi 0, %s17
    %p14 = scmp.ge.s32.totalorder %s13, 8
    %s20 = sphi 0, %s32
    %s21 = sphi 0, %s28
    %s22 = sphi 0, %s20
    %s23 = sphi 0, %s21
    %s24 = sphi 0, %s22
    %s25 = sphi 0, %s23
    %s37 = sphi 0, %s39
    %s40 = sphi 0, %s37
    %s41 = sphi 0, %s40
    %s57 = sphi 0, %s41
    %s67 = sphi 0, %s69
    %s70 = sphi 0, %s67
    %s71 = sphi 0, %s70
    %s87 = sphi 0, %s71
    %s97 = sphi 0, %s99
    %s100 = sphi 0, %s97
    %s101 = sphi 0, %s100
    %s117 = sphi 0, %s101
    %s127 = sphi 0, %s129
    %s130 = sphi 0, %s127
    %s131 = sphi 0, %s130
    %s147 = sphi 0, %s131
    %s151 = sphi 0, %s151
    %s153 = sphi 0, %s151
    %s154 = sphi 0, %s153
    %s168 = sphi 0, %s154
    %s176 = sphi 0, %s178
    %s179 = sphi 0, %s176
    %s180 = sphi 0, %s179
    %s196 = sphi 0, %s180
    %s204 = sphi 0, %s206
    %s207 = sphi 0, %s204
    %s208 = sphi 0, %s207
    %s224 = sphi 0, %s208
  $region4: #{nlayer_discriminator_forward.13} parent=0 // loop_header_branch
    %16 = sbr.rel (%p14) target = $region8
  $region5: #{nlayer_discriminator_forward.13} parent=0 // loop_body
    %s18 = ssub.s32 %s13, 1
    %s19 = ssub.s32 %s13, 2
    %s26 = sadd.s32 1, %s21
    %p27 = scmp.ge.s32.totalorder %s26, 3
    %s28 = scalar_select %p27, 0, %s26
    %s29 = sadd.s32 1, %s20
    %s30 = scalar_select %p27, %s29, %s20
    %p31 = scmp.ge.s32.totalorder %s30, 2
    %s32 = scalar_select %p31, 0, %s30
    %s33 = ssub.s32 %s20, %s32
    %s34 = ssub.s32 %s21, %s28
    %s35 = sor.u32 %s33, %s34
    %p36 = scmp.eq.s32.totalorder %s35, 0
    %s38 = sadd.s32 %s37, 1
    %s39 = scalar_select %p36, %s37, %s38
    %p42 = pneg %p36
    %p43 = scmp.eq.s32.totalorder %s13, 5
    %p44 = por %p42, %p43
    %p45 = scmp.ne.s32.totalorder %s37, %s40
    %p46 = scmp.eq.s32.totalorder %s13, 0
    %p47 = por %p45, %p46
    %p48 = scmp.ne.s32.totalorder %s37, %s40
    %p49 = scmp.eq.s32.totalorder %s18, 5
    %p50 = por %p48, %p49
    %p51 = scmp.ne.s32.totalorder %s40, %s41
    %p52 = scmp.eq.s32.totalorder %s18, 0
    %p53 = por %p51, %p52
    %p54 = scmp.ne.s32.totalorder %s40, %s41
    %p55 = scmp.eq.s32.totalorder %s19, 5
    %p56 = por %p54, %p55
    %p58 = scmp.ne.s32.totalorder %s41, %s57
    %p59 = scmp.eq.s32.totalorder %s19, 0
    %p60 = por %p58, %p59
    %s61 = sadd.s32 %s21, 1
    %s62 = sadd.s32 %s28, 1
    %s63 = ssub.s32 %s20, %s32
    %s64 = ssub.s32 %s61, %s62
    %s65 = sor.u32 %s63, %s64
    %p66 = scmp.eq.s32.totalorder %s65, 0
    %s68 = sadd.s32 %s67, 1
    %s69 = scalar_select %p66, %s67, %s68
    %p72 = pneg %p66
    %p73 = scmp.eq.s32.totalorder %s13, 5
    %p74 = por %p72, %p73
    %p75 = scmp.ne.s32.totalorder %s67, %s70
    %p76 = scmp.eq.s32.totalorder %s13, 0
    %p77 = por %p75, %p76
    %p78 = scmp.ne.s32.totalorder %s67, %s70
    %p79 = scmp.eq.s32.totalorder %s18, 5
    %p80 = por %p78, %p79
    %p81 = scmp.ne.s32.totalorder %s70, %s71
    %p82 = scmp.eq.s32.totalorder %s18, 0
    %p83 = por %p81, %p82
    %p84 = scmp.ne.s32.totalorder %s70, %s71
    %p85 = scmp.eq.s32.totalorder %s19, 5
    %p86 = por %p84, %p85
    %p88 = scmp.ne.s32.totalorder %s71, %s87
    %p89 = scmp.eq.s32.totalorder %s19, 0
    %p90 = por %p88, %p89
    %s91 = sadd.s32 %s21, 2
    %s92 = sadd.s32 %s28, 2
    %s93 = ssub.s32 %s20, %s32
    %s94 = ssub.s32 %s91, %s92
    %s95 = sor.u32 %s93, %s94
    %p96 = scmp.eq.s32.totalorder %s95, 0
    %s98 = sadd.s32 %s97, 1
    %s99 = scalar_select %p96, %s97, %s98
    %p102 = pneg %p96
    %p103 = scmp.eq.s32.totalorder %s13, 5
    %p104 = por %p102, %p103
    %p105 = scmp.ne.s32.totalorder %s97, %s100
    %p106 = scmp.eq.s32.totalorder %s13, 0
    %p107 = por %p105, %p106
    %p108 = scmp.ne.s32.totalorder %s97, %s100
    %p109 = scmp.eq.s32.totalorder %s18, 5
    %p110 = por %p108, %p109
    %p111 = scmp.ne.s32.totalorder %s100, %s101
    %p112 = scmp.eq.s32.totalorder %s18, 0
    %p113 = por %p111, %p112
    %p114 = scmp.ne.s32.totalorder %s100, %s101
    %p115 = scmp.eq.s32.totalorder %s19, 5
    %p116 = por %p114, %p115
    %p118 = scmp.ne.s32.totalorder %s101, %s117
    %p119 = scmp.eq.s32.totalorder %s19, 0
    %p120 = por %p118, %p119
    %s121 = sadd.s32 %s21, 3
    %s122 = sadd.s32 %s28, 3
    %s123 = ssub.s32 %s20, %s32
    %s124 = ssub.s32 %s121, %s122
    %s125 = sor.u32 %s123, %s124
    %p126 = scmp.eq.s32.totalorder %s125, 0
    %s128 = sadd.s32 %s127, 1
    %s129 = scalar_select %p126, %s127, %s128
    %p132 = pneg %p126
    %p133 = scmp.eq.s32.totalorder %s13, 5
    %p134 = por %p132, %p133
    %p135 = scmp.ne.s32.totalorder %s127, %s130
    %p136 = scmp.eq.s32.totalorder %s13, 0
    %p137 = por %p135, %p136
    %p138 = scmp.ne.s32.totalorder %s127, %s130
    %p139 = scmp.eq.s32.totalorder %s18, 5
    %p140 = por %p138, %p139
    %p141 = scmp.ne.s32.totalorder %s130, %s131
    %p142 = scmp.eq.s32.totalorder %s18, 0
    %p143 = por %p141, %p142
    %p144 = scmp.ne.s32.totalorder %s130, %s131
    %p145 = scmp.eq.s32.totalorder %s19, 5
    %p146 = por %p144, %p145
    %p148 = scmp.ne.s32.totalorder %s131, %s147
    %p149 = scmp.eq.s32.totalorder %s19, 0
    %p150 = por %p148, %p149
    %s152 = sadd.s32 %s151, 1
    %p155 = scmp.eq.s32.totalorder %s13, 5
    %p156 = scmp.ne.s32.totalorder %s151, %s153
    %p157 = scmp.eq.s32.totalorder %s13, 0
    %p158 = por %p156, %p157
    %p159 = scmp.ne.s32.totalorder %s151, %s153
    %p160 = scmp.eq.s32.totalorder %s18, 5
    %p161 = por %p159, %p160
    %p162 = scmp.ne.s32.totalorder %s153, %s154
    %p163 = scmp.eq.s32.totalorder %s18, 0
    %p164 = por %p162, %p163
    %p165 = scmp.ne.s32.totalorder %s153, %s154
    %p166 = scmp.eq.s32.totalorder %s19, 5
    %p167 = por %p165, %p166
    %p169 = scmp.ne.s32.totalorder %s154, %s168
    %p170 = scmp.eq.s32.totalorder %s19, 0
    %p171 = por %p169, %p170
    %s172 = ssub.s32 %s20, %s32
    %s173 = ssub.s32 %s21, %s28
    %s174 = sor.u32 %s172, %s173
    %p175 = scmp.eq.s32.totalorder %s174, 0
    %s177 = sadd.s32 %s176, 1
    %s178 = scalar_select %p175, %s176, %s177
    %p181 = pneg %p175
    %p182 = scmp.eq.s32.totalorder %s13, 5
    %p183 = por %p181, %p182
    %p184 = scmp.ne.s32.totalorder %s176, %s179
    %p185 = scmp.eq.s32.totalorder %s13, 0
    %p186 = por %p184, %p185
    %p187 = scmp.ne.s32.totalorder %s176, %s179
    %p188 = scmp.eq.s32.totalorder %s18, 5
    %p189 = por %p187, %p188
    %p190 = scmp.ne.s32.totalorder %s179, %s180
    %p191 = scmp.eq.s32.totalorder %s18, 0
    %p192 = por %p190, %p191
    %p193 = scmp.ne.s32.totalorder %s179, %s180
    %p194 = scmp.eq.s32.totalorder %s19, 5
    %p195 = por %p193, %p194
    %p197 = scmp.ne.s32.totalorder %s180, %s196
    %p198 = scmp.eq.s32.totalorder %s19, 0
    %p199 = por %p197, %p198
    %s200 = ssub.s32 %s20, %s32
    %s201 = ssub.s32 %s21, %s28
    %s202 = sor.u32 %s200, %s201
    %p203 = scmp.eq.s32.totalorder %s202, 0
    %s205 = sadd.s32 %s204, 1
    %s206 = scalar_select %p203, %s204, %s205
    %p209 = pneg %p203
    %p210 = scmp.eq.s32.totalorder %s13, 5
    %p211 = por %p209, %p210
    %p212 = scmp.ne.s32.totalorder %s204, %s207
    %p213 = scmp.eq.s32.totalorder %s13, 0
    %p214 = por %p212, %p213
    %p215 = scmp.ne.s32.totalorder %s204, %s207
    %p216 = scmp.eq.s32.totalorder %s18, 5
    %p217 = por %p215, %p216
    %p218 = scmp.ne.s32.totalorder %s207, %s208
    %p219 = scmp.eq.s32.totalorder %s18, 0
    %p220 = por %p218, %p219
    %p221 = scmp.ne.s32.totalorder %s207, %s208
    %p222 = scmp.eq.s32.totalorder %s19, 5
    %p223 = por %p221, %p222
    %p225 = scmp.ne.s32.totalorder %s208, %s224
    %p226 = scmp.eq.s32.totalorder %s19, 0
    %p227 = por %p225, %p226
    %p228 = scmp.le.s32.totalorder 1, %s13
    %p229 = scmp.lt.s32.totalorder %s13, 7
    %p230 = pnand %p228, %p229
    %p231 = pneg %p230
    // Predicated region
    $region9: #{nlayer_discriminator_forward.13} parent=5 // pred_check
      _
    $region10: #{nlayer_discriminator_forward.13} parent=5 // pred_check_branch
      %233 = sbr.rel (%p230) target = $region12
    $region11: #{nlayer_discriminator_forward.13} parent=5 // pred_region
      %s234 = ssub.s32 %s13, 1
      // Predicated region
      $region13: #{nlayer_discriminator_forward.13} parent=11 // pred_check
        %p235 = pneg %p164
      $region14: #{nlayer_discriminator_forward.13} parent=11 // pred_check_branch
        %237 = sbr.rel (%p235) target = $region16
      $region15: #{nlayer_discriminator_forward.13} parent=11 // pred_region
        _
      $region16: #{nlayer_discriminator_forward.13} parent=11 // pred_fallthru
        _
    $region12: #{nlayer_discriminator_forward.13} parent=5 // pred_fallthru
      _
    %p238 = scmp.lt.s32.totalorder %s13, 6
    // Predicated region
    $region17: #{nlayer_discriminator_forward.13} parent=5 // pred_check
      %p239 = pneg %p238
    $region18: #{nlayer_discriminator_forward.13} parent=5 // pred_check_branch
      %241 = sbr.rel (%p239) target = $region20
    $region19: #{nlayer_discriminator_forward.13} parent=5 // pred_region
      // Predicated region
      $region21: #{nlayer_discriminator_forward.13} parent=19 // pred_check
        %p242 = pneg %p47
      $region22: #{nlayer_discriminator_forward.13} parent=19 // pred_check_branch
        %244 = sbr.rel (%p242) target = $region24
      $region23: #{nlayer_discriminator_forward.13} parent=19 // pred_region
        %p245 = scmp.lt.s32.totalorder %s20, 1
        %s246 = scalar_select %p245, %s20, 1
        %p247 = scmp.lt.s32.totalorder %s21, 5
        %s248 = scalar_select %p247, %s21, 5
        %s249 = smul.addr %s246, 6
        %s250 = sadd.s32 %s248, %s249
        %s251 = smul.addr %s250, 4
        %s252 = scalar_lea.vmem %s0, %s251
      $region24: #{nlayer_discriminator_forward.13} parent=19 // pred_fallthru
        _
      // Predicated region
      $region25: #{nlayer_discriminator_forward.13} parent=19 // pred_check
        %p253 = pneg %p77
      $region26: #{nlayer_discriminator_forward.13} parent=19 // pred_check_branch
        %255 = sbr.rel (%p253) target = $region28
      $region27: #{nlayer_discriminator_forward.13} parent=19 // pred_region
        %s256 = sadd.s32 %s21, 1
        %p257 = scmp.lt.s32.totalorder %s20, 1
        %s258 = scalar_select %p257, %s20, 1
        %p259 = scmp.lt.s32.totalorder %s256, 5
        %s260 = scalar_select %p259, %s256, 5
        %s261 = smul.addr %s258, 6
        %s262 = sadd.s32 %s260, %s261
        %s263 = smul.addr %s262, 4
        %s264 = scalar_lea.vmem %s1, %s263
        %s265 = sadd.s32 %s21, 1
      $region28: #{nlayer_discriminator_forward.13} parent=19 // pred_fallthru
        _
      // Predicated region
      $region29: #{nlayer_discriminator_forward.13} parent=19 // pred_check
        %p266 = pneg %p107
      $region30: #{nlayer_discriminator_forward.13} parent=19 // pred_check_branch
        %268 = sbr.rel (%p266) target = $region32
      $region31: #{nlayer_discriminator_forward.13} parent=19 // pred_region
        %s269 = sadd.s32 %s21, 2
        %p270 = scmp.lt.s32.totalorder %s20, 1
        %s271 = scalar_select %p270, %s20, 1
        %p272 = scmp.lt.s32.totalorder %s269, 5
        %s273 = scalar_select %p272, %s269, 5
        %s274 = smul.addr %s271, 6
        %s275 = sadd.s32 %s273, %s274
        %s276 = smul.addr %s275, 4
        %s277 = scalar_lea.vmem %s2, %s276
        %s278 = sadd.s32 %s21, 2
      $region32: #{nlayer_discriminator_forward.13} parent=19 // pred_fallthru
        _
      // Predicated region
      $region33: #{nlayer_discriminator_forward.13} parent=19 // pred_check
        %p279 = pneg %p137
      $region34: #{nlayer_discriminator_forward.13} parent=19 // pred_check_branch
        %281 = sbr.rel (%p279) target = $region36
      $region35: #{nlayer_discriminator_forward.13} parent=19 // pred_region
        %s282 = sadd.s32 %s21, 3
        %p283 = scmp.lt.s32.totalorder %s20, 1
        %s284 = scalar_select %p283, %s20, 1
        %p285 = scmp.lt.s32.totalorder %s282, 5
        %s286 = scalar_select %p285, %s282, 5
        %s287 = smul.addr %s284, 6
        %s288 = sadd.s32 %s286, %s287
        %s289 = smul.addr %s288, 4
        %s290 = scalar_lea.vmem %s3, %s289
        %s291 = sadd.s32 %s21, 3
      $region36: #{nlayer_discriminator_forward.13} parent=19 // pred_fallthru
        _
    $region20: #{nlayer_discriminator_forward.13} parent=5 // pred_fallthru
      _
    %p292 = scmp.le.s32.totalorder 1, %s13
    %p293 = scmp.lt.s32.totalorder %s13, 7
    %p294 = pnand %p292, %p293
    %p295 = pneg %p294
    // Predicated region
    $region37: #{nlayer_discriminator_forward.13} parent=5 // pred_check
      _
    $region38: #{nlayer_discriminator_forward.13} parent=5 // pred_check_branch
      %297 = sbr.rel (%p294) target = $region40
    $region39: #{nlayer_discriminator_forward.13} parent=5 // pred_region
      %s298 = ssub.s32 %s13, 1
      %p299 = scmp.lt.s32.totalorder %s22, 1
      %s300 = scalar_select %p299, %s22, 1
      %p301 = scmp.lt.s32.totalorder %s23, 5
      %s302 = scalar_select %p301, %s23, 5
      %s303 = smul.addr %s300, 6
      %s304 = sadd.s32 %s302, %s303
      %s305 = smul.addr %s304, 4
      %s306 = scalar_lea.vmem %s0, %s305
      %p307 = pneg %p53
      %p308 = pneg %p50
      %s309 = sadd.s32 %s23, 1
      %p310 = scmp.lt.s32.totalorder %s22, 1
      %s311 = scalar_select %p310, %s22, 1
      %p312 = scmp.lt.s32.totalorder %s309, 5
      %s313 = scalar_select %p312, %s309, 5
      %s314 = smul.addr %s311, 6
      %s315 = sadd.s32 %s313, %s314
      %s316 = smul.addr %s315, 4
      %s317 = scalar_lea.vmem %s1, %s316
      %p318 = pneg %p83
      %p319 = pneg %p80
      %s320 = sadd.s32 %s23, 2
      %p321 = scmp.lt.s32.totalorder %s22, 1
      %s322 = scalar_select %p321, %s22, 1
      %p323 = scmp.lt.s32.totalorder %s320, 5
      %s324 = scalar_select %p323, %s320, 5
      %s325 = smul.addr %s322, 6
      %s326 = sadd.s32 %s324, %s325
      %s327 = smul.addr %s326, 4
      %s328 = scalar_lea.vmem %s2, %s327
      %p329 = pneg %p113
      %p330 = pneg %p110
      %s331 = sadd.s32 %s23, 3
      %p332 = scmp.lt.s32.totalorder %s22, 1
      %s333 = scalar_select %p332, %s22, 1
      %p334 = scmp.lt.s32.totalorder %s331, 5
      %s335 = scalar_select %p334, %s331, 5
      %s336 = smul.addr %s333, 6
      %s337 = sadd.s32 %s335, %s336
      %s338 = smul.addr %s337, 4
      %s339 = scalar_lea.vmem %s3, %s338
      %p340 = pneg %p143
      %p341 = pneg %p140
      %p342 = pneg %p164
      %p343 = pneg %p161
      %p344 = pneg %p192
      %p345 = pneg %p189
      %p346 = scmp.lt.s32.totalorder %s22, 1
      %s347 = scalar_select %p346, %s22, 1
      %p348 = scmp.lt.s32.totalorder %s23, 2
      %s349 = scalar_select %p348, %s23, 2
      %s350 = smul.addr %s347, 3
      %s351 = sadd.s32 %s349, %s350
      %s352 = smul.addr %s351, 4
      %s353 = scalar_lea.vmem %s5, %s352
      %p354 = pneg %p220
      %p355 = pneg %p217
      %p356 = scmp.lt.s32.totalorder %s22, 1
      %s357 = scalar_select %p356, %s22, 1
      %p358 = scmp.lt.s32.totalorder %s23, 2
      %s359 = scalar_select %p358, %s23, 2
      %s360 = smul.addr %s357, 3
      %s361 = sadd.s32 %s359, %s360
      %s362 = smul.addr %s361, 2
      %s363 = scalar_lea.vmem %s6, %s362
      %p364 = scmp.lt.s32.totalorder %s22, 1
      %s365 = scalar_select %p364, %s22, 1
      %p366 = scmp.lt.s32.totalorder %s23, 5
      %s367 = scalar_select %p366, %s23, 5
      %s368 = smul.addr %s365, 6
      %s369 = sadd.s32 %s367, %s368
      %s370 = smul.addr %s369, 4
      %s371 = scalar_lea.vmem %s0, %s370
      %s372 = sadd.s32 %s23, 1
      %p373 = scmp.lt.s32.totalorder %s22, 1
      %s374 = scalar_select %p373, %s22, 1
      %p375 = scmp.lt.s32.totalorder %s372, 5
      %s376 = scalar_select %p375, %s372, 5
      %s377 = smul.addr %s374, 6
      %s378 = sadd.s32 %s376, %s377
      %s379 = smul.addr %s378, 4
      %s380 = scalar_lea.vmem %s1, %s379
      %s381 = sadd.s32 %s23, 1
      %s382 = sadd.s32 %s23, 2
      %p383 = scmp.lt.s32.totalorder %s22, 1
      %s384 = scalar_select %p383, %s22, 1
      %p385 = scmp.lt.s32.totalorder %s382, 5
      %s386 = scalar_select %p385, %s382, 5
      %s387 = smul.addr %s384, 6
      %s388 = sadd.s32 %s386, %s387
      %s389 = smul.addr %s388, 4
      %s390 = scalar_lea.vmem %s2, %s389
      %s391 = sadd.s32 %s23, 2
      %s392 = sadd.s32 %s23, 3
      %p393 = scmp.lt.s32.totalorder %s22, 1
      %s394 = scalar_select %p393, %s22, 1
      %p395 = scmp.lt.s32.totalorder %s392, 5
      %s396 = scalar_select %p395, %s392, 5
      %s397 = smul.addr %s394, 6
      %s398 = sadd.s32 %s396, %s397
      %s399 = smul.addr %s398, 4
      %s400 = scalar_lea.vmem %s3, %s399
      %s401 = sadd.s32 %s23, 3
      %p402 = scmp.lt.s32.totalorder %s22, 1
      %s403 = scalar_select %p402, %s22, 1
      %p404 = scmp.lt.s32.totalorder %s23, 2
      %s405 = scalar_select %p404, %s23, 2
      %s406 = smul.addr %s403, 3
      %s407 = sadd.s32 %s405, %s406
      %s408 = smul.addr %s407, 4
      %s409 = scalar_lea.vmem %s5, %s408
      %p410 = scmp.lt.s32.totalorder %s22, 1
      %s411 = scalar_select %p410, %s22, 1
      %p412 = scmp.lt.s32.totalorder %s23, 2
      %s413 = scalar_select %p412, %s23, 2
      %s414 = smul.addr %s411, 3
      %s415 = sadd.s32 %s413, %s414
      %s416 = smul.addr %s415, 2
      %s417 = scalar_lea.vmem %s6, %s416
      %v419 = vld [vmem:[%s371] sm:$0x7]
      %v420 = vld [vmem:[%s4] sm:$0xf]
      %v421 = vld [vmem:[%s4 + $0x4] sm:$0xf]
      %v422 = vld [vmem:[%s4 + $0x8] sm:$0xf]
      %v423 = vld [vmem:[%s4 + $0xc] sm:$0xf]
      %s424 = scalar_lea.vmem %s4, 16
      %v425 = vld [vmem:[%s424] sm:$0xf]
      %v426 = vld [vmem:[%s424 + $0x4] sm:$0xf]
      %v427 = vld [vmem:[%s424 + $0x8] sm:$0xf]
      %v428 = vld [vmem:[%s424 + $0xc] sm:$0xf]
      %v430 = vunpack.c.l.b16 %v419
      %v431 = vpack.c.b16 %v430, %v430
      %v433 = vshrl.u32 %v431, 16
      %v435 = vshll.u32 %v431, 16
      %v437 = vrot.slane %v435, 1
      %v438 = vor.u32 %v433, %v437
      %v443 = vunpack.c.l.b16 %v425
      %v444 = vunpack.c.l.b16 %v426
      %v445 = vunpack.c.l.b16 %v427
      %v446 = vunpack.c.l.b16 %v428
      %v447 = vpack.c.b16 %v444, %v443
      %v448 = vpack.c.b16 %v446, %v445
      %vm451 = vcmask 261120
      %v453 = vsel %vm451, %v438, 0
      %455 = vmatprep.subr.bf16.mxu0 0
      %456 = vmatpush1.bf16.msra.mxu0 %v447
      %457 = vmatprep.subr.bf16.mxu0 0
      %458 = vmatpush1.bf16.msra.mxu0 %v448
      %459 = vmatprep.subr.bf16.mxu0 0
      %460 = vmatpush1.bf16.msra.mxu0 0
      %461 = vmatprep.subr.bf16.mxu0 0
      %462 = vmatpush1.bf16.msra.mxu0 0
      %463 = vmatprep.subr.bf16.mxu0 0
      %464 = vmatpush1.bf16.msra.mxu0 0
      %465 = vmatprep.subr.bf16.mxu0 0
      %466 = vmatpush1.bf16.msra.mxu0 0
      %467 = vmatprep.subr.bf16.mxu0 0
      %468 = vmatpush1.bf16.msra.mxu0 0
      %469 = vmatprep.subr.bf16.mxu0 0
      %470 = vmatpush1.bf16.msra.mxu0 0
      %471 = vmatprep.subr.bf16.mxu0 0
      %472 = vmatpush1.bf16.msra.mxu0 0
      %473 = vmatprep.subr.bf16.mxu0 0
      %474 = vmatpush1.bf16.msra.mxu0 0
      %475 = vmatprep.subr.bf16.mxu0 0
      %476 = vmatpush1.bf16.msra.mxu0 0
      %477 = vmatprep.subr.bf16.mxu0 0
      %478 = vmatpush1.bf16.msra.mxu0 0
      %479 = vmatprep.subr.bf16.mxu0 0
      %480 = vmatpush1.bf16.msra.mxu0 0
      %481 = vmatprep.subr.bf16.mxu0 0
      %482 = vmatpush1.bf16.msra.mxu0 0
      %483 = vmatprep.subr.bf16.mxu0 0
      %484 = vmatpush1.bf16.msra.mxu0 0
      %485 = vmatprep.subr.bf16.mxu0 0
      %486 = vmatpush1.bf16.msra.mxu0 0
      %487 = vmatprep.mubr.bf16.mxu0 0
      %488 = vmatmul.mubr.bf16.gmra.mrb[0].mxu0 %v453
      %v489 = vpop.f32.mrb[0].mxu0
      %v490 = vadd.f32 0.0, %v489
      %v491 = vpop.f32.mrb[0].mxu0
      %v492 = vpop.f32.mrb[0].mxu0
      %v493 = vpop.f32.mrb[0].mxu0
      %494 = vdwg.mxu0
      %v499 = vunpack.c.l.b16 %v420
      %v500 = vunpack.c.l.b16 %v421
      %v501 = vunpack.c.l.b16 %v422
      %v502 = vunpack.c.l.b16 %v423
      %v503 = vpack.c.b16 %v500, %v499
      %v504 = vpack.c.b16 %v502, %v501
      %v508 = vsel %vm451, %v419, 0
      %510 = vmatprep.subr.bf16.mxu0 0
      %511 = vmatpush1.bf16.msra.mxu0 %v503
      %512 = vmatprep.subr.bf16.mxu0 0
      %513 = vmatpush1.bf16.msra.mxu0 %v504
      %514 = vmatprep.subr.bf16.mxu0 0
      %515 = vmatpush1.bf16.msra.mxu0 0
      %516 = vmatprep.subr.bf16.mxu0 0
      %517 = vmatpush1.bf16.msra.mxu0 0
      %518 = vmatprep.subr.bf16.mxu0 0
      %519 = vmatpush1.bf16.msra.mxu0 0
      %520 = vmatprep.subr.bf16.mxu0 0
      %521 = vmatpush1.bf16.msra.mxu0 0
      %522 = vmatprep.subr.bf16.mxu0 0
      %523 = vmatpush1.bf16.msra.mxu0 0
      %524 = vmatprep.subr.bf16.mxu0 0
      %525 = vmatpush1.bf16.msra.mxu0 0
      %526 = vmatprep.subr.bf16.mxu0 0
      %527 = vmatpush1.bf16.msra.mxu0 0
      %528 = vmatprep.subr.bf16.mxu0 0
      %529 = vmatpush1.bf16.msra.mxu0 0
      %530 = vmatprep.subr.bf16.mxu0 0
      %531 = vmatpush1.bf16.msra.mxu0 0
      %532 = vmatprep.subr.bf16.mxu0 0
      %533 = vmatpush1.bf16.msra.mxu0 0
      %534 = vmatprep.subr.bf16.mxu0 0
      %535 = vmatpush1.bf16.msra.mxu0 0
      %536 = vmatprep.subr.bf16.mxu0 0
      %537 = vmatpush1.bf16.msra.mxu0 0
      %538 = vmatprep.subr.bf16.mxu0 0
      %539 = vmatpush1.bf16.msra.mxu0 0
      %540 = vmatprep.subr.bf16.mxu0 0
      %541 = vmatpush1.bf16.msra.mxu0 0
      %542 = vmatprep.mubr.bf16.mxu0 0
      %543 = vmatmul.mubr.bf16.gmra.mrb[0].mxu0 %v508
      %v544 = vpop.f32.mrb[0].mxu0
      %v545 = vadd.f32 %v490, %v544
      %v546 = vpop.f32.mrb[0].mxu0
      %v547 = vpop.f32.mrb[0].mxu0
      %v548 = vpop.f32.mrb[0].mxu0
      %549 = vdwg.mxu0
      %s550 = scalar_lea.vmem %s4, 32
      %v551 = vld [vmem:[%s550] sm:$0xf]
      %v552 = vld [vmem:[%s550 + $0x4] sm:$0xf]
      %v553 = vld [vmem:[%s550 + $0x8] sm:$0xf]
      %v554 = vld [vmem:[%s550 + $0xc] sm:$0xf]
      %v555 = vrot.slane %v431, 1
      %v560 = vunpack.c.l.b16 %v551
      %v561 = vunpack.c.l.b16 %v552
      %v562 = vunpack.c.l.b16 %v553
      %v563 = vunpack.c.l.b16 %v554
      %v564 = vpack.c.b16 %v561, %v560
      %v565 = vpack.c.b16 %v563, %v562
      %v569 = vsel %vm451, %v555, 0
      %571 = vmatprep.subr.bf16.mxu0 0
      %572 = vmatpush1.bf16.msra.mxu0 %v564
      %573 = vmatprep.subr.bf16.mxu0 0
      %574 = vmatpush1.bf16.msra.mxu0 %v565
      %575 = vmatprep.subr.bf16.mxu0 0
      %576 = vmatpush1.bf16.msra.mxu0 0
      %577 = vmatprep.subr.bf16.mxu0 0
      %578 = vmatpush1.bf16.msra.mxu0 0
      %579 = vmatprep.subr.bf16.mxu0 0
      %580 = vmatpush1.bf16.msra.mxu0 0
      %581 = vmatprep.subr.bf16.mxu0 0
      %582 = vmatpush1.bf16.msra.mxu0 0
      %583 = vmatprep.subr.bf16.mxu0 0
      %584 = vmatpush1.bf16.msra.mxu0 0
      %585 = vmatprep.subr.bf16.mxu0 0
      %586 = vmatpush1.bf16.msra.mxu0 0
      %587 = vmatprep.subr.bf16.mxu0 0
      %588 = vmatpush1.bf16.msra.mxu0 0
      %589 = vmatprep.subr.bf16.mxu0 0
      %590 = vmatpush1.bf16.msra.mxu0 0
      %591 = vmatprep.subr.bf16.mxu0 0
      %592 = vmatpush1.bf16.msra.mxu0 0
      %593 = vmatprep.subr.bf16.mxu0 0
      %594 = vmatpush1.bf16.msra.mxu0 0
      %595 = vmatprep.subr.bf16.mxu0 0
      %596 = vmatpush1.bf16.msra.mxu0 0
      %597 = vmatprep.subr.bf16.mxu0 0
      %598 = vmatpush1.bf16.msra.mxu0 0
      %599 = vmatprep.subr.bf16.mxu0 0
      %600 = vmatpush1.bf16.msra.mxu0 0
      %601 = vmatprep.subr.bf16.mxu0 0
      %602 = vmatpush1.bf16.msra.mxu0 0
      %603 = vmatprep.mubr.bf16.mxu0 0
      %604 = vmatmul.mubr.bf16.gmra.mrb[0].mxu0 %v569
      %v605 = vpop.f32.mrb[0].mxu0
      %v606 = vadd.f32 0.0, %v605
      %v607 = vpop.f32.mrb[0].mxu0
      %v608 = vpop.f32.mrb[0].mxu0
      %v609 = vpop.f32.mrb[0].mxu0
      %610 = vdwg.mxu0
      %v611 = vadd.f32 %v545, %v606
      %s612 = scalar_lea.vmem %s4, 48
      %v613 = vld [vmem:[%s612] sm:$0xf]
      %v614 = vld [vmem:[%s612 + $0x4] sm:$0xf]
      %v615 = vld [vmem:[%s612 + $0x8] sm:$0xf]
      %v616 = vld [vmem:[%s612 + $0xc] sm:$0xf]
      %v617 = vrot.slane %v433, 1
      %v618 = vrot.slane %v435, 2
      %v619 = vor.u32 %v617, %v618
      %v624 = vunpack.c.l.b16 %v613
      %v625 = vunpack.c.l.b16 %v614
      %v626 = vunpack.c.l.b16 %v615
      %v627 = vunpack.c.l.b16 %v616
      %v628 = vpack.c.b16 %v625, %v624
      %v629 = vpack.c.b16 %v627, %v626
      %v633 = vsel %vm451, %v619, 0
      %635 = vmatprep.subr.bf16.mxu0 0
      %636 = vmatpush1.bf16.msra.mxu0 %v628
      %637 = vmatprep.subr.bf16.mxu0 0
      %638 = vmatpush1.bf16.msra.mxu0 %v629
      %639 = vmatprep.subr.bf16.mxu0 0
      %640 = vmatpush1.bf16.msra.mxu0 0
      %641 = vmatprep.subr.bf16.mxu0 0
      %642 = vmatpush1.bf16.msra.mxu0 0
      %643 = vmatprep.subr.bf16.mxu0 0
      %644 = vmatpush1.bf16.msra.mxu0 0
      %645 = vmatprep.subr.bf16.mxu0 0
      %646 = vmatpush1.bf16.msra.mxu0 0
      %647 = vmatprep.subr.bf16.mxu0 0
      %648 = vmatpush1.bf16.msra.mxu0 0
      %649 = vmatprep.subr.bf16.mxu0 0
      %650 = vmatpush1.bf16.msra.mxu0 0
      %651 = vmatprep.subr.bf16.mxu0 0
      %652 = vmatpush1.bf16.msra.mxu0 0
      %653 = vmatprep.subr.bf16.mxu0 0
      %654 = vmatpush1.bf16.msra.mxu0 0
      %655 = vmatprep.subr.bf16.mxu0 0
      %656 = vmatpush1.bf16.msra.mxu0 0
      %657 = vmatprep.subr.bf16.mxu0 0
      %658 = vmatpush1.bf16.msra.mxu0 0
      %659 = vmatprep.subr.bf16.mxu0 0
      %660 = vmatpush1.bf16.msra.mxu0 0
      %661 = vmatprep.subr.bf16.mxu0 0
      %662 = vmatpush1.bf16.msra.mxu0 0
      %663 = vmatprep.subr.bf16.mxu0 0
      %664 = vmatpush1.bf16.msra.mxu0 0
      %665 = vmatprep.subr.bf16.mxu0 0
      %666 = vmatpush1.bf16.msra.mxu0 0
      %667 = vmatprep.mubr.bf16.mxu0 0
      %668 = vmatmul.mubr.bf16.gmra.mrb[0].mxu0 %v633
      %v669 = vpop.f32.mrb[0].mxu0
      %v670 = vadd.f32 0.0, %v669
      %v671 = vpop.f32.mrb[0].mxu0
      %v672 = vpop.f32.mrb[0].mxu0
      %v673 = vpop.f32.mrb[0].mxu0
      %674 = vdwg.mxu0
      %v675 = vadd.f32 %v611, %v670
      %v676 = vld [vmem:[%s380] sm:$0x7]
      %s677 = scalar_lea.vmem %s4, 64
      %v678 = vld [vmem:[%s677] sm:$0xf]
      %v679 = vld [vmem:[%s677 + $0x4] sm:$0xf]
      %v680 = vld [vmem:[%s677 + $0x8] sm:$0xf]
      %v681 = vld [vmem:[%s677 + $0xc] sm:$0xf]
      %v686 = vunpack.c.l.b16 %v678
      %v687 = vunpack.c.l.b16 %v679
      %v688 = vunpack.c.l.b16 %v680
      %v689 = vunpack.c.l.b16 %v681
      %v690 = vpack.c.b16 %v687, %v686
      %v691 = vpack.c.b16 %v689, %v688
      %v695 = vsel %vm451, %v676, 0
      %697 = vmatprep.subr.bf16.mxu0 0
      %698 = vmatpush1.bf16.msra.mxu0 %v690
      %699 = vmatprep.subr.bf16.mxu0 0
      %700 = vmatpush1.bf16.msra.mxu0 %v691
      %701 = vmatprep.subr.bf16.mxu0 0
      %702 = vmatpush1.bf16.msra.mxu0 0
      %703 = vmatprep.subr.bf16.mxu0 0
      %704 = vmatpush1.bf16.msra.mxu0 0
      %705 = vmatprep.subr.bf16.mxu0 0
      %706 = vmatpush1.bf16.msra.mxu0 0
      %707 = vmatprep.subr.bf16.mxu0 0
      %708 = vmatpush1.bf16.msra.mxu0 0
      %709 = vmatprep.subr.bf16.mxu0 0
      %710 = vmatpush1.bf16.msra.mxu0 0
      %711 = vmatprep.subr.bf16.mxu0 0
      %712 = vmatpush1.bf16.msra.mxu0 0
      %713 = vmatprep.subr.bf16.mxu0 0
      %714 = vmatpush1.bf16.msra.mxu0 0
      %715 = vmatprep.subr.bf16.mxu0 0
      %716 = vmatpush1.bf16.msra.mxu0 0
      %717 = vmatprep.subr.bf16.mxu0 0
      %718 = vmatpush1.bf16.msra.mxu0 0
      %719 = vmatprep.subr.bf16.mxu0 0
      %720 = vmatpush1.bf16.msra.mxu0 0
      %721 = vmatprep.subr.bf16.mxu0 0
      %722 = vmatpush1.bf16.msra.mxu0 0
      %723 = vmatprep.subr.bf16.mxu0 0
      %724 = vmatpush1.bf16.msra.mxu0 0
      %725 = vmatprep.subr.bf16.mxu0 0
      %726 = vmatpush1.bf16.msra.mxu0 0
      %727 = vmatprep.subr.bf16.mxu0 0
      %728 = vmatpush1.bf16.msra.mxu0 0
      %729 = vmatprep.mubr.bf16.mxu0 0
      %730 = vmatmul.mubr.bf16.gmra.mrb[0].mxu0 %v695
      %v731 = vpop.f32.mrb[0].mxu0
      %v732 = vadd.f32 0.0, %v731
      %v733 = vpop.f32.mrb[0].mxu0
      %v734 = vpop.f32.mrb[0].mxu0
      %v735 = vpop.f32.mrb[0].mxu0
      %736 = vdwg.mxu0
      %v737 = vadd.f32 %v675, %v732
      %s738 = scalar_lea.vmem %s4, 80
      %v739 = vld [vmem:[%s738] sm:$0xf]
      %v740 = vld [vmem:[%s738 + $0x4] sm:$0xf]
      %v741 = vld [vmem:[%s738 + $0x8] sm:$0xf]
      %v742 = vld [vmem:[%s738 + $0xc] sm:$0xf]
      %v744 = vunpack.c.l.b16 %v676
      %v745 = vpack.c.b16 %v744, %v744
      %v747 = vshrl.u32 %v745, 16
      %v749 = vshll.u32 %v745, 16
      %v751 = vrot.slane %v749, 1
      %v752 = vor.u32 %v747, %v751
      %v757 = vunpack.c.l.b16 %v739
      %v758 = vunpack.c.l.b16 %v740
      %v759 = vunpack.c.l.b16 %v741
      %v760 = vunpack.c.l.b16 %v742
      %v761 = vpack.c.b16 %v758, %v757
      %v762 = vpack.c.b16 %v760, %v759
      %v766 = vsel %vm451, %v752, 0
      %768 = vmatprep.subr.bf16.mxu0 0
      %769 = vmatpush1.bf16.msra.mxu0 %v761
      %770 = vmatprep.subr.bf16.mxu0 0
      %771 = vmatpush1.bf16.msra.mxu0 %v762
      %772 = vmatprep.subr.bf16.mxu0 0
      %773 = vmatpush1.bf16.msra.mxu0 0
      %774 = vmatprep.subr.bf16.mxu0 0
      %775 = vmatpush1.bf16.msra.mxu0 0
      %776 = vmatprep.subr.bf16.mxu0 0
      %777 = vmatpush1.bf16.msra.mxu0 0
      %778 = vmatprep.subr.bf16.mxu0 0
      %779 = vmatpush1.bf16.msra.mxu0 0
      %780 = vmatprep.subr.bf16.mxu0 0
      %781 = vmatpush1.bf16.msra.mxu0 0
      %782 = vmatprep.subr.bf16.mxu0 0
      %783 = vmatpush1.bf16.msra.mxu0 0
      %784 = vmatprep.subr.bf16.mxu0 0
      %785 = vmatpush1.bf16.msra.mxu0 0
      %786 = vmatprep.subr.bf16.mxu0 0
      %787 = vmatpush1.bf16.msra.mxu0 0
      %788 = vmatprep.subr.bf16.mxu0 0
      %789 = vmatpush1.bf16.msra.mxu0 0
      %790 = vmatprep.subr.bf16.mxu0 0
      %791 = vmatpush1.bf16.msra.mxu0 0
      %792 = vmatprep.subr.bf16.mxu0 0
      %793 = vmatpush1.bf16.msra.mxu0 0
      %794 = vmatprep.subr.bf16.mxu0 0
      %795 = vmatpush1.bf16.msra.mxu0 0
      %796 = vmatprep.subr.bf16.mxu0 0
      %797 = vmatpush1.bf16.msra.mxu0 0
      %798 = vmatprep.subr.bf16.mxu0 0
      %799 = vmatpush1.bf16.msra.mxu0 0
      %800 = vmatprep.mubr.bf16.mxu0 0
      %801 = vmatmul.mubr.bf16.gmra.mrb[0].mxu0 %v766
      %v802 = vpop.f32.mrb[0].mxu0
      %v803 = vadd.f32 0.0, %v802
      %v804 = vpop.f32.mrb[0].mxu0
      %v805 = vpop.f32.mrb[0].mxu0
      %v806 = vpop.f32.mrb[0].mxu0
      %807 = vdwg.mxu0
      %v808 = vadd.f32 %v737, %v803
      %s809 = scalar_lea.vmem %s4, 96
      %v810 = vld [vmem:[%s809] sm:$0xf]
      %v811 = vld [vmem:[%s809 + $0x4] sm:$0xf]
      %v812 = vld [vmem:[%s809 + $0x8] sm:$0xf]
      %v813 = vld [vmem:[%s809 + $0xc] sm:$0xf]
      %v814 = vrot.slane %v745, 1
      %v819 = vunpack.c.l.b16 %v810
      %v820 = vunpack.c.l.b16 %v811
      %v821 = vunpack.c.l.b16 %v812
      %v822 = vunpack.c.l.b16 %v813
      %v823 = vpack.c.b16 %v820, %v819
      %v824 = vpack.c.b16 %v822, %v821
      %v828 = vsel %vm451, %v814, 0
      %830 = vmatprep.subr.bf16.mxu0 0
      %831 = vmatpush1.bf16.msra.mxu0 %v823
      %832 = vmatprep.subr.bf16.mxu0 0
      %833 = vmatpush1.bf16.msra.mxu0 %v824
      %834 = vmatprep.subr.bf16.mxu0 0
      %835 = vmatpush1.bf16.msra.mxu0 0
      %836 = vmatprep.subr.bf16.mxu0 0
      %837 = vmatpush1.bf16.msra.mxu0 0
      %838 = vmatprep.subr.bf16.mxu0 0
      %839 = vmatpush1.bf16.msra.mxu0 0
      %840 = vmatprep.subr.bf16.mxu0 0
      %841 = vmatpush1.bf16.msra.mxu0 0
      %842 = vmatprep.subr.bf16.mxu0 0
      %843 = vmatpush1.bf16.msra.mxu0 0
      %844 = vmatprep.subr.bf16.mxu0 0
      %845 = vmatpush1.bf16.msra.mxu0 0
      %846 = vmatprep.subr.bf16.mxu0 0
      %847 = vmatpush1.bf16.msra.mxu0 0
      %848 = vmatprep.subr.bf16.mxu0 0
      %849 = vmatpush1.bf16.msra.mxu0 0
      %850 = vmatprep.subr.bf16.mxu0 0
      %851 = vmatpush1.bf16.msra.mxu0 0
      %852 = vmatprep.subr.bf16.mxu0 0
      %853 = vmatpush1.bf16.msra.mxu0 0
      %854 = vmatprep.subr.bf16.mxu0 0
      %855 = vmatpush1.bf16.msra.mxu0 0
      %856 = vmatprep.subr.bf16.mxu0 0
      %857 = vmatpush1.bf16.msra.mxu0 0
      %858 = vmatprep.subr.bf16.mxu0 0
      %859 = vmatpush1.bf16.msra.mxu0 0
      %860 = vmatprep.subr.bf16.mxu0 0
      %861 = vmatpush1.bf16.msra.mxu0 0
      %862 = vmatprep.mubr.bf16.mxu0 0
      %863 = vmatmul.mubr.bf16.gmra.mrb[0].mxu0 %v828
      %v864 = vpop.f32.mrb[0].mxu0
      %v865 = vadd.f32 0.0, %v864
      %v866 = vpop.f32.mrb[0].mxu0
      %v867 = vpop.f32.mrb[0].mxu0
      %v868 = vpop.f32.mrb[0].mxu0
      %869 = vdwg.mxu0
      %v870 = vadd.f32 %v808, %v865
      %s871 = scalar_lea.vmem %s4, 112
      %v872 = vld [vmem:[%s871] sm:$0xf]
      %v873 = vld [vmem:[%s871 + $0x4] sm:$0xf]
      %v874 = vld [vmem:[%s871 + $0x8] sm:$0xf]
      %v875 = vld [vmem:[%s871 + $0xc] sm:$0xf]
      %v876 = vrot.slane %v747, 1
      %v877 = vrot.slane %v749, 2
      %v878 = vor.u32 %v876, %v877
      %v883 = vunpack.c.l.b16 %v872
      %v884 = vunpack.c.l.b16 %v873
      %v885 = vunpack.c.l.b16 %v874
      %v886 = vunpack.c.l.b16 %v875
      %v887 = vpack.c.b16 %v884, %v883
      %v888 = vpack.c.b16 %v886, %v885
      %v892 = vsel %vm451, %v878, 0
      %894 = vmatprep.subr.bf16.mxu0 0
      %895 = vmatpush1.bf16.msra.mxu0 %v887
      %896 = vmatprep.subr.bf16.mxu0 0
      %897 = vmatpush1.bf16.msra.mxu0 %v888
      %898 = vmatprep.subr.bf16.mxu0 0
      %899 = vmatpush1.bf16.msra.mxu0 0
      %900 = vmatprep.subr.bf16.mxu0 0
      %901 = vmatpush1.bf16.msra.mxu0 0
      %902 = vmatprep.subr.bf16.mxu0 0
      %903 = vmatpush1.bf16.msra.mxu0 0
      %904 = vmatprep.subr.bf16.mxu0 0
      %905 = vmatpush1.bf16.msra.mxu0 0
      %906 = vmatprep.subr.bf16.mxu0 0
      %907 = vmatpush1.bf16.msra.mxu0 0
      %908 = vmatprep.subr.bf16.mxu0 0
      %909 = vmatpush1.bf16.msra.mxu0 0
      %910 = vmatprep.subr.bf16.mxu0 0
      %911 = vmatpush1.bf16.msra.mxu0 0
      %912 = vmatprep.subr.bf16.mxu0 0
      %913 = vmatpush1.bf16.msra.mxu0 0
      %914 = vmatprep.subr.bf16.mxu0 0
      %915 = vmatpush1.bf16.msra.mxu0 0
      %916 = vmatprep.subr.bf16.mxu0 0
      %917 = vmatpush1.bf16.msra.mxu0 0
      %918 = vmatprep.subr.bf16.mxu0 0
      %919 = vmatpush1.bf16.msra.mxu0 0
      %920 = vmatprep.subr.bf16.mxu0 0
      %921 = vmatpush1.bf16.msra.mxu0 0
      %922 = vmatprep.subr.bf16.mxu0 0
      %923 = vmatpush1.bf16.msra.mxu0 0
      %924 = vmatprep.subr.bf16.mxu0 0
      %925 = vmatpush1.bf16.msra.mxu0 0
      %926 = vmatprep.mubr.bf16.mxu0 0
      %927 = vmatmul.mubr.bf16.gmra.mrb[0].mxu0 %v892
      %v928 = vpop.f32.mrb[0].mxu0
      %v929 = vadd.f32 0.0, %v928
      %v930 = vpop.f32.mrb[0].mxu0
      %v931 = vpop.f32.mrb[0].mxu0
      %v932 = vpop.f32.mrb[0].mxu0
      %933 = vdwg.mxu0
      %v934 = vadd.f32 %v870, %v929
      %v935 = vld [vmem:[%s390] sm:$0x7]
      %s936 = scalar_lea.vmem %s4, 128
      %v937 = vld [vmem:[%s936] sm:$0xf]
      %v938 = vld [vmem:[%s936 + $0x4] sm:$0xf]
      %v939 = vld [vmem:[%s936 + $0x8] sm:$0xf]
      %v940 = vld [vmem:[%s936 + $0xc] sm:$0xf]
      %v945 = vunpack.c.l.b16 %v937
      %v946 = vunpack.c.l.b16 %v938
      %v947 = vunpack.c.l.b16 %v939
      %v948 = vunpack.c.l.b16 %v940
      %v949 = vpack.c.b16 %v946, %v945
      %v950 = vpack.c.b16 %v948, %v947
      %v954 = vsel %vm451, %v935, 0
      %956 = vmatprep.subr.bf16.mxu0 0
      %957 = vmatpush1.bf16.msra.mxu0 %v949
      %958 = vmatprep.subr.bf16.mxu0 0
      %959 = vmatpush1.bf16.msra.mxu0 %v950
      %960 = vmatprep.subr.bf16.mxu0 0
      %961 = vmatpush1.bf16.msra.mxu0 0
      %962 = vmatprep.subr.bf16.mxu0 0
      %963 = vmatpush1.bf16.msra.mxu0 0
      %964 = vmatprep.subr.bf16.mxu0 0
      %965 = vmatpush1.bf16.msra.mxu0 0
      %966 = vmatprep.subr.bf16.mxu0 0
      %967 = vmatpush1.bf16.msra.mxu0 0
      %968 = vmatprep.subr.bf16.mxu0 0
      %969 = vmatpush1.bf16.msra.mxu0 0
      %970 = vmatprep.subr.bf16.mxu0 0
      %971 = vmatpush1.bf16.msra.mxu0 0
      %972 = vmatprep.subr.bf16.mxu0 0
      %973 = vmatpush1.bf16.msra.mxu0 0
      %974 = vmatprep.subr.bf16.mxu0 0
      %975 = vmatpush1.bf16.msra.mxu0 0
      %976 = vmatprep.subr.bf16.mxu0 0
      %977 = vmatpush1.bf16.msra.mxu0 0
      %978 = vmatprep.subr.bf16.mxu0 0
      %979 = vmatpush1.bf16.msra.mxu0 0
      %980 = vmatprep.subr.bf16.mxu0 0
      %981 = vmatpush1.bf16.msra.mxu0 0
      %982 = vmatprep.subr.bf16.mxu0 0
      %983 = vmatpush1.bf16.msra.mxu0 0
      %984 = vmatprep.subr.bf16.mxu0 0
      %985 = vmatpush1.bf16.msra.mxu0 0
      %986 = vmatprep.subr.bf16.mxu0 0
      %987 = vmatpush1.bf16.msra.mxu0 0
      %988 = vmatprep.mubr.bf16.mxu0 0
      %989 = vmatmul.mubr.bf16.gmra.mrb[0].mxu0 %v954
      %v990 = vpop.f32.mrb[0].mxu0
      %v991 = vadd.f32 0.0, %v990
      %v992 = vpop.f32.mrb[0].mxu0
      %v993 = vpop.f32.mrb[0].mxu0
      %v994 = vpop.f32.mrb[0].mxu0
      %995 = vdwg.mxu0
      %v996 = vadd.f32 %v934, %v991
      %s997 = scalar_lea.vmem %s4, 144
      %v998 = vld [vmem:[%s997] sm:$0xf]
      %v999 = vld [vmem:[%s997 + $0x4] sm:$0xf]
      %v1000 = vld [vmem:[%s997 + $0x8] sm:$0xf]
      %v1001 = vld [vmem:[%s997 + $0xc] sm:$0xf]
      %v1003 = vunpack.c.l.b16 %v935
      %v1004 = vpack.c.b16 %v1003, %v1003
      %v1006 = vshrl.u32 %v1004, 16
      %v1008 = vshll.u32 %v1004, 16
      %v1010 = vrot.slane %v1008, 1
      %v1011 = vor.u32 %v1006, %v1010
      %v1016 = vunpack.c.l.b16 %v998
      %v1017 = vunpack.c.l.b16 %v999
      %v1018 = vunpack.c.l.b16 %v1000
      %v1019 = vunpack.c.l.b16 %v1001
      %v1020 = vpack.c.b16 %v1017, %v1016
      %v1021 = vpack.c.b16 %v1019, %v1018
      %v1025 = vsel %vm451, %v1011, 0
      %1027 = vmatprep.subr.bf16.mxu0 0
      %1028 = vmatpush1.bf16.msra.mxu0 %v1020
      %1029 = vmatprep.subr.bf16.mxu0 0
      %1030 = vmatpush1.bf16.msra.mxu0 %v1021
      %1031 = vmatprep.subr.bf16.mxu0 0
      %1032 = vmatpush1.bf16.msra.mxu0 0
      %1033 = vmatprep.subr.bf16.mxu0 0
      %1034 = vmatpush1.bf16.msra.mxu0 0
      %1035 = vmatprep.subr.bf16.mxu0 0
      %1036 = vmatpush1.bf16.msra.mxu0 0
      %1037 = vmatprep.subr.bf16.mxu0 0
      %1038 = vmatpush1.bf16.msra.mxu0 0
      %1039 = vmatprep.subr.bf16.mxu0 0
      %1040 = vmatpush1.bf16.msra.mxu0 0
      %1041 = vmatprep.subr.bf16.mxu0 0
      %1042 = vmatpush1.bf16.msra.mxu0 0
      %1043 = vmatprep.subr.bf16.mxu0 0
      %1044 = vmatpush1.bf16.msra.mxu0 0
      %1045 = vmatprep.subr.bf16.mxu0 0
      %1046 = vmatpush1.bf16.msra.mxu0 0
      %1047 = vmatprep.subr.bf16.mxu0 0
      %1048 = vmatpush1.bf16.msra.mxu0 0
      %1049 = vmatprep.subr.bf16.mxu0 0
      %1050 = vmatpush1.bf16.msra.mxu0 0
      %1051 = vmatprep.subr.bf16.mxu0 0
      %1052 = vmatpush1.bf16.msra.mxu0 0
      %1053 = vmatprep.subr.bf16.mxu0 0
      %1054 = vmatpush1.bf16.msra.mxu0 0
      %1055 = vmatprep.subr.bf16.mxu0 0
      %1056 = vmatpush1.bf16.msra.mxu0 0
      %1057 = vmatprep.subr.bf16.mxu0 0
      %1058 = vmatpush1.bf16.msra.mxu0 0
      %1059 = vmatprep.mubr.bf16.mxu0 0
      %1060 = vmatmul.mubr.bf16.gmra.mrb[0].mxu0 %v1025
      %v1061 = vpop.f32.mrb[0].mxu0
      %v1062 = vadd.f32 0.0, %v1061
      %v1063 = vpop.f32.mrb[0].mxu0
      %v1064 = vpop.f32.mrb[0].mxu0
      %v1065 = vpop.f32.mrb[0].mxu0
      %1066 = vdwg.mxu0
      %v1067 = vadd.f32 %v996, %v1062
      %s1068 = scalar_lea.vmem %s4, 160
      %v1069 = vld [vmem:[%s1068] sm:$0xf]
      %v1070 = vld [vmem:[%s1068 + $0x4] sm:$0xf]
      %v1071 = vld [vmem:[%s1068 + $0x8] sm:$0xf]
      %v1072 = vld [vmem:[%s1068 + $0xc] sm:$0xf]
      %v1073 = vrot.slane %v1004, 1
      %v1078 = vunpack.c.l.b16 %v1069
      %v1079 = vunpack.c.l.b16 %v1070
      %v1080 = vunpack.c.l.b16 %v1071
      %v1081 = vunpack.c.l.b16 %v1072
      %v1082 = vpack.c.b16 %v1079, %v1078
      %v1083 = vpack.c.b16 %v1081, %v1080
      %v1087 = vsel %vm451, %v1073, 0
      %1089 = vmatprep.subr.bf16.mxu0 0
      %1090 = vmatpush1.bf16.msra.mxu0 %v1082
      %1091 = vmatprep.subr.bf16.mxu0 0
      %1092 = vmatpush1.bf16.msra.mxu0 %v1083
      %1093 = vmatprep.subr.bf16.mxu0 0
      %1094 = vmatpush1.bf16.msra.mxu0 0
      %1095 = vmatprep.subr.bf16.mxu0 0
      %1096 = vmatpush1.bf16.msra.mxu0 0
      %1097 = vmatprep.subr.bf16.mxu0 0
      %1098 = vmatpush1.bf16.msra.mxu0 0
      %1099 = vmatprep.subr.bf16.mxu0 0
      %1100 = vmatpush1.bf16.msra.mxu0 0
      %1101 = vmatprep.subr.bf16.mxu0 0
      %1102 = vmatpush1.bf16.msra.mxu0 0
      %1103 = vmatprep.subr.bf16.mxu0 0
      %1104 = vmatpush1.bf16.msra.mxu0 0
      %1105 = vmatprep.subr.bf16.mxu0 0
      %1106 = vmatpush1.bf16.msra.mxu0 0
      %1107 = vmatprep.subr.bf16.mxu0 0
      %1108 = vmatpush1.bf16.msra.mxu0 0
      %1109 = vmatprep.subr.bf16.mxu0 0
      %1110 = vmatpush1.bf16.msra.mxu0 0
      %1111 = vmatprep.subr.bf16.mxu0 0
      %1112 = vmatpush1.bf16.msra.mxu0 0
      %1113 = vmatprep.subr.bf16.mxu0 0
      %1114 = vmatpush1.bf16.msra.mxu0 0
      %1115 = vmatprep.subr.bf16.mxu0 0
      %1116 = vmatpush1.bf16.msra.mxu0 0
      %1117 = vmatprep.subr.bf16.mxu0 0
      %1118 = vmatpush1.bf16.msra.mxu0 0
      %1119 = vmatprep.subr.bf16.mxu0 0
      %1120 = vmatpush1.bf16.msra.mxu0 0
      %1121 = vmatprep.mubr.bf16.mxu0 0
      %1122 = vmatmul.mubr.bf16.gmra.mrb[0].mxu0 %v1087
      %v1123 = vpop.f32.mrb[0].mxu0
      %v1124 = vadd.f32 0.0, %v1123
      %v1125 = vpop.f32.mrb[0].mxu0
      %v1126 = vpop.f32.mrb[0].mxu0
      %v1127 = vpop.f32.mrb[0].mxu0
      %1128 = vdwg.mxu0
      %v1129 = vadd.f32 %v1067, %v1124
      %s1130 = scalar_lea.vmem %s4, 176
      %v1131 = vld [vmem:[%s1130] sm:$0xf]
      %v1132 = vld [vmem:[%s1130 + $0x4] sm:$0xf]
      %v1133 = vld [vmem:[%s1130 + $0x8] sm:$0xf]
      %v1134 = vld [vmem:[%s1130 + $0xc] sm:$0xf]
      %v1135 = vrot.slane %v1006, 1
      %v1136 = vrot.slane %v1008, 2
      %v1137 = vor.u32 %v1135, %v1136
      %v1142 = vunpack.c.l.b16 %v1131
      %v1143 = vunpack.c.l.b16 %v1132
      %v1144 = vunpack.c.l.b16 %v1133
      %v1145 = vunpack.c.l.b16 %v1134
      %v1146 = vpack.c.b16 %v1143, %v1142
      %v1147 = vpack.c.b16 %v1145, %v1144
      %v1151 = vsel %vm451, %v1137, 0
      %1153 = vmatprep.subr.bf16.mxu0 0
      %1154 = vmatpush1.bf16.msra.mxu0 %v1146
      %1155 = vmatprep.subr.bf16.mxu0 0
      %1156 = vmatpush1.bf16.msra.mxu0 %v1147
      %1157 = vmatprep.subr.bf16.mxu0 0
      %1158 = vmatpush1.bf16.msra.mxu0 0
      %1159 = vmatprep.subr.bf16.mxu0 0
      %1160 = vmatpush1.bf16.msra.mxu0 0
      %1161 = vmatprep.subr.bf16.mxu0 0
      %1162 = vmatpush1.bf16.msra.mxu0 0
      %1163 = vmatprep.subr.bf16.mxu0 0
      %1164 = vmatpush1.bf16.msra.mxu0 0
      %1165 = vmatprep.subr.bf16.mxu0 0
      %1166 = vmatpush1.bf16.msra.mxu0 0
      %1167 = vmatprep.subr.bf16.mxu0 0
      %1168 = vmatpush1.bf16.msra.mxu0 0
      %1169 = vmatprep.subr.bf16.mxu0 0
      %1170 = vmatpush1.bf16.msra.mxu0 0
      %1171 = vmatprep.subr.bf16.mxu0 0
      %1172 = vmatpush1.bf16.msra.mxu0 0
      %1173 = vmatprep.subr.bf16.mxu0 0
      %1174 = vmatpush1.bf16.msra.mxu0 0
      %1175 = vmatprep.subr.bf16.mxu0 0
      %1176 = vmatpush1.bf16.msra.mxu0 0
      %1177 = vmatprep.subr.bf16.mxu0 0
      %1178 = vmatpush1.bf16.msra.mxu0 0
      %1179 = vmatprep.subr.bf16.mxu0 0
      %1180 = vmatpush1.bf16.msra.mxu0 0
      %1181 = vmatprep.subr.bf16.mxu0 0
      %1182 = vmatpush1.bf16.msra.mxu0 0
      %1183 = vmatprep.subr.bf16.mxu0 0
      %1184 = vmatpush1.bf16.msra.mxu0 0
      %1185 = vmatprep.mubr.bf16.mxu0 0
      %1186 = vmatmul.mubr.bf16.gmra.mrb[0].mxu0 %v1151
      %v1187 = vpop.f32.mrb[0].mxu0
      %v1188 = vadd.f32 0.0, %v1187
      %v1189 = vpop.f32.mrb[0].mxu0
      %v1190 = vpop.f32.mrb[0].mxu0
      %v1191 = vpop.f32.mrb[0].mxu0
      %1192 = vdwg.mxu0
      %v1193 = vadd.f32 %v1129, %v1188
      %v1194 = vld [vmem:[%s400] sm:$0x7]
      %s1195 = scalar_lea.vmem %s4, 192
      %v1196 = vld [vmem:[%s1195] sm:$0xf]
      %v1197 = vld [vmem:[%s1195 + $0x4] sm:$0xf]
      %v1198 = vld [vmem:[%s1195 + $0x8] sm:$0xf]
      %v1199 = vld [vmem:[%s1195 + $0xc] sm:$0xf]
      %v1204 = vunpack.c.l.b16 %v1196
      %v1205 = vunpack.c.l.b16 %v1197
      %v1206 = vunpack.c.l.b16 %v1198
      %v1207 = vunpack.c.l.b16 %v1199
      %v1208 = vpack.c.b16 %v1205, %v1204
      %v1209 = vpack.c.b16 %v1207, %v1206
      %v1213 = vsel %vm451, %v1194, 0
      %1215 = vmatprep.subr.bf16.mxu0 0
      %1216 = vmatpush1.bf16.msra.mxu0 %v1208
      %1217 = vmatprep.subr.bf16.mxu0 0
      %1218 = vmatpush1.bf16.msra.mxu0 %v1209
      %1219 = vmatprep.subr.bf16.mxu0 0
      %1220 = vmatpush1.bf16.msra.mxu0 0
      %1221 = vmatprep.subr.bf16.mxu0 0
      %1222 = vmatpush1.bf16.msra.mxu0 0
      %1223 = vmatprep.subr.bf16.mxu0 0
      %1224 = vmatpush1.bf16.msra.mxu0 0
      %1225 = vmatprep.subr.bf16.mxu0 0
      %1226 = vmatpush1.bf16.msra.mxu0 0
      %1227 = vmatprep.subr.bf16.mxu0 0
      %1228 = vmatpush1.bf16.msra.mxu0 0
      %1229 = vmatprep.subr.bf16.mxu0 0
      %1230 = vmatpush1.bf16.msra.mxu0 0
      %1231 = vmatprep.subr.bf16.mxu0 0
      %1232 = vmatpush1.bf16.msra.mxu0 0
      %1233 = vmatprep.subr.bf16.mxu0 0
      %1234 = vmatpush1.bf16.msra.mxu0 0
      %1235 = vmatprep.subr.bf16.mxu0 0
      %1236 = vmatpush1.bf16.msra.mxu0 0
      %1237 = vmatprep.subr.bf16.mxu0 0
      %1238 = vmatpush1.bf16.msra.mxu0 0
      %1239 = vmatprep.subr.bf16.mxu0 0
      %1240 = vmatpush1.bf16.msra.mxu0 0
      %1241 = vmatprep.subr.bf16.mxu0 0
      %1242 = vmatpush1.bf16.msra.mxu0 0
      %1243 = vmatprep.subr.bf16.mxu0 0
      %1244 = vmatpush1.bf16.msra.mxu0 0
      %1245 = vmatprep.subr.bf16.mxu0 0
      %1246 = vmatpush1.bf16.msra.mxu0 0
      %1247 = vmatprep.mubr.bf16.mxu0 0
      %1248 = vmatmul.mubr.bf16.gmra.mrb[0].mxu0 %v1213
      %v1249 = vpop.f32.mrb[0].mxu0
      %v1250 = vadd.f32 0.0, %v1249
      %v1251 = vpop.f32.mrb[0].mxu0
      %v1252 = vpop.f32.mrb[0].mxu0
      %v1253 = vpop.f32.mrb[0].mxu0
      %1254 = vdwg.mxu0
      %v1255 = vadd.f32 %v1193, %v1250
      %s1256 = scalar_lea.vmem %s4, 208
      %v1257 = vld [vmem:[%s1256] sm:$0xf]
      %v1258 = vld [vmem:[%s1256 + $0x4] sm:$0xf]
      %v1259 = vld [vmem:[%s1256 + $0x8] sm:$0xf]
      %v1260 = vld [vmem:[%s1256 + $0xc] sm:$0xf]
      %v1262 = vunpack.c.l.b16 %v1194
      %v1263 = vpack.c.b16 %v1262, %v1262
      %v1265 = vshrl.u32 %v1263, 16
      %v1267 = vshll.u32 %v1263, 16
      %v1269 = vrot.slane %v1267, 1
      %v1270 = vor.u32 %v1265, %v1269
      %v1275 = vunpack.c.l.b16 %v1257
      %v1276 = vunpack.c.l.b16 %v1258
      %v1277 = vunpack.c.l.b16 %v1259
      %v1278 = vunpack.c.l.b16 %v1260
      %v1279 = vpack.c.b16 %v1276, %v1275
      %v1280 = vpack.c.b16 %v1278, %v1277
      %v1284 = vsel %vm451, %v1270, 0
      %1286 = vmatprep.subr.bf16.mxu0 0
      %1287 = vmatpush1.bf16.msra.mxu0 %v1279
      %1288 = vmatprep.subr.bf16.mxu0 0
      %1289 = vmatpush1.bf16.msra.mxu0 %v1280
      %1290 = vmatprep.subr.bf16.mxu0 0
      %1291 = vmatpush1.bf16.msra.mxu0 0
      %1292 = vmatprep.subr.bf16.mxu0 0
      %1293 = vmatpush1.bf16.msra.mxu0 0
      %1294 = vmatprep.subr.bf16.mxu0 0
      %1295 = vmatpush1.bf16.msra.mxu0 0
      %1296 = vmatprep.subr.bf16.mxu0 0
      %1297 = vmatpush1.bf16.msra.mxu0 0
      %1298 = vmatprep.subr.bf16.mxu0 0
      %1299 = vmatpush1.bf16.msra.mxu0 0
      %1300 = vmatprep.subr.bf16.mxu0 0
      %1301 = vmatpush1.bf16.msra.mxu0 0
      %1302 = vmatprep.subr.bf16.mxu0 0
      %1303 = vmatpush1.bf16.msra.mxu0 0
      %1304 = vmatprep.subr.bf16.mxu0 0
      %1305 = vmatpush1.bf16.msra.mxu0 0
      %1306 = vmatprep.subr.bf16.mxu0 0
      %1307 = vmatpush1.bf16.msra.mxu0 0
      %1308 = vmatprep.subr.bf16.mxu0 0
      %1309 = vmatpush1.bf16.msra.mxu0 0
      %1310 = vmatprep.subr.bf16.mxu0 0
      %1311 = vmatpush1.bf16.msra.mxu0 0
      %1312 = vmatprep.subr.bf16.mxu0 0
      %1313 = vmatpush1.bf16.msra.mxu0 0
      %1314 = vmatprep.subr.bf16.mxu0 0
      %1315 = vmatpush1.bf16.msra.mxu0 0
      %1316 = vmatprep.subr.bf16.mxu0 0
      %1317 = vmatpush1.bf16.msra.mxu0 0
      %1318 = vmatprep.mubr.bf16.mxu0 0
      %1319 = vmatmul.mubr.bf16.gmra.mrb[0].mxu0 %v1284
      %v1320 = vpop.f32.mrb[0].mxu0
      %v1321 = vadd.f32 0.0, %v1320
      %v1322 = vpop.f32.mrb[0].mxu0
      %v1323 = vpop.f32.mrb[0].mxu0
      %v1324 = vpop.f32.mrb[0].mxu0
      %1325 = vdwg.mxu0
      %v1326 = vadd.f32 %v1255, %v1321
      %s1327 = scalar_lea.vmem %s4, 224
      %v1328 = vld [vmem:[%s1327] sm:$0xf]
      %v1329 = vld [vmem:[%s1327 + $0x4] sm:$0xf]
      %v1330 = vld [vmem:[%s1327 + $0x8] sm:$0xf]
      %v1331 = vld [vmem:[%s1327 + $0xc] sm:$0xf]
      %v1332 = vrot.slane %v1263, 1
      %v1337 = vunpack.c.l.b16 %v1328
      %v1338 = vunpack.c.l.b16 %v1329
      %v1339 = vunpack.c.l.b16 %v1330
      %v1340 = vunpack.c.l.b16 %v1331
      %v1341 = vpack.c.b16 %v1338, %v1337
      %v1342 = vpack.c.b16 %v1340, %v1339
      %v1346 = vsel %vm451, %v1332, 0
      %1348 = vmatprep.subr.bf16.mxu0 0
      %1349 = vmatpush1.bf16.msra.mxu0 %v1341
      %1350 = vmatprep.subr.bf16.mxu0 0
      %1351 = vmatpush1.bf16.msra.mxu0 %v1342
      %1352 = vmatprep.subr.bf16.mxu0 0
      %1353 = vmatpush1.bf16.msra.mxu0 0
      %1354 = vmatprep.subr.bf16.mxu0 0
      %1355 = vmatpush1.bf16.msra.mxu0 0
      %1356 = vmatprep.subr.bf16.mxu0 0
      %1357 = vmatpush1.bf16.msra.mxu0 0
      %1358 = vmatprep.subr.bf16.mxu0 0
      %1359 = vmatpush1.bf16.msra.mxu0 0
      %1360 = vmatprep.subr.bf16.mxu0 0
      %1361 = vmatpush1.bf16.msra.mxu0 0
      %1362 = vmatprep.subr.bf16.mxu0 0
      %1363 = vmatpush1.bf16.msra.mxu0 0
      %1364 = vmatprep.subr.bf16.mxu0 0
      %1365 = vmatpush1.bf16.msra.mxu0 0
      %1366 = vmatprep.subr.bf16.mxu0 0
      %1367 = vmatpush1.bf16.msra.mxu0 0
      %1368 = vmatprep.subr.bf16.mxu0 0
      %1369 = vmatpush1.bf16.msra.mxu0 0
      %1370 = vmatprep.subr.bf16.mxu0 0
      %1371 = vmatpush1.bf16.msra.mxu0 0
      %1372 = vmatprep.subr.bf16.mxu0 0
      %1373 = vmatpush1.bf16.msra.mxu0 0
      %1374 = vmatprep.subr.bf16.mxu0 0
      %1375 = vmatpush1.bf16.msra.mxu0 0
      %1376 = vmatprep.subr.bf16.mxu0 0
      %1377 = vmatpush1.bf16.msra.mxu0 0
      %1378 = vmatprep.subr.bf16.mxu0 0
      %1379 = vmatpush1.bf16.msra.mxu0 0
      %1380 = vmatprep.mubr.bf16.mxu0 0
      %1381 = vmatmul.mubr.bf16.gmra.mrb[0].mxu0 %v1346
      %v1382 = vpop.f32.mrb[0].mxu0
      %v1383 = vadd.f32 0.0, %v1382
      %v1384 = vpop.f32.mrb[0].mxu0
      %v1385 = vpop.f32.mrb[0].mxu0
      %v1386 = vpop.f32.mrb[0].mxu0
      %1387 = vdwg.mxu0
      %v1388 = vadd.f32 %v1326, %v1383
      %s1389 = scalar_lea.vmem %s4, 240
      %v1390 = vld [vmem:[%s1389] sm:$0xf]
      %v1391 = vld [vmem:[%s1389 + $0x4] sm:$0xf]
      %v1392 = vld [vmem:[%s1389 + $0x8] sm:$0xf]
      %v1393 = vld [vmem:[%s1389 + $0xc] sm:$0xf]
      %v1394 = vrot.slane %v1265, 1
      %v1395 = vrot.slane %v1267, 2
      %v1396 = vor.u32 %v1394, %v1395
      %v1401 = vunpack.c.l.b16 %v1390
      %v1402 = vunpack.c.l.b16 %v1391
      %v1403 = vunpack.c.l.b16 %v1392
      %v1404 = vunpack.c.l.b16 %v1393
      %v1405 = vpack.c.b16 %v1402, %v1401
      %v1406 = vpack.c.b16 %v1404, %v1403
      %v1410 = vsel %vm451, %v1396, 0
      %1412 = vmatprep.subr.bf16.mxu0 0
      %1413 = vmatpush1.bf16.msra.mxu0 %v1405
      %1414 = vmatprep.subr.bf16.mxu0 0
      %1415 = vmatpush1.bf16.msra.mxu0 %v1406
      %1416 = vmatprep.subr.bf16.mxu0 0
      %1417 = vmatpush1.bf16.msra.mxu0 0
      %1418 = vmatprep.subr.bf16.mxu0 0
      %1419 = vmatpush1.bf16.msra.mxu0 0
      %1420 = vmatprep.subr.bf16.mxu0 0
      %1421 = vmatpush1.bf16.msra.mxu0 0
      %1422 = vmatprep.subr.bf16.mxu0 0
      %1423 = vmatpush1.bf16.msra.mxu0 0
      %1424 = vmatprep.subr.bf16.mxu0 0
      %1425 = vmatpush1.bf16.msra.mxu0 0
      %1426 = vmatprep.subr.bf16.mxu0 0
      %1427 = vmatpush1.bf16.msra.mxu0 0
      %1428 = vmatprep.subr.bf16.mxu0 0
      %1429 = vmatpush1.bf16.msra.mxu0 0
      %1430 = vmatprep.subr.bf16.mxu0 0
      %1431 = vmatpush1.bf16.msra.mxu0 0
      %1432 = vmatprep.subr.bf16.mxu0 0
      %1433 = vmatpush1.bf16.msra.mxu0 0
      %1434 = vmatprep.subr.bf16.mxu0 0
      %1435 = vmatpush1.bf16.msra.mxu0 0
      %1436 = vmatprep.subr.bf16.mxu0 0
      %1437 = vmatpush1.bf16.msra.mxu0 0
      %1438 = vmatprep.subr.bf16.mxu0 0
      %1439 = vmatpush1.bf16.msra.mxu0 0
      %1440 = vmatprep.subr.bf16.mxu0 0
      %1441 = vmatpush1.bf16.msra.mxu0 0
      %1442 = vmatprep.subr.bf16.mxu0 0
      %1443 = vmatpush1.bf16.msra.mxu0 0
      %1444 = vmatprep.mubr.bf16.mxu0 0
      %1445 = vmatmul.mubr.bf16.gmra.mrb[0].mxu0 %v1410
      %v1446 = vpop.f32.mrb[0].mxu0
      %v1447 = vadd.f32 0.0, %v1446
      %v1448 = vpop.f32.mrb[0].mxu0
      %v1449 = vpop.f32.mrb[0].mxu0
      %v1450 = vpop.f32.mrb[0].mxu0
      %1451 = vdwg.mxu0
      %v1452 = vadd.f32 %v1388, %v1447
      %vm1453 = vcmask 518144
      %1454 = vst.msk [vmem:[%s409] sm:$0x7] %vm1453, %v1452
      %v1455 = vsel %vm1453, %v1452, 0.0
      %v1456 = vrot.slane %v1455, 4
      %v1457 = vadd.f32 %v1455, %v1456
      %v1458 = vrot.slane %v1457, 2
      %v1459 = vadd.f32 %v1457, %v1458
      %v1460 = vrot.slane %v1459, 1
      %v1461 = vadd.f32 %v1459, %v1460
      %v1462 = vmul.f32 %v1452, %v1452
      %v1463 = vsel %vm1453, %v1462, 0.0
      %v1464 = vrot.slane %v1463, 4
      %v1465 = vadd.f32 %v1463, %v1464
      %v1466 = vrot.slane %v1465, 2
      %v1467 = vadd.f32 %v1465, %v1466
      %v1468 = vrot.slane %v1467, 1
      %v1469 = vadd.f32 %v1467, %v1468
      %vm1470 = vcmask 1040384
      %v1471 = vsel %vm1470, %v1461, %v1469
      %vm1472 = vcmask 517120
      %1473 = vst.msk [vmem:[%s417] sm:$0x3] %vm1472, %v1471
      %p1474 = scmp.lt.s32.totalorder %s22, 1
      %s1475 = scalar_select %p1474, %s22, 1
      %p1476 = scmp.lt.s32.totalorder %s23, 2
      %s1477 = scalar_select %p1476, %s23, 2
      %s1478 = smul.addr %s1475, 3
      %s1479 = sadd.s32 %s1477, %s1478
      %s1480 = smul.addr %s1479, 4
      %s1481 = scalar_lea.vmem %s5, %s1480
      %p1482 = scmp.lt.s32.totalorder %s22, 1
      %s1483 = scalar_select %p1482, %s22, 1
      %p1484 = scmp.lt.s32.totalorder %s23, 2
      %s1485 = scalar_select %p1484, %s23, 2
      %s1486 = smul.addr %s1483, 3
      %s1487 = sadd.s32 %s1485, %s1486
      %s1488 = smul.addr %s1487, 2
      %s1489 = scalar_lea.vmem %s6, %s1488
      // Predicated region
      $region41: #{nlayer_discriminator_forward.13} parent=39 // pred_check
        %p1490 = pneg %p189
      $region42: #{nlayer_discriminator_forward.13} parent=39 // pred_check_branch
        %1492 = sbr.rel (%p1490) target = $region44
      $region43: #{nlayer_discriminator_forward.13} parent=39 // pred_region
        _
      $region44: #{nlayer_discriminator_forward.13} parent=39 // pred_fallthru
        _
      // Predicated region
      $region45: #{nlayer_discriminator_forward.13} parent=39 // pred_check
        %p1493 = pneg %p217
      $region46: #{nlayer_discriminator_forward.13} parent=39 // pred_check_branch
        %1495 = sbr.rel (%p1493) target = $region48
      $region47: #{nlayer_discriminator_forward.13} parent=39 // pred_region
        _
      $region48: #{nlayer_discriminator_forward.13} parent=39 // pred_fallthru
        _
    $region40: #{nlayer_discriminator_forward.13} parent=5 // pred_fallthru
      _
    %p1496 = scmp.le.s32.totalorder 2, %s13
    // Predicated region
    $region49: #{nlayer_discriminator_forward.13} parent=5 // pred_check
      %p1497 = pneg %p1496
    $region50: #{nlayer_discriminator_forward.13} parent=5 // pred_check_branch
      %1499 = sbr.rel (%p1497) target = $region52
    $region51: #{nlayer_discriminator_forward.13} parent=5 // pred_region
      %s1500 = ssub.s32 %s13, 2
      // Predicated region
      $region53: #{nlayer_discriminator_forward.13} parent=51 // pred_check
        %p1501 = pneg %p195
      $region54: #{nlayer_discriminator_forward.13} parent=51 // pred_check_branch
        %1503 = sbr.rel (%p1501) target = $region56
      $region55: #{nlayer_discriminator_forward.13} parent=51 // pred_region
        %p1504 = scmp.lt.s32.totalorder %s24, 1
        %s1505 = scalar_select %p1504, %s24, 1
        %p1506 = scmp.lt.s32.totalorder %s25, 2
        %s1507 = scalar_select %p1506, %s25, 2
        %s1508 = smul.addr %s1505, 3
        %s1509 = sadd.s32 %s1507, %s1508
        %s1510 = smul.addr %s1509, 4
        %s1511 = scalar_lea.vmem %s5, %s1510
      $region56: #{nlayer_discriminator_forward.13} parent=51 // pred_fallthru
        _
      // Predicated region
      $region57: #{nlayer_discriminator_forward.13} parent=51 // pred_check
        %p1512 = pneg %p223
      $region58: #{nlayer_discriminator_forward.13} parent=51 // pred_check_branch
        %1514 = sbr.rel (%p1512) target = $region60
      $region59: #{nlayer_discriminator_forward.13} parent=51 // pred_region
        %p1515 = scmp.lt.s32.totalorder %s24, 1
        %s1516 = scalar_select %p1515, %s24, 1
        %p1517 = scmp.lt.s32.totalorder %s25, 2
        %s1518 = scalar_select %p1517, %s25, 2
        %s1519 = smul.addr %s1516, 3
        %s1520 = sadd.s32 %s1518, %s1519
        %s1521 = smul.addr %s1520, 2
        %s1522 = scalar_lea.vmem %s6, %s1521
      $region60: #{nlayer_discriminator_forward.13} parent=51 // pred_fallthru
        _
    $region52: #{nlayer_discriminator_forward.13} parent=5 // pred_fallthru
      _
  $region6: #{nlayer_discriminator_forward.13} parent=0 // loop_footer
    %s17 = sadd.s32 1, %s13
  $region7: #{nlayer_discriminator_forward.13} parent=0 // loop_footer_branch
    %12 = sbr.rel target = $region3
  $region8: #{nlayer_discriminator_forward.13} parent=0 // loop_exit
    _

// kernel: nlayer_discriminator_forward.15
$region0: #{nlayer_discriminator_forward.15}
  #allocation0 [shape = 'u32[]', space=smem, size = 0x4, offset = 0x4, fixed_abs, tag = 'smem constant byte address 0x4 - core index']
  #allocation1 [shape = 'u32[144,128]{1,0:T(1,128)}', space=vmem, size = 0x12000, scoped, tag = 'internal scratch']
  %s0 = inlined_call_operand.vmem [shape: bf16[2,5,5,64], index: 0, kind: input, shape index: {}, may-alias: {0,1,2,3}]
  %s1 = inlined_call_operand.vmem [shape: bf16[2,5,5,64], index: 1, kind: input, shape index: {}, may-alias: {0,1,2,3}]
  %s2 = inlined_call_operand.vmem [shape: bf16[2,5,5,64], index: 2, kind: input, shape index: {}, may-alias: {0,1,2,3}]
  %s3 = inlined_call_operand.vmem [shape: bf16[2,5,5,64], index: 3, kind: input, shape index: {}, may-alias: {0,1,2,3}]
  %s4 = inlined_call_operand.vmem [shape: bf16[4,4,64,128], index: 4, kind: input, shape index: {}]
  %s5 = inlined_call_operand.vmem [shape: f32[1,128], index: 5, kind: input, shape index: {}]
  %s6 = inlined_call_operand.vmem [shape: f32[2,2,2,128], index: 6, kind: output, shape index: {}]
  %s7 = sld [smem:[#allocation0]]
  $region57: #{nlayer_discriminator_forward.15} parent=0
    _
  %s9 = ssub.s32 1, %s7
  %s10 = scalar_select 0, %s9, %s7
  loop: start=0, step=1, limit=6
  $region2: #{nlayer_discriminator_forward.15} parent=0 // loop_pre_header
    _
  $region3: #{nlayer_discriminator_forward.15} parent=0 // loop_header
    %s12 = sphi 0, %s16
    %p13 = scmp.ge.s32.totalorder %s12, 6
    %s19 = sphi 0, %s31
    %s20 = sphi 0, %s27
    %s21 = sphi 0, %s19
    %s22 = sphi 0, %s20
    %s23 = sphi 0, %s21
    %s24 = sphi 0, %s22
    %s36 = sphi 0, %s38
    %s39 = sphi 0, %s36
    %s40 = sphi 0, %s39
    %s56 = sphi 0, %s40
    %s66 = sphi 0, %s68
    %s69 = sphi 0, %s66
    %s70 = sphi 0, %s69
    %s86 = sphi 0, %s70
    %s96 = sphi 0, %s98
    %s99 = sphi 0, %s96
    %s100 = sphi 0, %s99
    %s116 = sphi 0, %s100
    %s126 = sphi 0, %s128
    %s129 = sphi 0, %s126
    %s130 = sphi 0, %s129
    %s146 = sphi 0, %s130
    %s150 = sphi 0, %s150
    %s152 = sphi 0, %s150
    %s153 = sphi 0, %s152
    %s167 = sphi 0, %s153
    %s171 = sphi 0, %s171
    %s173 = sphi 0, %s171
    %s174 = sphi 0, %s173
    %s188 = sphi 0, %s174
    %s196 = sphi 0, %s198
    %s199 = sphi 0, %s196
    %s200 = sphi 0, %s199
    %s216 = sphi 0, %s200
  $region4: #{nlayer_discriminator_forward.15} parent=0 // loop_header_branch
    %15 = sbr.rel (%p13) target = $region8
  $region5: #{nlayer_discriminator_forward.15} parent=0 // loop_body
    %s17 = ssub.s32 %s12, 1
    %s18 = ssub.s32 %s12, 2
    %s25 = sadd.s32 1, %s20
    %p26 = scmp.ge.s32.totalorder %s25, 2
    %s27 = scalar_select %p26, 0, %s25
    %s28 = sadd.s32 1, %s19
    %s29 = scalar_select %p26, %s28, %s19
    %p30 = scmp.ge.s32.totalorder %s29, 2
    %s31 = scalar_select %p30, 0, %s29
    %s32 = ssub.s32 %s19, %s31
    %s33 = ssub.s32 %s20, %s27
    %s34 = sor.u32 %s32, %s33
    %p35 = scmp.eq.s32.totalorder %s34, 0
    %s37 = sadd.s32 %s36, 1
    %s38 = scalar_select %p35, %s36, %s37
    %p41 = pneg %p35
    %p42 = scmp.eq.s32.totalorder %s12, 3
    %p43 = por %p41, %p42
    %p44 = scmp.ne.s32.totalorder %s36, %s39
    %p45 = scmp.eq.s32.totalorder %s12, 0
    %p46 = por %p44, %p45
    %p47 = scmp.ne.s32.totalorder %s36, %s39
    %p48 = scmp.eq.s32.totalorder %s17, 3
    %p49 = por %p47, %p48
    %p50 = scmp.ne.s32.totalorder %s39, %s40
    %p51 = scmp.eq.s32.totalorder %s17, 0
    %p52 = por %p50, %p51
    %p53 = scmp.ne.s32.totalorder %s39, %s40
    %p54 = scmp.eq.s32.totalorder %s18, 3
    %p55 = por %p53, %p54
    %p57 = scmp.ne.s32.totalorder %s40, %s56
    %p58 = scmp.eq.s32.totalorder %s18, 0
    %p59 = por %p57, %p58
    %s60 = sadd.s32 %s20, 1
    %s61 = sadd.s32 %s27, 1
    %s62 = ssub.s32 %s19, %s31
    %s63 = ssub.s32 %s60, %s61
    %s64 = sor.u32 %s62, %s63
    %p65 = scmp.eq.s32.totalorder %s64, 0
    %s67 = sadd.s32 %s66, 1
    %s68 = scalar_select %p65, %s66, %s67
    %p71 = pneg %p65
    %p72 = scmp.eq.s32.totalorder %s12, 3
    %p73 = por %p71, %p72
    %p74 = scmp.ne.s32.totalorder %s66, %s69
    %p75 = scmp.eq.s32.totalorder %s12, 0
    %p76 = por %p74, %p75
    %p77 = scmp.ne.s32.totalorder %s66, %s69
    %p78 = scmp.eq.s32.totalorder %s17, 3
    %p79 = por %p77, %p78
    %p80 = scmp.ne.s32.totalorder %s69, %s70
    %p81 = scmp.eq.s32.totalorder %s17, 0
    %p82 = por %p80, %p81
    %p83 = scmp.ne.s32.totalorder %s69, %s70
    %p84 = scmp.eq.s32.totalorder %s18, 3
    %p85 = por %p83, %p84
    %p87 = scmp.ne.s32.totalorder %s70, %s86
    %p88 = scmp.eq.s32.totalorder %s18, 0
    %p89 = por %p87, %p88
    %s90 = sadd.s32 %s20, 2
    %s91 = sadd.s32 %s27, 2
    %s92 = ssub.s32 %s19, %s31
    %s93 = ssub.s32 %s90, %s91
    %s94 = sor.u32 %s92, %s93
    %p95 = scmp.eq.s32.totalorder %s94, 0
    %s97 = sadd.s32 %s96, 1
    %s98 = scalar_select %p95, %s96, %s97
    %p101 = pneg %p95
    %p102 = scmp.eq.s32.totalorder %s12, 3
    %p103 = por %p101, %p102
    %p104 = scmp.ne.s32.totalorder %s96, %s99
    %p105 = scmp.eq.s32.totalorder %s12, 0
    %p106 = por %p104, %p105
    %p107 = scmp.ne.s32.totalorder %s96, %s99
    %p108 = scmp.eq.s32.totalorder %s17, 3
    %p109 = por %p107, %p108
    %p110 = scmp.ne.s32.totalorder %s99, %s100
    %p111 = scmp.eq.s32.totalorder %s17, 0
    %p112 = por %p110, %p111
    %p113 = scmp.ne.s32.totalorder %s99, %s100
    %p114 = scmp.eq.s32.totalorder %s18, 3
    %p115 = por %p113, %p114
    %p117 = scmp.ne.s32.totalorder %s100, %s116
    %p118 = scmp.eq.s32.totalorder %s18, 0
    %p119 = por %p117, %p118
    %s120 = sadd.s32 %s20, 3
    %s121 = sadd.s32 %s27, 3
    %s122 = ssub.s32 %s19, %s31
    %s123 = ssub.s32 %s120, %s121
    %s124 = sor.u32 %s122, %s123
    %p125 = scmp.eq.s32.totalorder %s124, 0
    %s127 = sadd.s32 %s126, 1
    %s128 = scalar_select %p125, %s126, %s127
    %p131 = pneg %p125
    %p132 = scmp.eq.s32.totalorder %s12, 3
    %p133 = por %p131, %p132
    %p134 = scmp.ne.s32.totalorder %s126, %s129
    %p135 = scmp.eq.s32.totalorder %s12, 0
    %p136 = por %p134, %p135
    %p137 = scmp.ne.s32.totalorder %s126, %s129
    %p138 = scmp.eq.s32.totalorder %s17, 3
    %p139 = por %p137, %p138
    %p140 = scmp.ne.s32.totalorder %s129, %s130
    %p141 = scmp.eq.s32.totalorder %s17, 0
    %p142 = por %p140, %p141
    %p143 = scmp.ne.s32.totalorder %s129, %s130
    %p144 = scmp.eq.s32.totalorder %s18, 3
    %p145 = por %p143, %p144
    %p147 = scmp.ne.s32.totalorder %s130, %s146
    %p148 = scmp.eq.s32.totalorder %s18, 0
    %p149 = por %p147, %p148
    %s151 = sadd.s32 %s150, 1
    %p154 = scmp.eq.s32.totalorder %s12, 3
    %p155 = scmp.ne.s32.totalorder %s150, %s152
    %p156 = scmp.eq.s32.totalorder %s12, 0
    %p157 = por %p155, %p156
    %p158 = scmp.ne.s32.totalorder %s150, %s152
    %p159 = scmp.eq.s32.totalorder %s17, 3
    %p160 = por %p158, %p159
    %p161 = scmp.ne.s32.totalorder %s152, %s153
    %p162 = scmp.eq.s32.totalorder %s17, 0
    %p163 = por %p161, %p162
    %p164 = scmp.ne.s32.totalorder %s152, %s153
    %p165 = scmp.eq.s32.totalorder %s18, 3
    %p166 = por %p164, %p165
    %p168 = scmp.ne.s32.totalorder %s153, %s167
    %p169 = scmp.eq.s32.totalorder %s18, 0
    %p170 = por %p168, %p169
    %s172 = sadd.s32 %s171, 1
    %p175 = scmp.eq.s32.totalorder %s12, 3
    %p176 = scmp.ne.s32.totalorder %s171, %s173
    %p177 = scmp.eq.s32.totalorder %s12, 0
    %p178 = por %p176, %p177
    %p179 = scmp.ne.s32.totalorder %s171, %s173
    %p180 = scmp.eq.s32.totalorder %s17, 3
    %p181 = por %p179, %p180
    %p182 = scmp.ne.s32.totalorder %s173, %s174
    %p183 = scmp.eq.s32.totalorder %s17, 0
    %p184 = por %p182, %p183
    %p185 = scmp.ne.s32.totalorder %s173, %s174
    %p186 = scmp.eq.s32.totalorder %s18, 3
    %p187 = por %p185, %p186
    %p189 = scmp.ne.s32.totalorder %s174, %s188
    %p190 = scmp.eq.s32.totalorder %s18, 0
    %p191 = por %p189, %p190
    %s192 = ssub.s32 %s19, %s31
    %s193 = ssub.s32 %s20, %s27
    %s194 = sor.u32 %s192, %s193
    %p195 = scmp.eq.s32.totalorder %s194, 0
    %s197 = sadd.s32 %s196, 1
    %s198 = scalar_select %p195, %s196, %s197
    %p201 = pneg %p195
    %p202 = scmp.eq.s32.totalorder %s12, 3
    %p203 = por %p201, %p202
    %p204 = scmp.ne.s32.totalorder %s196, %s199
    %p205 = scmp.eq.s32.totalorder %s12, 0
    %p206 = por %p204, %p205
    %p207 = scmp.ne.s32.totalorder %s196, %s199
    %p208 = scmp.eq.s32.totalorder %s17, 3
    %p209 = por %p207, %p208
    %p210 = scmp.ne.s32.totalorder %s199, %s200
    %p211 = scmp.eq.s32.totalorder %s17, 0
    %p212 = por %p210, %p211
    %p213 = scmp.ne.s32.totalorder %s199, %s200
    %p214 = scmp.eq.s32.totalorder %s18, 3
    %p215 = por %p213, %p214
    %p217 = scmp.ne.s32.totalorder %s200, %s216
    %p218 = scmp.eq.s32.totalorder %s18, 0
    %p219 = por %p217, %p218
    %p220 = scmp.le.s32.totalorder 1, %s12
    %p221 = scmp.lt.s32.totalorder %s12, 5
    %p222 = pnand %p220, %p221
    %p223 = pneg %p222
    // Predicated region
    $region9: #{nlayer_discriminator_forward.15} parent=5 // pred_check
      _
    $region10: #{nlayer_discriminator_forward.15} parent=5 // pred_check_branch
      %225 = sbr.rel (%p222) target = $region12
    $region11: #{nlayer_discriminator_forward.15} parent=5 // pred_region
      %s226 = ssub.s32 %s12, 1
      // Predicated region
      $region13: #{nlayer_discriminator_forward.15} parent=11 // pred_check
        %p227 = pneg %p163
      $region14: #{nlayer_discriminator_forward.15} parent=11 // pred_check_branch
        %229 = sbr.rel (%p227) target = $region16
      $region15: #{nlayer_discriminator_forward.15} parent=11 // pred_region
        _
      $region16: #{nlayer_discriminator_forward.15} parent=11 // pred_fallthru
        _
      // Predicated region
      $region17: #{nlayer_discriminator_forward.15} parent=11 // pred_check
        %p230 = pneg %p184
      $region18: #{nlayer_discriminator_forward.15} parent=11 // pred_check_branch
        %232 = sbr.rel (%p230) target = $region20
      $region19: #{nlayer_discriminator_forward.15} parent=11 // pred_region
        _
      $region20: #{nlayer_discriminator_forward.15} parent=11 // pred_fallthru
        _
    $region12: #{nlayer_discriminator_forward.15} parent=5 // pred_fallthru
      _
    %p233 = scmp.lt.s32.totalorder %s12, 4
    // Predicated region
    $region21: #{nlayer_discriminator_forward.15} parent=5 // pred_check
      %p234 = pneg %p233
    $region22: #{nlayer_discriminator_forward.15} parent=5 // pred_check_branch
      %236 = sbr.rel (%p234) target = $region24
    $region23: #{nlayer_discriminator_forward.15} parent=5 // pred_region
      // Predicated region
      $region25: #{nlayer_discriminator_forward.15} parent=23 // pred_check
        %p237 = pneg %p46
      $region26: #{nlayer_discriminator_forward.15} parent=23 // pred_check_branch
        %239 = sbr.rel (%p237) target = $region28
      $region27: #{nlayer_discriminator_forward.15} parent=23 // pred_region
        %p240 = scmp.lt.s32.totalorder %s19, 1
        %s241 = scalar_select %p240, %s19, 1
        %p242 = scmp.lt.s32.totalorder %s20, 4
        %s243 = scalar_select %p242, %s20, 4
        %s244 = smul.addr %s241, 5
        %s245 = sadd.s32 %s243, %s244
        %s246 = smul.addr %s245, 4
        %s247 = scalar_lea.vmem %s0, %s246
      $region28: #{nlayer_discriminator_forward.15} parent=23 // pred_fallthru
        _
      // Predicated region
      $region29: #{nlayer_discriminator_forward.15} parent=23 // pred_check
        %p248 = pneg %p76
      $region30: #{nlayer_discriminator_forward.15} parent=23 // pred_check_branch
        %250 = sbr.rel (%p248) target = $region32
      $region31: #{nlayer_discriminator_forward.15} parent=23 // pred_region
        %s251 = sadd.s32 %s20, 1
        %p252 = scmp.lt.s32.totalorder %s19, 1
        %s253 = scalar_select %p252, %s19, 1
        %p254 = scmp.lt.s32.totalorder %s251, 4
        %s255 = scalar_select %p254, %s251, 4
        %s256 = smul.addr %s253, 5
        %s257 = sadd.s32 %s255, %s256
        %s258 = smul.addr %s257, 4
        %s259 = scalar_lea.vmem %s1, %s258
        %s260 = sadd.s32 %s20, 1
      $region32: #{nlayer_discriminator_forward.15} parent=23 // pred_fallthru
        _
      // Predicated region
      $region33: #{nlayer_discriminator_forward.15} parent=23 // pred_check
        %p261 = pneg %p106
      $region34: #{nlayer_discriminator_forward.15} parent=23 // pred_check_branch
        %263 = sbr.rel (%p261) target = $region36
      $region35: #{nlayer_discriminator_forward.15} parent=23 // pred_region
        %s264 = sadd.s32 %s20, 2
        %p265 = scmp.lt.s32.totalorder %s19, 1
        %s266 = scalar_select %p265, %s19, 1
        %p267 = scmp.lt.s32.totalorder %s264, 4
        %s268 = scalar_select %p267, %s264, 4
        %s269 = smul.addr %s266, 5
        %s270 = sadd.s32 %s268, %s269
        %s271 = smul.addr %s270, 4
        %s272 = scalar_lea.vmem %s2, %s271
        %s273 = sadd.s32 %s20, 2
      $region36: #{nlayer_discriminator_forward.15} parent=23 // pred_fallthru
        _
      // Predicated region
      $region37: #{nlayer_discriminator_forward.15} parent=23 // pred_check
        %p274 = pneg %p136
      $region38: #{nlayer_discriminator_forward.15} parent=23 // pred_check_branch
        %276 = sbr.rel (%p274) target = $region40
      $region39: #{nlayer_discriminator_forward.15} parent=23 // pred_region
        %s277 = sadd.s32 %s20, 3
        %p278 = scmp.lt.s32.totalorder %s19, 1
        %s279 = scalar_select %p278, %s19, 1
        %p280 = scmp.lt.s32.totalorder %s277, 4
        %s281 = scalar_select %p280, %s277, 4
        %s282 = smul.addr %s279, 5
        %s283 = sadd.s32 %s281, %s282
        %s284 = smul.addr %s283, 4
        %s285 = scalar_lea.vmem %s3, %s284
        %s286 = sadd.s32 %s20, 3
      $region40: #{nlayer_discriminator_forward.15} parent=23 // pred_fallthru
        _
    $region24: #{nlayer_discriminator_forward.15} parent=5 // pred_fallthru
      _
    %p287 = scmp.le.s32.totalorder 1, %s12
    %p288 = scmp.lt.s32.totalorder %s12, 5
    %p289 = pnand %p287, %p288
    %p290 = pneg %p289
    // Predicated region
    $region41: #{nlayer_discriminator_forward.15} parent=5 // pred_check
      _
    $region42: #{nlayer_discriminator_forward.15} parent=5 // pred_check_branch
      %292 = sbr.rel (%p289) target = $region44
    $region43: #{nlayer_discriminator_forward.15} parent=5 // pred_region
      %s293 = ssub.s32 %s12, 1
      %p294 = scmp.lt.s32.totalorder %s21, 1
      %s295 = scalar_select %p294, %s21, 1
      %p296 = scmp.lt.s32.totalorder %s22, 4
      %s297 = scalar_select %p296, %s22, 4
      %s298 = smul.addr %s295, 5
      %s299 = sadd.s32 %s297, %s298
      %s300 = smul.addr %s299, 4
      %s301 = scalar_lea.vmem %s0, %s300
      %p302 = pneg %p52
      %p303 = pneg %p49
      %s304 = sadd.s32 %s22, 1
      %p305 = scmp.lt.s32.totalorder %s21, 1
      %s306 = scalar_select %p305, %s21, 1
      %p307 = scmp.lt.s32.totalorder %s304, 4
      %s308 = scalar_select %p307, %s304, 4
      %s309 = smul.addr %s306, 5
      %s310 = sadd.s32 %s308, %s309
      %s311 = smul.addr %s310, 4
      %s312 = scalar_lea.vmem %s1, %s311
      %p313 = pneg %p82
      %p314 = pneg %p79
      %s315 = sadd.s32 %s22, 2
      %p316 = scmp.lt.s32.totalorder %s21, 1
      %s317 = scalar_select %p316, %s21, 1
      %p318 = scmp.lt.s32.totalorder %s315, 4
      %s319 = scalar_select %p318, %s315, 4
      %s320 = smul.addr %s317, 5
      %s321 = sadd.s32 %s319, %s320
      %s322 = smul.addr %s321, 4
      %s323 = scalar_lea.vmem %s2, %s322
      %p324 = pneg %p112
      %p325 = pneg %p109
      %s326 = sadd.s32 %s22, 3
      %p327 = scmp.lt.s32.totalorder %s21, 1
      %s328 = scalar_select %p327, %s21, 1
      %p329 = scmp.lt.s32.totalorder %s326, 4
      %s330 = scalar_select %p329, %s326, 4
      %s331 = smul.addr %s328, 5
      %s332 = sadd.s32 %s330, %s331
      %s333 = smul.addr %s332, 4
      %s334 = scalar_lea.vmem %s3, %s333
      %p335 = pneg %p142
      %p336 = pneg %p139
      %p337 = pneg %p163
      %p338 = pneg %p160
      %p339 = pneg %p184
      %p340 = pneg %p181
      %p341 = pneg %p212
      %p342 = pneg %p209
      %p343 = scmp.lt.s32.totalorder %s21, 1
      %s344 = scalar_select %p343, %s21, 1
      %p345 = scmp.lt.s32.totalorder %s22, 1
      %s346 = scalar_select %p345, %s22, 1
      %s347 = smul.addr %s344, 2
      %s348 = sadd.s32 %s346, %s347
      %s349 = smul.addr %s348, 2
      %s350 = scalar_lea.vmem %s6, %s349
      %p351 = scmp.lt.s32.totalorder %s21, 1
      %s352 = scalar_select %p351, %s21, 1
      %p353 = scmp.lt.s32.totalorder %s22, 4
      %s354 = scalar_select %p353, %s22, 4
      %s355 = smul.addr %s352, 5
      %s356 = sadd.s32 %s354, %s355
      %s357 = smul.addr %s356, 4
      %s358 = scalar_lea.vmem %s0, %s357
      %s359 = sadd.s32 %s22, 1
      %p360 = scmp.lt.s32.totalorder %s21, 1
      %s361 = scalar_select %p360, %s21, 1
      %p362 = scmp.lt.s32.totalorder %s359, 4
      %s363 = scalar_select %p362, %s359, 4
      %s364 = smul.addr %s361, 5
      %s365 = sadd.s32 %s363, %s364
      %s366 = smul.addr %s365, 4
      %s367 = scalar_lea.vmem %s1, %s366
      %s368 = sadd.s32 %s22, 1
      %s369 = sadd.s32 %s22, 2
      %p370 = scmp.lt.s32.totalorder %s21, 1
      %s371 = scalar_select %p370, %s21, 1
      %p372 = scmp.lt.s32.totalorder %s369, 4
      %s373 = scalar_select %p372, %s369, 4
      %s374 = smul.addr %s371, 5
      %s375 = sadd.s32 %s373, %s374
      %s376 = smul.addr %s375, 4
      %s377 = scalar_lea.vmem %s2, %s376
      %s378 = sadd.s32 %s22, 2
      %s379 = sadd.s32 %s22, 3
      %p380 = scmp.lt.s32.totalorder %s21, 1
      %s381 = scalar_select %p380, %s21, 1
      %p382 = scmp.lt.s32.totalorder %s379, 4
      %s383 = scalar_select %p382, %s379, 4
      %s384 = smul.addr %s381, 5
      %s385 = sadd.s32 %s383, %s384
      %s386 = smul.addr %s385, 4
      %s387 = scalar_lea.vmem %s3, %s386
      %s388 = sadd.s32 %s22, 3
      %p389 = scmp.lt.s32.totalorder %s21, 1
      %s390 = scalar_select %p389, %s21, 1
      %p391 = scmp.lt.s32.totalorder %s22, 1
      %s392 = scalar_select %p391, %s22, 1
      %s393 = smul.addr %s390, 2
      %s394 = sadd.s32 %s392, %s393
      %s395 = smul.addr %s394, 2
      %s396 = scalar_lea.vmem %s6, %s395
      %v398 = vld [vmem:[%s358] sm:$0x7]
      %v399 = vld [vmem:[%s4] sm:$0xf]
      %v400 = vld [vmem:[%s4 + $0x4] sm:$0xf]
      %v401 = vld [vmem:[%s4 + $0x8] sm:$0xf]
      %v402 = vld [vmem:[%s4 + $0xc] sm:$0xf]
      %v403 = vld [vmem:[%s4 + $0x10] sm:$0xf]
      %v404 = vld [vmem:[%s4 + $0x14] sm:$0xf]
      %v405 = vld [vmem:[%s4 + $0x18] sm:$0xf]
      %v406 = vld [vmem:[%s4 + $0x1c] sm:$0xf]
      %s407 = scalar_lea.vmem %s4, 32
      %v408 = vld [vmem:[%s407] sm:$0xf]
      %v409 = vld [vmem:[%s407 + $0x4] sm:$0xf]
      %v410 = vld [vmem:[%s407 + $0x8] sm:$0xf]
      %v411 = vld [vmem:[%s407 + $0xc] sm:$0xf]
      %v412 = vld [vmem:[%s407 + $0x10] sm:$0xf]
      %v413 = vld [vmem:[%s407 + $0x14] sm:$0xf]
      %v414 = vld [vmem:[%s407 + $0x18] sm:$0xf]
      %v415 = vld [vmem:[%s407 + $0x1c] sm:$0xf]
      %v417 = vunpack.c.l.b16 %v398
      %v418 = vpack.c.b16 %v417, %v417
      %v420 = vshrl.u32 %v418, 16
      %v422 = vshll.u32 %v418, 16
      %v424 = vrot.slane %v422, 1
      %v425 = vor.u32 %v420, %v424
      %v434 = vunpack.c.l.b16 %v408
      %v435 = vunpack.c.l.b16 %v409
      %v436 = vunpack.c.l.b16 %v410
      %v437 = vunpack.c.l.b16 %v411
      %v438 = vunpack.c.l.b16 %v412
      %v439 = vunpack.c.l.b16 %v413
      %v440 = vunpack.c.l.b16 %v414
      %v441 = vunpack.c.l.b16 %v415
      %v442 = vpack.c.b16 %v435, %v434
      %v443 = vpack.c.b16 %v437, %v436
      %v444 = vpack.c.b16 %v439, %v438
      %v445 = vpack.c.b16 %v441, %v440
      %vm450 = vcmask 523264
      %v452 = vsel %vm450, %v425, 0
      %454 = vmatprep.subr.bf16.mxu0 0
      %455 = vmatpush1.bf16.msra.mxu0 %v442
      %456 = vmatprep.subr.bf16.mxu0 0
      %457 = vmatpush1.bf16.msra.mxu0 %v443
      %458 = vmatprep.subr.bf16.mxu0 0
      %459 = vmatpush1.bf16.msra.mxu0 %v444
      %460 = vmatprep.subr.bf16.mxu0 0
      %461 = vmatpush1.bf16.msra.mxu0 %v445
      %462 = vmatprep.subr.bf16.mxu0 0
      %463 = vmatpush1.bf16.msra.mxu0 0
      %464 = vmatprep.subr.bf16.mxu0 0
      %465 = vmatpush1.bf16.msra.mxu0 0
      %466 = vmatprep.subr.bf16.mxu0 0
      %467 = vmatpush1.bf16.msra.mxu0 0
      %468 = vmatprep.subr.bf16.mxu0 0
      %469 = vmatpush1.bf16.msra.mxu0 0
      %470 = vmatprep.subr.bf16.mxu0 0
      %471 = vmatpush1.bf16.msra.mxu0 0
      %472 = vmatprep.subr.bf16.mxu0 0
      %473 = vmatpush1.bf16.msra.mxu0 0
      %474 = vmatprep.subr.bf16.mxu0 0
      %475 = vmatpush1.bf16.msra.mxu0 0
      %476 = vmatprep.subr.bf16.mxu0 0
      %477 = vmatpush1.bf16.msra.mxu0 0
      %478 = vmatprep.subr.bf16.mxu0 0
      %479 = vmatpush1.bf16.msra.mxu0 0
      %480 = vmatprep.subr.bf16.mxu0 0
      %481 = vmatpush1.bf16.msra.mxu0 0
      %482 = vmatprep.subr.bf16.mxu0 0
      %483 = vmatpush1.bf16.msra.mxu0 0
      %484 = vmatprep.subr.bf16.mxu0 0
      %485 = vmatpush1.bf16.msra.mxu0 0
      %486 = vmatprep.mubr.bf16.mxu0 0
      %487 = vmatmul.mubr.bf16.gmra.mrb[0].mxu0 %v452
      %v488 = vpop.f32.mrb[0].mxu0
      %v489 = vadd.f32 0.0, %v488
      %v490 = vpop.f32.mrb[0].mxu0
      %v491 = vpop.f32.mrb[0].mxu0
      %v492 = vpop.f32.mrb[0].mxu0
      %493 = vdwg.mxu0
      %v502 = vunpack.c.l.b16 %v399
      %v503 = vunpack.c.l.b16 %v400
      %v504 = vunpack.c.l.b16 %v401
      %v505 = vunpack.c.l.b16 %v402
      %v506 = vunpack.c.l.b16 %v403
      %v507 = vunpack.c.l.b16 %v404
      %v508 = vunpack.c.l.b16 %v405
      %v509 = vunpack.c.l.b16 %v406
      %v510 = vpack.c.b16 %v503, %v502
      %v511 = vpack.c.b16 %v505, %v504
      %v512 = vpack.c.b16 %v507, %v506
      %v513 = vpack.c.b16 %v509, %v508
      %v519 = vsel %vm450, %v398, 0
      %521 = vmatprep.subr.bf16.mxu0 0
      %522 = vmatpush1.bf16.msra.mxu0 %v510
      %523 = vmatprep.subr.bf16.mxu0 0
      %524 = vmatpush1.bf16.msra.mxu0 %v511
      %525 = vmatprep.subr.bf16.mxu0 0
      %526 = vmatpush1.bf16.msra.mxu0 %v512
      %527 = vmatprep.subr.bf16.mxu0 0
      %528 = vmatpush1.bf16.msra.mxu0 %v513
      %529 = vmatprep.subr.bf16.mxu0 0
      %530 = vmatpush1.bf16.msra.mxu0 0
      %531 = vmatprep.subr.bf16.mxu0 0
      %532 = vmatpush1.bf16.msra.mxu0 0
      %533 = vmatprep.subr.bf16.mxu0 0
      %534 = vmatpush1.bf16.msra.mxu0 0
      %535 = vmatprep.subr.bf16.mxu0 0
      %536 = vmatpush1.bf16.msra.mxu0 0
      %537 = vmatprep.subr.bf16.mxu0 0
      %538 = vmatpush1.bf16.msra.mxu0 0
      %539 = vmatprep.subr.bf16.mxu0 0
      %540 = vmatpush1.bf16.msra.mxu0 0
      %541 = vmatprep.subr.bf16.mxu0 0
      %542 = vmatpush1.bf16.msra.mxu0 0
      %543 = vmatprep.subr.bf16.mxu0 0
      %544 = vmatpush1.bf16.msra.mxu0 0
      %545 = vmatprep.subr.bf16.mxu0 0
      %546 = vmatpush1.bf16.msra.mxu0 0
      %547 = vmatprep.subr.bf16.mxu0 0
      %548 = vmatpush1.bf16.msra.mxu0 0
      %549 = vmatprep.subr.bf16.mxu0 0
      %550 = vmatpush1.bf16.msra.mxu0 0
      %551 = vmatprep.subr.bf16.mxu0 0
      %552 = vmatpush1.bf16.msra.mxu0 0
      %553 = vmatprep.mubr.bf16.mxu0 0
      %554 = vmatmul.mubr.bf16.gmra.mrb[0].mxu0 %v519
      %v555 = vpop.f32.mrb[0].mxu0
      %v556 = vadd.f32 %v489, %v555
      %v557 = vpop.f32.mrb[0].mxu0
      %v558 = vpop.f32.mrb[0].mxu0
      %v559 = vpop.f32.mrb[0].mxu0
      %560 = vdwg.mxu0
      %s561 = scalar_lea.vmem %s4, 64
      %v562 = vld [vmem:[%s561] sm:$0xf]
      %v563 = vld [vmem:[%s561 + $0x4] sm:$0xf]
      %v564 = vld [vmem:[%s561 + $0x8] sm:$0xf]
      %v565 = vld [vmem:[%s561 + $0xc] sm:$0xf]
      %v566 = vld [vmem:[%s561 + $0x10] sm:$0xf]
      %v567 = vld [vmem:[%s561 + $0x14] sm:$0xf]
      %v568 = vld [vmem:[%s561 + $0x18] sm:$0xf]
      %v569 = vld [vmem:[%s561 + $0x1c] sm:$0xf]
      %v570 = vrot.slane %v418, 1
      %v579 = vunpack.c.l.b16 %v562
      %v580 = vunpack.c.l.b16 %v563
      %v581 = vunpack.c.l.b16 %v564
      %v582 = vunpack.c.l.b16 %v565
      %v583 = vunpack.c.l.b16 %v566
      %v584 = vunpack.c.l.b16 %v567
      %v585 = vunpack.c.l.b16 %v568
      %v586 = vunpack.c.l.b16 %v569
      %v587 = vpack.c.b16 %v580, %v579
      %v588 = vpack.c.b16 %v582, %v581
      %v589 = vpack.c.b16 %v584, %v583
      %v590 = vpack.c.b16 %v586, %v585
      %v596 = vsel %vm450, %v570, 0
      %598 = vmatprep.subr.bf16.mxu0 0
      %599 = vmatpush1.bf16.msra.mxu0 %v587
      %600 = vmatprep.subr.bf16.mxu0 0
      %601 = vmatpush1.bf16.msra.mxu0 %v588
      %602 = vmatprep.subr.bf16.mxu0 0
      %603 = vmatpush1.bf16.msra.mxu0 %v589
      %604 = vmatprep.subr.bf16.mxu0 0
      %605 = vmatpush1.bf16.msra.mxu0 %v590
      %606 = vmatprep.subr.bf16.mxu0 0
      %607 = vmatpush1.bf16.msra.mxu0 0
      %608 = vmatprep.subr.bf16.mxu0 0
      %609 = vmatpush1.bf16.msra.mxu0 0
      %610 = vmatprep.subr.bf16.mxu0 0
      %611 = vmatpush1.bf16.msra.mxu0 0
      %612 = vmatprep.subr.bf16.mxu0 0
      %613 = vmatpush1.bf16.msra.mxu0 0
      %614 = vmatprep.subr.bf16.mxu0 0
      %615 = vmatpush1.bf16.msra.mxu0 0
      %616 = vmatprep.subr.bf16.mxu0 0
      %617 = vmatpush1.bf16.msra.mxu0 0
      %618 = vmatprep.subr.bf16.mxu0 0
      %619 = vmatpush1.bf16.msra.mxu0 0
      %620 = vmatprep.subr.bf16.mxu0 0
      %621 = vmatpush1.bf16.msra.mxu0 0
      %622 = vmatprep.subr.bf16.mxu0 0
      %623 = vmatpush1.bf16.msra.mxu0 0
      %624 = vmatprep.subr.bf16.mxu0 0
      %625 = vmatpush1.bf16.msra.mxu0 0
      %626 = vmatprep.subr.bf16.mxu0 0
      %627 = vmatpush1.bf16.msra.mxu0 0
      %628 = vmatprep.subr.bf16.mxu0 0
      %629 = vmatpush1.bf16.msra.mxu0 0
      %630 = vmatprep.mubr.bf16.mxu0 0
      %631 = vmatmul.mubr.bf16.gmra.mrb[0].mxu0 %v596
      %v632 = vpop.f32.mrb[0].mxu0
      %v633 = vadd.f32 0.0, %v632
      %v634 = vpop.f32.mrb[0].mxu0
      %v635 = vpop.f32.mrb[0].mxu0
      %v636 = vpop.f32.mrb[0].mxu0
      %637 = vdwg.mxu0
      %v638 = vadd.f32 %v556, %v633
      %s639 = scalar_lea.vmem %s4, 96
      %v640 = vld [vmem:[%s639] sm:$0xf]
      %v641 = vld [vmem:[%s639 + $0x4] sm:$0xf]
      %v642 = vld [vmem:[%s639 + $0x8] sm:$0xf]
      %v643 = vld [vmem:[%s639 + $0xc] sm:$0xf]
      %v644 = vld [vmem:[%s639 + $0x10] sm:$0xf]
      %v645 = vld [vmem:[%s639 + $0x14] sm:$0xf]
      %v646 = vld [vmem:[%s639 + $0x18] sm:$0xf]
      %v647 = vld [vmem:[%s639 + $0x1c] sm:$0xf]
      %v648 = vrot.slane %v420, 1
      %v649 = vrot.slane %v422, 2
      %v650 = vor.u32 %v648, %v649
      %v659 = vunpack.c.l.b16 %v640
      %v660 = vunpack.c.l.b16 %v641
      %v661 = vunpack.c.l.b16 %v642
      %v662 = vunpack.c.l.b16 %v643
      %v663 = vunpack.c.l.b16 %v644
      %v664 = vunpack.c.l.b16 %v645
      %v665 = vunpack.c.l.b16 %v646
      %v666 = vunpack.c.l.b16 %v647
      %v667 = vpack.c.b16 %v660, %v659
      %v668 = vpack.c.b16 %v662, %v661
      %v669 = vpack.c.b16 %v664, %v663
      %v670 = vpack.c.b16 %v666, %v665
      %v676 = vsel %vm450, %v650, 0
      %678 = vmatprep.subr.bf16.mxu0 0
      %679 = vmatpush1.bf16.msra.mxu0 %v667
      %680 = vmatprep.subr.bf16.mxu0 0
      %681 = vmatpush1.bf16.msra.mxu0 %v668
      %682 = vmatprep.subr.bf16.mxu0 0
      %683 = vmatpush1.bf16.msra.mxu0 %v669
      %684 = vmatprep.subr.bf16.mxu0 0
      %685 = vmatpush1.bf16.msra.mxu0 %v670
      %686 = vmatprep.subr.bf16.mxu0 0
      %687 = vmatpush1.bf16.msra.mxu0 0
      %688 = vmatprep.subr.bf16.mxu0 0
      %689 = vmatpush1.bf16.msra.mxu0 0
      %690 = vmatprep.subr.bf16.mxu0 0
      %691 = vmatpush1.bf16.msra.mxu0 0
      %692 = vmatprep.subr.bf16.mxu0 0
      %693 = vmatpush1.bf16.msra.mxu0 0
      %694 = vmatprep.subr.bf16.mxu0 0
      %695 = vmatpush1.bf16.msra.mxu0 0
      %696 = vmatprep.subr.bf16.mxu0 0
      %697 = vmatpush1.bf16.msra.mxu0 0
      %698 = vmatprep.subr.bf16.mxu0 0
      %699 = vmatpush1.bf16.msra.mxu0 0
      %700 = vmatprep.subr.bf16.mxu0 0
      %701 = vmatpush1.bf16.msra.mxu0 0
      %702 = vmatprep.subr.bf16.mxu0 0
      %703 = vmatpush1.bf16.msra.mxu0 0
      %704 = vmatprep.subr.bf16.mxu0 0
      %705 = vmatpush1.bf16.msra.mxu0 0
      %706 = vmatprep.subr.bf16.mxu0 0
      %707 = vmatpush1.bf16.msra.mxu0 0
      %708 = vmatprep.subr.bf16.mxu0 0
      %709 = vmatpush1.bf16.msra.mxu0 0
      %710 = vmatprep.mubr.bf16.mxu0 0
      %711 = vmatmul.mubr.bf16.gmra.mrb[0].mxu0 %v676
      %v712 = vpop.f32.mrb[0].mxu0
      %v713 = vadd.f32 0.0, %v712
      %v714 = vpop.f32.mrb[0].mxu0
      %v715 = vpop.f32.mrb[0].mxu0
      %v716 = vpop.f32.mrb[0].mxu0
      %717 = vdwg.mxu0
      %v718 = vadd.f32 %v638, %v713
      %v719 = vld [vmem:[%s367] sm:$0x7]
      %s720 = scalar_lea.vmem %s4, 128
      %v721 = vld [vmem:[%s720] sm:$0xf]
      %v722 = vld [vmem:[%s720 + $0x4] sm:$0xf]
      %v723 = vld [vmem:[%s720 + $0x8] sm:$0xf]
      %v724 = vld [vmem:[%s720 + $0xc] sm:$0xf]
      %v725 = vld [vmem:[%s720 + $0x10] sm:$0xf]
      %v726 = vld [vmem:[%s720 + $0x14] sm:$0xf]
      %v727 = vld [vmem:[%s720 + $0x18] sm:$0xf]
      %v728 = vld [vmem:[%s720 + $0x1c] sm:$0xf]
      %v737 = vunpack.c.l.b16 %v721
      %v738 = vunpack.c.l.b16 %v722
      %v739 = vunpack.c.l.b16 %v723
      %v740 = vunpack.c.l.b16 %v724
      %v741 = vunpack.c.l.b16 %v725
      %v742 = vunpack.c.l.b16 %v726
      %v743 = vunpack.c.l.b16 %v727
      %v744 = vunpack.c.l.b16 %v728
      %v745 = vpack.c.b16 %v738, %v737
      %v746 = vpack.c.b16 %v740, %v739
      %v747 = vpack.c.b16 %v742, %v741
      %v748 = vpack.c.b16 %v744, %v743
      %v754 = vsel %vm450, %v719, 0
      %756 = vmatprep.subr.bf16.mxu0 0
      %757 = vmatpush1.bf16.msra.mxu0 %v745
      %758 = vmatprep.subr.bf16.mxu0 0
      %759 = vmatpush1.bf16.msra.mxu0 %v746
      %760 = vmatprep.subr.bf16.mxu0 0
      %761 = vmatpush1.bf16.msra.mxu0 %v747
      %762 = vmatprep.subr.bf16.mxu0 0
      %763 = vmatpush1.bf16.msra.mxu0 %v748
      %764 = vmatprep.subr.bf16.mxu0 0
      %765 = vmatpush1.bf16.msra.mxu0 0
      %766 = vmatprep.subr.bf16.mxu0 0
      %767 = vmatpush1.bf16.msra.mxu0 0
      %768 = vmatprep.subr.bf16.mxu0 0
      %769 = vmatpush1.bf16.msra.mxu0 0
      %770 = vmatprep.subr.bf16.mxu0 0
      %771 = vmatpush1.bf16.msra.mxu0 0
      %772 = vmatprep.subr.bf16.mxu0 0
      %773 = vmatpush1.bf16.msra.mxu0 0
      %774 = vmatprep.subr.bf16.mxu0 0
      %775 = vmatpush1.bf16.msra.mxu0 0
      %776 = vmatprep.subr.bf16.mxu0 0
      %777 = vmatpush1.bf16.msra.mxu0 0
      %778 = vmatprep.subr.bf16.mxu0 0
      %779 = vmatpush1.bf16.msra.mxu0 0
      %780 = vmatprep.subr.bf16.mxu0 0
      %781 = vmatpush1.bf16.msra.mxu0 0
      %782 = vmatprep.subr.bf16.mxu0 0
      %783 = vmatpush1.bf16.msra.mxu0 0
      %784 = vmatprep.subr.bf16.mxu0 0
      %785 = vmatpush1.bf16.msra.mxu0 0
      %786 = vmatprep.subr.bf16.mxu0 0
      %787 = vmatpush1.bf16.msra.mxu0 0
      %788 = vmatprep.mubr.bf16.mxu0 0
      %789 = vmatmul.mubr.bf16.gmra.mrb[0].mxu0 %v754
      %v790 = vpop.f32.mrb[0].mxu0
      %v791 = vadd.f32 0.0, %v790
      %v792 = vpop.f32.mrb[0].mxu0
      %v793 = vpop.f32.mrb[0].mxu0
      %v794 = vpop.f32.mrb[0].mxu0
      %795 = vdwg.mxu0
      %v796 = vadd.f32 %v718, %v791
      %s797 = scalar_lea.vmem %s4, 160
      %v798 = vld [vmem:[%s797] sm:$0xf]
      %v799 = vld [vmem:[%s797 + $0x4] sm:$0xf]
      %v800 = vld [vmem:[%s797 + $0x8] sm:$0xf]
      %v801 = vld [vmem:[%s797 + $0xc] sm:$0xf]
      %v802 = vld [vmem:[%s797 + $0x10] sm:$0xf]
      %v803 = vld [vmem:[%s797 + $0x14] sm:$0xf]
      %v804 = vld [vmem:[%s797 + $0x18] sm:$0xf]
      %v805 = vld [vmem:[%s797 + $0x1c] sm:$0xf]
      %v807 = vunpack.c.l.b16 %v719
      %v808 = vpack.c.b16 %v807, %v807
      %v810 = vshrl.u32 %v808, 16
      %v812 = vshll.u32 %v808, 16
      %v814 = vrot.slane %v812, 1
      %v815 = vor.u32 %v810, %v814
      %v824 = vunpack.c.l.b16 %v798
      %v825 = vunpack.c.l.b16 %v799
      %v826 = vunpack.c.l.b16 %v800
      %v827 = vunpack.c.l.b16 %v801
      %v828 = vunpack.c.l.b16 %v802
      %v829 = vunpack.c.l.b16 %v803
      %v830 = vunpack.c.l.b16 %v804
      %v831 = vunpack.c.l.b16 %v805
      %v832 = vpack.c.b16 %v825, %v824
      %v833 = vpack.c.b16 %v827, %v826
      %v834 = vpack.c.b16 %v829, %v828
      %v835 = vpack.c.b16 %v831, %v830
      %v841 = vsel %vm450, %v815, 0
      %843 = vmatprep.subr.bf16.mxu0 0
      %844 = vmatpush1.bf16.msra.mxu0 %v832
      %845 = vmatprep.subr.bf16.mxu0 0
      %846 = vmatpush1.bf16.msra.mxu0 %v833
      %847 = vmatprep.subr.bf16.mxu0 0
      %848 = vmatpush1.bf16.msra.mxu0 %v834
      %849 = vmatprep.subr.bf16.mxu0 0
      %850 = vmatpush1.bf16.msra.mxu0 %v835
      %851 = vmatprep.subr.bf16.mxu0 0
      %852 = vmatpush1.bf16.msra.mxu0 0
      %853 = vmatprep.subr.bf16.mxu0 0
      %854 = vmatpush1.bf16.msra.mxu0 0
      %855 = vmatprep.subr.bf16.mxu0 0
      %856 = vmatpush1.bf16.msra.mxu0 0
      %857 = vmatprep.subr.bf16.mxu0 0
      %858 = vmatpush1.bf16.msra.mxu0 0
      %859 = vmatprep.subr.bf16.mxu0 0
      %860 = vmatpush1.bf16.msra.mxu0 0
      %861 = vmatprep.subr.bf16.mxu0 0
      %862 = vmatpush1.bf16.msra.mxu0 0
      %863 = vmatprep.subr.bf16.mxu0 0
      %864 = vmatpush1.bf16.msra.mxu0 0
      %865 = vmatprep.subr.bf16.mxu0 0
      %866 = vmatpush1.bf16.msra.mxu0 0
      %867 = vmatprep.subr.bf16.mxu0 0
      %868 = vmatpush1.bf16.msra.mxu0 0
      %869 = vmatprep.subr.bf16.mxu0 0
      %870 = vmatpush1.bf16.msra.mxu0 0
      %871 = vmatprep.subr.bf16.mxu0 0
      %872 = vmatpush1.bf16.msra.mxu0 0
      %873 = vmatprep.subr.bf16.mxu0 0
      %874 = vmatpush1.bf16.msra.mxu0 0
      %875 = vmatprep.mubr.bf16.mxu0 0
      %876 = vmatmul.mubr.bf16.gmra.mrb[0].mxu0 %v841
      %v877 = vpop.f32.mrb[0].mxu0
      %v878 = vadd.f32 0.0, %v877
      %v879 = vpop.f32.mrb[0].mxu0
      %v880 = vpop.f32.mrb[0].mxu0
      %v881 = vpop.f32.mrb[0].mxu0
      %882 = vdwg.mxu0
      %v883 = vadd.f32 %v796, %v878
      %s884 = scalar_lea.vmem %s4, 192
      %v885 = vld [vmem:[%s884] sm:$0xf]
      %v886 = vld [vmem:[%s884 + $0x4] sm:$0xf]
      %v887 = vld [vmem:[%s884 + $0x8] sm:$0xf]
      %v888 = vld [vmem:[%s884 + $0xc] sm:$0xf]
      %v889 = vld [vmem:[%s884 + $0x10] sm:$0xf]
      %v890 = vld [vmem:[%s884 + $0x14] sm:$0xf]
      %v891 = vld [vmem:[%s884 + $0x18] sm:$0xf]
      %v892 = vld [vmem:[%s884 + $0x1c] sm:$0xf]
      %v893 = vrot.slane %v808, 1
      %v902 = vunpack.c.l.b16 %v885
      %v903 = vunpack.c.l.b16 %v886
      %v904 = vunpack.c.l.b16 %v887
      %v905 = vunpack.c.l.b16 %v888
      %v906 = vunpack.c.l.b16 %v889
      %v907 = vunpack.c.l.b16 %v890
      %v908 = vunpack.c.l.b16 %v891
      %v909 = vunpack.c.l.b16 %v892
      %v910 = vpack.c.b16 %v903, %v902
      %v911 = vpack.c.b16 %v905, %v904
      %v912 = vpack.c.b16 %v907, %v906
      %v913 = vpack.c.b16 %v909, %v908
      %v919 = vsel %vm450, %v893, 0
      %921 = vmatprep.subr.bf16.mxu0 0
      %922 = vmatpush1.bf16.msra.mxu0 %v910
      %923 = vmatprep.subr.bf16.mxu0 0
      %924 = vmatpush1.bf16.msra.mxu0 %v911
      %925 = vmatprep.subr.bf16.mxu0 0
      %926 = vmatpush1.bf16.msra.mxu0 %v912
      %927 = vmatprep.subr.bf16.mxu0 0
      %928 = vmatpush1.bf16.msra.mxu0 %v913
      %929 = vmatprep.subr.bf16.mxu0 0
      %930 = vmatpush1.bf16.msra.mxu0 0
      %931 = vmatprep.subr.bf16.mxu0 0
      %932 = vmatpush1.bf16.msra.mxu0 0
      %933 = vmatprep.subr.bf16.mxu0 0
      %934 = vmatpush1.bf16.msra.mxu0 0
      %935 = vmatprep.subr.bf16.mxu0 0
      %936 = vmatpush1.bf16.msra.mxu0 0
      %937 = vmatprep.subr.bf16.mxu0 0
      %938 = vmatpush1.bf16.msra.mxu0 0
      %939 = vmatprep.subr.bf16.mxu0 0
      %940 = vmatpush1.bf16.msra.mxu0 0
      %941 = vmatprep.subr.bf16.mxu0 0
      %942 = vmatpush1.bf16.msra.mxu0 0
      %943 = vmatprep.subr.bf16.mxu0 0
      %944 = vmatpush1.bf16.msra.mxu0 0
      %945 = vmatprep.subr.bf16.mxu0 0
      %946 = vmatpush1.bf16.msra.mxu0 0
      %947 = vmatprep.subr.bf16.mxu0 0
      %948 = vmatpush1.bf16.msra.mxu0 0
      %949 = vmatprep.subr.bf16.mxu0 0
      %950 = vmatpush1.bf16.msra.mxu0 0
      %951 = vmatprep.subr.bf16.mxu0 0
      %952 = vmatpush1.bf16.msra.mxu0 0
      %953 = vmatprep.mubr.bf16.mxu0 0
      %954 = vmatmul.mubr.bf16.gmra.mrb[0].mxu0 %v919
      %v955 = vpop.f32.mrb[0].mxu0
      %v956 = vadd.f32 0.0, %v955
      %v957 = vpop.f32.mrb[0].mxu0
      %v958 = vpop.f32.mrb[0].mxu0
      %v959 = vpop.f32.mrb[0].mxu0
      %960 = vdwg.mxu0
      %v961 = vadd.f32 %v883, %v956
      %s962 = scalar_lea.vmem %s4, 224
      %v963 = vld [vmem:[%s962] sm:$0xf]
      %v964 = vld [vmem:[%s962 + $0x4] sm:$0xf]
      %v965 = vld [vmem:[%s962 + $0x8] sm:$0xf]
      %v966 = vld [vmem:[%s962 + $0xc] sm:$0xf]
      %v967 = vld [vmem:[%s962 + $0x10] sm:$0xf]
      %v968 = vld [vmem:[%s962 + $0x14] sm:$0xf]
      %v969 = vld [vmem:[%s962 + $0x18] sm:$0xf]
      %v970 = vld [vmem:[%s962 + $0x1c] sm:$0xf]
      %v971 = vrot.slane %v810, 1
      %v972 = vrot.slane %v812, 2
      %v973 = vor.u32 %v971, %v972
      %v982 = vunpack.c.l.b16 %v963
      %v983 = vunpack.c.l.b16 %v964
      %v984 = vunpack.c.l.b16 %v965
      %v985 = vunpack.c.l.b16 %v966
      %v986 = vunpack.c.l.b16 %v967
      %v987 = vunpack.c.l.b16 %v968
      %v988 = vunpack.c.l.b16 %v969
      %v989 = vunpack.c.l.b16 %v970
      %v990 = vpack.c.b16 %v983, %v982
      %v991 = vpack.c.b16 %v985, %v984
      %v992 = vpack.c.b16 %v987, %v986
      %v993 = vpack.c.b16 %v989, %v988
      %v999 = vsel %vm450, %v973, 0
      %1001 = vmatprep.subr.bf16.mxu0 0
      %1002 = vmatpush1.bf16.msra.mxu0 %v990
      %1003 = vmatprep.subr.bf16.mxu0 0
      %1004 = vmatpush1.bf16.msra.mxu0 %v991
      %1005 = vmatprep.subr.bf16.mxu0 0
      %1006 = vmatpush1.bf16.msra.mxu0 %v992
      %1007 = vmatprep.subr.bf16.mxu0 0
      %1008 = vmatpush1.bf16.msra.mxu0 %v993
      %1009 = vmatprep.subr.bf16.mxu0 0
      %1010 = vmatpush1.bf16.msra.mxu0 0
      %1011 = vmatprep.subr.bf16.mxu0 0
      %1012 = vmatpush1.bf16.msra.mxu0 0
      %1013 = vmatprep.subr.bf16.mxu0 0
      %1014 = vmatpush1.bf16.msra.mxu0 0
      %1015 = vmatprep.subr.bf16.mxu0 0
      %1016 = vmatpush1.bf16.msra.mxu0 0
      %1017 = vmatprep.subr.bf16.mxu0 0
      %1018 = vmatpush1.bf16.msra.mxu0 0
      %1019 = vmatprep.subr.bf16.mxu0 0
      %1020 = vmatpush1.bf16.msra.mxu0 0
      %1021 = vmatprep.subr.bf16.mxu0 0
      %1022 = vmatpush1.bf16.msra.mxu0 0
      %1023 = vmatprep.subr.bf16.mxu0 0
      %1024 = vmatpush1.bf16.msra.mxu0 0
      %1025 = vmatprep.subr.bf16.mxu0 0
      %1026 = vmatpush1.bf16.msra.mxu0 0
      %1027 = vmatprep.subr.bf16.mxu0 0
      %1028 = vmatpush1.bf16.msra.mxu0 0
      %1029 = vmatprep.subr.bf16.mxu0 0
      %1030 = vmatpush1.bf16.msra.mxu0 0
      %1031 = vmatprep.subr.bf16.mxu0 0
      %1032 = vmatpush1.bf16.msra.mxu0 0
      %1033 = vmatprep.mubr.bf16.mxu0 0
      %1034 = vmatmul.mubr.bf16.gmra.mrb[0].mxu0 %v999
      %v1035 = vpop.f32.mrb[0].mxu0
      %v1036 = vadd.f32 0.0, %v1035
      %v1037 = vpop.f32.mrb[0].mxu0
      %v1038 = vpop.f32.mrb[0].mxu0
      %v1039 = vpop.f32.mrb[0].mxu0
      %1040 = vdwg.mxu0
      %v1041 = vadd.f32 %v961, %v1036
      %v1042 = vld [vmem:[%s377] sm:$0x7]
      %s1043 = scalar_lea.vmem %s4, 256
      %v1044 = vld [vmem:[%s1043] sm:$0xf]
      %v1045 = vld [vmem:[%s1043 + $0x4] sm:$0xf]
      %v1046 = vld [vmem:[%s1043 + $0x8] sm:$0xf]
      %v1047 = vld [vmem:[%s1043 + $0xc] sm:$0xf]
      %v1048 = vld [vmem:[%s1043 + $0x10] sm:$0xf]
      %v1049 = vld [vmem:[%s1043 + $0x14] sm:$0xf]
      %v1050 = vld [vmem:[%s1043 + $0x18] sm:$0xf]
      %v1051 = vld [vmem:[%s1043 + $0x1c] sm:$0xf]
      %v1060 = vunpack.c.l.b16 %v1044
      %v1061 = vunpack.c.l.b16 %v1045
      %v1062 = vunpack.c.l.b16 %v1046
      %v1063 = vunpack.c.l.b16 %v1047
      %v1064 = vunpack.c.l.b16 %v1048
      %v1065 = vunpack.c.l.b16 %v1049
      %v1066 = vunpack.c.l.b16 %v1050
      %v1067 = vunpack.c.l.b16 %v1051
      %v1068 = vpack.c.b16 %v1061, %v1060
      %v1069 = vpack.c.b16 %v1063, %v1062
      %v1070 = vpack.c.b16 %v1065, %v1064
      %v1071 = vpack.c.b16 %v1067, %v1066
      %v1077 = vsel %vm450, %v1042, 0
      %1079 = vmatprep.subr.bf16.mxu0 0
      %1080 = vmatpush1.bf16.msra.mxu0 %v1068
      %1081 = vmatprep.subr.bf16.mxu0 0
      %1082 = vmatpush1.bf16.msra.mxu0 %v1069
      %1083 = vmatprep.subr.bf16.mxu0 0
      %1084 = vmatpush1.bf16.msra.mxu0 %v1070
      %1085 = vmatprep.subr.bf16.mxu0 0
      %1086 = vmatpush1.bf16.msra.mxu0 %v1071
      %1087 = vmatprep.subr.bf16.mxu0 0
      %1088 = vmatpush1.bf16.msra.mxu0 0
      %1089 = vmatprep.subr.bf16.mxu0 0
      %1090 = vmatpush1.bf16.msra.mxu0 0
      %1091 = vmatprep.subr.bf16.mxu0 0
      %1092 = vmatpush1.bf16.msra.mxu0 0
      %1093 = vmatprep.subr.bf16.mxu0 0
      %1094 = vmatpush1.bf16.msra.mxu0 0
      %1095 = vmatprep.subr.bf16.mxu0 0
      %1096 = vmatpush1.bf16.msra.mxu0 0
      %1097 = vmatprep.subr.bf16.mxu0 0
      %1098 = vmatpush1.bf16.msra.mxu0 0
      %1099 = vmatprep.subr.bf16.mxu0 0
      %1100 = vmatpush1.bf16.msra.mxu0 0
      %1101 = vmatprep.subr.bf16.mxu0 0
      %1102 = vmatpush1.bf16.msra.mxu0 0
      %1103 = vmatprep.subr.bf16.mxu0 0
      %1104 = vmatpush1.bf16.msra.mxu0 0
      %1105 = vmatprep.subr.bf16.mxu0 0
      %1106 = vmatpush1.bf16.msra.mxu0 0
      %1107 = vmatprep.subr.bf16.mxu0 0
      %1108 = vmatpush1.bf16.msra.mxu0 0
      %1109 = vmatprep.subr.bf16.mxu0 0
      %1110 = vmatpush1.bf16.msra.mxu0 0
      %1111 = vmatprep.mubr.bf16.mxu0 0
      %1112 = vmatmul.mubr.bf16.gmra.mrb[0].mxu0 %v1077
      %v1113 = vpop.f32.mrb[0].mxu0
      %v1114 = vadd.f32 0.0, %v1113
      %v1115 = vpop.f32.mrb[0].mxu0
      %v1116 = vpop.f32.mrb[0].mxu0
      %v1117 = vpop.f32.mrb[0].mxu0
      %1118 = vdwg.mxu0
      %v1119 = vadd.f32 %v1041, %v1114
      %s1120 = scalar_lea.vmem %s4, 288
      %v1121 = vld [vmem:[%s1120] sm:$0xf]
      %v1122 = vld [vmem:[%s1120 + $0x4] sm:$0xf]
      %v1123 = vld [vmem:[%s1120 + $0x8] sm:$0xf]
      %v1124 = vld [vmem:[%s1120 + $0xc] sm:$0xf]
      %v1125 = vld [vmem:[%s1120 + $0x10] sm:$0xf]
      %v1126 = vld [vmem:[%s1120 + $0x14] sm:$0xf]
      %v1127 = vld [vmem:[%s1120 + $0x18] sm:$0xf]
      %v1128 = vld [vmem:[%s1120 + $0x1c] sm:$0xf]
      %v1130 = vunpack.c.l.b16 %v1042
      %v1131 = vpack.c.b16 %v1130, %v1130
      %v1133 = vshrl.u32 %v1131, 16
      %v1135 = vshll.u32 %v1131, 16
      %v1137 = vrot.slane %v1135, 1
      %v1138 = vor.u32 %v1133, %v1137
      %v1147 = vunpack.c.l.b16 %v1121
      %v1148 = vunpack.c.l.b16 %v1122
      %v1149 = vunpack.c.l.b16 %v1123
      %v1150 = vunpack.c.l.b16 %v1124
      %v1151 = vunpack.c.l.b16 %v1125
      %v1152 = vunpack.c.l.b16 %v1126
      %v1153 = vunpack.c.l.b16 %v1127
      %v1154 = vunpack.c.l.b16 %v1128
      %v1155 = vpack.c.b16 %v1148, %v1147
      %v1156 = vpack.c.b16 %v1150, %v1149
      %v1157 = vpack.c.b16 %v1152, %v1151
      %v1158 = vpack.c.b16 %v1154, %v1153
      %v1164 = vsel %vm450, %v1138, 0
      %1166 = vmatprep.subr.bf16.mxu0 0
      %1167 = vmatpush1.bf16.msra.mxu0 %v1155
      %1168 = vmatprep.subr.bf16.mxu0 0
      %1169 = vmatpush1.bf16.msra.mxu0 %v1156
      %1170 = vmatprep.subr.bf16.mxu0 0
      %1171 = vmatpush1.bf16.msra.mxu0 %v1157
      %1172 = vmatprep.subr.bf16.mxu0 0
      %1173 = vmatpush1.bf16.msra.mxu0 %v1158
      %1174 = vmatprep.subr.bf16.mxu0 0
      %1175 = vmatpush1.bf16.msra.mxu0 0
      %1176 = vmatprep.subr.bf16.mxu0 0
      %1177 = vmatpush1.bf16.msra.mxu0 0
      %1178 = vmatprep.subr.bf16.mxu0 0
      %1179 = vmatpush1.bf16.msra.mxu0 0
      %1180 = vmatprep.subr.bf16.mxu0 0
      %1181 = vmatpush1.bf16.msra.mxu0 0
      %1182 = vmatprep.subr.bf16.mxu0 0
      %1183 = vmatpush1.bf16.msra.mxu0 0
      %1184 = vmatprep.subr.bf16.mxu0 0
      %1185 = vmatpush1.bf16.msra.mxu0 0
      %1186 = vmatprep.subr.bf16.mxu0 0
      %1187 = vmatpush1.bf16.msra.mxu0 0
      %1188 = vmatprep.subr.bf16.mxu0 0
      %1189 = vmatpush1.bf16.msra.mxu0 0
      %1190 = vmatprep.subr.bf16.mxu0 0
      %1191 = vmatpush1.bf16.msra.mxu0 0
      %1192 = vmatprep.subr.bf16.mxu0 0
      %1193 = vmatpush1.bf16.msra.mxu0 0
      %1194 = vmatprep.subr.bf16.mxu0 0
      %1195 = vmatpush1.bf16.msra.mxu0 0
      %1196 = vmatprep.subr.bf16.mxu0 0
      %1197 = vmatpush1.bf16.msra.mxu0 0
      %1198 = vmatprep.mubr.bf16.mxu0 0
      %1199 = vmatmul.mubr.bf16.gmra.mrb[0].mxu0 %v1164
      %v1200 = vpop.f32.mrb[0].mxu0
      %v1201 = vadd.f32 0.0, %v1200
      %v1202 = vpop.f32.mrb[0].mxu0
      %v1203 = vpop.f32.mrb[0].mxu0
      %v1204 = vpop.f32.mrb[0].mxu0
      %1205 = vdwg.mxu0
      %v1206 = vadd.f32 %v1119, %v1201
      %s1207 = scalar_lea.vmem %s4, 320
      %v1208 = vld [vmem:[%s1207] sm:$0xf]
      %v1209 = vld [vmem:[%s1207 + $0x4] sm:$0xf]
      %v1210 = vld [vmem:[%s1207 + $0x8] sm:$0xf]
      %v1211 = vld [vmem:[%s1207 + $0xc] sm:$0xf]
      %v1212 = vld [vmem:[%s1207 + $0x10] sm:$0xf]
      %v1213 = vld [vmem:[%s1207 + $0x14] sm:$0xf]
      %v1214 = vld [vmem:[%s1207 + $0x18] sm:$0xf]
      %v1215 = vld [vmem:[%s1207 + $0x1c] sm:$0xf]
      %v1216 = vrot.slane %v1131, 1
      %v1225 = vunpack.c.l.b16 %v1208
      %v1226 = vunpack.c.l.b16 %v1209
      %v1227 = vunpack.c.l.b16 %v1210
      %v1228 = vunpack.c.l.b16 %v1211
      %v1229 = vunpack.c.l.b16 %v1212
      %v1230 = vunpack.c.l.b16 %v1213
      %v1231 = vunpack.c.l.b16 %v1214
      %v1232 = vunpack.c.l.b16 %v1215
      %v1233 = vpack.c.b16 %v1226, %v1225
      %v1234 = vpack.c.b16 %v1228, %v1227
      %v1235 = vpack.c.b16 %v1230, %v1229
      %v1236 = vpack.c.b16 %v1232, %v1231
      %v1242 = vsel %vm450, %v1216, 0
      %1244 = vmatprep.subr.bf16.mxu0 0
      %1245 = vmatpush1.bf16.msra.mxu0 %v1233
      %1246 = vmatprep.subr.bf16.mxu0 0
      %1247 = vmatpush1.bf16.msra.mxu0 %v1234
      %1248 = vmatprep.subr.bf16.mxu0 0
      %1249 = vmatpush1.bf16.msra.mxu0 %v1235
      %1250 = vmatprep.subr.bf16.mxu0 0
      %1251 = vmatpush1.bf16.msra.mxu0 %v1236
      %1252 = vmatprep.subr.bf16.mxu0 0
      %1253 = vmatpush1.bf16.msra.mxu0 0
      %1254 = vmatprep.subr.bf16.mxu0 0
      %1255 = vmatpush1.bf16.msra.mxu0 0
      %1256 = vmatprep.subr.bf16.mxu0 0
      %1257 = vmatpush1.bf16.msra.mxu0 0
      %1258 = vmatprep.subr.bf16.mxu0 0
      %1259 = vmatpush1.bf16.msra.mxu0 0
      %1260 = vmatprep.subr.bf16.mxu0 0
      %1261 = vmatpush1.bf16.msra.mxu0 0
      %1262 = vmatprep.subr.bf16.mxu0 0
      %1263 = vmatpush1.bf16.msra.mxu0 0
      %1264 = vmatprep.subr.bf16.mxu0 0
      %1265 = vmatpush1.bf16.msra.mxu0 0
      %1266 = vmatprep.subr.bf16.mxu0 0
      %1267 = vmatpush1.bf16.msra.mxu0 0
      %1268 = vmatprep.subr.bf16.mxu0 0
      %1269 = vmatpush1.bf16.msra.mxu0 0
      %1270 = vmatprep.subr.bf16.mxu0 0
      %1271 = vmatpush1.bf16.msra.mxu0 0
      %1272 = vmatprep.subr.bf16.mxu0 0
      %1273 = vmatpush1.bf16.msra.mxu0 0
      %1274 = vmatprep.subr.bf16.mxu0 0
      %1275 = vmatpush1.bf16.msra.mxu0 0
      %1276 = vmatprep.mubr.bf16.mxu0 0
      %1277 = vmatmul.mubr.bf16.gmra.mrb[0].mxu0 %v1242
      %v1278 = vpop.f32.mrb[0].mxu0
      %v1279 = vadd.f32 0.0, %v1278
      %v1280 = vpop.f32.mrb[0].mxu0
      %v1281 = vpop.f32.mrb[0].mxu0
      %v1282 = vpop.f32.mrb[0].mxu0
      %1283 = vdwg.mxu0
      %v1284 = vadd.f32 %v1206, %v1279
      %s1285 = scalar_lea.vmem %s4, 352
      %v1286 = vld [vmem:[%s1285] sm:$0xf]
      %v1287 = vld [vmem:[%s1285 + $0x4] sm:$0xf]
      %v1288 = vld [vmem:[%s1285 + $0x8] sm:$0xf]
      %v1289 = vld [vmem:[%s1285 + $0xc] sm:$0xf]
      %v1290 = vld [vmem:[%s1285 + $0x10] sm:$0xf]
      %v1291 = vld [vmem:[%s1285 + $0x14] sm:$0xf]
      %v1292 = vld [vmem:[%s1285 + $0x18] sm:$0xf]
      %v1293 = vld [vmem:[%s1285 + $0x1c] sm:$0xf]
      %v1294 = vrot.slane %v1133, 1
      %v1295 = vrot.slane %v1135, 2
      %v1296 = vor.u32 %v1294, %v1295
      %v1305 = vunpack.c.l.b16 %v1286
      %v1306 = vunpack.c.l.b16 %v1287
      %v1307 = vunpack.c.l.b16 %v1288
      %v1308 = vunpack.c.l.b16 %v1289
      %v1309 = vunpack.c.l.b16 %v1290
      %v1310 = vunpack.c.l.b16 %v1291
      %v1311 = vunpack.c.l.b16 %v1292
      %v1312 = vunpack.c.l.b16 %v1293
      %v1313 = vpack.c.b16 %v1306, %v1305
      %v1314 = vpack.c.b16 %v1308, %v1307
      %v1315 = vpack.c.b16 %v1310, %v1309
      %v1316 = vpack.c.b16 %v1312, %v1311
      %v1322 = vsel %vm450, %v1296, 0
      %1324 = vmatprep.subr.bf16.mxu0 0
      %1325 = vmatpush1.bf16.msra.mxu0 %v1313
      %1326 = vmatprep.subr.bf16.mxu0 0
      %1327 = vmatpush1.bf16.msra.mxu0 %v1314
      %1328 = vmatprep.subr.bf16.mxu0 0
      %1329 = vmatpush1.bf16.msra.mxu0 %v1315
      %1330 = vmatprep.subr.bf16.mxu0 0
      %1331 = vmatpush1.bf16.msra.mxu0 %v1316
      %1332 = vmatprep.subr.bf16.mxu0 0
      %1333 = vmatpush1.bf16.msra.mxu0 0
      %1334 = vmatprep.subr.bf16.mxu0 0
      %1335 = vmatpush1.bf16.msra.mxu0 0
      %1336 = vmatprep.subr.bf16.mxu0 0
      %1337 = vmatpush1.bf16.msra.mxu0 0
      %1338 = vmatprep.subr.bf16.mxu0 0
      %1339 = vmatpush1.bf16.msra.mxu0 0
      %1340 = vmatprep.subr.bf16.mxu0 0
      %1341 = vmatpush1.bf16.msra.mxu0 0
      %1342 = vmatprep.subr.bf16.mxu0 0
      %1343 = vmatpush1.bf16.msra.mxu0 0
      %1344 = vmatprep.subr.bf16.mxu0 0
      %1345 = vmatpush1.bf16.msra.mxu0 0
      %1346 = vmatprep.subr.bf16.mxu0 0
      %1347 = vmatpush1.bf16.msra.mxu0 0
      %1348 = vmatprep.subr.bf16.mxu0 0
      %1349 = vmatpush1.bf16.msra.mxu0 0
      %1350 = vmatprep.subr.bf16.mxu0 0
      %1351 = vmatpush1.bf16.msra.mxu0 0
      %1352 = vmatprep.subr.bf16.mxu0 0
      %1353 = vmatpush1.bf16.msra.mxu0 0
      %1354 = vmatprep.subr.bf16.mxu0 0
      %1355 = vmatpush1.bf16.msra.mxu0 0
      %1356 = vmatprep.mubr.bf16.mxu0 0
      %1357 = vmatmul.mubr.bf16.gmra.mrb[0].mxu0 %v1322
      %v1358 = vpop.f32.mrb[0].mxu0
      %v1359 = vadd.f32 0.0, %v1358
      %v1360 = vpop.f32.mrb[0].mxu0
      %v1361 = vpop.f32.mrb[0].mxu0
      %v1362 = vpop.f32.mrb[0].mxu0
      %1363 = vdwg.mxu0
      %v1364 = vadd.f32 %v1284, %v1359
      %v1365 = vld [vmem:[%s387] sm:$0x7]
      %s1366 = scalar_lea.vmem %s4, 384
      %v1367 = vld [vmem:[%s1366] sm:$0xf]
      %v1368 = vld [vmem:[%s1366 + $0x4] sm:$0xf]
      %v1369 = vld [vmem:[%s1366 + $0x8] sm:$0xf]
      %v1370 = vld [vmem:[%s1366 + $0xc] sm:$0xf]
      %v1371 = vld [vmem:[%s1366 + $0x10] sm:$0xf]
      %v1372 = vld [vmem:[%s1366 + $0x14] sm:$0xf]
      %v1373 = vld [vmem:[%s1366 + $0x18] sm:$0xf]
      %v1374 = vld [vmem:[%s1366 + $0x1c] sm:$0xf]
      %v1383 = vunpack.c.l.b16 %v1367
      %v1384 = vunpack.c.l.b16 %v1368
      %v1385 = vunpack.c.l.b16 %v1369
      %v1386 = vunpack.c.l.b16 %v1370
      %v1387 = vunpack.c.l.b16 %v1371
      %v1388 = vunpack.c.l.b16 %v1372
      %v1389 = vunpack.c.l.b16 %v1373
      %v1390 = vunpack.c.l.b16 %v1374
      %v1391 = vpack.c.b16 %v1384, %v1383
      %v1392 = vpack.c.b16 %v1386, %v1385
      %v1393 = vpack.c.b16 %v1388, %v1387
      %v1394 = vpack.c.b16 %v1390, %v1389
      %v1400 = vsel %vm450, %v1365, 0
      %1402 = vmatprep.subr.bf16.mxu0 0
      %1403 = vmatpush1.bf16.msra.mxu0 %v1391
      %1404 = vmatprep.subr.bf16.mxu0 0
      %1405 = vmatpush1.bf16.msra.mxu0 %v1392
      %1406 = vmatprep.subr.bf16.mxu0 0
      %1407 = vmatpush1.bf16.msra.mxu0 %v1393
      %1408 = vmatprep.subr.bf16.mxu0 0
      %1409 = vmatpush1.bf16.msra.mxu0 %v1394
      %1410 = vmatprep.subr.bf16.mxu0 0
      %1411 = vmatpush1.bf16.msra.mxu0 0
      %1412 = vmatprep.subr.bf16.mxu0 0
      %1413 = vmatpush1.bf16.msra.mxu0 0
      %1414 = vmatprep.subr.bf16.mxu0 0
      %1415 = vmatpush1.bf16.msra.mxu0 0
      %1416 = vmatprep.subr.bf16.mxu0 0
      %1417 = vmatpush1.bf16.msra.mxu0 0
      %1418 = vmatprep.subr.bf16.mxu0 0
      %1419 = vmatpush1.bf16.msra.mxu0 0
      %1420 = vmatprep.subr.bf16.mxu0 0
      %1421 = vmatpush1.bf16.msra.mxu0 0
      %1422 = vmatprep.subr.bf16.mxu0 0
      %1423 = vmatpush1.bf16.msra.mxu0 0
      %1424 = vmatprep.subr.bf16.mxu0 0
      %1425 = vmatpush1.bf16.msra.mxu0 0
      %1426 = vmatprep.subr.bf16.mxu0 0
      %1427 = vmatpush1.bf16.msra.mxu0 0
      %1428 = vmatprep.subr.bf16.mxu0 0
      %1429 = vmatpush1.bf16.msra.mxu0 0
      %1430 = vmatprep.subr.bf16.mxu0 0
      %1431 = vmatpush1.bf16.msra.mxu0 0
      %1432 = vmatprep.subr.bf16.mxu0 0
      %1433 = vmatpush1.bf16.msra.mxu0 0
      %1434 = vmatprep.mubr.bf16.mxu0 0
      %1435 = vmatmul.mubr.bf16.gmra.mrb[0].mxu0 %v1400
      %v1436 = vpop.f32.mrb[0].mxu0
      %v1437 = vadd.f32 0.0, %v1436
      %v1438 = vpop.f32.mrb[0].mxu0
      %v1439 = vpop.f32.mrb[0].mxu0
      %v1440 = vpop.f32.mrb[0].mxu0
      %1441 = vdwg.mxu0
      %v1442 = vadd.f32 %v1364, %v1437
      %s1443 = scalar_lea.vmem %s4, 416
      %v1444 = vld [vmem:[%s1443] sm:$0xf]
      %v1445 = vld [vmem:[%s1443 + $0x4] sm:$0xf]
      %v1446 = vld [vmem:[%s1443 + $0x8] sm:$0xf]
      %v1447 = vld [vmem:[%s1443 + $0xc] sm:$0xf]
      %v1448 = vld [vmem:[%s1443 + $0x10] sm:$0xf]
      %v1449 = vld [vmem:[%s1443 + $0x14] sm:$0xf]
      %v1450 = vld [vmem:[%s1443 + $0x18] sm:$0xf]
      %v1451 = vld [vmem:[%s1443 + $0x1c] sm:$0xf]
      %v1453 = vunpack.c.l.b16 %v1365
      %v1454 = vpack.c.b16 %v1453, %v1453
      %v1456 = vshrl.u32 %v1454, 16
      %v1458 = vshll.u32 %v1454, 16
      %v1460 = vrot.slane %v1458, 1
      %v1461 = vor.u32 %v1456, %v1460
      %v1470 = vunpack.c.l.b16 %v1444
      %v1471 = vunpack.c.l.b16 %v1445
      %v1472 = vunpack.c.l.b16 %v1446
      %v1473 = vunpack.c.l.b16 %v1447
      %v1474 = vunpack.c.l.b16 %v1448
      %v1475 = vunpack.c.l.b16 %v1449
      %v1476 = vunpack.c.l.b16 %v1450
      %v1477 = vunpack.c.l.b16 %v1451
      %v1478 = vpack.c.b16 %v1471, %v1470
      %v1479 = vpack.c.b16 %v1473, %v1472
      %v1480 = vpack.c.b16 %v1475, %v1474
      %v1481 = vpack.c.b16 %v1477, %v1476
      %v1487 = vsel %vm450, %v1461, 0
      %1489 = vmatprep.subr.bf16.mxu0 0
      %1490 = vmatpush1.bf16.msra.mxu0 %v1478
      %1491 = vmatprep.subr.bf16.mxu0 0
      %1492 = vmatpush1.bf16.msra.mxu0 %v1479
      %1493 = vmatprep.subr.bf16.mxu0 0
      %1494 = vmatpush1.bf16.msra.mxu0 %v1480
      %1495 = vmatprep.subr.bf16.mxu0 0
      %1496 = vmatpush1.bf16.msra.mxu0 %v1481
      %1497 = vmatprep.subr.bf16.mxu0 0
      %1498 = vmatpush1.bf16.msra.mxu0 0
      %1499 = vmatprep.subr.bf16.mxu0 0
      %1500 = vmatpush1.bf16.msra.mxu0 0
      %1501 = vmatprep.subr.bf16.mxu0 0
      %1502 = vmatpush1.bf16.msra.mxu0 0
      %1503 = vmatprep.subr.bf16.mxu0 0
      %1504 = vmatpush1.bf16.msra.mxu0 0
      %1505 = vmatprep.subr.bf16.mxu0 0
      %1506 = vmatpush1.bf16.msra.mxu0 0
      %1507 = vmatprep.subr.bf16.mxu0 0
      %1508 = vmatpush1.bf16.msra.mxu0 0
      %1509 = vmatprep.subr.bf16.mxu0 0
      %1510 = vmatpush1.bf16.msra.mxu0 0
      %1511 = vmatprep.subr.bf16.mxu0 0
      %1512 = vmatpush1.bf16.msra.mxu0 0
      %1513 = vmatprep.subr.bf16.mxu0 0
      %1514 = vmatpush1.bf16.msra.mxu0 0
      %1515 = vmatprep.subr.bf16.mxu0 0
      %1516 = vmatpush1.bf16.msra.mxu0 0
      %1517 = vmatprep.subr.bf16.mxu0 0
      %1518 = vmatpush1.bf16.msra.mxu0 0
      %1519 = vmatprep.subr.bf16.mxu0 0
      %1520 = vmatpush1.bf16.msra.mxu0 0
      %1521 = vmatprep.mubr.bf16.mxu0 0
      %1522 = vmatmul.mubr.bf16.gmra.mrb[0].mxu0 %v1487
      %v1523 = vpop.f32.mrb[0].mxu0
      %v1524 = vadd.f32 0.0, %v1523
      %v1525 = vpop.f32.mrb[0].mxu0
      %v1526 = vpop.f32.mrb[0].mxu0
      %v1527 = vpop.f32.mrb[0].mxu0
      %1528 = vdwg.mxu0
      %v1529 = vadd.f32 %v1442, %v1524
      %s1530 = scalar_lea.vmem %s4, 448
      %v1531 = vld [vmem:[%s1530] sm:$0xf]
      %v1532 = vld [vmem:[%s1530 + $0x4] sm:$0xf]
      %v1533 = vld [vmem:[%s1530 + $0x8] sm:$0xf]
      %v1534 = vld [vmem:[%s1530 + $0xc] sm:$0xf]
      %v1535 = vld [vmem:[%s1530 + $0x10] sm:$0xf]
      %v1536 = vld [vmem:[%s1530 + $0x14] sm:$0xf]
      %v1537 = vld [vmem:[%s1530 + $0x18] sm:$0xf]
      %v1538 = vld [vmem:[%s1530 + $0x1c] sm:$0xf]
      %v1539 = vrot.slane %v1454, 1
      %v1548 = vunpack.c.l.b16 %v1531
      %v1549 = vunpack.c.l.b16 %v1532
      %v1550 = vunpack.c.l.b16 %v1533
      %v1551 = vunpack.c.l.b16 %v1534
      %v1552 = vunpack.c.l.b16 %v1535
      %v1553 = vunpack.c.l.b16 %v1536
      %v1554 = vunpack.c.l.b16 %v1537
      %v1555 = vunpack.c.l.b16 %v1538
      %v1556 = vpack.c.b16 %v1549, %v1548
      %v1557 = vpack.c.b16 %v1551, %v1550
      %v1558 = vpack.c.b16 %v1553, %v1552
      %v1559 = vpack.c.b16 %v1555, %v1554
      %v1565 = vsel %vm450, %v1539, 0
      %1567 = vmatprep.subr.bf16.mxu0 0
      %1568 = vmatpush1.bf16.msra.mxu0 %v1556
      %1569 = vmatprep.subr.bf16.mxu0 0
      %1570 = vmatpush1.bf16.msra.mxu0 %v1557
      %1571 = vmatprep.subr.bf16.mxu0 0
      %1572 = vmatpush1.bf16.msra.mxu0 %v1558
      %1573 = vmatprep.subr.bf16.mxu0 0
      %1574 = vmatpush1.bf16.msra.mxu0 %v1559
      %1575 = vmatprep.subr.bf16.mxu0 0
      %1576 = vmatpush1.bf16.msra.mxu0 0
      %1577 = vmatprep.subr.bf16.mxu0 0
      %1578 = vmatpush1.bf16.msra.mxu0 0
      %1579 = vmatprep.subr.bf16.mxu0 0
      %1580 = vmatpush1.bf16.msra.mxu0 0
      %1581 = vmatprep.subr.bf16.mxu0 0
      %1582 = vmatpush1.bf16.msra.mxu0 0
      %1583 = vmatprep.subr.bf16.mxu0 0
      %1584 = vmatpush1.bf16.msra.mxu0 0
      %1585 = vmatprep.subr.bf16.mxu0 0
      %1586 = vmatpush1.bf16.msra.mxu0 0
      %1587 = vmatprep.subr.bf16.mxu0 0
      %1588 = vmatpush1.bf16.msra.mxu0 0
      %1589 = vmatprep.subr.bf16.mxu0 0
      %1590 = vmatpush1.bf16.msra.mxu0 0
      %1591 = vmatprep.subr.bf16.mxu0 0
      %1592 = vmatpush1.bf16.msra.mxu0 0
      %1593 = vmatprep.subr.bf16.mxu0 0
      %1594 = vmatpush1.bf16.msra.mxu0 0
      %1595 = vmatprep.subr.bf16.mxu0 0
      %1596 = vmatpush1.bf16.msra.mxu0 0
      %1597 = vmatprep.subr.bf16.mxu0 0
      %1598 = vmatpush1.bf16.msra.mxu0 0
      %1599 = vmatprep.mubr.bf16.mxu0 0
      %1600 = vmatmul.mubr.bf16.gmra.mrb[0].mxu0 %v1565
      %v1601 = vpop.f32.mrb[0].mxu0
      %v1602 = vadd.f32 0.0, %v1601
      %v1603 = vpop.f32.mrb[0].mxu0
      %v1604 = vpop.f32.mrb[0].mxu0
      %v1605 = vpop.f32.mrb[0].mxu0
      %1606 = vdwg.mxu0
      %v1607 = vadd.f32 %v1529, %v1602
      %s1608 = scalar_lea.vmem %s4, 480
      %v1609 = vld [vmem:[%s1608] sm:$0xf]
      %v1610 = vld [vmem:[%s1608 + $0x4] sm:$0xf]
      %v1611 = vld [vmem:[%s1608 + $0x8] sm:$0xf]
      %v1612 = vld [vmem:[%s1608 + $0xc] sm:$0xf]
      %v1613 = vld [vmem:[%s1608 + $0x10] sm:$0xf]
      %v1614 = vld [vmem:[%s1608 + $0x14] sm:$0xf]
      %v1615 = vld [vmem:[%s1608 + $0x18] sm:$0xf]
      %v1616 = vld [vmem:[%s1608 + $0x1c] sm:$0xf]
      %v1617 = vrot.slane %v1456, 1
      %v1618 = vrot.slane %v1458, 2
      %v1619 = vor.u32 %v1617, %v1618
      %v1628 = vunpack.c.l.b16 %v1609
      %v1629 = vunpack.c.l.b16 %v1610
      %v1630 = vunpack.c.l.b16 %v1611
      %v1631 = vunpack.c.l.b16 %v1612
      %v1632 = vunpack.c.l.b16 %v1613
      %v1633 = vunpack.c.l.b16 %v1614
      %v1634 = vunpack.c.l.b16 %v1615
      %v1635 = vunpack.c.l.b16 %v1616
      %v1636 = vpack.c.b16 %v1629, %v1628
      %v1637 = vpack.c.b16 %v1631, %v1630
      %v1638 = vpack.c.b16 %v1633, %v1632
      %v1639 = vpack.c.b16 %v1635, %v1634
      %v1645 = vsel %vm450, %v1619, 0
      %1647 = vmatprep.subr.bf16.mxu0 0
      %1648 = vmatpush1.bf16.msra.mxu0 %v1636
      %1649 = vmatprep.subr.bf16.mxu0 0
      %1650 = vmatpush1.bf16.msra.mxu0 %v1637
      %1651 = vmatprep.subr.bf16.mxu0 0
      %1652 = vmatpush1.bf16.msra.mxu0 %v1638
      %1653 = vmatprep.subr.bf16.mxu0 0
      %1654 = vmatpush1.bf16.msra.mxu0 %v1639
      %1655 = vmatprep.subr.bf16.mxu0 0
      %1656 = vmatpush1.bf16.msra.mxu0 0
      %1657 = vmatprep.subr.bf16.mxu0 0
      %1658 = vmatpush1.bf16.msra.mxu0 0
      %1659 = vmatprep.subr.bf16.mxu0 0
      %1660 = vmatpush1.bf16.msra.mxu0 0
      %1661 = vmatprep.subr.bf16.mxu0 0
      %1662 = vmatpush1.bf16.msra.mxu0 0
      %1663 = vmatprep.subr.bf16.mxu0 0
      %1664 = vmatpush1.bf16.msra.mxu0 0
      %1665 = vmatprep.subr.bf16.mxu0 0
      %1666 = vmatpush1.bf16.msra.mxu0 0
      %1667 = vmatprep.subr.bf16.mxu0 0
      %1668 = vmatpush1.bf16.msra.mxu0 0
      %1669 = vmatprep.subr.bf16.mxu0 0
      %1670 = vmatpush1.bf16.msra.mxu0 0
      %1671 = vmatprep.subr.bf16.mxu0 0
      %1672 = vmatpush1.bf16.msra.mxu0 0
      %1673 = vmatprep.subr.bf16.mxu0 0
      %1674 = vmatpush1.bf16.msra.mxu0 0
      %1675 = vmatprep.subr.bf16.mxu0 0
      %1676 = vmatpush1.bf16.msra.mxu0 0
      %1677 = vmatprep.subr.bf16.mxu0 0
      %1678 = vmatpush1.bf16.msra.mxu0 0
      %1679 = vmatprep.mubr.bf16.mxu0 0
      %1680 = vmatmul.mubr.bf16.gmra.mrb[0].mxu0 %v1645
      %v1681 = vpop.f32.mrb[0].mxu0
      %v1682 = vadd.f32 0.0, %v1681
      %v1683 = vpop.f32.mrb[0].mxu0
      %v1684 = vpop.f32.mrb[0].mxu0
      %v1685 = vpop.f32.mrb[0].mxu0
      %1686 = vdwg.mxu0
      %v1687 = vadd.f32 %v1607, %v1682
      %v1688 = vld [vmem:[%s5] sm:$0x1]
      %v1690 = vlaneseq
      %v1691 = vshrl.u32 %v1690, 7
      %v1692 = vsub.s32 0, %v1691
      %v1693 = vrot.slane %v1688, %v1692
      %v1695 = vadd.f32 %v1687, %v1693
      %1696 = vst [vmem:[%s396] sm:$0x3] %v1695
      %p1697 = scmp.lt.s32.totalorder %s21, 1
      %s1698 = scalar_select %p1697, %s21, 1
      %p1699 = scmp.lt.s32.totalorder %s22, 1
      %s1700 = scalar_select %p1699, %s22, 1
      %s1701 = smul.addr %s1698, 2
      %s1702 = sadd.s32 %s1700, %s1701
      %s1703 = smul.addr %s1702, 2
      %s1704 = scalar_lea.vmem %s6, %s1703
      // Predicated region
      $region45: #{nlayer_discriminator_forward.15} parent=43 // pred_check
        %p1705 = pneg %p209
      $region46: #{nlayer_discriminator_forward.15} parent=43 // pred_check_branch
        %1707 = sbr.rel (%p1705) target = $region48
      $region47: #{nlayer_discriminator_forward.15} parent=43 // pred_region
        _
      $region48: #{nlayer_discriminator_forward.15} parent=43 // pred_fallthru
        _
    $region44: #{nlayer_discriminator_forward.15} parent=5 // pred_fallthru
      _
    %p1708 = scmp.le.s32.totalorder 2, %s12
    // Predicated region
    $region49: #{nlayer_discriminator_forward.15} parent=5 // pred_check
      %p1709 = pneg %p1708
    $region50: #{nlayer_discriminator_forward.15} parent=5 // pred_check_branch
      %1711 = sbr.rel (%p1709) target = $region52
    $region51: #{nlayer_discriminator_forward.15} parent=5 // pred_region
      %s1712 = ssub.s32 %s12, 2
      // Predicated region
      $region53: #{nlayer_discriminator_forward.15} parent=51 // pred_check
        %p1713 = pneg %p215
      $region54: #{nlayer_discriminator_forward.15} parent=51 // pred_check_branch
        %1715 = sbr.rel (%p1713) target = $region56
      $region55: #{nlayer_discriminator_forward.15} parent=51 // pred_region
        %p1716 = scmp.lt.s32.totalorder %s23, 1
        %s1717 = scalar_select %p1716, %s23, 1
        %p1718 = scmp.lt.s32.totalorder %s24, 1
        %s1719 = scalar_select %p1718, %s24, 1
        %s1720 = smul.addr %s1717, 2
        %s1721 = sadd.s32 %s1719, %s1720
        %s1722 = smul.addr %s1721, 2
        %s1723 = scalar_lea.vmem %s6, %s1722
      $region56: #{nlayer_discriminator_forward.15} parent=51 // pred_fallthru
        _
    $region52: #{nlayer_discriminator_forward.15} parent=5 // pred_fallthru
      _
  $region6: #{nlayer_discriminator_forward.15} parent=0 // loop_footer
    %s16 = sadd.s32 1, %s12
  $region7: #{nlayer_discriminator_forward.15} parent=0 // loop_footer_branch
    %11 = sbr.rel target = $region3
  $region8: #{nlayer_discriminator_forward.15} parent=0 // loop_exit
    _

</llo_original>
